<compile_context>
chip_gen: v7x
topology: tpu7x:2x2x1
jax: 0.10.0
libtpu: 0.0.40
codegen_flags: <defaults>
</compile_context>

<pallas_src>
import functools
import math

import jax
import jax.numpy as jnp
from jax.experimental import pallas as pl
from jax.experimental.pallas import tpu as pltpu

_SQRT_HALF = math.sqrt(0.5)


# ----------------- fused WaveNet + AffineCoupling epilogue kernel ------------

def _coupling_kernel(xa_ref, ca_ref, ib_ref,
                     wfr_ref, bfr_ref, wfg_ref, bfg_ref, wc_ref,
                     wrs_ref, brs_ref, w1_ref, b1_ref,
                     w2_ref, b2_ref, zscale_ref,
                     outb_ref, ld_ref,
                     *, rows, T, dilations, R, G, S, padc):
    """One row tile = (samples_per_tile * T) flattened time steps.

    Runs the whole conditional WaveNet (front conv + all dilated ResBlocks +
    final head) and the affine-coupling epilogue with everything resident in
    VMEM/vregs.  Matmul operands are bf16; accumulation / elementwise is f32.
    """
    f32, bf16 = jnp.float32, jnp.bfloat16

    # per-row time index within its sample (rows are batch-major: r = b*T + t)
    t_idx = jax.lax.broadcasted_iota(jnp.int32, (rows, 1), 0) % T

    def dot(a_bf16, w):
        return jnp.dot(a_bf16, w, preferred_element_type=f32)

    def tap(prod, d, direction):
        # shift-after-matmul "same"-padding tap: contribution of h[t - d]
        # (direction=+1) or h[t + d] (direction=-1) to output row t.  The
        # shift is a cheap XLU sublane rotate; the mask zeroes rows whose tap
        # falls outside the sample (zero padding / cross-sample rows).
        if d >= T:
            return jnp.zeros_like(prod)
        shift = (direction * d) % rows
        rolled = pltpu.roll(prod, shift=shift, axis=0)
        if direction > 0:
            return jnp.where(t_idx >= d, rolled, 0.0)
        return jnp.where(t_idx < T - d, rolled, 0.0)

    xa = xa_ref[...].astype(bf16)                     # (rows, Cin)
    ca = ca_ref[...].astype(bf16)                     # (rows, Cc)

    # ---- front conv (K=3, dilation=1, "same") + ReLU -------------------------
    h = (dot(xa, wfr_ref[1])
         + tap(dot(xa, wfr_ref[0]), 1, +1)
         + tap(dot(xa, wfr_ref[2]), 1, -1)
         + bfr_ref[...])
    h = jnp.maximum(h, 0.0)                           # (rows, R) f32

    # ---- dilated ResBlocks (unrolled); h / skip stay resident ----------------
    # TODO(synk): for deep WaveNets (n_layer >= 8) make the layer a grid axis
    # (weights streamed per layer, h/skip in VMEM scratch) to bound live ranges.
    skip = jnp.zeros((rows, S), f32)
    for l, d in enumerate(dilations):
        hb = h.astype(bf16)
        fg = (dot(hb, wfg_ref[3 * l + 1])             # center tap, [filter|gate]
              + tap(dot(hb, wfg_ref[3 * l + 0]), d, +1)
              + tap(dot(hb, wfg_ref[3 * l + 2]), d, -1)
              + dot(ca, wc_ref[l])                    # 1x1 conditioning
              + bfg_ref[l])                           # (rows, 2G) f32
        gated = jnp.tanh(fg[:, :G]) * jax.nn.sigmoid(fg[:, G:])
        rs = dot(gated.astype(bf16), wrs_ref[l]) + brs_ref[l]   # [res|skip]
        h = (h + rs[:, :R]) * _SQRT_HALF
        skip = skip + rs[:, R:]

    # ---- head: ReLU -> 1x1 Conv(S,S) -> ReLU -> ZeroConv1d (lane-padded) -----
    s = jnp.maximum(skip, 0.0)
    h1 = jnp.maximum(dot(s.astype(bf16), w1_ref[...]) + b1_ref[...], 0.0)
    z = (dot(h1.astype(bf16), w2_ref[...]) + b2_ref[...]) * jnp.exp(zscale_ref[...] * 3.0)
    log_s = z[:, :padc]                               # pad lanes are exactly 0
    t_shift = z[:, padc:]

    # ---- fused AffineCoupling epilogue (lane-dense store) --------------------
    outb_ref[...] = (ib_ref[...] - t_shift) * jnp.exp(-log_s)
    # padded lanes of log_s are zero -> contribute nothing to the reduction
    ld_ref[0] = jnp.broadcast_to(-jnp.sum(log_s, axis=0, keepdims=True), (8, padc))


def _full(shape):
    n = len(shape)
    return pl.BlockSpec(shape, lambda i, _n=n: (0,) * _n)


def _vmem_limit_bytes():
    # Leave headroom on v7x (64 MiB physical VMEM); allow more on v5e/v6e (128 MiB).
    try:
        cap = int(pltpu.get_tpu_info().vmem_capacity_bytes)
    except Exception:
        cap = 64 * 1024 * 1024
    return max(32 * 1024 * 1024, min(cap // 2, 64 * 1024 * 1024))


def _samples_per_tile(B, T, target_rows=512):
    # Pack whole samples per grid step so the per-sample "same" halo can be
    # handled with roll+mask; aim for >=256-row matmuls when B*T is large.
    best = 1
    for bt in range(1, B + 1):
        if B % bt:
            continue
        if bt * T > max(target_rows, T):
            break
        best = bt
    if best != B and (best * T) % 8:      # keep the row block sublane-aligned
        best = B
    return best


def coupling_forward(x, c, p, dilations):
    """ActNorm output -> AffineCoupling output & logdet; ONE fused pallas_call."""
    B, C, T = x.shape
    half = C // 2
    cc_half = c.shape[1] // 2
    in_a, in_b = x[:, :half], x[:, half:]
    c_a = c[:, :cc_half]

    L3, R, twoG = p["wfg"].shape
    G = twoG // 2
    S = p["wrs"].shape[2] - R
    padc = p["w2"].shape[1] // 2

    # flatten (B, ch, T) -> (B*T, ch): batch folded into the matmul M dimension
    def flat(v):
        return jnp.transpose(v, (0, 2, 1)).reshape(B * T, -1).astype(jnp.float32)

    xa, ca, ib = flat(in_a), flat(c_a), flat(in_b)
    ib_pad = jnp.pad(ib, ((0, 0), (0, padc - half)))   # lane-dense epilogue/store

    bt = _samples_per_tile(B, T)
    rows = bt * T
    nt = B // bt

    kern = functools.partial(_coupling_kernel, rows=rows, T=T,
                             dilations=tuple(dilations), R=R, G=G, S=S, padc=padc)
    out_pad, ld_part = pl.pallas_call(
        kern,
        out_shape=(jax.ShapeDtypeStruct((B * T, padc), jnp.float32),
                   jax.ShapeDtypeStruct((nt, 8, padc), jnp.float32)),
        grid=(nt,),
        in_specs=[
            pl.BlockSpec((rows, half), lambda i: (i, 0)),
            pl.BlockSpec((rows, cc_half), lambda i: (i, 0)),
            pl.BlockSpec((rows, padc), lambda i: (i, 0)),
            _full(p["wfr"].shape), _full(p["bfr"].shape),
            _full(p["wfg"].shape), _full(p["bfg"].shape), _full(p["wc"].shape),
            _full(p["wrs"].shape), _full(p["brs"].shape),
            _full(p["w1"].shape), _full(p["b1"].shape),
            _full(p["w2"].shape), _full(p["b2"].shape), _full(p["zscale"].shape),
        ],
        out_specs=(pl.BlockSpec((rows, padc), lambda i: (i, 0)),
                   pl.BlockSpec((1, 8, padc), lambda i: (i, 0, 0))),
        compiler_params=pltpu.CompilerParams(
            dimension_semantics=("parallel",),        # row tiles across v7x TCs
            vmem_limit_bytes=_vmem_limit_bytes()),
    )(xa, ca, ib_pad,
      p["wfr"], p["bfr"], p["wfg"], p["bfg"], p["wc"],
      p["wrs"], p["brs"], p["w1"], p["b1"], p["w2"], p["b2"], p["zscale"])

    out_b = jnp.transpose(out_pad[:, :half].reshape(B, T, half), (0, 2, 1))
    logdet = jnp.sum(ld_part[:, 0, :])
    return jnp.concatenate([in_a, out_b], axis=1), logdet


# ------------------------------ flow glue (JAX) -------------------------------
# Squeeze / ActNorm statistics / chunk / cat / change_order are trivial
# memory-bound reshuffles on tiny tensors; they are left to XLA.

def actnorm_forward(x):
    # pretrained=False -> data-dependent init on this input, then affine + logdet.
    # NOTE: matches the *first* forward of a fresh module; persisting loc/scale
    # across calls would need external state carried by the caller.
    B, C, T = x.shape
    flat = jnp.transpose(x, (1, 0, 2)).reshape(C, -1)
    mean = jnp.mean(flat, axis=1)
    std = jnp.std(flat, axis=1, ddof=1)                 # torch.std is unbiased
    loc = -mean
    scale = 1.0 / (std + 1e-6)
    out = scale[None, :, None] * (x + loc[None, :, None])
    logdet = jnp.sum(jnp.log(jnp.abs(scale))) * (B * T)
    return out, logdet


def change_order(x, c):
    x_a, x_b = jnp.split(x, 2, axis=1)
    c_a, c_b = jnp.split(c, 2, axis=1)
    return jnp.concatenate([x_b, x_a], axis=1), jnp.concatenate([c_b, c_a], axis=1)


def block_forward(x, c, params, *, n_layer, split=False):
    B, C, T = x.shape
    Cc = c.shape[1]
    # squeeze (B, C, T) -> (B, 2C, T/2), same for c
    out = x.reshape(B, C, T // 2, 2).transpose(0, 1, 3, 2).reshape(B, 2 * C, T // 2)
    cc = c.reshape(B, Cc, T // 2, 2).transpose(0, 1, 3, 2).reshape(B, 2 * Cc, T // 2)

    dilations = tuple(2 ** n for n in range(n_layer))   # num_blocks = 1
    logdet = jnp.zeros((), jnp.float32)
    for fp in params["flows"]:
        out, a_det = actnorm_forward(out)
        out, c_det = coupling_forward(out, cc, fp["wavenet"], dilations)
        out, cc = change_order(out, cc)
        logdet = logdet + a_det + c_det

    log_p = jnp.zeros((), jnp.float32)
    # TODO(synk): split=True branch (prior WaveNet + gaussian_log_p) not
    # implemented; the reference Block defaults to split=False.
    return out, cc, logdet, log_p


# --------------------------------- params -------------------------------------

def init_wavenet_params(key, *, in_ch, cc_ch, out_ch, n_layer, R, G, S, padc):
    """Weights stored pre-fused and tap-stacked for the kernel (bf16 matmul
    operands, f32 biases):
       wfr   (3, Cin, R)      front conv taps [t-1 | t | t+1]
       wfg   (3L, R, 2G)      per-layer [filter|gate] taps, index 3l+{0,1,2}
       bfg   (L, 1, 2G)       conv bias + 1x1-conditioning bias, folded
       wc    (L, Cc, 2G)      per-layer [filter|gate] 1x1 conditioning
       wrs   (L, G, R+S)      per-layer [res|skip] 1x1
       w1/b1                  final 1x1 Conv(S, S)
       w2/b2/zscale           ZeroConv1d — zero at init (faithful); lane-padded
                              to 2*padc: log_s cols at [0:out_ch/2), t cols at
                              [padc:padc+out_ch/2) so the tail is lane-dense.
    """
    L = n_layer
    ks = jax.random.split(key, 9)

    def nrm(k, shape, fan_in):
        w = math.sqrt(2.0 / fan_in) * jax.random.normal(k, shape, jnp.float32)
        return w.astype(jnp.bfloat16)        # matmul operand: MXU-native bf16

    def bia(k, shape, fan_in):
        b = 1.0 / math.sqrt(fan_in)
        return jax.random.uniform(k, shape, jnp.float32, -b, b)

    return {
        "wfr": nrm(ks[0], (3, in_ch, R), 3 * in_ch),
        "bfr": bia(ks[1], (1, R), 3 * in_ch),
        "wfg": nrm(ks[2], (3 * L, R, 2 * G), 3 * R),
        "bfg": bia(ks[3], (L, 1, 2 * G), 3 * R),
        "wc":  nrm(ks[4], (L, cc_ch, 2 * G), cc_ch),
        "wrs": nrm(ks[5], (L, G, R + S), G),
        "brs": bia(ks[6], (L, 1, R + S), G),
        "w1":  nrm(ks[7], (S, S), S),
        "b1":  bia(ks[8], (1, S), S),
        "w2":  jnp.zeros((S, 2 * padc), jnp.bfloat16),
        "b2":  jnp.zeros((1, 2 * padc), jnp.float32),
        "zscale": jnp.zeros((1, 2 * padc), jnp.float32),
    }


def init_block_params(key, *, in_channel, cin_channel, n_flow, n_layer,
                      filter_size=256):
    squeeze_dim = in_channel * 2
    squeeze_dim_c = cin_channel * 2
    half = squeeze_dim // 2
    padc = 128 * max(1, -(-half // 128))     # lane-padded half-channel width
    flows = []
    for k in jax.random.split(key, n_flow):
        flows.append({
            # ActNorm loc/scale are data-initialized on forward (pretrained=False),
            # so no stored params are needed for them.
            "wavenet": init_wavenet_params(
                k, in_ch=half, cc_ch=squeeze_dim_c // 2,
                out_ch=squeeze_dim, n_layer=n_layer,
                R=filter_size, G=filter_size, S=filter_size, padc=padc),
        })
    return {"flows": flows}


# ---------------------------------- main ---------------------------------------

if __name__ == "__main__":
    B = 2
    in_channel = 2          # Block in_channel  -> squeeze_dim   = 4
    cin_channel = 2         # Block cin_channel -> squeeze_dim_c = 4
    T = 16                  # even (squeeze halves it to 8)
    n_flow = 2
    n_layer = 2
    filter_size = 256       # hard-coded in the reference Flow / AffineCoupling

    root = jax.random.PRNGKey(0)
    kp, kx, kc = jax.random.split(root, 3)

    params = init_block_params(
        kp, in_channel=in_channel, cin_channel=cin_channel,
        n_flow=n_flow, n_layer=n_layer, filter_size=filter_size)

    x = jax.random.normal(kx, (B, in_channel, T), jnp.float32)
    c = jax.random.normal(kc, (B, cin_channel, T), jnp.float32)

    fwd = jax.jit(functools.partial(block_forward, n_layer=n_layer))
    out, c_out, logdet, log_p = jax.block_until_ready(fwd(x, c, params))

    assert out.shape == (B, 2 * in_channel, T // 2), out.shape
    assert c_out.shape == (B, 2 * cin_channel, T // 2), c_out.shape
    assert bool(jnp.all(jnp.isfinite(out)))
    assert bool(jnp.all(jnp.isfinite(c_out)))
    assert bool(jnp.isfinite(logdet)) and bool(jnp.isfinite(log_p))
    print("KERNEL_OK")
</pallas_src>

<mosaic_0001>
module attributes {stable_mosaic.version = 11 : i64} {
  func.func @_coupling_kernel(%arg0: i32, %arg1: memref<16x2xf32, #tpu.memory_space<vmem>>, %arg2: memref<16x2xf32, #tpu.memory_space<vmem>>, %arg3: memref<16x128xf32, #tpu.memory_space<vmem>>, %arg4: memref<3x2x256xbf16, #tpu.memory_space<vmem>>, %arg5: memref<1x256xf32, #tpu.memory_space<vmem>>, %arg6: memref<6x256x512xbf16, #tpu.memory_space<vmem>>, %arg7: memref<2x1x512xf32, #tpu.memory_space<vmem>>, %arg8: memref<2x2x512xbf16, #tpu.memory_space<vmem>>, %arg9: memref<2x256x512xbf16, #tpu.memory_space<vmem>>, %arg10: memref<2x1x512xf32, #tpu.memory_space<vmem>>, %arg11: memref<256x256xbf16, #tpu.memory_space<vmem>>, %arg12: memref<1x256xf32, #tpu.memory_space<vmem>>, %arg13: memref<256x256xbf16, #tpu.memory_space<vmem>>, %arg14: memref<1x256xf32, #tpu.memory_space<vmem>>, %arg15: memref<1x256xf32, #tpu.memory_space<vmem>>, %arg16: memref<16x128xf32, #tpu.memory_space<vmem>>, %arg17: memref<1x8x128xf32, #tpu.memory_space<vmem>>) attributes {dimension_semantics = [#tpu.dimension_semantics<parallel>], iteration_bounds = array<i64: 1>, scalar_prefetch = 0 : i64, scratch_operands = 0 : i64, tpu.core_type = #tpu.core_type<tc>, window_params = [{transform_indices = @transform_0, window_bounds = array<i64: 16, 2>}, {transform_indices = @transform_1, window_bounds = array<i64: 16, 2>}, {transform_indices = @transform_2, window_bounds = array<i64: 16, 128>}, {pipeline_mode = #tpu.pipeline_mode<synchronous>, transform_indices = @transform_3, window_bounds = array<i64: 3, 2, 256>}, {pipeline_mode = #tpu.pipeline_mode<synchronous>, transform_indices = @transform_4, window_bounds = array<i64: 1, 256>}, {pipeline_mode = #tpu.pipeline_mode<synchronous>, transform_indices = @transform_5, window_bounds = array<i64: 6, 256, 512>}, {pipeline_mode = #tpu.pipeline_mode<synchronous>, transform_indices = @transform_6, window_bounds = array<i64: 2, 1, 512>}, {pipeline_mode = #tpu.pipeline_mode<synchronous>, transform_indices = @transform_7, window_bounds = array<i64: 2, 2, 512>}, {pipeline_mode = #tpu.pipeline_mode<synchronous>, transform_indices = @transform_8, window_bounds = array<i64: 2, 256, 512>}, {pipeline_mode = #tpu.pipeline_mode<synchronous>, transform_indices = @transform_9, window_bounds = array<i64: 2, 1, 512>}, {pipeline_mode = #tpu.pipeline_mode<synchronous>, transform_indices = @transform_10, window_bounds = array<i64: 256, 256>}, {pipeline_mode = #tpu.pipeline_mode<synchronous>, transform_indices = @transform_11, window_bounds = array<i64: 1, 256>}, {pipeline_mode = #tpu.pipeline_mode<synchronous>, transform_indices = @transform_12, window_bounds = array<i64: 256, 256>}, {pipeline_mode = #tpu.pipeline_mode<synchronous>, transform_indices = @transform_13, window_bounds = array<i64: 1, 256>}, {pipeline_mode = #tpu.pipeline_mode<synchronous>, transform_indices = @transform_14, window_bounds = array<i64: 1, 256>}, {transform_indices = @transform_15, window_bounds = array<i64: 16, 128>}, {transform_indices = @transform_16, window_bounds = array<i64: 1, 8, 128>}]} {
    %0 = tpu.iota {dimensions = array<i32: 0>} : vector<16x1xi32>
    %c8_i32 = arith.constant 8 : i32
    %c0_i32 = arith.constant 0 : i32
    %1 = arith.cmpi eq, %c8_i32, %c0_i32 : i32
    %c1_i32 = arith.constant 1 : i32
    %2 = arith.select %1, %c1_i32, %c8_i32 : i32
    %3 = vector.broadcast %2 : i32 to vector<16x1xi32>
    %4 = arith.remsi %0, %3 : vector<16x1xi32>
    %c0_i32_0 = arith.constant 0 : i32
    %5 = vector.broadcast %c0_i32_0 : i32 to vector<16x1xi32>
    %6 = arith.cmpi ne, %4, %5 : vector<16x1xi32>
    %c0_i32_1 = arith.constant 0 : i32
    %7 = vector.broadcast %c0_i32_1 : i32 to vector<16x1xi32>
    %8 = arith.cmpi slt, %4, %7 : vector<16x1xi32>
    %c0_i32_2 = arith.constant 0 : i32
    %9 = arith.cmpi slt, %2, %c0_i32_2 : i32
    %10 = vector.broadcast %9 : i1 to vector<16x1xi1>
    %11 = vector.broadcast %10 : vector<16x1xi1> to vector<16x1xi1>
    %12 = arith.xori %8, %11 : vector<16x1xi1>
    %13 = arith.andi %12, %6 : vector<16x1xi1>
    %14 = vector.broadcast %2 : i32 to vector<16x1xi32>
    %15 = arith.addi %4, %14 : vector<16x1xi32>
    %16 = arith.select %13, %15, %4 : vector<16x1xi1>, vector<16x1xi32>
    %c0 = arith.constant 0 : index
    %c0_3 = arith.constant 0 : index
    %17 = vector.load %arg1[%c0, %c0_3] : memref<16x2xf32, #tpu.memory_space<vmem>>, vector<16x2xf32>
    %18 = arith.truncf %17 : vector<16x2xf32> to vector<16x2xbf16>
    %c0_4 = arith.constant 0 : index
    %c0_5 = arith.constant 0 : index
    %19 = vector.load %arg2[%c0_4, %c0_5] : memref<16x2xf32, #tpu.memory_space<vmem>>, vector<16x2xf32>
    %20 = arith.truncf %19 : vector<16x2xf32> to vector<16x2xbf16>
    %c1 = arith.constant 1 : index
    %c0_6 = arith.constant 0 : index
    %c0_7 = arith.constant 0 : index
    %21 = vector.load %arg4[%c1, %c0_6, %c0_7] : memref<3x2x256xbf16, #tpu.memory_space<vmem>>, vector<1x2x256xbf16>
    %22 = vector.shape_cast %21 : vector<1x2x256xbf16> to vector<2x256xbf16>
    %cst = arith.constant dense<0.000000e+00> : vector<16x256xf32>
    %23 = tpu.matmul %18, %22, %cst {dimension_numbers = #tpu.dot_dimension_numbers<[1], [0], [0], [1], [0, 0, 1, 1], [], []>} : vector<16x2xbf16>, vector<2x256xbf16>, vector<16x256xf32> -> vector<16x256xf32>
    %c0_8 = arith.constant 0 : index
    %c0_9 = arith.constant 0 : index
    %c0_10 = arith.constant 0 : index
    %24 = vector.load %arg4[%c0_8, %c0_9, %c0_10] : memref<3x2x256xbf16, #tpu.memory_space<vmem>>, vector<1x2x256xbf16>
    %25 = vector.shape_cast %24 : vector<1x2x256xbf16> to vector<2x256xbf16>
    %cst_11 = arith.constant dense<0.000000e+00> : vector<16x256xf32>
    %26 = tpu.matmul %18, %25, %cst_11 {dimension_numbers = #tpu.dot_dimension_numbers<[1], [0], [0], [1], [0, 0, 1, 1], [], []>} : vector<16x2xbf16>, vector<2x256xbf16>, vector<16x256xf32> -> vector<16x256xf32>
    %c1_i32_12 = arith.constant 1 : i32
    %27 = tpu.dynamic_rotate %26 by %c1_i32_12 dim 0 : vector<16x256xf32>, i32 -> vector<16x256xf32>
    %c1_i32_13 = arith.constant 1 : i32
    %28 = vector.broadcast %c1_i32_13 : i32 to vector<16x1xi32>
    %29 = arith.cmpi sge, %16, %28 : vector<16x1xi32>
    %cst_14 = arith.constant 0.000000e+00 : f32
    %30 = vector.shape_cast %29 : vector<16x1xi1> to vector<16x1xi1>
    %31 = vector.broadcast %30 : vector<16x1xi1> to vector<16x256xi1>
    %32 = vector.broadcast %cst_14 : f32 to vector<16x256xf32>
    %33 = arith.select %31, %27, %32 : vector<16x256xi1>, vector<16x256xf32>
    %34 = arith.addf %23, %33 : vector<16x256xf32>
    %c2 = arith.constant 2 : index
    %c0_15 = arith.constant 0 : index
    %c0_16 = arith.constant 0 : index
    %35 = vector.load %arg4[%c2, %c0_15, %c0_16] : memref<3x2x256xbf16, #tpu.memory_space<vmem>>, vector<1x2x256xbf16>
    %36 = vector.shape_cast %35 : vector<1x2x256xbf16> to vector<2x256xbf16>
    %cst_17 = arith.constant dense<0.000000e+00> : vector<16x256xf32>
    %37 = tpu.matmul %18, %36, %cst_17 {dimension_numbers = #tpu.dot_dimension_numbers<[1], [0], [0], [1], [0, 0, 1, 1], [], []>} : vector<16x2xbf16>, vector<2x256xbf16>, vector<16x256xf32> -> vector<16x256xf32>
    %c15_i32 = arith.constant 15 : i32
    %38 = tpu.dynamic_rotate %37 by %c15_i32 dim 0 : vector<16x256xf32>, i32 -> vector<16x256xf32>
    %c7_i32 = arith.constant 7 : i32
    %39 = vector.broadcast %c7_i32 : i32 to vector<16x1xi32>
    %40 = arith.cmpi slt, %16, %39 : vector<16x1xi32>
    %cst_18 = arith.constant 0.000000e+00 : f32
    %41 = vector.shape_cast %40 : vector<16x1xi1> to vector<16x1xi1>
    %42 = vector.broadcast %41 : vector<16x1xi1> to vector<16x256xi1>
    %43 = vector.broadcast %cst_18 : f32 to vector<16x256xf32>
    %44 = arith.select %42, %38, %43 : vector<16x256xi1>, vector<16x256xf32>
    %45 = arith.addf %34, %44 : vector<16x256xf32>
    %c0_19 = arith.constant 0 : index
    %c0_20 = arith.constant 0 : index
    %46 = vector.load %arg5[%c0_19, %c0_20] : memref<1x256xf32, #tpu.memory_space<vmem>>, vector<1x256xf32>
    %47 = vector.broadcast %46 : vector<1x256xf32> to vector<16x256xf32>
    %48 = arith.addf %45, %47 : vector<16x256xf32>
    %cst_21 = arith.constant 0.000000e+00 : f32
    %49 = vector.broadcast %cst_21 : f32 to vector<16x256xf32>
    %50 = arith.maximumf %48, %49 : vector<16x256xf32>
    %cst_22 = arith.constant 0.000000e+00 : f32
    %51 = vector.broadcast %cst_22 : f32 to vector<16x256xf32>
    %52 = arith.truncf %50 : vector<16x256xf32> to vector<16x256xbf16>
    %c1_23 = arith.constant 1 : index
    %c0_24 = arith.constant 0 : index
    %c0_25 = arith.constant 0 : index
    %53 = vector.load %arg6[%c1_23, %c0_24, %c0_25] : memref<6x256x512xbf16, #tpu.memory_space<vmem>>, vector<1x256x512xbf16>
    %54 = vector.shape_cast %53 : vector<1x256x512xbf16> to vector<256x512xbf16>
    %cst_26 = arith.constant dense<0.000000e+00> : vector<16x512xf32>
    %55 = tpu.matmul %52, %54, %cst_26 {dimension_numbers = #tpu.dot_dimension_numbers<[1], [0], [0], [1], [0, 0, 1, 1], [], []>} : vector<16x256xbf16>, vector<256x512xbf16>, vector<16x512xf32> -> vector<16x512xf32>
    %c0_27 = arith.constant 0 : index
    %c0_28 = arith.constant 0 : index
    %c0_29 = arith.constant 0 : index
    %56 = vector.load %arg6[%c0_27, %c0_28, %c0_29] : memref<6x256x512xbf16, #tpu.memory_space<vmem>>, vector<1x256x512xbf16>
    %57 = vector.shape_cast %56 : vector<1x256x512xbf16> to vector<256x512xbf16>
    %cst_30 = arith.constant dense<0.000000e+00> : vector<16x512xf32>
    %58 = tpu.matmul %52, %57, %cst_30 {dimension_numbers = #tpu.dot_dimension_numbers<[1], [0], [0], [1], [0, 0, 1, 1], [], []>} : vector<16x256xbf16>, vector<256x512xbf16>, vector<16x512xf32> -> vector<16x512xf32>
    %c1_i32_31 = arith.constant 1 : i32
    %59 = tpu.dynamic_rotate %58 by %c1_i32_31 dim 0 : vector<16x512xf32>, i32 -> vector<16x512xf32>
    %c1_i32_32 = arith.constant 1 : i32
    %60 = vector.broadcast %c1_i32_32 : i32 to vector<16x1xi32>
    %61 = arith.cmpi sge, %16, %60 : vector<16x1xi32>
    %cst_33 = arith.constant 0.000000e+00 : f32
    %62 = vector.shape_cast %61 : vector<16x1xi1> to vector<16x1xi1>
    %63 = vector.broadcast %62 : vector<16x1xi1> to vector<16x512xi1>
    %64 = vector.broadcast %cst_33 : f32 to vector<16x512xf32>
    %65 = arith.select %63, %59, %64 : vector<16x512xi1>, vector<16x512xf32>
    %66 = arith.addf %55, %65 : vector<16x512xf32>
    %c2_34 = arith.constant 2 : index
    %c0_35 = arith.constant 0 : index
    %c0_36 = arith.constant 0 : index
    %67 = vector.load %arg6[%c2_34, %c0_35, %c0_36] : memref<6x256x512xbf16, #tpu.memory_space<vmem>>, vector<1x256x512xbf16>
    %68 = vector.shape_cast %67 : vector<1x256x512xbf16> to vector<256x512xbf16>
    %cst_37 = arith.constant dense<0.000000e+00> : vector<16x512xf32>
    %69 = tpu.matmul %52, %68, %cst_37 {dimension_numbers = #tpu.dot_dimension_numbers<[1], [0], [0], [1], [0, 0, 1, 1], [], []>} : vector<16x256xbf16>, vector<256x512xbf16>, vector<16x512xf32> -> vector<16x512xf32>
    %c15_i32_38 = arith.constant 15 : i32
    %70 = tpu.dynamic_rotate %69 by %c15_i32_38 dim 0 : vector<16x512xf32>, i32 -> vector<16x512xf32>
    %c7_i32_39 = arith.constant 7 : i32
    %71 = vector.broadcast %c7_i32_39 : i32 to vector<16x1xi32>
    %72 = arith.cmpi slt, %16, %71 : vector<16x1xi32>
    %cst_40 = arith.constant 0.000000e+00 : f32
    %73 = vector.shape_cast %72 : vector<16x1xi1> to vector<16x1xi1>
    %74 = vector.broadcast %73 : vector<16x1xi1> to vector<16x512xi1>
    %75 = vector.broadcast %cst_40 : f32 to vector<16x512xf32>
    %76 = arith.select %74, %70, %75 : vector<16x512xi1>, vector<16x512xf32>
    %77 = arith.addf %66, %76 : vector<16x512xf32>
    %c0_41 = arith.constant 0 : index
    %c0_42 = arith.constant 0 : index
    %c0_43 = arith.constant 0 : index
    %78 = vector.load %arg8[%c0_41, %c0_42, %c0_43] : memref<2x2x512xbf16, #tpu.memory_space<vmem>>, vector<1x2x512xbf16>
    %79 = vector.shape_cast %78 : vector<1x2x512xbf16> to vector<2x512xbf16>
    %cst_44 = arith.constant dense<0.000000e+00> : vector<16x512xf32>
    %80 = tpu.matmul %20, %79, %cst_44 {dimension_numbers = #tpu.dot_dimension_numbers<[1], [0], [0], [1], [0, 0, 1, 1], [], []>} : vector<16x2xbf16>, vector<2x512xbf16>, vector<16x512xf32> -> vector<16x512xf32>
    %81 = arith.addf %77, %80 : vector<16x512xf32>
    %c0_45 = arith.constant 0 : index
    %c0_46 = arith.constant 0 : index
    %c0_47 = arith.constant 0 : index
    %82 = vector.load %arg7[%c0_45, %c0_46, %c0_47] : memref<2x1x512xf32, #tpu.memory_space<vmem>>, vector<1x1x512xf32>
    %83 = vector.shape_cast %82 : vector<1x1x512xf32> to vector<1x512xf32>
    %84 = vector.broadcast %83 : vector<1x512xf32> to vector<16x512xf32>
    %85 = arith.addf %81, %84 : vector<16x512xf32>
    %86 = vector.extract_strided_slice %85 {offsets = [0, 0], sizes = [16, 256], strides = [1, 1]} : vector<16x512xf32> to vector<16x256xf32>
    %87 = math.tanh %86 : vector<16x256xf32>
    %88 = vector.extract_strided_slice %85 {offsets = [0, 256], sizes = [16, 256], strides = [1, 1]} : vector<16x512xf32> to vector<16x256xf32>
    %89 = arith.negf %88 : vector<16x256xf32>
    %90 = math.exp %89 : vector<16x256xf32>
    %cst_48 = arith.constant 1.000000e+00 : f32
    %91 = vector.broadcast %cst_48 : f32 to vector<16x256xf32>
    %92 = arith.addf %91, %90 : vector<16x256xf32>
    %93 = arith.divf %91, %92 : vector<16x256xf32>
    %94 = arith.mulf %87, %93 : vector<16x256xf32>
    %95 = arith.truncf %94 : vector<16x256xf32> to vector<16x256xbf16>
    %c0_49 = arith.constant 0 : index
    %c0_50 = arith.constant 0 : index
    %c0_51 = arith.constant 0 : index
    %96 = vector.load %arg9[%c0_49, %c0_50, %c0_51] : memref<2x256x512xbf16, #tpu.memory_space<vmem>>, vector<1x256x512xbf16>
    %97 = vector.shape_cast %96 : vector<1x256x512xbf16> to vector<256x512xbf16>
    %cst_52 = arith.constant dense<0.000000e+00> : vector<16x512xf32>
    %98 = tpu.matmul %95, %97, %cst_52 {dimension_numbers = #tpu.dot_dimension_numbers<[1], [0], [0], [1], [0, 0, 1, 1], [], []>} : vector<16x256xbf16>, vector<256x512xbf16>, vector<16x512xf32> -> vector<16x512xf32>
    %c0_53 = arith.constant 0 : index
    %c0_54 = arith.constant 0 : index
    %c0_55 = arith.constant 0 : index
    %99 = vector.load %arg10[%c0_53, %c0_54, %c0_55] : memref<2x1x512xf32, #tpu.memory_space<vmem>>, vector<1x1x512xf32>
    %100 = vector.shape_cast %99 : vector<1x1x512xf32> to vector<1x512xf32>
    %101 = vector.broadcast %100 : vector<1x512xf32> to vector<16x512xf32>
    %102 = arith.addf %98, %101 : vector<16x512xf32>
    %103 = vector.extract_strided_slice %102 {offsets = [0, 0], sizes = [16, 256], strides = [1, 1]} : vector<16x512xf32> to vector<16x256xf32>
    %104 = arith.addf %50, %103 : vector<16x256xf32>
    %cst_56 = arith.constant 0.707106769 : f32
    %105 = vector.broadcast %cst_56 : f32 to vector<16x256xf32>
    %106 = arith.mulf %104, %105 : vector<16x256xf32>
    %107 = vector.extract_strided_slice %102 {offsets = [0, 256], sizes = [16, 256], strides = [1, 1]} : vector<16x512xf32> to vector<16x256xf32>
    %108 = arith.addf %51, %107 : vector<16x256xf32>
    %109 = arith.truncf %106 : vector<16x256xf32> to vector<16x256xbf16>
    %c4 = arith.constant 4 : index
    %c0_57 = arith.constant 0 : index
    %c0_58 = arith.constant 0 : index
    %110 = vector.load %arg6[%c4, %c0_57, %c0_58] : memref<6x256x512xbf16, #tpu.memory_space<vmem>>, vector<1x256x512xbf16>
    %111 = vector.shape_cast %110 : vector<1x256x512xbf16> to vector<256x512xbf16>
    %cst_59 = arith.constant dense<0.000000e+00> : vector<16x512xf32>
    %112 = tpu.matmul %109, %111, %cst_59 {dimension_numbers = #tpu.dot_dimension_numbers<[1], [0], [0], [1], [0, 0, 1, 1], [], []>} : vector<16x256xbf16>, vector<256x512xbf16>, vector<16x512xf32> -> vector<16x512xf32>
    %c3 = arith.constant 3 : index
    %c0_60 = arith.constant 0 : index
    %c0_61 = arith.constant 0 : index
    %113 = vector.load %arg6[%c3, %c0_60, %c0_61] : memref<6x256x512xbf16, #tpu.memory_space<vmem>>, vector<1x256x512xbf16>
    %114 = vector.shape_cast %113 : vector<1x256x512xbf16> to vector<256x512xbf16>
    %cst_62 = arith.constant dense<0.000000e+00> : vector<16x512xf32>
    %115 = tpu.matmul %109, %114, %cst_62 {dimension_numbers = #tpu.dot_dimension_numbers<[1], [0], [0], [1], [0, 0, 1, 1], [], []>} : vector<16x256xbf16>, vector<256x512xbf16>, vector<16x512xf32> -> vector<16x512xf32>
    %c2_i32 = arith.constant 2 : i32
    %116 = tpu.dynamic_rotate %115 by %c2_i32 dim 0 : vector<16x512xf32>, i32 -> vector<16x512xf32>
    %c2_i32_63 = arith.constant 2 : i32
    %117 = vector.broadcast %c2_i32_63 : i32 to vector<16x1xi32>
    %118 = arith.cmpi sge, %16, %117 : vector<16x1xi32>
    %cst_64 = arith.constant 0.000000e+00 : f32
    %119 = vector.shape_cast %118 : vector<16x1xi1> to vector<16x1xi1>
    %120 = vector.broadcast %119 : vector<16x1xi1> to vector<16x512xi1>
    %121 = vector.broadcast %cst_64 : f32 to vector<16x512xf32>
    %122 = arith.select %120, %116, %121 : vector<16x512xi1>, vector<16x512xf32>
    %123 = arith.addf %112, %122 : vector<16x512xf32>
    %c5 = arith.constant 5 : index
    %c0_65 = arith.constant 0 : index
    %c0_66 = arith.constant 0 : index
    %124 = vector.load %arg6[%c5, %c0_65, %c0_66] : memref<6x256x512xbf16, #tpu.memory_space<vmem>>, vector<1x256x512xbf16>
    %125 = vector.shape_cast %124 : vector<1x256x512xbf16> to vector<256x512xbf16>
    %cst_67 = arith.constant dense<0.000000e+00> : vector<16x512xf32>
    %126 = tpu.matmul %109, %125, %cst_67 {dimension_numbers = #tpu.dot_dimension_numbers<[1], [0], [0], [1], [0, 0, 1, 1], [], []>} : vector<16x256xbf16>, vector<256x512xbf16>, vector<16x512xf32> -> vector<16x512xf32>
    %c14_i32 = arith.constant 14 : i32
    %127 = tpu.dynamic_rotate %126 by %c14_i32 dim 0 : vector<16x512xf32>, i32 -> vector<16x512xf32>
    %c6_i32 = arith.constant 6 : i32
    %128 = vector.broadcast %c6_i32 : i32 to vector<16x1xi32>
    %129 = arith.cmpi slt, %16, %128 : vector<16x1xi32>
    %cst_68 = arith.constant 0.000000e+00 : f32
    %130 = vector.shape_cast %129 : vector<16x1xi1> to vector<16x1xi1>
    %131 = vector.broadcast %130 : vector<16x1xi1> to vector<16x512xi1>
    %132 = vector.broadcast %cst_68 : f32 to vector<16x512xf32>
    %133 = arith.select %131, %127, %132 : vector<16x512xi1>, vector<16x512xf32>
    %134 = arith.addf %123, %133 : vector<16x512xf32>
    %c1_69 = arith.constant 1 : index
    %c0_70 = arith.constant 0 : index
    %c0_71 = arith.constant 0 : index
    %135 = vector.load %arg8[%c1_69, %c0_70, %c0_71] : memref<2x2x512xbf16, #tpu.memory_space<vmem>>, vector<1x2x512xbf16>
    %136 = vector.shape_cast %135 : vector<1x2x512xbf16> to vector<2x512xbf16>
    %cst_72 = arith.constant dense<0.000000e+00> : vector<16x512xf32>
    %137 = tpu.matmul %20, %136, %cst_72 {dimension_numbers = #tpu.dot_dimension_numbers<[1], [0], [0], [1], [0, 0, 1, 1], [], []>} : vector<16x2xbf16>, vector<2x512xbf16>, vector<16x512xf32> -> vector<16x512xf32>
    %138 = arith.addf %134, %137 : vector<16x512xf32>
    %c1_73 = arith.constant 1 : index
    %c0_74 = arith.constant 0 : index
    %c0_75 = arith.constant 0 : index
    %139 = vector.load %arg7[%c1_73, %c0_74, %c0_75] : memref<2x1x512xf32, #tpu.memory_space<vmem>>, vector<1x1x512xf32>
    %140 = vector.shape_cast %139 : vector<1x1x512xf32> to vector<1x512xf32>
    %141 = vector.broadcast %140 : vector<1x512xf32> to vector<16x512xf32>
    %142 = arith.addf %138, %141 : vector<16x512xf32>
    %143 = vector.extract_strided_slice %142 {offsets = [0, 0], sizes = [16, 256], strides = [1, 1]} : vector<16x512xf32> to vector<16x256xf32>
    %144 = math.tanh %143 : vector<16x256xf32>
    %145 = vector.extract_strided_slice %142 {offsets = [0, 256], sizes = [16, 256], strides = [1, 1]} : vector<16x512xf32> to vector<16x256xf32>
    %146 = arith.negf %145 : vector<16x256xf32>
    %147 = math.exp %146 : vector<16x256xf32>
    %cst_76 = arith.constant 1.000000e+00 : f32
    %148 = vector.broadcast %cst_76 : f32 to vector<16x256xf32>
    %149 = arith.addf %148, %147 : vector<16x256xf32>
    %150 = arith.divf %148, %149 : vector<16x256xf32>
    %151 = arith.mulf %144, %150 : vector<16x256xf32>
    %152 = arith.truncf %151 : vector<16x256xf32> to vector<16x256xbf16>
    %c1_77 = arith.constant 1 : index
    %c0_78 = arith.constant 0 : index
    %c0_79 = arith.constant 0 : index
    %153 = vector.load %arg9[%c1_77, %c0_78, %c0_79] : memref<2x256x512xbf16, #tpu.memory_space<vmem>>, vector<1x256x512xbf16>
    %154 = vector.shape_cast %153 : vector<1x256x512xbf16> to vector<256x512xbf16>
    %cst_80 = arith.constant dense<0.000000e+00> : vector<16x512xf32>
    %155 = tpu.matmul %152, %154, %cst_80 {dimension_numbers = #tpu.dot_dimension_numbers<[1], [0], [0], [1], [0, 0, 1, 1], [], []>} : vector<16x256xbf16>, vector<256x512xbf16>, vector<16x512xf32> -> vector<16x512xf32>
    %c1_81 = arith.constant 1 : index
    %c0_82 = arith.constant 0 : index
    %c0_83 = arith.constant 0 : index
    %156 = vector.load %arg10[%c1_81, %c0_82, %c0_83] : memref<2x1x512xf32, #tpu.memory_space<vmem>>, vector<1x1x512xf32>
    %157 = vector.shape_cast %156 : vector<1x1x512xf32> to vector<1x512xf32>
    %158 = vector.broadcast %157 : vector<1x512xf32> to vector<16x512xf32>
    %159 = arith.addf %155, %158 : vector<16x512xf32>
    %160 = vector.extract_strided_slice %159 {offsets = [0, 256], sizes = [16, 256], strides = [1, 1]} : vector<16x512xf32> to vector<16x256xf32>
    %161 = arith.addf %108, %160 : vector<16x256xf32>
    %cst_84 = arith.constant 0.000000e+00 : f32
    %162 = vector.broadcast %cst_84 : f32 to vector<16x256xf32>
    %163 = arith.maximumf %161, %162 : vector<16x256xf32>
    %164 = arith.truncf %163 : vector<16x256xf32> to vector<16x256xbf16>
    %c0_85 = arith.constant 0 : index
    %c0_86 = arith.constant 0 : index
    %165 = vector.load %arg11[%c0_85, %c0_86] : memref<256x256xbf16, #tpu.memory_space<vmem>>, vector<256x256xbf16>
    %cst_87 = arith.constant dense<0.000000e+00> : vector<16x256xf32>
    %166 = tpu.matmul %164, %165, %cst_87 {dimension_numbers = #tpu.dot_dimension_numbers<[1], [0], [0], [1], [0, 0, 1, 1], [], []>} : vector<16x256xbf16>, vector<256x256xbf16>, vector<16x256xf32> -> vector<16x256xf32>
    %c0_88 = arith.constant 0 : index
    %c0_89 = arith.constant 0 : index
    %167 = vector.load %arg12[%c0_88, %c0_89] : memref<1x256xf32, #tpu.memory_space<vmem>>, vector<1x256xf32>
    %168 = vector.broadcast %167 : vector<1x256xf32> to vector<16x256xf32>
    %169 = arith.addf %166, %168 : vector<16x256xf32>
    %cst_90 = arith.constant 0.000000e+00 : f32
    %170 = vector.broadcast %cst_90 : f32 to vector<16x256xf32>
    %171 = arith.maximumf %169, %170 : vector<16x256xf32>
    %172 = arith.truncf %171 : vector<16x256xf32> to vector<16x256xbf16>
    %c0_91 = arith.constant 0 : index
    %c0_92 = arith.constant 0 : index
    %173 = vector.load %arg13[%c0_91, %c0_92] : memref<256x256xbf16, #tpu.memory_space<vmem>>, vector<256x256xbf16>
    %cst_93 = arith.constant dense<0.000000e+00> : vector<16x256xf32>
    %174 = tpu.matmul %172, %173, %cst_93 {dimension_numbers = #tpu.dot_dimension_numbers<[1], [0], [0], [1], [0, 0, 1, 1], [], []>} : vector<16x256xbf16>, vector<256x256xbf16>, vector<16x256xf32> -> vector<16x256xf32>
    %c0_94 = arith.constant 0 : index
    %c0_95 = arith.constant 0 : index
    %175 = vector.load %arg14[%c0_94, %c0_95] : memref<1x256xf32, #tpu.memory_space<vmem>>, vector<1x256xf32>
    %176 = vector.broadcast %175 : vector<1x256xf32> to vector<16x256xf32>
    %177 = arith.addf %174, %176 : vector<16x256xf32>
    %c0_96 = arith.constant 0 : index
    %c0_97 = arith.constant 0 : index
    %178 = vector.load %arg15[%c0_96, %c0_97] : memref<1x256xf32, #tpu.memory_space<vmem>>, vector<1x256xf32>
    %cst_98 = arith.constant 3.000000e+00 : f32
    %179 = vector.broadcast %cst_98 : f32 to vector<1x256xf32>
    %180 = arith.mulf %178, %179 : vector<1x256xf32>
    %181 = math.exp %180 : vector<1x256xf32>
    %182 = vector.broadcast %181 : vector<1x256xf32> to vector<16x256xf32>
    %183 = arith.mulf %177, %182 : vector<16x256xf32>
    %184 = vector.extract_strided_slice %183 {offsets = [0, 0], sizes = [16, 128], strides = [1, 1]} : vector<16x256xf32> to vector<16x128xf32>
    %185 = vector.extract_strided_slice %183 {offsets = [0, 128], sizes = [16, 128], strides = [1, 1]} : vector<16x256xf32> to vector<16x128xf32>
    %c0_99 = arith.constant 0 : index
    %c0_100 = arith.constant 0 : index
    %186 = vector.load %arg3[%c0_99, %c0_100] : memref<16x128xf32, #tpu.memory_space<vmem>>, vector<16x128xf32>
    %187 = arith.subf %186, %185 : vector<16x128xf32>
    %cst_101 = arith.constant 0.000000e+00 : f32
    %188 = vector.broadcast %cst_101 : f32 to vector<16x128xf32>
    %189 = arith.subf %188, %184 : vector<16x128xf32>
    %190 = math.exp %189 : vector<16x128xf32>
    %191 = arith.mulf %187, %190 : vector<16x128xf32>
    %c0_102 = arith.constant 0 : index
    %c0_103 = arith.constant 0 : index
    %192 = vector.load %arg16[%c0_102, %c0_103] : memref<16x128xf32, #tpu.memory_space<vmem>>, vector<16x128xf32>
    tpu.vector_store %arg16[%c0_102, %c0_103], %191 {strides = array<i32>} : memref<16x128xf32, #tpu.memory_space<vmem>>, vector<16x128xf32>,
    %cst_104 = arith.constant dense<0.000000e+00> : vector<128xf32>
    %193 = vector.multi_reduction <add>, %184, %cst_104 [0] : vector<16x128xf32> to vector<128xf32>
    %194 = vector.shape_cast %193 : vector<128xf32> to vector<1x128xf32>
    %cst_105 = arith.constant 0.000000e+00 : f32
    %195 = vector.broadcast %cst_105 : f32 to vector<1x128xf32>
    %196 = arith.subf %195, %194 : vector<1x128xf32>
    %197 = vector.shape_cast %196 : vector<1x128xf32> to vector<1x128xf32>
    %198 = vector.broadcast %197 : vector<1x128xf32> to vector<8x128xf32>
    %c0_106 = arith.constant 0 : index
    %c0_107 = arith.constant 0 : index
    %c0_108 = arith.constant 0 : index
    %199 = vector.load %arg17[%c0_106, %c0_107, %c0_108] : memref<1x8x128xf32, #tpu.memory_space<vmem>>, vector<1x8x128xf32>
    %200 = vector.shape_cast %199 : vector<1x8x128xf32> to vector<8x128xf32>
    %201 = vector.shape_cast %198 : vector<8x128xf32> to vector<1x8x128xf32>
    tpu.vector_store %arg17[%c0_106, %c0_107, %c0_108], %201 {strides = array<i32>} : memref<1x8x128xf32, #tpu.memory_space<vmem>>, vector<1x8x128xf32>,
    return
  }
  func.func @transform_0(%arg0: i32) -> (i32, i32) {
    %c0_i32 = arith.constant 0 : i32
    %c0_i32_0 = arith.constant 0 : i32
    return %arg0, %c0_i32 : i32, i32
  }
  func.func @transform_1(%arg0: i32) -> (i32, i32) {
    %c0_i32 = arith.constant 0 : i32
    %c0_i32_0 = arith.constant 0 : i32
    return %arg0, %c0_i32 : i32, i32
  }
  func.func @transform_2(%arg0: i32) -> (i32, i32) {
    %c0_i32 = arith.constant 0 : i32
    %c0_i32_0 = arith.constant 0 : i32
    return %arg0, %c0_i32 : i32, i32
  }
  func.func @transform_3(%arg0: i32) -> (i32, i32, i32) {
    %c0_i32 = arith.constant 0 : i32
    %c0_i32_0 = arith.constant 0 : i32
    %c0_i32_1 = arith.constant 0 : i32
    %c0_i32_2 = arith.constant 0 : i32
    return %c0_i32, %c0_i32_0, %c0_i32_1 : i32, i32, i32
  }
  func.func @transform_4(%arg0: i32) -> (i32, i32) {
    %c0_i32 = arith.constant 0 : i32
    %c0_i32_0 = arith.constant 0 : i32
    %c0_i32_1 = arith.constant 0 : i32
    return %c0_i32, %c0_i32_0 : i32, i32
  }
  func.func @transform_5(%arg0: i32) -> (i32, i32, i32) {
    %c0_i32 = arith.constant 0 : i32
    %c0_i32_0 = arith.constant 0 : i32
    %c0_i32_1 = arith.constant 0 : i32
    %c0_i32_2 = arith.constant 0 : i32
    return %c0_i32, %c0_i32_0, %c0_i32_1 : i32, i32, i32
  }
  func.func @transform_6(%arg0: i32) -> (i32, i32, i32) {
    %c0_i32 = arith.constant 0 : i32
    %c0_i32_0 = arith.constant 0 : i32
    %c0_i32_1 = arith.constant 0 : i32
    %c0_i32_2 = arith.constant 0 : i32
    return %c0_i32, %c0_i32_0, %c0_i32_1 : i32, i32, i32
  }
  func.func @transform_7(%arg0: i32) -> (i32, i32, i32) {
    %c0_i32 = arith.constant 0 : i32
    %c0_i32_0 = arith.constant 0 : i32
    %c0_i32_1 = arith.constant 0 : i32
    %c0_i32_2 = arith.constant 0 : i32
    return %c0_i32, %c0_i32_0, %c0_i32_1 : i32, i32, i32
  }
  func.func @transform_8(%arg0: i32) -> (i32, i32, i32) {
    %c0_i32 = arith.constant 0 : i32
    %c0_i32_0 = arith.constant 0 : i32
    %c0_i32_1 = arith.constant 0 : i32
    %c0_i32_2 = arith.constant 0 : i32
    return %c0_i32, %c0_i32_0, %c0_i32_1 : i32, i32, i32
  }
  func.func @transform_9(%arg0: i32) -> (i32, i32, i32) {
    %c0_i32 = arith.constant 0 : i32
    %c0_i32_0 = arith.constant 0 : i32
    %c0_i32_1 = arith.constant 0 : i32
    %c0_i32_2 = arith.constant 0 : i32
    return %c0_i32, %c0_i32_0, %c0_i32_1 : i32, i32, i32
  }
  func.func @transform_10(%arg0: i32) -> (i32, i32) {
    %c0_i32 = arith.constant 0 : i32
    %c0_i32_0 = arith.constant 0 : i32
    %c0_i32_1 = arith.constant 0 : i32
    return %c0_i32, %c0_i32_0 : i32, i32
  }
  func.func @transform_11(%arg0: i32) -> (i32, i32) {
    %c0_i32 = arith.constant 0 : i32
    %c0_i32_0 = arith.constant 0 : i32
    %c0_i32_1 = arith.constant 0 : i32
    return %c0_i32, %c0_i32_0 : i32, i32
  }
  func.func @transform_12(%arg0: i32) -> (i32, i32) {
    %c0_i32 = arith.constant 0 : i32
    %c0_i32_0 = arith.constant 0 : i32
    %c0_i32_1 = arith.constant 0 : i32
    return %c0_i32, %c0_i32_0 : i32, i32
  }
  func.func @transform_13(%arg0: i32) -> (i32, i32) {
    %c0_i32 = arith.constant 0 : i32
    %c0_i32_0 = arith.constant 0 : i32
    %c0_i32_1 = arith.constant 0 : i32
    return %c0_i32, %c0_i32_0 : i32, i32
  }
  func.func @transform_14(%arg0: i32) -> (i32, i32) {
    %c0_i32 = arith.constant 0 : i32
    %c0_i32_0 = arith.constant 0 : i32
    %c0_i32_1 = arith.constant 0 : i32
    return %c0_i32, %c0_i32_0 : i32, i32
  }
  func.func @transform_15(%arg0: i32) -> (i32, i32) {
    %c0_i32 = arith.constant 0 : i32
    %c0_i32_0 = arith.constant 0 : i32
    return %arg0, %c0_i32 : i32, i32
  }
  func.func @transform_16(%arg0: i32) -> (i32, i32, i32) {
    %c0_i32 = arith.constant 0 : i32
    %c0_i32_0 = arith.constant 0 : i32
    %c0_i32_1 = arith.constant 0 : i32
    return %arg0, %c0_i32, %c0_i32_0 : i32, i32, i32
  }
}

module attributes {stable_mosaic.version = 11 : i64} {
  func.func @_coupling_kernel(%arg0: i32, %arg1: memref<16x2xf32, #tpu.memory_space<vmem>>, %arg2: memref<16x2xf32, #tpu.memory_space<vmem>>, %arg3: memref<16x128xf32, #tpu.memory_space<vmem>>, %arg4: memref<3x2x256xbf16, #tpu.memory_space<vmem>>, %arg5: memref<1x256xf32, #tpu.memory_space<vmem>>, %arg6: memref<6x256x512xbf16, #tpu.memory_space<vmem>>, %arg7: memref<2x1x512xf32, #tpu.memory_space<vmem>>, %arg8: memref<2x2x512xbf16, #tpu.memory_space<vmem>>, %arg9: memref<2x256x512xbf16, #tpu.memory_space<vmem>>, %arg10: memref<2x1x512xf32, #tpu.memory_space<vmem>>, %arg11: memref<256x256xbf16, #tpu.memory_space<vmem>>, %arg12: memref<1x256xf32, #tpu.memory_space<vmem>>, %arg13: memref<256x256xbf16, #tpu.memory_space<vmem>>, %arg14: memref<1x256xf32, #tpu.memory_space<vmem>>, %arg15: memref<1x256xf32, #tpu.memory_space<vmem>>, %arg16: memref<16x128xf32, #tpu.memory_space<vmem>>, %arg17: memref<1x8x128xf32, #tpu.memory_space<vmem>>) attributes {dimension_semantics = [#tpu.dimension_semantics<parallel>], iteration_bounds = array<i64: 1>, scalar_prefetch = 0 : i64, scratch_operands = 0 : i64, tpu.core_type = #tpu.core_type<tc>, window_params = [{transform_indices = @transform_0, window_bounds = array<i64: 16, 2>}, {transform_indices = @transform_1, window_bounds = array<i64: 16, 2>}, {transform_indices = @transform_2, window_bounds = array<i64: 16, 128>}, {pipeline_mode = #tpu.pipeline_mode<synchronous>, transform_indices = @transform_3, window_bounds = array<i64: 3, 2, 256>}, {pipeline_mode = #tpu.pipeline_mode<synchronous>, transform_indices = @transform_4, window_bounds = array<i64: 1, 256>}, {pipeline_mode = #tpu.pipeline_mode<synchronous>, transform_indices = @transform_5, window_bounds = array<i64: 6, 256, 512>}, {pipeline_mode = #tpu.pipeline_mode<synchronous>, transform_indices = @transform_6, window_bounds = array<i64: 2, 1, 512>}, {pipeline_mode = #tpu.pipeline_mode<synchronous>, transform_indices = @transform_7, window_bounds = array<i64: 2, 2, 512>}, {pipeline_mode = #tpu.pipeline_mode<synchronous>, transform_indices = @transform_8, window_bounds = array<i64: 2, 256, 512>}, {pipeline_mode = #tpu.pipeline_mode<synchronous>, transform_indices = @transform_9, window_bounds = array<i64: 2, 1, 512>}, {pipeline_mode = #tpu.pipeline_mode<synchronous>, transform_indices = @transform_10, window_bounds = array<i64: 256, 256>}, {pipeline_mode = #tpu.pipeline_mode<synchronous>, transform_indices = @transform_11, window_bounds = array<i64: 1, 256>}, {pipeline_mode = #tpu.pipeline_mode<synchronous>, transform_indices = @transform_12, window_bounds = array<i64: 256, 256>}, {pipeline_mode = #tpu.pipeline_mode<synchronous>, transform_indices = @transform_13, window_bounds = array<i64: 1, 256>}, {pipeline_mode = #tpu.pipeline_mode<synchronous>, transform_indices = @transform_14, window_bounds = array<i64: 1, 256>}, {transform_indices = @transform_15, window_bounds = array<i64: 16, 128>}, {transform_indices = @transform_16, window_bounds = array<i64: 1, 8, 128>}]} {
    %0 = tpu.iota {dimensions = array<i32: 0>} : vector<16x1xi32>
    %c8_i32 = arith.constant 8 : i32
    %c0_i32 = arith.constant 0 : i32
    %1 = arith.cmpi eq, %c8_i32, %c0_i32 : i32
    %c1_i32 = arith.constant 1 : i32
    %2 = arith.select %1, %c1_i32, %c8_i32 : i32
    %3 = vector.broadcast %2 : i32 to vector<16x1xi32>
    %4 = arith.remsi %0, %3 : vector<16x1xi32>
    %c0_i32_0 = arith.constant 0 : i32
    %5 = vector.broadcast %c0_i32_0 : i32 to vector<16x1xi32>
    %6 = arith.cmpi ne, %4, %5 : vector<16x1xi32>
    %c0_i32_1 = arith.constant 0 : i32
    %7 = vector.broadcast %c0_i32_1 : i32 to vector<16x1xi32>
    %8 = arith.cmpi slt, %4, %7 : vector<16x1xi32>
    %c0_i32_2 = arith.constant 0 : i32
    %9 = arith.cmpi slt, %2, %c0_i32_2 : i32
    %10 = vector.broadcast %9 : i1 to vector<16x1xi1>
    %11 = vector.broadcast %10 : vector<16x1xi1> to vector<16x1xi1>
    %12 = arith.xori %8, %11 : vector<16x1xi1>
    %13 = arith.andi %12, %6 : vector<16x1xi1>
    %14 = vector.broadcast %2 : i32 to vector<16x1xi32>
    %15 = arith.addi %4, %14 : vector<16x1xi32>
    %16 = arith.select %13, %15, %4 : vector<16x1xi1>, vector<16x1xi32>
    %c0 = arith.constant 0 : index
    %c0_3 = arith.constant 0 : index
    %17 = vector.load %arg1[%c0, %c0_3] : memref<16x2xf32, #tpu.memory_space<vmem>>, vector<16x2xf32>
    %18 = arith.truncf %17 : vector<16x2xf32> to vector<16x2xbf16>
    %c0_4 = arith.constant 0 : index
    %c0_5 = arith.constant 0 : index
    %19 = vector.load %arg2[%c0_4, %c0_5] : memref<16x2xf32, #tpu.memory_space<vmem>>, vector<16x2xf32>
    %20 = arith.truncf %19 : vector<16x2xf32> to vector<16x2xbf16>
    %c1 = arith.constant 1 : index
    %c0_6 = arith.constant 0 : index
    %c0_7 = arith.constant 0 : index
    %21 = vector.load %arg4[%c1, %c0_6, %c0_7] : memref<3x2x256xbf16, #tpu.memory_space<vmem>>, vector<1x2x256xbf16>
    %22 = vector.shape_cast %21 : vector<1x2x256xbf16> to vector<2x256xbf16>
    %cst = arith.constant dense<0.000000e+00> : vector<16x256xf32>
    %23 = tpu.matmul %18, %22, %cst {dimension_numbers = #tpu.dot_dimension_numbers<[1], [0], [0], [1], [0, 0, 1, 1], [], []>} : vector<16x2xbf16>, vector<2x256xbf16>, vector<16x256xf32> -> vector<16x256xf32>
    %c0_8 = arith.constant 0 : index
    %c0_9 = arith.constant 0 : index
    %c0_10 = arith.constant 0 : index
    %24 = vector.load %arg4[%c0_8, %c0_9, %c0_10] : memref<3x2x256xbf16, #tpu.memory_space<vmem>>, vector<1x2x256xbf16>
    %25 = vector.shape_cast %24 : vector<1x2x256xbf16> to vector<2x256xbf16>
    %cst_11 = arith.constant dense<0.000000e+00> : vector<16x256xf32>
    %26 = tpu.matmul %18, %25, %cst_11 {dimension_numbers = #tpu.dot_dimension_numbers<[1], [0], [0], [1], [0, 0, 1, 1], [], []>} : vector<16x2xbf16>, vector<2x256xbf16>, vector<16x256xf32> -> vector<16x256xf32>
    %c1_i32_12 = arith.constant 1 : i32
    %27 = tpu.dynamic_rotate %26 by %c1_i32_12 dim 0 : vector<16x256xf32>, i32 -> vector<16x256xf32>
    %c1_i32_13 = arith.constant 1 : i32
    %28 = vector.broadcast %c1_i32_13 : i32 to vector<16x1xi32>
    %29 = arith.cmpi sge, %16, %28 : vector<16x1xi32>
    %cst_14 = arith.constant 0.000000e+00 : f32
    %30 = vector.shape_cast %29 : vector<16x1xi1> to vector<16x1xi1>
    %31 = vector.broadcast %30 : vector<16x1xi1> to vector<16x256xi1>
    %32 = vector.broadcast %cst_14 : f32 to vector<16x256xf32>
    %33 = arith.select %31, %27, %32 : vector<16x256xi1>, vector<16x256xf32>
    %34 = arith.addf %23, %33 : vector<16x256xf32>
    %c2 = arith.constant 2 : index
    %c0_15 = arith.constant 0 : index
    %c0_16 = arith.constant 0 : index
    %35 = vector.load %arg4[%c2, %c0_15, %c0_16] : memref<3x2x256xbf16, #tpu.memory_space<vmem>>, vector<1x2x256xbf16>
    %36 = vector.shape_cast %35 : vector<1x2x256xbf16> to vector<2x256xbf16>
    %cst_17 = arith.constant dense<0.000000e+00> : vector<16x256xf32>
    %37 = tpu.matmul %18, %36, %cst_17 {dimension_numbers = #tpu.dot_dimension_numbers<[1], [0], [0], [1], [0, 0, 1, 1], [], []>} : vector<16x2xbf16>, vector<2x256xbf16>, vector<16x256xf32> -> vector<16x256xf32>
    %c15_i32 = arith.constant 15 : i32
    %38 = tpu.dynamic_rotate %37 by %c15_i32 dim 0 : vector<16x256xf32>, i32 -> vector<16x256xf32>
    %c7_i32 = arith.constant 7 : i32
    %39 = vector.broadcast %c7_i32 : i32 to vector<16x1xi32>
    %40 = arith.cmpi slt, %16, %39 : vector<16x1xi32>
    %cst_18 = arith.constant 0.000000e+00 : f32
    %41 = vector.shape_cast %40 : vector<16x1xi1> to vector<16x1xi1>
    %42 = vector.broadcast %41 : vector<16x1xi1> to vector<16x256xi1>
    %43 = vector.broadcast %cst_18 : f32 to vector<16x256xf32>
    %44 = arith.select %42, %38, %43 : vector<16x256xi1>, vector<16x256xf32>
    %45 = arith.addf %34, %44 : vector<16x256xf32>
    %c0_19 = arith.constant 0 : index
    %c0_20 = arith.constant 0 : index
    %46 = vector.load %arg5[%c0_19, %c0_20] : memref<1x256xf32, #tpu.memory_space<vmem>>, vector<1x256xf32>
    %47 = vector.broadcast %46 : vector<1x256xf32> to vector<16x256xf32>
    %48 = arith.addf %45, %47 : vector<16x256xf32>
    %cst_21 = arith.constant 0.000000e+00 : f32
    %49 = vector.broadcast %cst_21 : f32 to vector<16x256xf32>
    %50 = arith.maximumf %48, %49 : vector<16x256xf32>
    %cst_22 = arith.constant 0.000000e+00 : f32
    %51 = vector.broadcast %cst_22 : f32 to vector<16x256xf32>
    %52 = arith.truncf %50 : vector<16x256xf32> to vector<16x256xbf16>
    %c1_23 = arith.constant 1 : index
    %c0_24 = arith.constant 0 : index
    %c0_25 = arith.constant 0 : index
    %53 = vector.load %arg6[%c1_23, %c0_24, %c0_25] : memref<6x256x512xbf16, #tpu.memory_space<vmem>>, vector<1x256x512xbf16>
    %54 = vector.shape_cast %53 : vector<1x256x512xbf16> to vector<256x512xbf16>
    %cst_26 = arith.constant dense<0.000000e+00> : vector<16x512xf32>
    %55 = tpu.matmul %52, %54, %cst_26 {dimension_numbers = #tpu.dot_dimension_numbers<[1], [0], [0], [1], [0, 0, 1, 1], [], []>} : vector<16x256xbf16>, vector<256x512xbf16>, vector<16x512xf32> -> vector<16x512xf32>
    %c0_27 = arith.constant 0 : index
    %c0_28 = arith.constant 0 : index
    %c0_29 = arith.constant 0 : index
    %56 = vector.load %arg6[%c0_27, %c0_28, %c0_29] : memref<6x256x512xbf16, #tpu.memory_space<vmem>>, vector<1x256x512xbf16>
    %57 = vector.shape_cast %56 : vector<1x256x512xbf16> to vector<256x512xbf16>
    %cst_30 = arith.constant dense<0.000000e+00> : vector<16x512xf32>
    %58 = tpu.matmul %52, %57, %cst_30 {dimension_numbers = #tpu.dot_dimension_numbers<[1], [0], [0], [1], [0, 0, 1, 1], [], []>} : vector<16x256xbf16>, vector<256x512xbf16>, vector<16x512xf32> -> vector<16x512xf32>
    %c1_i32_31 = arith.constant 1 : i32
    %59 = tpu.dynamic_rotate %58 by %c1_i32_31 dim 0 : vector<16x512xf32>, i32 -> vector<16x512xf32>
    %c1_i32_32 = arith.constant 1 : i32
    %60 = vector.broadcast %c1_i32_32 : i32 to vector<16x1xi32>
    %61 = arith.cmpi sge, %16, %60 : vector<16x1xi32>
    %cst_33 = arith.constant 0.000000e+00 : f32
    %62 = vector.shape_cast %61 : vector<16x1xi1> to vector<16x1xi1>
    %63 = vector.broadcast %62 : vector<16x1xi1> to vector<16x512xi1>
    %64 = vector.broadcast %cst_33 : f32 to vector<16x512xf32>
    %65 = arith.select %63, %59, %64 : vector<16x512xi1>, vector<16x512xf32>
    %66 = arith.addf %55, %65 : vector<16x512xf32>
    %c2_34 = arith.constant 2 : index
    %c0_35 = arith.constant 0 : index
    %c0_36 = arith.constant 0 : index
    %67 = vector.load %arg6[%c2_34, %c0_35, %c0_36] : memref<6x256x512xbf16, #tpu.memory_space<vmem>>, vector<1x256x512xbf16>
    %68 = vector.shape_cast %67 : vector<1x256x512xbf16> to vector<256x512xbf16>
    %cst_37 = arith.constant dense<0.000000e+00> : vector<16x512xf32>
    %69 = tpu.matmul %52, %68, %cst_37 {dimension_numbers = #tpu.dot_dimension_numbers<[1], [0], [0], [1], [0, 0, 1, 1], [], []>} : vector<16x256xbf16>, vector<256x512xbf16>, vector<16x512xf32> -> vector<16x512xf32>
    %c15_i32_38 = arith.constant 15 : i32
    %70 = tpu.dynamic_rotate %69 by %c15_i32_38 dim 0 : vector<16x512xf32>, i32 -> vector<16x512xf32>
    %c7_i32_39 = arith.constant 7 : i32
    %71 = vector.broadcast %c7_i32_39 : i32 to vector<16x1xi32>
    %72 = arith.cmpi slt, %16, %71 : vector<16x1xi32>
    %cst_40 = arith.constant 0.000000e+00 : f32
    %73 = vector.shape_cast %72 : vector<16x1xi1> to vector<16x1xi1>
    %74 = vector.broadcast %73 : vector<16x1xi1> to vector<16x512xi1>
    %75 = vector.broadcast %cst_40 : f32 to vector<16x512xf32>
    %76 = arith.select %74, %70, %75 : vector<16x512xi1>, vector<16x512xf32>
    %77 = arith.addf %66, %76 : vector<16x512xf32>
    %c0_41 = arith.constant 0 : index
    %c0_42 = arith.constant 0 : index
    %c0_43 = arith.constant 0 : index
    %78 = vector.load %arg8[%c0_41, %c0_42, %c0_43] : memref<2x2x512xbf16, #tpu.memory_space<vmem>>, vector<1x2x512xbf16>
    %79 = vector.shape_cast %78 : vector<1x2x512xbf16> to vector<2x512xbf16>
    %cst_44 = arith.constant dense<0.000000e+00> : vector<16x512xf32>
    %80 = tpu.matmul %20, %79, %cst_44 {dimension_numbers = #tpu.dot_dimension_numbers<[1], [0], [0], [1], [0, 0, 1, 1], [], []>} : vector<16x2xbf16>, vector<2x512xbf16>, vector<16x512xf32> -> vector<16x512xf32>
    %81 = arith.addf %77, %80 : vector<16x512xf32>
    %c0_45 = arith.constant 0 : index
    %c0_46 = arith.constant 0 : index
    %c0_47 = arith.constant 0 : index
    %82 = vector.load %arg7[%c0_45, %c0_46, %c0_47] : memref<2x1x512xf32, #tpu.memory_space<vmem>>, vector<1x1x512xf32>
    %83 = vector.shape_cast %82 : vector<1x1x512xf32> to vector<1x512xf32>
    %84 = vector.broadcast %83 : vector<1x512xf32> to vector<16x512xf32>
    %85 = arith.addf %81, %84 : vector<16x512xf32>
    %86 = vector.extract_strided_slice %85 {offsets = [0, 0], sizes = [16, 256], strides = [1, 1]} : vector<16x512xf32> to vector<16x256xf32>
    %87 = math.tanh %86 : vector<16x256xf32>
    %88 = vector.extract_strided_slice %85 {offsets = [0, 256], sizes = [16, 256], strides = [1, 1]} : vector<16x512xf32> to vector<16x256xf32>
    %89 = arith.negf %88 : vector<16x256xf32>
    %90 = math.exp %89 : vector<16x256xf32>
    %cst_48 = arith.constant 1.000000e+00 : f32
    %91 = vector.broadcast %cst_48 : f32 to vector<16x256xf32>
    %92 = arith.addf %91, %90 : vector<16x256xf32>
    %93 = arith.divf %91, %92 : vector<16x256xf32>
    %94 = arith.mulf %87, %93 : vector<16x256xf32>
    %95 = arith.truncf %94 : vector<16x256xf32> to vector<16x256xbf16>
    %c0_49 = arith.constant 0 : index
    %c0_50 = arith.constant 0 : index
    %c0_51 = arith.constant 0 : index
    %96 = vector.load %arg9[%c0_49, %c0_50, %c0_51] : memref<2x256x512xbf16, #tpu.memory_space<vmem>>, vector<1x256x512xbf16>
    %97 = vector.shape_cast %96 : vector<1x256x512xbf16> to vector<256x512xbf16>
    %cst_52 = arith.constant dense<0.000000e+00> : vector<16x512xf32>
    %98 = tpu.matmul %95, %97, %cst_52 {dimension_numbers = #tpu.dot_dimension_numbers<[1], [0], [0], [1], [0, 0, 1, 1], [], []>} : vector<16x256xbf16>, vector<256x512xbf16>, vector<16x512xf32> -> vector<16x512xf32>
    %c0_53 = arith.constant 0 : index
    %c0_54 = arith.constant 0 : index
    %c0_55 = arith.constant 0 : index
    %99 = vector.load %arg10[%c0_53, %c0_54, %c0_55] : memref<2x1x512xf32, #tpu.memory_space<vmem>>, vector<1x1x512xf32>
    %100 = vector.shape_cast %99 : vector<1x1x512xf32> to vector<1x512xf32>
    %101 = vector.broadcast %100 : vector<1x512xf32> to vector<16x512xf32>
    %102 = arith.addf %98, %101 : vector<16x512xf32>
    %103 = vector.extract_strided_slice %102 {offsets = [0, 0], sizes = [16, 256], strides = [1, 1]} : vector<16x512xf32> to vector<16x256xf32>
    %104 = arith.addf %50, %103 : vector<16x256xf32>
    %cst_56 = arith.constant 0.707106769 : f32
    %105 = vector.broadcast %cst_56 : f32 to vector<16x256xf32>
    %106 = arith.mulf %104, %105 : vector<16x256xf32>
    %107 = vector.extract_strided_slice %102 {offsets = [0, 256], sizes = [16, 256], strides = [1, 1]} : vector<16x512xf32> to vector<16x256xf32>
    %108 = arith.addf %51, %107 : vector<16x256xf32>
    %109 = arith.truncf %106 : vector<16x256xf32> to vector<16x256xbf16>
    %c4 = arith.constant 4 : index
    %c0_57 = arith.constant 0 : index
    %c0_58 = arith.constant 0 : index
    %110 = vector.load %arg6[%c4, %c0_57, %c0_58] : memref<6x256x512xbf16, #tpu.memory_space<vmem>>, vector<1x256x512xbf16>
    %111 = vector.shape_cast %110 : vector<1x256x512xbf16> to vector<256x512xbf16>
    %cst_59 = arith.constant dense<0.000000e+00> : vector<16x512xf32>
    %112 = tpu.matmul %109, %111, %cst_59 {dimension_numbers = #tpu.dot_dimension_numbers<[1], [0], [0], [1], [0, 0, 1, 1], [], []>} : vector<16x256xbf16>, vector<256x512xbf16>, vector<16x512xf32> -> vector<16x512xf32>
    %c3 = arith.constant 3 : index
    %c0_60 = arith.constant 0 : index
    %c0_61 = arith.constant 0 : index
    %113 = vector.load %arg6[%c3, %c0_60, %c0_61] : memref<6x256x512xbf16, #tpu.memory_space<vmem>>, vector<1x256x512xbf16>
    %114 = vector.shape_cast %113 : vector<1x256x512xbf16> to vector<256x512xbf16>
    %cst_62 = arith.constant dense<0.000000e+00> : vector<16x512xf32>
    %115 = tpu.matmul %109, %114, %cst_62 {dimension_numbers = #tpu.dot_dimension_numbers<[1], [0], [0], [1], [0, 0, 1, 1], [], []>} : vector<16x256xbf16>, vector<256x512xbf16>, vector<16x512xf32> -> vector<16x512xf32>
    %c2_i32 = arith.constant 2 : i32
    %116 = tpu.dynamic_rotate %115 by %c2_i32 dim 0 : vector<16x512xf32>, i32 -> vector<16x512xf32>
    %c2_i32_63 = arith.constant 2 : i32
    %117 = vector.broadcast %c2_i32_63 : i32 to vector<16x1xi32>
    %118 = arith.cmpi sge, %16, %117 : vector<16x1xi32>
    %cst_64 = arith.constant 0.000000e+00 : f32
    %119 = vector.shape_cast %118 : vector<16x1xi1> to vector<16x1xi1>
    %120 = vector.broadcast %119 : vector<16x1xi1> to vector<16x512xi1>
    %121 = vector.broadcast %cst_64 : f32 to vector<16x512xf32>
    %122 = arith.select %120, %116, %121 : vector<16x512xi1>, vector<16x512xf32>
    %123 = arith.addf %112, %122 : vector<16x512xf32>
    %c5 = arith.constant 5 : index
    %c0_65 = arith.constant 0 : index
    %c0_66 = arith.constant 0 : index
    %124 = vector.load %arg6[%c5, %c0_65, %c0_66] : memref<6x256x512xbf16, #tpu.memory_space<vmem>>, vector<1x256x512xbf16>
    %125 = vector.shape_cast %124 : vector<1x256x512xbf16> to vector<256x512xbf16>
    %cst_67 = arith.constant dense<0.000000e+00> : vector<16x512xf32>
    %126 = tpu.matmul %109, %125, %cst_67 {dimension_numbers = #tpu.dot_dimension_numbers<[1], [0], [0], [1], [0, 0, 1, 1], [], []>} : vector<16x256xbf16>, vector<256x512xbf16>, vector<16x512xf32> -> vector<16x512xf32>
    %c14_i32 = arith.constant 14 : i32
    %127 = tpu.dynamic_rotate %126 by %c14_i32 dim 0 : vector<16x512xf32>, i32 -> vector<16x512xf32>
    %c6_i32 = arith.constant 6 : i32
    %128 = vector.broadcast %c6_i32 : i32 to vector<16x1xi32>
    %129 = arith.cmpi slt, %16, %128 : vector<16x1xi32>
    %cst_68 = arith.constant 0.000000e+00 : f32
    %130 = vector.shape_cast %129 : vector<16x1xi1> to vector<16x1xi1>
    %131 = vector.broadcast %130 : vector<16x1xi1> to vector<16x512xi1>
    %132 = vector.broadcast %cst_68 : f32 to vector<16x512xf32>
    %133 = arith.select %131, %127, %132 : vector<16x512xi1>, vector<16x512xf32>
    %134 = arith.addf %123, %133 : vector<16x512xf32>
    %c1_69 = arith.constant 1 : index
    %c0_70 = arith.constant 0 : index
    %c0_71 = arith.constant 0 : index
    %135 = vector.load %arg8[%c1_69, %c0_70, %c0_71] : memref<2x2x512xbf16, #tpu.memory_space<vmem>>, vector<1x2x512xbf16>
    %136 = vector.shape_cast %135 : vector<1x2x512xbf16> to vector<2x512xbf16>
    %cst_72 = arith.constant dense<0.000000e+00> : vector<16x512xf32>
    %137 = tpu.matmul %20, %136, %cst_72 {dimension_numbers = #tpu.dot_dimension_numbers<[1], [0], [0], [1], [0, 0, 1, 1], [], []>} : vector<16x2xbf16>, vector<2x512xbf16>, vector<16x512xf32> -> vector<16x512xf32>
    %138 = arith.addf %134, %137 : vector<16x512xf32>
    %c1_73 = arith.constant 1 : index
    %c0_74 = arith.constant 0 : index
    %c0_75 = arith.constant 0 : index
    %139 = vector.load %arg7[%c1_73, %c0_74, %c0_75] : memref<2x1x512xf32, #tpu.memory_space<vmem>>, vector<1x1x512xf32>
    %140 = vector.shape_cast %139 : vector<1x1x512xf32> to vector<1x512xf32>
    %141 = vector.broadcast %140 : vector<1x512xf32> to vector<16x512xf32>
    %142 = arith.addf %138, %141 : vector<16x512xf32>
    %143 = vector.extract_strided_slice %142 {offsets = [0, 0], sizes = [16, 256], strides = [1, 1]} : vector<16x512xf32> to vector<16x256xf32>
    %144 = math.tanh %143 : vector<16x256xf32>
    %145 = vector.extract_strided_slice %142 {offsets = [0, 256], sizes = [16, 256], strides = [1, 1]} : vector<16x512xf32> to vector<16x256xf32>
    %146 = arith.negf %145 : vector<16x256xf32>
    %147 = math.exp %146 : vector<16x256xf32>
    %cst_76 = arith.constant 1.000000e+00 : f32
    %148 = vector.broadcast %cst_76 : f32 to vector<16x256xf32>
    %149 = arith.addf %148, %147 : vector<16x256xf32>
    %150 = arith.divf %148, %149 : vector<16x256xf32>
    %151 = arith.mulf %144, %150 : vector<16x256xf32>
    %152 = arith.truncf %151 : vector<16x256xf32> to vector<16x256xbf16>
    %c1_77 = arith.constant 1 : index
    %c0_78 = arith.constant 0 : index
    %c0_79 = arith.constant 0 : index
    %153 = vector.load %arg9[%c1_77, %c0_78, %c0_79] : memref<2x256x512xbf16, #tpu.memory_space<vmem>>, vector<1x256x512xbf16>
    %154 = vector.shape_cast %153 : vector<1x256x512xbf16> to vector<256x512xbf16>
    %cst_80 = arith.constant dense<0.000000e+00> : vector<16x512xf32>
    %155 = tpu.matmul %152, %154, %cst_80 {dimension_numbers = #tpu.dot_dimension_numbers<[1], [0], [0], [1], [0, 0, 1, 1], [], []>} : vector<16x256xbf16>, vector<256x512xbf16>, vector<16x512xf32> -> vector<16x512xf32>
    %c1_81 = arith.constant 1 : index
    %c0_82 = arith.constant 0 : index
    %c0_83 = arith.constant 0 : index
    %156 = vector.load %arg10[%c1_81, %c0_82, %c0_83] : memref<2x1x512xf32, #tpu.memory_space<vmem>>, vector<1x1x512xf32>
    %157 = vector.shape_cast %156 : vector<1x1x512xf32> to vector<1x512xf32>
    %158 = vector.broadcast %157 : vector<1x512xf32> to vector<16x512xf32>
    %159 = arith.addf %155, %158 : vector<16x512xf32>
    %160 = vector.extract_strided_slice %159 {offsets = [0, 256], sizes = [16, 256], strides = [1, 1]} : vector<16x512xf32> to vector<16x256xf32>
    %161 = arith.addf %108, %160 : vector<16x256xf32>
    %cst_84 = arith.constant 0.000000e+00 : f32
    %162 = vector.broadcast %cst_84 : f32 to vector<16x256xf32>
    %163 = arith.maximumf %161, %162 : vector<16x256xf32>
    %164 = arith.truncf %163 : vector<16x256xf32> to vector<16x256xbf16>
    %c0_85 = arith.constant 0 : index
    %c0_86 = arith.constant 0 : index
    %165 = vector.load %arg11[%c0_85, %c0_86] : memref<256x256xbf16, #tpu.memory_space<vmem>>, vector<256x256xbf16>
    %cst_87 = arith.constant dense<0.000000e+00> : vector<16x256xf32>
    %166 = tpu.matmul %164, %165, %cst_87 {dimension_numbers = #tpu.dot_dimension_numbers<[1], [0], [0], [1], [0, 0, 1, 1], [], []>} : vector<16x256xbf16>, vector<256x256xbf16>, vector<16x256xf32> -> vector<16x256xf32>
    %c0_88 = arith.constant 0 : index
    %c0_89 = arith.constant 0 : index
    %167 = vector.load %arg12[%c0_88, %c0_89] : memref<1x256xf32, #tpu.memory_space<vmem>>, vector<1x256xf32>
    %168 = vector.broadcast %167 : vector<1x256xf32> to vector<16x256xf32>
    %169 = arith.addf %166, %168 : vector<16x256xf32>
    %cst_90 = arith.constant 0.000000e+00 : f32
    %170 = vector.broadcast %cst_90 : f32 to vector<16x256xf32>
    %171 = arith.maximumf %169, %170 : vector<16x256xf32>
    %172 = arith.truncf %171 : vector<16x256xf32> to vector<16x256xbf16>
    %c0_91 = arith.constant 0 : index
    %c0_92 = arith.constant 0 : index
    %173 = vector.load %arg13[%c0_91, %c0_92] : memref<256x256xbf16, #tpu.memory_space<vmem>>, vector<256x256xbf16>
    %cst_93 = arith.constant dense<0.000000e+00> : vector<16x256xf32>
    %174 = tpu.matmul %172, %173, %cst_93 {dimension_numbers = #tpu.dot_dimension_numbers<[1], [0], [0], [1], [0, 0, 1, 1], [], []>} : vector<16x256xbf16>, vector<256x256xbf16>, vector<16x256xf32> -> vector<16x256xf32>
    %c0_94 = arith.constant 0 : index
    %c0_95 = arith.constant 0 : index
    %175 = vector.load %arg14[%c0_94, %c0_95] : memref<1x256xf32, #tpu.memory_space<vmem>>, vector<1x256xf32>
    %176 = vector.broadcast %175 : vector<1x256xf32> to vector<16x256xf32>
    %177 = arith.addf %174, %176 : vector<16x256xf32>
    %c0_96 = arith.constant 0 : index
    %c0_97 = arith.constant 0 : index
    %178 = vector.load %arg15[%c0_96, %c0_97] : memref<1x256xf32, #tpu.memory_space<vmem>>, vector<1x256xf32>
    %cst_98 = arith.constant 3.000000e+00 : f32
    %179 = vector.broadcast %cst_98 : f32 to vector<1x256xf32>
    %180 = arith.mulf %178, %179 : vector<1x256xf32>
    %181 = math.exp %180 : vector<1x256xf32>
    %182 = vector.broadcast %181 : vector<1x256xf32> to vector<16x256xf32>
    %183 = arith.mulf %177, %182 : vector<16x256xf32>
    %184 = vector.extract_strided_slice %183 {offsets = [0, 0], sizes = [16, 128], strides = [1, 1]} : vector<16x256xf32> to vector<16x128xf32>
    %185 = vector.extract_strided_slice %183 {offsets = [0, 128], sizes = [16, 128], strides = [1, 1]} : vector<16x256xf32> to vector<16x128xf32>
    %c0_99 = arith.constant 0 : index
    %c0_100 = arith.constant 0 : index
    %186 = vector.load %arg3[%c0_99, %c0_100] : memref<16x128xf32, #tpu.memory_space<vmem>>, vector<16x128xf32>
    %187 = arith.subf %186, %185 : vector<16x128xf32>
    %cst_101 = arith.constant 0.000000e+00 : f32
    %188 = vector.broadcast %cst_101 : f32 to vector<16x128xf32>
    %189 = arith.subf %188, %184 : vector<16x128xf32>
    %190 = math.exp %189 : vector<16x128xf32>
    %191 = arith.mulf %187, %190 : vector<16x128xf32>
    %c0_102 = arith.constant 0 : index
    %c0_103 = arith.constant 0 : index
    %192 = vector.load %arg16[%c0_102, %c0_103] : memref<16x128xf32, #tpu.memory_space<vmem>>, vector<16x128xf32>
    tpu.vector_store %arg16[%c0_102, %c0_103], %191 {strides = array<i32>} : memref<16x128xf32, #tpu.memory_space<vmem>>, vector<16x128xf32>,
    %cst_104 = arith.constant dense<0.000000e+00> : vector<128xf32>
    %193 = vector.multi_reduction <add>, %184, %cst_104 [0] : vector<16x128xf32> to vector<128xf32>
    %194 = vector.shape_cast %193 : vector<128xf32> to vector<1x128xf32>
    %cst_105 = arith.constant 0.000000e+00 : f32
    %195 = vector.broadcast %cst_105 : f32 to vector<1x128xf32>
    %196 = arith.subf %195, %194 : vector<1x128xf32>
    %197 = vector.shape_cast %196 : vector<1x128xf32> to vector<1x128xf32>
    %198 = vector.broadcast %197 : vector<1x128xf32> to vector<8x128xf32>
    %c0_106 = arith.constant 0 : index
    %c0_107 = arith.constant 0 : index
    %c0_108 = arith.constant 0 : index
    %199 = vector.load %arg17[%c0_106, %c0_107, %c0_108] : memref<1x8x128xf32, #tpu.memory_space<vmem>>, vector<1x8x128xf32>
    %200 = vector.shape_cast %199 : vector<1x8x128xf32> to vector<8x128xf32>
    %201 = vector.shape_cast %198 : vector<8x128xf32> to vector<1x8x128xf32>
    tpu.vector_store %arg17[%c0_106, %c0_107, %c0_108], %201 {strides = array<i32>} : memref<1x8x128xf32, #tpu.memory_space<vmem>>, vector<1x8x128xf32>,
    return
  }
  func.func @transform_0(%arg0: i32) -> (i32, i32) {
    %c0_i32 = arith.constant 0 : i32
    %c0_i32_0 = arith.constant 0 : i32
    return %arg0, %c0_i32 : i32, i32
  }
  func.func @transform_1(%arg0: i32) -> (i32, i32) {
    %c0_i32 = arith.constant 0 : i32
    %c0_i32_0 = arith.constant 0 : i32
    return %arg0, %c0_i32 : i32, i32
  }
  func.func @transform_2(%arg0: i32) -> (i32, i32) {
    %c0_i32 = arith.constant 0 : i32
    %c0_i32_0 = arith.constant 0 : i32
    return %arg0, %c0_i32 : i32, i32
  }
  func.func @transform_3(%arg0: i32) -> (i32, i32, i32) {
    %c0_i32 = arith.constant 0 : i32
    %c0_i32_0 = arith.constant 0 : i32
    %c0_i32_1 = arith.constant 0 : i32
    %c0_i32_2 = arith.constant 0 : i32
    return %c0_i32, %c0_i32_0, %c0_i32_1 : i32, i32, i32
  }
  func.func @transform_4(%arg0: i32) -> (i32, i32) {
    %c0_i32 = arith.constant 0 : i32
    %c0_i32_0 = arith.constant 0 : i32
    %c0_i32_1 = arith.constant 0 : i32
    return %c0_i32, %c0_i32_0 : i32, i32
  }
  func.func @transform_5(%arg0: i32) -> (i32, i32, i32) {
    %c0_i32 = arith.constant 0 : i32
    %c0_i32_0 = arith.constant 0 : i32
    %c0_i32_1 = arith.constant 0 : i32
    %c0_i32_2 = arith.constant 0 : i32
    return %c0_i32, %c0_i32_0, %c0_i32_1 : i32, i32, i32
  }
  func.func @transform_6(%arg0: i32) -> (i32, i32, i32) {
    %c0_i32 = arith.constant 0 : i32
    %c0_i32_0 = arith.constant 0 : i32
    %c0_i32_1 = arith.constant 0 : i32
    %c0_i32_2 = arith.constant 0 : i32
    return %c0_i32, %c0_i32_0, %c0_i32_1 : i32, i32, i32
  }
  func.func @transform_7(%arg0: i32) -> (i32, i32, i32) {
    %c0_i32 = arith.constant 0 : i32
    %c0_i32_0 = arith.constant 0 : i32
    %c0_i32_1 = arith.constant 0 : i32
    %c0_i32_2 = arith.constant 0 : i32
    return %c0_i32, %c0_i32_0, %c0_i32_1 : i32, i32, i32
  }
  func.func @transform_8(%arg0: i32) -> (i32, i32, i32) {
    %c0_i32 = arith.constant 0 : i32
    %c0_i32_0 = arith.constant 0 : i32
    %c0_i32_1 = arith.constant 0 : i32
    %c0_i32_2 = arith.constant 0 : i32
    return %c0_i32, %c0_i32_0, %c0_i32_1 : i32, i32, i32
  }
  func.func @transform_9(%arg0: i32) -> (i32, i32, i32) {
    %c0_i32 = arith.constant 0 : i32
    %c0_i32_0 = arith.constant 0 : i32
    %c0_i32_1 = arith.constant 0 : i32
    %c0_i32_2 = arith.constant 0 : i32
    return %c0_i32, %c0_i32_0, %c0_i32_1 : i32, i32, i32
  }
  func.func @transform_10(%arg0: i32) -> (i32, i32) {
    %c0_i32 = arith.constant 0 : i32
    %c0_i32_0 = arith.constant 0 : i32
    %c0_i32_1 = arith.constant 0 : i32
    return %c0_i32, %c0_i32_0 : i32, i32
  }
  func.func @transform_11(%arg0: i32) -> (i32, i32) {
    %c0_i32 = arith.constant 0 : i32
    %c0_i32_0 = arith.constant 0 : i32
    %c0_i32_1 = arith.constant 0 : i32
    return %c0_i32, %c0_i32_0 : i32, i32
  }
  func.func @transform_12(%arg0: i32) -> (i32, i32) {
    %c0_i32 = arith.constant 0 : i32
    %c0_i32_0 = arith.constant 0 : i32
    %c0_i32_1 = arith.constant 0 : i32
    return %c0_i32, %c0_i32_0 : i32, i32
  }
  func.func @transform_13(%arg0: i32) -> (i32, i32) {
    %c0_i32 = arith.constant 0 : i32
    %c0_i32_0 = arith.constant 0 : i32
    %c0_i32_1 = arith.constant 0 : i32
    return %c0_i32, %c0_i32_0 : i32, i32
  }
  func.func @transform_14(%arg0: i32) -> (i32, i32) {
    %c0_i32 = arith.constant 0 : i32
    %c0_i32_0 = arith.constant 0 : i32
    %c0_i32_1 = arith.constant 0 : i32
    return %c0_i32, %c0_i32_0 : i32, i32
  }
  func.func @transform_15(%arg0: i32) -> (i32, i32) {
    %c0_i32 = arith.constant 0 : i32
    %c0_i32_0 = arith.constant 0 : i32
    return %arg0, %c0_i32 : i32, i32
  }
  func.func @transform_16(%arg0: i32) -> (i32, i32, i32) {
    %c0_i32 = arith.constant 0 : i32
    %c0_i32_0 = arith.constant 0 : i32
    %c0_i32_1 = arith.constant 0 : i32
    return %arg0, %c0_i32, %c0_i32_0 : i32, i32, i32
  }
}

</mosaic_0001>

<llo_original>
// kernel: block_forward.2
$region0: #{block_forward.2}
  #allocation0 [shape = 'u32[]', space=smem, size = 0x4, offset = 0x4, fixed_abs, tag = 'smem constant byte address 0x4 - core index']
  #allocation1 [shape = 'u32[144,128]{1,0:T(1,128)}', space=vmem, size = 0x12000, scoped, tag = 'internal scratch']
  %s0 = inlined_call_operand.vmem [shape: f32[16,2], index: 0, kind: input, shape index: {}]
  %s1 = inlined_call_operand.vmem [shape: f32[16,2], index: 1, kind: input, shape index: {}]
  %s2 = inlined_call_operand.vmem [shape: f32[16,128], index: 2, kind: input, shape index: {}]
  %s3 = inlined_call_operand.hbm [shape: bf16[3,2,256], index: 3, kind: input, shape index: {}]
  %s4 = inlined_call_operand.hbm [shape: f32[1,256], index: 4, kind: input, shape index: {}]
  %s5 = inlined_call_operand.hbm [shape: bf16[6,256,512], index: 5, kind: input, shape index: {}]
  %s6 = inlined_call_operand.hbm [shape: f32[2,1,512], index: 6, kind: input, shape index: {}]
  %s7 = inlined_call_operand.hbm [shape: bf16[2,2,512], index: 7, kind: input, shape index: {}]
  %s8 = inlined_call_operand.hbm [shape: bf16[2,256,512], index: 8, kind: input, shape index: {}]
  %s9 = inlined_call_operand.hbm [shape: f32[2,1,512], index: 9, kind: input, shape index: {}]
  %s10 = inlined_call_operand.hbm [shape: bf16[256,256], index: 10, kind: input, shape index: {}]
  %s11 = inlined_call_operand.hbm [shape: f32[1,256], index: 11, kind: input, shape index: {}]
  %s12 = inlined_call_operand.hbm [shape: bf16[256,256], index: 12, kind: input, shape index: {}]
  %s13 = inlined_call_operand.hbm [shape: f32[1,256], index: 13, kind: input, shape index: {}]
  %s14 = inlined_call_operand.hbm [shape: f32[1,256], index: 14, kind: input, shape index: {}]
  %s15 = inlined_call_operand.vmem [shape: f32[16,128], index: 15, kind: output, shape index: {0}]
  %s16 = inlined_call_operand.vmem [shape: f32[1,8,128], index: 16, kind: output, shape index: {1}]
  %17 = xla_tuple %s15, %s16
  %s18 = sld [smem:[#allocation0]]
  $region126: #{block_forward.2} parent=0
    _
  %s20 = ssub.s32 1, %s18
  %s21 = scalar_select 0, %s20, %s18
  $region1: #{block_forward.2} parent=0
    #allocation2 [shape = 'u8[3072]{0}', space=vmem, size = 0xc00, scoped, tag = 'input window, operand 3, single buffered']
    #allocation3 [shape = 's32[1]{0}', space=sflag, size = 0x4, scoped, tag = 'scoped memory for block_forward.2']
    #allocation4 [shape = 'u8[1024]{0}', space=vmem, size = 0x400, scoped, tag = 'input window, operand 4, single buffered']
    #allocation5 [shape = 's32[1]{0}', space=sflag, size = 0x4, scoped, tag = 'scoped memory for block_forward.2']
    #allocation6 [shape = 'u8[1572864]{0}', space=vmem, size = 0x180000, scoped, tag = 'input window, operand 5, single buffered']
    #allocation7 [shape = 'u8[4096]{0}', space=vmem, size = 0x1000, scoped, tag = 'input window, operand 6, single buffered']
    #allocation8 [shape = 's32[1]{0}', space=sflag, size = 0x4, scoped, tag = 'scoped memory for block_forward.2']
    #allocation9 [shape = 'u8[4096]{0}', space=vmem, size = 0x1000, scoped, tag = 'input window, operand 7, single buffered']
    #allocation10 [shape = 'u8[524288]{0}', space=vmem, size = 0x80000, scoped, tag = 'input window, operand 8, single buffered']
    #allocation11 [shape = 's32[1]{0}', space=sflag, size = 0x4, scoped, tag = 'scoped memory for block_forward.2']
    #allocation12 [shape = 'u8[4096]{0}', space=vmem, size = 0x1000, scoped, tag = 'input window, operand 9, single buffered']
    #allocation13 [shape = 'u8[131072]{0}', space=vmem, size = 0x20000, scoped, tag = 'input window, operand 10, single buffered']
    #allocation14 [shape = 's32[1]{0}', space=sflag, size = 0x4, scoped, tag = 'scoped memory for block_forward.2']
    #allocation15 [shape = 'u8[1024]{0}', space=vmem, size = 0x400, scoped, tag = 'input window, operand 11, single buffered']
    #allocation16 [shape = 'u8[131072]{0}', space=vmem, size = 0x20000, scoped, tag = 'input window, operand 12, single buffered']
    #allocation17 [shape = 's32[1]{0}', space=sflag, size = 0x4, scoped, tag = 'scoped memory for block_forward.2']
    #allocation18 [shape = 'u8[1024]{0}', space=vmem, size = 0x400, scoped, tag = 'input window, operand 13, single buffered']
    #allocation19 [shape = 'u8[1024]{0}', space=vmem, size = 0x400, scoped, tag = 'input window, operand 14, single buffered']
    #allocation20 [shape = 's32[1]{0}', space=sflag, size = 0x4, scoped, tag = 'scoped memory for block_forward.2']
    %22 = vsyncpa [#allocation3], 0
    %23 = vsyncpa [#allocation5], 0
    %24 = vsyncpa [#allocation8], 0
    %25 = vsyncpa [#allocation11], 0
    %26 = vsyncpa [#allocation14], 0
    %27 = vsyncpa [#allocation17], 0
    %28 = vsyncpa [#allocation20], 0
    // Predicated region
    $region2: #{block_forward.2} parent=1 // pred_check
      _
    $region3: #{block_forward.2} parent=1 // pred_check_branch
      %30 = sbr.rel (0) target = $region5
    $region4: #{block_forward.2} parent=1 // pred_region
      _
    $region5: #{block_forward.2} parent=1 // pred_fallthru
      _
    // Predicated region
    $region6: #{block_forward.2} parent=1 // pred_check
      _
    $region7: #{block_forward.2} parent=1 // pred_check_branch
      %32 = sbr.rel (0) target = $region9
    $region8: #{block_forward.2} parent=1 // pred_region
      _
    $region9: #{block_forward.2} parent=1 // pred_fallthru
      _
    // Predicated region
    $region10: #{block_forward.2} parent=1 // pred_check
      _
    $region11: #{block_forward.2} parent=1 // pred_check_branch
      %34 = sbr.rel (0) target = $region13
    $region12: #{block_forward.2} parent=1 // pred_region
      _
    $region13: #{block_forward.2} parent=1 // pred_fallthru
      _
    // Predicated region
    $region14: #{block_forward.2} parent=1 // pred_check
      _
    $region15: #{block_forward.2} parent=1 // pred_check_branch
      %36 = sbr.rel (0) target = $region17
    $region16: #{block_forward.2} parent=1 // pred_region
      %s38 = ssub.s32 96, 96
      %39 = vsyncadd [#allocation3], %s38
      %s40 = sshll.u32 [#allocation2], 4
      %s41 = int_to_ptr.vmem [resolvable:$true] %s40
      %46 = dma.hbm_to_vmem [thread:$0]  %s3, 96, %s41, [#allocation3], 32, 32, 2
    $region17: #{block_forward.2} parent=1 // pred_fallthru
      _
    // Predicated region
    $region18: #{block_forward.2} parent=1 // pred_check
      _
    $region19: #{block_forward.2} parent=1 // pred_check_branch
      %48 = sbr.rel (0) target = $region21
    $region20: #{block_forward.2} parent=1 // pred_region
      %s50 = ssub.s32 32, 32
      %51 = vsyncadd [#allocation5], %s50
      %s53 = sshll.u32 [#allocation4], 4
      %s54 = int_to_ptr.vmem [resolvable:$true] %s53
      %56 = dma.hbm_to_vmem [thread:$0]  %s4, 32, %s54, [#allocation5]
    $region21: #{block_forward.2} parent=1 // pred_fallthru
      _
    // Predicated region
    $region22: #{block_forward.2} parent=1 // pred_check
      _
    $region23: #{block_forward.2} parent=1 // pred_check_branch
      %58 = sbr.rel (0) target = $region25
    $region24: #{block_forward.2} parent=1 // pred_region
      %s60 = ssub.s32 49152, 49152
      %61 = vsyncadd [#allocation5], %s60
      %s62 = sshll.u32 [#allocation6], 4
      %s63 = int_to_ptr.vmem [resolvable:$true] %s62
      %68 = dma.hbm_to_vmem [thread:$0]  %s5, 49152, %s63, [#allocation5], 256, 256, 16
    $region25: #{block_forward.2} parent=1 // pred_fallthru
      _
    // Predicated region
    $region26: #{block_forward.2} parent=1 // pred_check
      _
    $region27: #{block_forward.2} parent=1 // pred_check_branch
      %70 = sbr.rel (0) target = $region29
    $region28: #{block_forward.2} parent=1 // pred_region
      %s72 = ssub.s32 128, 128
      %73 = vsyncadd [#allocation8], %s72
      %s74 = sshll.u32 [#allocation7], 4
      %s75 = int_to_ptr.vmem [resolvable:$true] %s74
      %80 = dma.hbm_to_vmem [thread:$0]  %s6, 128, %s75, [#allocation8], 64, 64, 4
    $region29: #{block_forward.2} parent=1 // pred_fallthru
      _
    // Predicated region
    $region30: #{block_forward.2} parent=1 // pred_check
      _
    $region31: #{block_forward.2} parent=1 // pred_check_branch
      %82 = sbr.rel (0) target = $region33
    $region32: #{block_forward.2} parent=1 // pred_region
      %s84 = ssub.s32 128, 128
      %85 = vsyncadd [#allocation8], %s84
      %s86 = sshll.u32 [#allocation9], 4
      %s87 = int_to_ptr.vmem [resolvable:$true] %s86
      %92 = dma.hbm_to_vmem [thread:$0]  %s7, 128, %s87, [#allocation8], 64, 64, 4
    $region33: #{block_forward.2} parent=1 // pred_fallthru
      _
    // Predicated region
    $region34: #{block_forward.2} parent=1 // pred_check
      _
    $region35: #{block_forward.2} parent=1 // pred_check_branch
      %94 = sbr.rel (0) target = $region37
    $region36: #{block_forward.2} parent=1 // pred_region
      %s96 = ssub.s32 16384, 16384
      %97 = vsyncadd [#allocation11], %s96
      %s98 = sshll.u32 [#allocation10], 4
      %s99 = int_to_ptr.vmem [resolvable:$true] %s98
      %104 = dma.hbm_to_vmem [thread:$0]  %s8, 16384, %s99, [#allocation11], 256, 256, 16
    $region37: #{block_forward.2} parent=1 // pred_fallthru
      _
    // Predicated region
    $region38: #{block_forward.2} parent=1 // pred_check
      _
    $region39: #{block_forward.2} parent=1 // pred_check_branch
      %106 = sbr.rel (0) target = $region41
    $region40: #{block_forward.2} parent=1 // pred_region
      %s108 = ssub.s32 128, 128
      %109 = vsyncadd [#allocation11], %s108
      %s110 = sshll.u32 [#allocation12], 4
      %s111 = int_to_ptr.vmem [resolvable:$true] %s110
      %116 = dma.hbm_to_vmem [thread:$0]  %s9, 128, %s111, [#allocation11], 64, 64, 4
    $region41: #{block_forward.2} parent=1 // pred_fallthru
      _
    // Predicated region
    $region42: #{block_forward.2} parent=1 // pred_check
      _
    $region43: #{block_forward.2} parent=1 // pred_check_branch
      %118 = sbr.rel (0) target = $region45
    $region44: #{block_forward.2} parent=1 // pred_region
      %s120 = ssub.s32 4096, 4096
      %121 = vsyncadd [#allocation14], %s120
      %s122 = sshll.u32 [#allocation13], 4
      %s123 = int_to_ptr.vmem [resolvable:$true] %s122
      %128 = dma.hbm_to_vmem [thread:$0]  %s10, 4096, %s123, [#allocation14], 128, 128, 8
    $region45: #{block_forward.2} parent=1 // pred_fallthru
      _
    // Predicated region
    $region46: #{block_forward.2} parent=1 // pred_check
      _
    $region47: #{block_forward.2} parent=1 // pred_check_branch
      %130 = sbr.rel (0) target = $region49
    $region48: #{block_forward.2} parent=1 // pred_region
      %s132 = ssub.s32 32, 32
      %133 = vsyncadd [#allocation14], %s132
      %s135 = sshll.u32 [#allocation15], 4
      %s136 = int_to_ptr.vmem [resolvable:$true] %s135
      %138 = dma.hbm_to_vmem [thread:$0]  %s11, 32, %s136, [#allocation14]
    $region49: #{block_forward.2} parent=1 // pred_fallthru
      _
    // Predicated region
    $region50: #{block_forward.2} parent=1 // pred_check
      _
    $region51: #{block_forward.2} parent=1 // pred_check_branch
      %140 = sbr.rel (0) target = $region53
    $region52: #{block_forward.2} parent=1 // pred_region
      %s142 = ssub.s32 4096, 4096
      %143 = vsyncadd [#allocation17], %s142
      %s144 = sshll.u32 [#allocation16], 4
      %s145 = int_to_ptr.vmem [resolvable:$true] %s144
      %150 = dma.hbm_to_vmem [thread:$0]  %s12, 4096, %s145, [#allocation17], 128, 128, 8
    $region53: #{block_forward.2} parent=1 // pred_fallthru
      _
    // Predicated region
    $region54: #{block_forward.2} parent=1 // pred_check
      _
    $region55: #{block_forward.2} parent=1 // pred_check_branch
      %152 = sbr.rel (0) target = $region57
    $region56: #{block_forward.2} parent=1 // pred_region
      %s154 = ssub.s32 32, 32
      %155 = vsyncadd [#allocation17], %s154
      %s157 = sshll.u32 [#allocation18], 4
      %s158 = int_to_ptr.vmem [resolvable:$true] %s157
      %160 = dma.hbm_to_vmem [thread:$0]  %s13, 32, %s158, [#allocation17]
    $region57: #{block_forward.2} parent=1 // pred_fallthru
      _
    // Predicated region
    $region58: #{block_forward.2} parent=1 // pred_check
      _
    $region59: #{block_forward.2} parent=1 // pred_check_branch
      %162 = sbr.rel (0) target = $region61
    $region60: #{block_forward.2} parent=1 // pred_region
      %s164 = ssub.s32 32, 32
      %165 = vsyncadd [#allocation20], %s164
      %s167 = sshll.u32 [#allocation19], 4
      %s168 = int_to_ptr.vmem [resolvable:$true] %s167
      %170 = dma.hbm_to_vmem [thread:$0]  %s14, 32, %s168, [#allocation20]
    $region61: #{block_forward.2} parent=1 // pred_fallthru
      _
    // Predicated region
    $region62: #{block_forward.2} parent=1 // pred_check
      _
    $region63: #{block_forward.2} parent=1 // pred_check_branch
      %172 = sbr.rel (0) target = $region65
    $region64: #{block_forward.2} parent=1 // pred_region
      %173 = dma.done [#allocation3], 96
    $region65: #{block_forward.2} parent=1 // pred_fallthru
      _
    // Predicated region
    $region66: #{block_forward.2} parent=1 // pred_check
      _
    $region67: #{block_forward.2} parent=1 // pred_check_branch
      %175 = sbr.rel (0) target = $region69
    $region68: #{block_forward.2} parent=1 // pred_region
      %176 = dma.done [#allocation5], 32
    $region69: #{block_forward.2} parent=1 // pred_fallthru
      _
    // Predicated region
    $region70: #{block_forward.2} parent=1 // pred_check
      _
    $region71: #{block_forward.2} parent=1 // pred_check_branch
      %178 = sbr.rel (0) target = $region73
    $region72: #{block_forward.2} parent=1 // pred_region
      %179 = dma.done [#allocation5], 49152
    $region73: #{block_forward.2} parent=1 // pred_fallthru
      _
    // Predicated region
    $region74: #{block_forward.2} parent=1 // pred_check
      _
    $region75: #{block_forward.2} parent=1 // pred_check_branch
      %181 = sbr.rel (0) target = $region77
    $region76: #{block_forward.2} parent=1 // pred_region
      %182 = dma.done [#allocation8], 128
    $region77: #{block_forward.2} parent=1 // pred_fallthru
      _
    // Predicated region
    $region78: #{block_forward.2} parent=1 // pred_check
      _
    $region79: #{block_forward.2} parent=1 // pred_check_branch
      %184 = sbr.rel (0) target = $region81
    $region80: #{block_forward.2} parent=1 // pred_region
      %185 = dma.done [#allocation8], 128
    $region81: #{block_forward.2} parent=1 // pred_fallthru
      _
    // Predicated region
    $region82: #{block_forward.2} parent=1 // pred_check
      _
    $region83: #{block_forward.2} parent=1 // pred_check_branch
      %187 = sbr.rel (0) target = $region85
    $region84: #{block_forward.2} parent=1 // pred_region
      %188 = dma.done [#allocation11], 16384
    $region85: #{block_forward.2} parent=1 // pred_fallthru
      _
    // Predicated region
    $region86: #{block_forward.2} parent=1 // pred_check
      _
    $region87: #{block_forward.2} parent=1 // pred_check_branch
      %190 = sbr.rel (0) target = $region89
    $region88: #{block_forward.2} parent=1 // pred_region
      %191 = dma.done [#allocation11], 128
    $region89: #{block_forward.2} parent=1 // pred_fallthru
      _
    // Predicated region
    $region90: #{block_forward.2} parent=1 // pred_check
      _
    $region91: #{block_forward.2} parent=1 // pred_check_branch
      %193 = sbr.rel (0) target = $region93
    $region92: #{block_forward.2} parent=1 // pred_region
      %194 = dma.done [#allocation14], 4096
    $region93: #{block_forward.2} parent=1 // pred_fallthru
      _
    // Predicated region
    $region94: #{block_forward.2} parent=1 // pred_check
      _
    $region95: #{block_forward.2} parent=1 // pred_check_branch
      %196 = sbr.rel (0) target = $region97
    $region96: #{block_forward.2} parent=1 // pred_region
      %197 = dma.done [#allocation14], 32
    $region97: #{block_forward.2} parent=1 // pred_fallthru
      _
    // Predicated region
    $region98: #{block_forward.2} parent=1 // pred_check
      _
    $region99: #{block_forward.2} parent=1 // pred_check_branch
      %199 = sbr.rel (0) target = $region101
    $region100: #{block_forward.2} parent=1 // pred_region
      %200 = dma.done [#allocation17], 4096
    $region101: #{block_forward.2} parent=1 // pred_fallthru
      _
    // Predicated region
    $region102: #{block_forward.2} parent=1 // pred_check
      _
    $region103: #{block_forward.2} parent=1 // pred_check_branch
      %202 = sbr.rel (0) target = $region105
    $region104: #{block_forward.2} parent=1 // pred_region
      %203 = dma.done [#allocation17], 32
    $region105: #{block_forward.2} parent=1 // pred_fallthru
      _
    // Predicated region
    $region106: #{block_forward.2} parent=1 // pred_check
      _
    $region107: #{block_forward.2} parent=1 // pred_check_branch
      %205 = sbr.rel (0) target = $region109
    $region108: #{block_forward.2} parent=1 // pred_region
      %206 = dma.done [#allocation20], 32
    $region109: #{block_forward.2} parent=1 // pred_fallthru
      _
    %v208 = vlaneseq
    %v209 = vshrl.u32 %v208, 7
    %v210 = vadd.s32 %v209, 8
    %vm211 = vcmp.lt.s32.totalorder %v209, 0
    %v212 = vsub.s32 0, %v209
    %v213 = vsel %vm211, %v212, %v209
    %v214 = vshrl.u32 %v213, 3
    %v215 = vand.u32 %v213, 7
    %v216 = vsub.s32 0, %v215
    %v217 = vsel %vm211, %v216, %v215
    %vm218 = vcmp.lt.s32.totalorder %v210, 0
    %v219 = vsub.s32 0, %v210
    %v220 = vsel %vm218, %v219, %v210
    %v221 = vshrl.u32 %v220, 3
    %v222 = vand.u32 %v220, 7
    %v223 = vsub.s32 0, %v222
    %v224 = vsel %vm218, %v223, %v222
    %vm225 = vcmp.ne.s32.totalorder %v217, 0
    %vm226 = vcmp.ne.s32.totalorder %v224, 0
    %vm227 = vcmp.lt.s32.totalorder %v217, 0
    %vm228 = vcmp.lt.s32.totalorder %v224, 0
    %vm229 = vmand %vm227, %vm225
    %vm230 = vmand %vm228, %vm226
    %v231 = vadd.s32 %v217, 8
    %v232 = vadd.s32 %v224, 8
    %v233 = vsel %vm229, %v231, %v217
    %v234 = vsel %vm230, %v232, %v224
    %v235 = vld [vmem:[%s0] sm:$0xff]
    %v236 = vld [vmem:[%s0 + $0x8] sm:$0xff]
    %v237 = vpack.c.bf16 %v236, %v235
    %v238 = vld [vmem:[%s1] sm:$0xff]
    %v239 = vld [vmem:[%s1 + $0x8] sm:$0xff]
    %v240 = vpack.c.bf16 %v239, %v238
    %s241 = scalar_lea.vmem [#allocation2], 2
    %v242 = vld [vmem:[%s241] sm:$0x3]
    %v243 = vld [vmem:[#allocation2] sm:$0x3]
    %v246 = vunpack.c.l.s4 1966171168
    %v247 = vunpack.c.0.s8 %v246
    %v248 = vlaneseq
    %v249 = vshrl.u32 %v248, 7
    %v250 = vsub.s32 %v247, %v249
    %v251 = vrot.slane %v243, %v250
    %v252 = vcombine.high %v251, %v251
    %v254 = vunpack.c.l.s4 1966171168
    %v255 = vunpack.c.0.s8 %v254
    %v256 = vlaneseq
    %v257 = vshrl.u32 %v256, 7
    %v258 = vsub.s32 %v255, %v257
    %v259 = vrot.slane %v251, %v258
    %v261 = vunpack.c.l.s4 1966171168
    %v262 = vunpack.c.0.s8 %v261
    %v263 = vlaneseq
    %v264 = vshrl.u32 %v263, 7
    %v265 = vsub.s32 %v262, %v264
    %v266 = vrot.slane %v252, %v265
    %vm267 = vcmask 15360
    %v269 = vsel %vm267, %v237, 0
    %vm271 = vcmask 1040384
    %v273 = vsel %vm271, %v259, 0
    %v276 = vsel %vm271, %v266, 0
    %278 = vmatprep.subr.bf16.mxu0 %v276
    %279 = vmatpush1.bf16.msra.mxu0 %v273
    %280 = vmatprep.subr.bf16.mxu0 0
    %281 = vmatpush1.bf16.msra.mxu0 0
    %282 = vmatprep.subr.bf16.mxu0 0
    %283 = vmatpush1.bf16.msra.mxu0 0
    %284 = vmatprep.subr.bf16.mxu0 0
    %285 = vmatpush1.bf16.msra.mxu0 0
    %286 = vmatprep.subr.bf16.mxu0 0
    %287 = vmatpush1.bf16.msra.mxu0 0
    %288 = vmatprep.subr.bf16.mxu0 0
    %289 = vmatpush1.bf16.msra.mxu0 0
    %290 = vmatprep.subr.bf16.mxu0 0
    %291 = vmatpush1.bf16.msra.mxu0 0
    %292 = vmatprep.subr.bf16.mxu0 0
    %293 = vmatpush1.bf16.msra.mxu0 0
    %294 = vmatprep.subr.bf16.mxu0 0
    %295 = vmatpush1.bf16.msra.mxu0 0
    %296 = vmatprep.subr.bf16.mxu0 0
    %297 = vmatpush1.bf16.msra.mxu0 0
    %298 = vmatprep.subr.bf16.mxu0 0
    %299 = vmatpush1.bf16.msra.mxu0 0
    %300 = vmatprep.subr.bf16.mxu0 0
    %301 = vmatpush1.bf16.msra.mxu0 0
    %302 = vmatprep.subr.bf16.mxu0 0
    %303 = vmatpush1.bf16.msra.mxu0 0
    %304 = vmatprep.subr.bf16.mxu0 0
    %305 = vmatpush1.bf16.msra.mxu0 0
    %306 = vmatprep.subr.bf16.mxu0 0
    %307 = vmatpush1.bf16.msra.mxu0 0
    %308 = vmatprep.subr.bf16.mxu0 0
    %309 = vmatpush1.bf16.msra.mxu0 0
    %310 = vmatprep.mubr.bf16.mxu0 0
    %311 = vmatmul.mubr.bf16.gmra.mrb[0].mxu0 %v269
    %v312 = vpop.f32.mrb[0].mxu0
    %v313 = vadd.f32 0.0, %v312
    %v314 = vpop.f32.mrb[0].mxu0
    %v315 = vadd.f32 0.0, %v314
    %v316 = vpop.f32.mrb[0].mxu0
    %v317 = vadd.f32 0.0, %v316
    %v318 = vpop.f32.mrb[0].mxu0
    %v319 = vadd.f32 0.0, %v318
    %320 = vdwg.mxu0
    %v321 = vrot.slane %v313, 7
    %v322 = vrot.slane %v315, 7
    %v323 = vrot.slane %v317, 7
    %v324 = vrot.slane %v319, 7
    %vm325 = vcmp.lt.s32.totalorder %v209, 1
    %v326 = vsel %vm325, %v321, %v323
    %v327 = vsel %vm325, %v322, %v324
    %v328 = vsel %vm325, %v323, %v321
    %v329 = vsel %vm325, %v324, %v322
    %vm330 = vcmp.ge.s32.totalorder %v233, 1
    %vm331 = vcmp.ge.s32.totalorder %v234, 1
    %v332 = vsel %vm330, 1, 0
    %v333 = vsel %vm331, 1, 0
    %vm334 = vcmp.eq.s32.totalorder %v332, 1
    %vm335 = vcmp.eq.s32.totalorder %v333, 1
    %v336 = vsel %vm334, %v328, 0.0
    %v337 = vsel %vm334, %v329, 0.0
    %v338 = vsel %vm335, %v326, 0.0
    %v339 = vsel %vm335, %v327, 0.0
    %v342 = vunpack.c.l.s4 1966171168
    %v343 = vunpack.c.0.s8 %v342
    %v344 = vlaneseq
    %v345 = vshrl.u32 %v344, 7
    %v346 = vsub.s32 %v343, %v345
    %v347 = vrot.slane %v242, %v346
    %v348 = vcombine.high %v347, %v347
    %v350 = vunpack.c.l.s4 1966171168
    %v351 = vunpack.c.0.s8 %v350
    %v352 = vlaneseq
    %v353 = vshrl.u32 %v352, 7
    %v354 = vsub.s32 %v351, %v353
    %v355 = vrot.slane %v347, %v354
    %v357 = vunpack.c.l.s4 1966171168
    %v358 = vunpack.c.0.s8 %v357
    %v359 = vlaneseq
    %v360 = vshrl.u32 %v359, 7
    %v361 = vsub.s32 %v358, %v360
    %v362 = vrot.slane %v348, %v361
    %v364 = vsel %vm271, %v355, 0
    %v367 = vsel %vm271, %v362, 0
    %369 = vmatprep.subr.bf16.mxu0 %v367
    %370 = vmatpush1.bf16.msra.mxu0 %v364
    %371 = vmatprep.subr.bf16.mxu0 0
    %372 = vmatpush1.bf16.msra.mxu0 0
    %373 = vmatprep.subr.bf16.mxu0 0
    %374 = vmatpush1.bf16.msra.mxu0 0
    %375 = vmatprep.subr.bf16.mxu0 0
    %376 = vmatpush1.bf16.msra.mxu0 0
    %377 = vmatprep.subr.bf16.mxu0 0
    %378 = vmatpush1.bf16.msra.mxu0 0
    %379 = vmatprep.subr.bf16.mxu0 0
    %380 = vmatpush1.bf16.msra.mxu0 0
    %381 = vmatprep.subr.bf16.mxu0 0
    %382 = vmatpush1.bf16.msra.mxu0 0
    %383 = vmatprep.subr.bf16.mxu0 0
    %384 = vmatpush1.bf16.msra.mxu0 0
    %385 = vmatprep.subr.bf16.mxu0 0
    %386 = vmatpush1.bf16.msra.mxu0 0
    %387 = vmatprep.subr.bf16.mxu0 0
    %388 = vmatpush1.bf16.msra.mxu0 0
    %389 = vmatprep.subr.bf16.mxu0 0
    %390 = vmatpush1.bf16.msra.mxu0 0
    %391 = vmatprep.subr.bf16.mxu0 0
    %392 = vmatpush1.bf16.msra.mxu0 0
    %393 = vmatprep.subr.bf16.mxu0 0
    %394 = vmatpush1.bf16.msra.mxu0 0
    %395 = vmatprep.subr.bf16.mxu0 0
    %396 = vmatpush1.bf16.msra.mxu0 0
    %397 = vmatprep.subr.bf16.mxu0 0
    %398 = vmatpush1.bf16.msra.mxu0 0
    %399 = vmatprep.subr.bf16.mxu0 0
    %400 = vmatpush1.bf16.msra.mxu0 0
    %401 = vmatprep.mubr.bf16.mxu0 0
    %402 = vmatmul.mubr.bf16.gmra.mrb[0].mxu0 %v269
    %v403 = vpop.f32.mrb[0].mxu0
    %v404 = vadd.f32 %v336, %v403
    %v405 = vpop.f32.mrb[0].mxu0
    %v406 = vadd.f32 %v337, %v405
    %v407 = vpop.f32.mrb[0].mxu0
    %v408 = vadd.f32 %v338, %v407
    %v409 = vpop.f32.mrb[0].mxu0
    %v410 = vadd.f32 %v339, %v409
    %411 = vdwg.mxu0
    %s412 = scalar_lea.vmem [#allocation2], 4
    %v413 = vld [vmem:[%s412] sm:$0x3]
    %v416 = vunpack.c.l.s4 1966171168
    %v417 = vunpack.c.0.s8 %v416
    %v418 = vlaneseq
    %v419 = vshrl.u32 %v418, 7
    %v420 = vsub.s32 %v417, %v419
    %v421 = vrot.slane %v413, %v420
    %v422 = vcombine.high %v421, %v421
    %v424 = vunpack.c.l.s4 1966171168
    %v425 = vunpack.c.0.s8 %v424
    %v426 = vlaneseq
    %v427 = vshrl.u32 %v426, 7
    %v428 = vsub.s32 %v425, %v427
    %v429 = vrot.slane %v421, %v428
    %v431 = vunpack.c.l.s4 1966171168
    %v432 = vunpack.c.0.s8 %v431
    %v433 = vlaneseq
    %v434 = vshrl.u32 %v433, 7
    %v435 = vsub.s32 %v432, %v434
    %v436 = vrot.slane %v422, %v435
    %v438 = vsel %vm271, %v429, 0
    %v441 = vsel %vm271, %v436, 0
    %443 = vmatprep.subr.bf16.mxu0 %v441
    %444 = vmatpush1.bf16.msra.mxu0 %v438
    %445 = vmatprep.subr.bf16.mxu0 0
    %446 = vmatpush1.bf16.msra.mxu0 0
    %447 = vmatprep.subr.bf16.mxu0 0
    %448 = vmatpush1.bf16.msra.mxu0 0
    %449 = vmatprep.subr.bf16.mxu0 0
    %450 = vmatpush1.bf16.msra.mxu0 0
    %451 = vmatprep.subr.bf16.mxu0 0
    %452 = vmatpush1.bf16.msra.mxu0 0
    %453 = vmatprep.subr.bf16.mxu0 0
    %454 = vmatpush1.bf16.msra.mxu0 0
    %455 = vmatprep.subr.bf16.mxu0 0
    %456 = vmatpush1.bf16.msra.mxu0 0
    %457 = vmatprep.subr.bf16.mxu0 0
    %458 = vmatpush1.bf16.msra.mxu0 0
    %459 = vmatprep.subr.bf16.mxu0 0
    %460 = vmatpush1.bf16.msra.mxu0 0
    %461 = vmatprep.subr.bf16.mxu0 0
    %462 = vmatpush1.bf16.msra.mxu0 0
    %463 = vmatprep.subr.bf16.mxu0 0
    %464 = vmatpush1.bf16.msra.mxu0 0
    %465 = vmatprep.subr.bf16.mxu0 0
    %466 = vmatpush1.bf16.msra.mxu0 0
    %467 = vmatprep.subr.bf16.mxu0 0
    %468 = vmatpush1.bf16.msra.mxu0 0
    %469 = vmatprep.subr.bf16.mxu0 0
    %470 = vmatpush1.bf16.msra.mxu0 0
    %471 = vmatprep.subr.bf16.mxu0 0
    %472 = vmatpush1.bf16.msra.mxu0 0
    %473 = vmatprep.subr.bf16.mxu0 0
    %474 = vmatpush1.bf16.msra.mxu0 0
    %475 = vmatprep.mubr.bf16.mxu0 0
    %476 = vmatmul.mubr.bf16.gmra.mrb[0].mxu0 %v269
    %v477 = vpop.f32.mrb[0].mxu0
    %v478 = vadd.f32 0.0, %v477
    %v479 = vpop.f32.mrb[0].mxu0
    %v480 = vadd.f32 0.0, %v479
    %v481 = vpop.f32.mrb[0].mxu0
    %v482 = vadd.f32 0.0, %v481
    %v483 = vpop.f32.mrb[0].mxu0
    %v484 = vadd.f32 0.0, %v483
    %485 = vdwg.mxu0
    %v486 = vrot.slane %v478, 1
    %v487 = vrot.slane %v480, 1
    %v488 = vrot.slane %v482, 1
    %v489 = vrot.slane %v484, 1
    %vm490 = vcmp.lt.s32.totalorder %v209, 7
    %v491 = vsel %vm490, %v486, %v488
    %v492 = vsel %vm490, %v487, %v489
    %v493 = vsel %vm490, %v488, %v486
    %v494 = vsel %vm490, %v489, %v487
    %vm495 = vcmp.lt.s32.totalorder %v233, 7
    %vm496 = vcmp.lt.s32.totalorder %v234, 7
    %v497 = vsel %vm495, 1, 0
    %v498 = vsel %vm496, 1, 0
    %vm499 = vcmp.eq.s32.totalorder %v497, 1
    %vm500 = vcmp.eq.s32.totalorder %v498, 1
    %v501 = vsel %vm499, %v491, 0.0
    %v502 = vsel %vm499, %v492, 0.0
    %v503 = vsel %vm500, %v493, 0.0
    %v504 = vsel %vm500, %v494, 0.0
    %v505 = vadd.f32 %v404, %v501
    %v506 = vadd.f32 %v406, %v502
    %v507 = vadd.f32 %v408, %v503
    %v508 = vadd.f32 %v410, %v504
    %v509 = vld [vmem:[#allocation4] sm:$0x3]
    %v511 = vlaneseq
    %v512 = vshrl.u32 %v511, 7
    %v513 = vsub.s32 0, %v512
    %v514 = vrot.slane %v509, %v513
    %v515 = vlaneseq
    %v516 = vshrl.u32 %v515, 7
    %v517 = vsub.s32 1, %v516
    %v518 = vrot.slane %v509, %v517
    %v521 = vadd.f32 %v505, %v514
    %v522 = vadd.f32 %v506, %v518
    %v523 = vadd.f32 %v507, %v514
    %v524 = vadd.f32 %v508, %v518
    %v525 = vmax.f32 %v521, 0.0
    %v526 = vmax.f32 %v522, 0.0
    %v527 = vmax.f32 %v523, 0.0
    %v528 = vmax.f32 %v524, 0.0
    %v529 = vpack.c.bf16 %v527, %v525
    %v530 = vpack.c.bf16 %v528, %v526
    %s531 = scalar_lea.vmem [#allocation6], 512
    %v532 = vld [vmem:[%s531] sm:$0xff]
    %v533 = vld [vmem:[%s531 + $0x8] sm:$0xff]
    %v534 = vld [vmem:[%s531 + $0x10] sm:$0xff]
    %v535 = vld [vmem:[%s531 + $0x18] sm:$0xff]
    %v536 = vld [vmem:[%s531 + $0x20] sm:$0xff]
    %v537 = vld [vmem:[%s531 + $0x28] sm:$0xff]
    %v538 = vld [vmem:[%s531 + $0x30] sm:$0xff]
    %v539 = vld [vmem:[%s531 + $0x38] sm:$0xff]
    %v540 = vld [vmem:[%s531 + $0x40] sm:$0xff]
    %v541 = vld [vmem:[%s531 + $0x48] sm:$0xff]
    %v542 = vld [vmem:[%s531 + $0x50] sm:$0xff]
    %v543 = vld [vmem:[%s531 + $0x58] sm:$0xff]
    %v544 = vld [vmem:[%s531 + $0x60] sm:$0xff]
    %v545 = vld [vmem:[%s531 + $0x68] sm:$0xff]
    %v546 = vld [vmem:[%s531 + $0x70] sm:$0xff]
    %v547 = vld [vmem:[%s531 + $0x78] sm:$0xff]
    %v548 = vld [vmem:[%s531 + $0x80] sm:$0xff]
    %v549 = vld [vmem:[%s531 + $0x88] sm:$0xff]
    %v550 = vld [vmem:[%s531 + $0x90] sm:$0xff]
    %v551 = vld [vmem:[%s531 + $0x98] sm:$0xff]
    %v552 = vld [vmem:[%s531 + $0xa0] sm:$0xff]
    %v553 = vld [vmem:[%s531 + $0xa8] sm:$0xff]
    %v554 = vld [vmem:[%s531 + $0xb0] sm:$0xff]
    %v555 = vld [vmem:[%s531 + $0xb8] sm:$0xff]
    %v556 = vld [vmem:[%s531 + $0xc0] sm:$0xff]
    %v557 = vld [vmem:[%s531 + $0xc8] sm:$0xff]
    %v558 = vld [vmem:[%s531 + $0xd0] sm:$0xff]
    %v559 = vld [vmem:[%s531 + $0xd8] sm:$0xff]
    %v560 = vld [vmem:[%s531 + $0xe0] sm:$0xff]
    %v561 = vld [vmem:[%s531 + $0xe8] sm:$0xff]
    %v562 = vld [vmem:[%s531 + $0xf0] sm:$0xff]
    %v563 = vld [vmem:[%s531 + $0xf8] sm:$0xff]
    %v564 = vld [vmem:[%s531 + $0x100] sm:$0xff]
    %v565 = vld [vmem:[%s531 + $0x108] sm:$0xff]
    %v566 = vld [vmem:[%s531 + $0x110] sm:$0xff]
    %v567 = vld [vmem:[%s531 + $0x118] sm:$0xff]
    %v568 = vld [vmem:[%s531 + $0x120] sm:$0xff]
    %v569 = vld [vmem:[%s531 + $0x128] sm:$0xff]
    %v570 = vld [vmem:[%s531 + $0x130] sm:$0xff]
    %v571 = vld [vmem:[%s531 + $0x138] sm:$0xff]
    %v572 = vld [vmem:[%s531 + $0x140] sm:$0xff]
    %v573 = vld [vmem:[%s531 + $0x148] sm:$0xff]
    %v574 = vld [vmem:[%s531 + $0x150] sm:$0xff]
    %v575 = vld [vmem:[%s531 + $0x158] sm:$0xff]
    %v576 = vld [vmem:[%s531 + $0x160] sm:$0xff]
    %v577 = vld [vmem:[%s531 + $0x168] sm:$0xff]
    %v578 = vld [vmem:[%s531 + $0x170] sm:$0xff]
    %v579 = vld [vmem:[%s531 + $0x178] sm:$0xff]
    %v580 = vld [vmem:[%s531 + $0x180] sm:$0xff]
    %v581 = vld [vmem:[%s531 + $0x188] sm:$0xff]
    %v582 = vld [vmem:[%s531 + $0x190] sm:$0xff]
    %v583 = vld [vmem:[%s531 + $0x198] sm:$0xff]
    %v584 = vld [vmem:[%s531 + $0x1a0] sm:$0xff]
    %v585 = vld [vmem:[%s531 + $0x1a8] sm:$0xff]
    %v586 = vld [vmem:[%s531 + $0x1b0] sm:$0xff]
    %v587 = vld [vmem:[%s531 + $0x1b8] sm:$0xff]
    %v588 = vld [vmem:[%s531 + $0x1c0] sm:$0xff]
    %v589 = vld [vmem:[%s531 + $0x1c8] sm:$0xff]
    %v590 = vld [vmem:[%s531 + $0x1d0] sm:$0xff]
    %v591 = vld [vmem:[%s531 + $0x1d8] sm:$0xff]
    %v592 = vld [vmem:[%s531 + $0x1e0] sm:$0xff]
    %v593 = vld [vmem:[%s531 + $0x1e8] sm:$0xff]
    %v594 = vld [vmem:[%s531 + $0x1f0] sm:$0xff]
    %v595 = vld [vmem:[%s531 + $0x1f8] sm:$0xff]
    %v596 = vld [vmem:[#allocation6] sm:$0xff]
    %v597 = vld [vmem:[#allocation6 + $0x8] sm:$0xff]
    %v598 = vld [vmem:[#allocation6 + $0x10] sm:$0xff]
    %v599 = vld [vmem:[#allocation6 + $0x18] sm:$0xff]
    %v600 = vld [vmem:[#allocation6 + $0x20] sm:$0xff]
    %v601 = vld [vmem:[#allocation6 + $0x28] sm:$0xff]
    %v602 = vld [vmem:[#allocation6 + $0x30] sm:$0xff]
    %v603 = vld [vmem:[#allocation6 + $0x38] sm:$0xff]
    %v604 = vld [vmem:[#allocation6 + $0x40] sm:$0xff]
    %v605 = vld [vmem:[#allocation6 + $0x48] sm:$0xff]
    %v606 = vld [vmem:[#allocation6 + $0x50] sm:$0xff]
    %v607 = vld [vmem:[#allocation6 + $0x58] sm:$0xff]
    %v608 = vld [vmem:[#allocation6 + $0x60] sm:$0xff]
    %v609 = vld [vmem:[#allocation6 + $0x68] sm:$0xff]
    %v610 = vld [vmem:[#allocation6 + $0x70] sm:$0xff]
    %v611 = vld [vmem:[#allocation6 + $0x78] sm:$0xff]
    %v612 = vld [vmem:[#allocation6 + $0x80] sm:$0xff]
    %v613 = vld [vmem:[#allocation6 + $0x88] sm:$0xff]
    %v614 = vld [vmem:[#allocation6 + $0x90] sm:$0xff]
    %v615 = vld [vmem:[#allocation6 + $0x98] sm:$0xff]
    %v616 = vld [vmem:[#allocation6 + $0xa0] sm:$0xff]
    %v617 = vld [vmem:[#allocation6 + $0xa8] sm:$0xff]
    %v618 = vld [vmem:[#allocation6 + $0xb0] sm:$0xff]
    %v619 = vld [vmem:[#allocation6 + $0xb8] sm:$0xff]
    %v620 = vld [vmem:[#allocation6 + $0xc0] sm:$0xff]
    %v621 = vld [vmem:[#allocation6 + $0xc8] sm:$0xff]
    %v622 = vld [vmem:[#allocation6 + $0xd0] sm:$0xff]
    %v623 = vld [vmem:[#allocation6 + $0xd8] sm:$0xff]
    %v624 = vld [vmem:[#allocation6 + $0xe0] sm:$0xff]
    %v625 = vld [vmem:[#allocation6 + $0xe8] sm:$0xff]
    %v626 = vld [vmem:[#allocation6 + $0xf0] sm:$0xff]
    %v627 = vld [vmem:[#allocation6 + $0xf8] sm:$0xff]
    %v628 = vld [vmem:[#allocation6 + $0x100] sm:$0xff]
    %v629 = vld [vmem:[#allocation6 + $0x108] sm:$0xff]
    %v630 = vld [vmem:[#allocation6 + $0x110] sm:$0xff]
    %v631 = vld [vmem:[#allocation6 + $0x118] sm:$0xff]
    %v632 = vld [vmem:[#allocation6 + $0x120] sm:$0xff]
    %v633 = vld [vmem:[#allocation6 + $0x128] sm:$0xff]
    %v634 = vld [vmem:[#allocation6 + $0x130] sm:$0xff]
    %v635 = vld [vmem:[#allocation6 + $0x138] sm:$0xff]
    %v636 = vld [vmem:[#allocation6 + $0x140] sm:$0xff]
    %v637 = vld [vmem:[#allocation6 + $0x148] sm:$0xff]
    %v638 = vld [vmem:[#allocation6 + $0x150] sm:$0xff]
    %v639 = vld [vmem:[#allocation6 + $0x158] sm:$0xff]
    %v640 = vld [vmem:[#allocation6 + $0x160] sm:$0xff]
    %v641 = vld [vmem:[#allocation6 + $0x168] sm:$0xff]
    %v642 = vld [vmem:[#allocation6 + $0x170] sm:$0xff]
    %v643 = vld [vmem:[#allocation6 + $0x178] sm:$0xff]
    %v644 = vld [vmem:[#allocation6 + $0x180] sm:$0xff]
    %v645 = vld [vmem:[#allocation6 + $0x188] sm:$0xff]
    %v646 = vld [vmem:[#allocation6 + $0x190] sm:$0xff]
    %v647 = vld [vmem:[#allocation6 + $0x198] sm:$0xff]
    %v648 = vld [vmem:[#allocation6 + $0x1a0] sm:$0xff]
    %v649 = vld [vmem:[#allocation6 + $0x1a8] sm:$0xff]
    %v650 = vld [vmem:[#allocation6 + $0x1b0] sm:$0xff]
    %v651 = vld [vmem:[#allocation6 + $0x1b8] sm:$0xff]
    %v652 = vld [vmem:[#allocation6 + $0x1c0] sm:$0xff]
    %v653 = vld [vmem:[#allocation6 + $0x1c8] sm:$0xff]
    %v654 = vld [vmem:[#allocation6 + $0x1d0] sm:$0xff]
    %v655 = vld [vmem:[#allocation6 + $0x1d8] sm:$0xff]
    %v656 = vld [vmem:[#allocation6 + $0x1e0] sm:$0xff]
    %v657 = vld [vmem:[#allocation6 + $0x1e8] sm:$0xff]
    %v658 = vld [vmem:[#allocation6 + $0x1f0] sm:$0xff]
    %v659 = vld [vmem:[#allocation6 + $0x1f8] sm:$0xff]
    %v724 = vunpack.c.l.b16 %v596
    %v725 = vunpack.c.h.b16 %v596
    %v726 = vunpack.c.l.b16 %v597
    %v727 = vunpack.c.h.b16 %v597
    %v728 = vunpack.c.l.b16 %v598
    %v729 = vunpack.c.h.b16 %v598
    %v730 = vunpack.c.l.b16 %v599
    %v731 = vunpack.c.h.b16 %v599
    %v732 = vunpack.c.l.b16 %v600
    %v733 = vunpack.c.h.b16 %v600
    %v734 = vunpack.c.l.b16 %v601
    %v735 = vunpack.c.h.b16 %v601
    %v736 = vunpack.c.l.b16 %v602
    %v737 = vunpack.c.h.b16 %v602
    %v738 = vunpack.c.l.b16 %v603
    %v739 = vunpack.c.h.b16 %v603
    %v740 = vunpack.c.l.b16 %v604
    %v741 = vunpack.c.h.b16 %v604
    %v742 = vunpack.c.l.b16 %v605
    %v743 = vunpack.c.h.b16 %v605
    %v744 = vunpack.c.l.b16 %v606
    %v745 = vunpack.c.h.b16 %v606
    %v746 = vunpack.c.l.b16 %v607
    %v747 = vunpack.c.h.b16 %v607
    %v748 = vunpack.c.l.b16 %v608
    %v749 = vunpack.c.h.b16 %v608
    %v750 = vunpack.c.l.b16 %v609
    %v751 = vunpack.c.h.b16 %v609
    %v752 = vunpack.c.l.b16 %v610
    %v753 = vunpack.c.h.b16 %v610
    %v754 = vunpack.c.l.b16 %v611
    %v755 = vunpack.c.h.b16 %v611
    %v756 = vunpack.c.l.b16 %v612
    %v757 = vunpack.c.h.b16 %v612
    %v758 = vunpack.c.l.b16 %v613
    %v759 = vunpack.c.h.b16 %v613
    %v760 = vunpack.c.l.b16 %v614
    %v761 = vunpack.c.h.b16 %v614
    %v762 = vunpack.c.l.b16 %v615
    %v763 = vunpack.c.h.b16 %v615
    %v764 = vunpack.c.l.b16 %v616
    %v765 = vunpack.c.h.b16 %v616
    %v766 = vunpack.c.l.b16 %v617
    %v767 = vunpack.c.h.b16 %v617
    %v768 = vunpack.c.l.b16 %v618
    %v769 = vunpack.c.h.b16 %v618
    %v770 = vunpack.c.l.b16 %v619
    %v771 = vunpack.c.h.b16 %v619
    %v772 = vunpack.c.l.b16 %v620
    %v773 = vunpack.c.h.b16 %v620
    %v774 = vunpack.c.l.b16 %v621
    %v775 = vunpack.c.h.b16 %v621
    %v776 = vunpack.c.l.b16 %v622
    %v777 = vunpack.c.h.b16 %v622
    %v778 = vunpack.c.l.b16 %v623
    %v779 = vunpack.c.h.b16 %v623
    %v780 = vunpack.c.l.b16 %v624
    %v781 = vunpack.c.h.b16 %v624
    %v782 = vunpack.c.l.b16 %v625
    %v783 = vunpack.c.h.b16 %v625
    %v784 = vunpack.c.l.b16 %v626
    %v785 = vunpack.c.h.b16 %v626
    %v786 = vunpack.c.l.b16 %v627
    %v787 = vunpack.c.h.b16 %v627
    %v788 = vunpack.c.l.b16 %v628
    %v789 = vunpack.c.h.b16 %v628
    %v790 = vunpack.c.l.b16 %v629
    %v791 = vunpack.c.h.b16 %v629
    %v792 = vunpack.c.l.b16 %v630
    %v793 = vunpack.c.h.b16 %v630
    %v794 = vunpack.c.l.b16 %v631
    %v795 = vunpack.c.h.b16 %v631
    %v796 = vunpack.c.l.b16 %v632
    %v797 = vunpack.c.h.b16 %v632
    %v798 = vunpack.c.l.b16 %v633
    %v799 = vunpack.c.h.b16 %v633
    %v800 = vunpack.c.l.b16 %v634
    %v801 = vunpack.c.h.b16 %v634
    %v802 = vunpack.c.l.b16 %v635
    %v803 = vunpack.c.h.b16 %v635
    %v804 = vunpack.c.l.b16 %v636
    %v805 = vunpack.c.h.b16 %v636
    %v806 = vunpack.c.l.b16 %v637
    %v807 = vunpack.c.h.b16 %v637
    %v808 = vunpack.c.l.b16 %v638
    %v809 = vunpack.c.h.b16 %v638
    %v810 = vunpack.c.l.b16 %v639
    %v811 = vunpack.c.h.b16 %v639
    %v812 = vunpack.c.l.b16 %v640
    %v813 = vunpack.c.h.b16 %v640
    %v814 = vunpack.c.l.b16 %v641
    %v815 = vunpack.c.h.b16 %v641
    %v816 = vunpack.c.l.b16 %v642
    %v817 = vunpack.c.h.b16 %v642
    %v818 = vunpack.c.l.b16 %v643
    %v819 = vunpack.c.h.b16 %v643
    %v820 = vunpack.c.l.b16 %v644
    %v821 = vunpack.c.h.b16 %v644
    %v822 = vunpack.c.l.b16 %v645
    %v823 = vunpack.c.h.b16 %v645
    %v824 = vunpack.c.l.b16 %v646
    %v825 = vunpack.c.h.b16 %v646
    %v826 = vunpack.c.l.b16 %v647
    %v827 = vunpack.c.h.b16 %v647
    %v828 = vunpack.c.l.b16 %v648
    %v829 = vunpack.c.h.b16 %v648
    %v830 = vunpack.c.l.b16 %v649
    %v831 = vunpack.c.h.b16 %v649
    %v832 = vunpack.c.l.b16 %v650
    %v833 = vunpack.c.h.b16 %v650
    %v834 = vunpack.c.l.b16 %v651
    %v835 = vunpack.c.h.b16 %v651
    %v836 = vunpack.c.l.b16 %v652
    %v837 = vunpack.c.h.b16 %v652
    %v838 = vunpack.c.l.b16 %v653
    %v839 = vunpack.c.h.b16 %v653
    %v840 = vunpack.c.l.b16 %v654
    %v841 = vunpack.c.h.b16 %v654
    %v842 = vunpack.c.l.b16 %v655
    %v843 = vunpack.c.h.b16 %v655
    %v844 = vunpack.c.l.b16 %v656
    %v845 = vunpack.c.h.b16 %v656
    %v846 = vunpack.c.l.b16 %v657
    %v847 = vunpack.c.h.b16 %v657
    %v848 = vunpack.c.l.b16 %v658
    %v849 = vunpack.c.h.b16 %v658
    %v850 = vunpack.c.l.b16 %v659
    %v851 = vunpack.c.h.b16 %v659
    %v852 = vpack.c.b16 %v728, %v724
    %v853 = vpack.c.b16 %v729, %v725
    %v854 = vpack.c.b16 %v730, %v726
    %v855 = vpack.c.b16 %v731, %v727
    %v856 = vpack.c.b16 %v736, %v732
    %v857 = vpack.c.b16 %v737, %v733
    %v858 = vpack.c.b16 %v738, %v734
    %v859 = vpack.c.b16 %v739, %v735
    %v860 = vpack.c.b16 %v744, %v740
    %v861 = vpack.c.b16 %v745, %v741
    %v862 = vpack.c.b16 %v746, %v742
    %v863 = vpack.c.b16 %v747, %v743
    %v864 = vpack.c.b16 %v752, %v748
    %v865 = vpack.c.b16 %v753, %v749
    %v866 = vpack.c.b16 %v754, %v750
    %v867 = vpack.c.b16 %v755, %v751
    %v868 = vpack.c.b16 %v760, %v756
    %v869 = vpack.c.b16 %v761, %v757
    %v870 = vpack.c.b16 %v762, %v758
    %v871 = vpack.c.b16 %v763, %v759
    %v872 = vpack.c.b16 %v768, %v764
    %v873 = vpack.c.b16 %v769, %v765
    %v874 = vpack.c.b16 %v770, %v766
    %v875 = vpack.c.b16 %v771, %v767
    %v876 = vpack.c.b16 %v776, %v772
    %v877 = vpack.c.b16 %v777, %v773
    %v878 = vpack.c.b16 %v778, %v774
    %v879 = vpack.c.b16 %v779, %v775
    %v880 = vpack.c.b16 %v784, %v780
    %v881 = vpack.c.b16 %v785, %v781
    %v882 = vpack.c.b16 %v786, %v782
    %v883 = vpack.c.b16 %v787, %v783
    %v884 = vpack.c.b16 %v792, %v788
    %v885 = vpack.c.b16 %v793, %v789
    %v886 = vpack.c.b16 %v794, %v790
    %v887 = vpack.c.b16 %v795, %v791
    %v888 = vpack.c.b16 %v800, %v796
    %v889 = vpack.c.b16 %v801, %v797
    %v890 = vpack.c.b16 %v802, %v798
    %v891 = vpack.c.b16 %v803, %v799
    %v892 = vpack.c.b16 %v808, %v804
    %v893 = vpack.c.b16 %v809, %v805
    %v894 = vpack.c.b16 %v810, %v806
    %v895 = vpack.c.b16 %v811, %v807
    %v896 = vpack.c.b16 %v816, %v812
    %v897 = vpack.c.b16 %v817, %v813
    %v898 = vpack.c.b16 %v818, %v814
    %v899 = vpack.c.b16 %v819, %v815
    %v900 = vpack.c.b16 %v824, %v820
    %v901 = vpack.c.b16 %v825, %v821
    %v902 = vpack.c.b16 %v826, %v822
    %v903 = vpack.c.b16 %v827, %v823
    %v904 = vpack.c.b16 %v832, %v828
    %v905 = vpack.c.b16 %v833, %v829
    %v906 = vpack.c.b16 %v834, %v830
    %v907 = vpack.c.b16 %v835, %v831
    %v908 = vpack.c.b16 %v840, %v836
    %v909 = vpack.c.b16 %v841, %v837
    %v910 = vpack.c.b16 %v842, %v838
    %v911 = vpack.c.b16 %v843, %v839
    %v912 = vpack.c.b16 %v848, %v844
    %v913 = vpack.c.b16 %v849, %v845
    %v914 = vpack.c.b16 %v850, %v846
    %v915 = vpack.c.b16 %v851, %v847
    %980 = vmatprep.subr.bf16.mxu0 %v853
    %981 = vmatpush1.bf16.msra.mxu0 %v852
    %982 = vmatprep.subr.bf16.mxu0 %v857
    %983 = vmatpush1.bf16.msra.mxu0 %v856
    %984 = vmatprep.subr.bf16.mxu0 %v861
    %985 = vmatpush1.bf16.msra.mxu0 %v860
    %986 = vmatprep.subr.bf16.mxu0 %v865
    %987 = vmatpush1.bf16.msra.mxu0 %v864
    %988 = vmatprep.subr.bf16.mxu0 %v869
    %989 = vmatpush1.bf16.msra.mxu0 %v868
    %990 = vmatprep.subr.bf16.mxu0 %v873
    %991 = vmatpush1.bf16.msra.mxu0 %v872
    %992 = vmatprep.subr.bf16.mxu0 %v877
    %993 = vmatpush1.bf16.msra.mxu0 %v876
    %994 = vmatprep.subr.bf16.mxu0 %v881
    %995 = vmatpush1.bf16.msra.mxu0 %v880
    %996 = vmatprep.subr.bf16.mxu0 %v885
    %997 = vmatpush1.bf16.msra.mxu0 %v884
    %998 = vmatprep.subr.bf16.mxu0 %v889
    %999 = vmatpush1.bf16.msra.mxu0 %v888
    %1000 = vmatprep.subr.bf16.mxu0 %v893
    %1001 = vmatpush1.bf16.msra.mxu0 %v892
    %1002 = vmatprep.subr.bf16.mxu0 %v897
    %1003 = vmatpush1.bf16.msra.mxu0 %v896
    %1004 = vmatprep.subr.bf16.mxu0 %v901
    %1005 = vmatpush1.bf16.msra.mxu0 %v900
    %1006 = vmatprep.subr.bf16.mxu0 %v905
    %1007 = vmatpush1.bf16.msra.mxu0 %v904
    %1008 = vmatprep.subr.bf16.mxu0 %v909
    %1009 = vmatpush1.bf16.msra.mxu0 %v908
    %1010 = vmatprep.subr.bf16.mxu0 %v913
    %1011 = vmatpush1.bf16.msra.mxu0 %v912
    %1012 = vmatprep.mubr.bf16.mxu0 %v530
    %1013 = vmatmul.mubr.bf16.gmra.mrb[0].mxu0 %v529
    %v1014 = vpop.f32.mrb[0].mxu0
    %v1015 = vadd.f32 0.0, %v1014
    %v1016 = vpop.f32.mrb[0].mxu0
    %v1017 = vadd.f32 0.0, %v1016
    %v1018 = vpop.f32.mrb[0].mxu0
    %v1019 = vadd.f32 0.0, %v1018
    %v1020 = vpop.f32.mrb[0].mxu0
    %v1021 = vadd.f32 0.0, %v1020
    %1022 = vdwg.mxu0
    %1023 = vmatprep.subr.bf16.mxu0 %v855
    %1024 = vmatpush1.bf16.msra.mxu0 %v854
    %1025 = vmatprep.subr.bf16.mxu0 %v859
    %1026 = vmatpush1.bf16.msra.mxu0 %v858
    %1027 = vmatprep.subr.bf16.mxu0 %v863
    %1028 = vmatpush1.bf16.msra.mxu0 %v862
    %1029 = vmatprep.subr.bf16.mxu0 %v867
    %1030 = vmatpush1.bf16.msra.mxu0 %v866
    %1031 = vmatprep.subr.bf16.mxu0 %v871
    %1032 = vmatpush1.bf16.msra.mxu0 %v870
    %1033 = vmatprep.subr.bf16.mxu0 %v875
    %1034 = vmatpush1.bf16.msra.mxu0 %v874
    %1035 = vmatprep.subr.bf16.mxu0 %v879
    %1036 = vmatpush1.bf16.msra.mxu0 %v878
    %1037 = vmatprep.subr.bf16.mxu0 %v883
    %1038 = vmatpush1.bf16.msra.mxu0 %v882
    %1039 = vmatprep.subr.bf16.mxu0 %v887
    %1040 = vmatpush1.bf16.msra.mxu0 %v886
    %1041 = vmatprep.subr.bf16.mxu0 %v891
    %1042 = vmatpush1.bf16.msra.mxu0 %v890
    %1043 = vmatprep.subr.bf16.mxu0 %v895
    %1044 = vmatpush1.bf16.msra.mxu0 %v894
    %1045 = vmatprep.subr.bf16.mxu0 %v899
    %1046 = vmatpush1.bf16.msra.mxu0 %v898
    %1047 = vmatprep.subr.bf16.mxu0 %v903
    %1048 = vmatpush1.bf16.msra.mxu0 %v902
    %1049 = vmatprep.subr.bf16.mxu0 %v907
    %1050 = vmatpush1.bf16.msra.mxu0 %v906
    %1051 = vmatprep.subr.bf16.mxu0 %v911
    %1052 = vmatpush1.bf16.msra.mxu0 %v910
    %1053 = vmatprep.subr.bf16.mxu0 %v915
    %1054 = vmatpush1.bf16.msra.mxu0 %v914
    %1055 = vmatprep.mubr.bf16.mxu0 %v530
    %1056 = vmatmul.mubr.bf16.gmra.mrb[0].mxu0 %v529
    %v1057 = vpop.f32.mrb[0].mxu0
    %v1058 = vadd.f32 0.0, %v1057
    %v1059 = vpop.f32.mrb[0].mxu0
    %v1060 = vadd.f32 0.0, %v1059
    %v1061 = vpop.f32.mrb[0].mxu0
    %v1062 = vadd.f32 0.0, %v1061
    %v1063 = vpop.f32.mrb[0].mxu0
    %v1064 = vadd.f32 0.0, %v1063
    %1065 = vdwg.mxu0
    %v1066 = vrot.slane %v1015, 7
    %v1067 = vrot.slane %v1017, 7
    %v1068 = vrot.slane %v1058, 7
    %v1069 = vrot.slane %v1060, 7
    %v1070 = vrot.slane %v1019, 7
    %v1071 = vrot.slane %v1021, 7
    %v1072 = vrot.slane %v1062, 7
    %v1073 = vrot.slane %v1064, 7
    %v1074 = vsel %vm325, %v1066, %v1070
    %v1075 = vsel %vm325, %v1067, %v1071
    %v1076 = vsel %vm325, %v1068, %v1072
    %v1077 = vsel %vm325, %v1069, %v1073
    %v1078 = vsel %vm325, %v1070, %v1066
    %v1079 = vsel %vm325, %v1071, %v1067
    %v1080 = vsel %vm325, %v1072, %v1068
    %v1081 = vsel %vm325, %v1073, %v1069
    %v1082 = vsel %vm334, %v1078, 0.0
    %v1083 = vsel %vm334, %v1079, 0.0
    %v1084 = vsel %vm334, %v1080, 0.0
    %v1085 = vsel %vm334, %v1081, 0.0
    %v1086 = vsel %vm335, %v1074, 0.0
    %v1087 = vsel %vm335, %v1075, 0.0
    %v1088 = vsel %vm335, %v1076, 0.0
    %v1089 = vsel %vm335, %v1077, 0.0
    %v1154 = vunpack.c.l.b16 %v532
    %v1155 = vunpack.c.h.b16 %v532
    %v1156 = vunpack.c.l.b16 %v533
    %v1157 = vunpack.c.h.b16 %v533
    %v1158 = vunpack.c.l.b16 %v534
    %v1159 = vunpack.c.h.b16 %v534
    %v1160 = vunpack.c.l.b16 %v535
    %v1161 = vunpack.c.h.b16 %v535
    %v1162 = vunpack.c.l.b16 %v536
    %v1163 = vunpack.c.h.b16 %v536
    %v1164 = vunpack.c.l.b16 %v537
    %v1165 = vunpack.c.h.b16 %v537
    %v1166 = vunpack.c.l.b16 %v538
    %v1167 = vunpack.c.h.b16 %v538
    %v1168 = vunpack.c.l.b16 %v539
    %v1169 = vunpack.c.h.b16 %v539
    %v1170 = vunpack.c.l.b16 %v540
    %v1171 = vunpack.c.h.b16 %v540
    %v1172 = vunpack.c.l.b16 %v541
    %v1173 = vunpack.c.h.b16 %v541
    %v1174 = vunpack.c.l.b16 %v542
    %v1175 = vunpack.c.h.b16 %v542
    %v1176 = vunpack.c.l.b16 %v543
    %v1177 = vunpack.c.h.b16 %v543
    %v1178 = vunpack.c.l.b16 %v544
    %v1179 = vunpack.c.h.b16 %v544
    %v1180 = vunpack.c.l.b16 %v545
    %v1181 = vunpack.c.h.b16 %v545
    %v1182 = vunpack.c.l.b16 %v546
    %v1183 = vunpack.c.h.b16 %v546
    %v1184 = vunpack.c.l.b16 %v547
    %v1185 = vunpack.c.h.b16 %v547
    %v1186 = vunpack.c.l.b16 %v548
    %v1187 = vunpack.c.h.b16 %v548
    %v1188 = vunpack.c.l.b16 %v549
    %v1189 = vunpack.c.h.b16 %v549
    %v1190 = vunpack.c.l.b16 %v550
    %v1191 = vunpack.c.h.b16 %v550
    %v1192 = vunpack.c.l.b16 %v551
    %v1193 = vunpack.c.h.b16 %v551
    %v1194 = vunpack.c.l.b16 %v552
    %v1195 = vunpack.c.h.b16 %v552
    %v1196 = vunpack.c.l.b16 %v553
    %v1197 = vunpack.c.h.b16 %v553
    %v1198 = vunpack.c.l.b16 %v554
    %v1199 = vunpack.c.h.b16 %v554
    %v1200 = vunpack.c.l.b16 %v555
    %v1201 = vunpack.c.h.b16 %v555
    %v1202 = vunpack.c.l.b16 %v556
    %v1203 = vunpack.c.h.b16 %v556
    %v1204 = vunpack.c.l.b16 %v557
    %v1205 = vunpack.c.h.b16 %v557
    %v1206 = vunpack.c.l.b16 %v558
    %v1207 = vunpack.c.h.b16 %v558
    %v1208 = vunpack.c.l.b16 %v559
    %v1209 = vunpack.c.h.b16 %v559
    %v1210 = vunpack.c.l.b16 %v560
    %v1211 = vunpack.c.h.b16 %v560
    %v1212 = vunpack.c.l.b16 %v561
    %v1213 = vunpack.c.h.b16 %v561
    %v1214 = vunpack.c.l.b16 %v562
    %v1215 = vunpack.c.h.b16 %v562
    %v1216 = vunpack.c.l.b16 %v563
    %v1217 = vunpack.c.h.b16 %v563
    %v1218 = vunpack.c.l.b16 %v564
    %v1219 = vunpack.c.h.b16 %v564
    %v1220 = vunpack.c.l.b16 %v565
    %v1221 = vunpack.c.h.b16 %v565
    %v1222 = vunpack.c.l.b16 %v566
    %v1223 = vunpack.c.h.b16 %v566
    %v1224 = vunpack.c.l.b16 %v567
    %v1225 = vunpack.c.h.b16 %v567
    %v1226 = vunpack.c.l.b16 %v568
    %v1227 = vunpack.c.h.b16 %v568
    %v1228 = vunpack.c.l.b16 %v569
    %v1229 = vunpack.c.h.b16 %v569
    %v1230 = vunpack.c.l.b16 %v570
    %v1231 = vunpack.c.h.b16 %v570
    %v1232 = vunpack.c.l.b16 %v571
    %v1233 = vunpack.c.h.b16 %v571
    %v1234 = vunpack.c.l.b16 %v572
    %v1235 = vunpack.c.h.b16 %v572
    %v1236 = vunpack.c.l.b16 %v573
    %v1237 = vunpack.c.h.b16 %v573
    %v1238 = vunpack.c.l.b16 %v574
    %v1239 = vunpack.c.h.b16 %v574
    %v1240 = vunpack.c.l.b16 %v575
    %v1241 = vunpack.c.h.b16 %v575
    %v1242 = vunpack.c.l.b16 %v576
    %v1243 = vunpack.c.h.b16 %v576
    %v1244 = vunpack.c.l.b16 %v577
    %v1245 = vunpack.c.h.b16 %v577
    %v1246 = vunpack.c.l.b16 %v578
    %v1247 = vunpack.c.h.b16 %v578
    %v1248 = vunpack.c.l.b16 %v579
    %v1249 = vunpack.c.h.b16 %v579
    %v1250 = vunpack.c.l.b16 %v580
    %v1251 = vunpack.c.h.b16 %v580
    %v1252 = vunpack.c.l.b16 %v581
    %v1253 = vunpack.c.h.b16 %v581
    %v1254 = vunpack.c.l.b16 %v582
    %v1255 = vunpack.c.h.b16 %v582
    %v1256 = vunpack.c.l.b16 %v583
    %v1257 = vunpack.c.h.b16 %v583
    %v1258 = vunpack.c.l.b16 %v584
    %v1259 = vunpack.c.h.b16 %v584
    %v1260 = vunpack.c.l.b16 %v585
    %v1261 = vunpack.c.h.b16 %v585
    %v1262 = vunpack.c.l.b16 %v586
    %v1263 = vunpack.c.h.b16 %v586
    %v1264 = vunpack.c.l.b16 %v587
    %v1265 = vunpack.c.h.b16 %v587
    %v1266 = vunpack.c.l.b16 %v588
    %v1267 = vunpack.c.h.b16 %v588
    %v1268 = vunpack.c.l.b16 %v589
    %v1269 = vunpack.c.h.b16 %v589
    %v1270 = vunpack.c.l.b16 %v590
    %v1271 = vunpack.c.h.b16 %v590
    %v1272 = vunpack.c.l.b16 %v591
    %v1273 = vunpack.c.h.b16 %v591
    %v1274 = vunpack.c.l.b16 %v592
    %v1275 = vunpack.c.h.b16 %v592
    %v1276 = vunpack.c.l.b16 %v593
    %v1277 = vunpack.c.h.b16 %v593
    %v1278 = vunpack.c.l.b16 %v594
    %v1279 = vunpack.c.h.b16 %v594
    %v1280 = vunpack.c.l.b16 %v595
    %v1281 = vunpack.c.h.b16 %v595
    %v1282 = vpack.c.b16 %v1158, %v1154
    %v1283 = vpack.c.b16 %v1159, %v1155
    %v1284 = vpack.c.b16 %v1160, %v1156
    %v1285 = vpack.c.b16 %v1161, %v1157
    %v1286 = vpack.c.b16 %v1166, %v1162
    %v1287 = vpack.c.b16 %v1167, %v1163
    %v1288 = vpack.c.b16 %v1168, %v1164
    %v1289 = vpack.c.b16 %v1169, %v1165
    %v1290 = vpack.c.b16 %v1174, %v1170
    %v1291 = vpack.c.b16 %v1175, %v1171
    %v1292 = vpack.c.b16 %v1176, %v1172
    %v1293 = vpack.c.b16 %v1177, %v1173
    %v1294 = vpack.c.b16 %v1182, %v1178
    %v1295 = vpack.c.b16 %v1183, %v1179
    %v1296 = vpack.c.b16 %v1184, %v1180
    %v1297 = vpack.c.b16 %v1185, %v1181
    %v1298 = vpack.c.b16 %v1190, %v1186
    %v1299 = vpack.c.b16 %v1191, %v1187
    %v1300 = vpack.c.b16 %v1192, %v1188
    %v1301 = vpack.c.b16 %v1193, %v1189
    %v1302 = vpack.c.b16 %v1198, %v1194
    %v1303 = vpack.c.b16 %v1199, %v1195
    %v1304 = vpack.c.b16 %v1200, %v1196
    %v1305 = vpack.c.b16 %v1201, %v1197
    %v1306 = vpack.c.b16 %v1206, %v1202
    %v1307 = vpack.c.b16 %v1207, %v1203
    %v1308 = vpack.c.b16 %v1208, %v1204
    %v1309 = vpack.c.b16 %v1209, %v1205
    %v1310 = vpack.c.b16 %v1214, %v1210
    %v1311 = vpack.c.b16 %v1215, %v1211
    %v1312 = vpack.c.b16 %v1216, %v1212
    %v1313 = vpack.c.b16 %v1217, %v1213
    %v1314 = vpack.c.b16 %v1222, %v1218
    %v1315 = vpack.c.b16 %v1223, %v1219
    %v1316 = vpack.c.b16 %v1224, %v1220
    %v1317 = vpack.c.b16 %v1225, %v1221
    %v1318 = vpack.c.b16 %v1230, %v1226
    %v1319 = vpack.c.b16 %v1231, %v1227
    %v1320 = vpack.c.b16 %v1232, %v1228
    %v1321 = vpack.c.b16 %v1233, %v1229
    %v1322 = vpack.c.b16 %v1238, %v1234
    %v1323 = vpack.c.b16 %v1239, %v1235
    %v1324 = vpack.c.b16 %v1240, %v1236
    %v1325 = vpack.c.b16 %v1241, %v1237
    %v1326 = vpack.c.b16 %v1246, %v1242
    %v1327 = vpack.c.b16 %v1247, %v1243
    %v1328 = vpack.c.b16 %v1248, %v1244
    %v1329 = vpack.c.b16 %v1249, %v1245
    %v1330 = vpack.c.b16 %v1254, %v1250
    %v1331 = vpack.c.b16 %v1255, %v1251
    %v1332 = vpack.c.b16 %v1256, %v1252
    %v1333 = vpack.c.b16 %v1257, %v1253
    %v1334 = vpack.c.b16 %v1262, %v1258
    %v1335 = vpack.c.b16 %v1263, %v1259
    %v1336 = vpack.c.b16 %v1264, %v1260
    %v1337 = vpack.c.b16 %v1265, %v1261
    %v1338 = vpack.c.b16 %v1270, %v1266
    %v1339 = vpack.c.b16 %v1271, %v1267
    %v1340 = vpack.c.b16 %v1272, %v1268
    %v1341 = vpack.c.b16 %v1273, %v1269
    %v1342 = vpack.c.b16 %v1278, %v1274
    %v1343 = vpack.c.b16 %v1279, %v1275
    %v1344 = vpack.c.b16 %v1280, %v1276
    %v1345 = vpack.c.b16 %v1281, %v1277
    %1410 = vmatprep.subr.bf16.mxu0 %v1283
    %1411 = vmatpush1.bf16.msra.mxu0 %v1282
    %1412 = vmatprep.subr.bf16.mxu0 %v1287
    %1413 = vmatpush1.bf16.msra.mxu0 %v1286
    %1414 = vmatprep.subr.bf16.mxu0 %v1291
    %1415 = vmatpush1.bf16.msra.mxu0 %v1290
    %1416 = vmatprep.subr.bf16.mxu0 %v1295
    %1417 = vmatpush1.bf16.msra.mxu0 %v1294
    %1418 = vmatprep.subr.bf16.mxu0 %v1299
    %1419 = vmatpush1.bf16.msra.mxu0 %v1298
    %1420 = vmatprep.subr.bf16.mxu0 %v1303
    %1421 = vmatpush1.bf16.msra.mxu0 %v1302
    %1422 = vmatprep.subr.bf16.mxu0 %v1307
    %1423 = vmatpush1.bf16.msra.mxu0 %v1306
    %1424 = vmatprep.subr.bf16.mxu0 %v1311
    %1425 = vmatpush1.bf16.msra.mxu0 %v1310
    %1426 = vmatprep.subr.bf16.mxu0 %v1315
    %1427 = vmatpush1.bf16.msra.mxu0 %v1314
    %1428 = vmatprep.subr.bf16.mxu0 %v1319
    %1429 = vmatpush1.bf16.msra.mxu0 %v1318
    %1430 = vmatprep.subr.bf16.mxu0 %v1323
    %1431 = vmatpush1.bf16.msra.mxu0 %v1322
    %1432 = vmatprep.subr.bf16.mxu0 %v1327
    %1433 = vmatpush1.bf16.msra.mxu0 %v1326
    %1434 = vmatprep.subr.bf16.mxu0 %v1331
    %1435 = vmatpush1.bf16.msra.mxu0 %v1330
    %1436 = vmatprep.subr.bf16.mxu0 %v1335
    %1437 = vmatpush1.bf16.msra.mxu0 %v1334
    %1438 = vmatprep.subr.bf16.mxu0 %v1339
    %1439 = vmatpush1.bf16.msra.mxu0 %v1338
    %1440 = vmatprep.subr.bf16.mxu0 %v1343
    %1441 = vmatpush1.bf16.msra.mxu0 %v1342
    %1442 = vmatprep.mubr.bf16.mxu0 %v530
    %1443 = vmatmul.mubr.bf16.gmra.mrb[0].mxu0 %v529
    %v1444 = vpop.f32.mrb[0].mxu0
    %v1445 = vadd.f32 %v1082, %v1444
    %v1446 = vpop.f32.mrb[0].mxu0
    %v1447 = vadd.f32 %v1083, %v1446
    %v1448 = vpop.f32.mrb[0].mxu0
    %v1449 = vadd.f32 %v1086, %v1448
    %v1450 = vpop.f32.mrb[0].mxu0
    %v1451 = vadd.f32 %v1087, %v1450
    %1452 = vdwg.mxu0
    %1453 = vmatprep.subr.bf16.mxu0 %v1285
    %1454 = vmatpush1.bf16.msra.mxu0 %v1284
    %1455 = vmatprep.subr.bf16.mxu0 %v1289
    %1456 = vmatpush1.bf16.msra.mxu0 %v1288
    %1457 = vmatprep.subr.bf16.mxu0 %v1293
    %1458 = vmatpush1.bf16.msra.mxu0 %v1292
    %1459 = vmatprep.subr.bf16.mxu0 %v1297
    %1460 = vmatpush1.bf16.msra.mxu0 %v1296
    %1461 = vmatprep.subr.bf16.mxu0 %v1301
    %1462 = vmatpush1.bf16.msra.mxu0 %v1300
    %1463 = vmatprep.subr.bf16.mxu0 %v1305
    %1464 = vmatpush1.bf16.msra.mxu0 %v1304
    %1465 = vmatprep.subr.bf16.mxu0 %v1309
    %1466 = vmatpush1.bf16.msra.mxu0 %v1308
    %1467 = vmatprep.subr.bf16.mxu0 %v1313
    %1468 = vmatpush1.bf16.msra.mxu0 %v1312
    %1469 = vmatprep.subr.bf16.mxu0 %v1317
    %1470 = vmatpush1.bf16.msra.mxu0 %v1316
    %1471 = vmatprep.subr.bf16.mxu0 %v1321
    %1472 = vmatpush1.bf16.msra.mxu0 %v1320
    %1473 = vmatprep.subr.bf16.mxu0 %v1325
    %1474 = vmatpush1.bf16.msra.mxu0 %v1324
    %1475 = vmatprep.subr.bf16.mxu0 %v1329
    %1476 = vmatpush1.bf16.msra.mxu0 %v1328
    %1477 = vmatprep.subr.bf16.mxu0 %v1333
    %1478 = vmatpush1.bf16.msra.mxu0 %v1332
    %1479 = vmatprep.subr.bf16.mxu0 %v1337
    %1480 = vmatpush1.bf16.msra.mxu0 %v1336
    %1481 = vmatprep.subr.bf16.mxu0 %v1341
    %1482 = vmatpush1.bf16.msra.mxu0 %v1340
    %1483 = vmatprep.subr.bf16.mxu0 %v1345
    %1484 = vmatpush1.bf16.msra.mxu0 %v1344
    %1485 = vmatprep.mubr.bf16.mxu0 %v530
    %1486 = vmatmul.mubr.bf16.gmra.mrb[0].mxu0 %v529
    %v1487 = vpop.f32.mrb[0].mxu0
    %v1488 = vadd.f32 %v1084, %v1487
    %v1489 = vpop.f32.mrb[0].mxu0
    %v1490 = vadd.f32 %v1085, %v1489
    %v1491 = vpop.f32.mrb[0].mxu0
    %v1492 = vadd.f32 %v1088, %v1491
    %v1493 = vpop.f32.mrb[0].mxu0
    %v1494 = vadd.f32 %v1089, %v1493
    %1495 = vdwg.mxu0
    %s1496 = scalar_lea.vmem [#allocation6], 1024
    %v1497 = vld [vmem:[%s1496] sm:$0xff]
    %v1498 = vld [vmem:[%s1496 + $0x8] sm:$0xff]
    %v1499 = vld [vmem:[%s1496 + $0x10] sm:$0xff]
    %v1500 = vld [vmem:[%s1496 + $0x18] sm:$0xff]
    %v1501 = vld [vmem:[%s1496 + $0x20] sm:$0xff]
    %v1502 = vld [vmem:[%s1496 + $0x28] sm:$0xff]
    %v1503 = vld [vmem:[%s1496 + $0x30] sm:$0xff]
    %v1504 = vld [vmem:[%s1496 + $0x38] sm:$0xff]
    %v1505 = vld [vmem:[%s1496 + $0x40] sm:$0xff]
    %v1506 = vld [vmem:[%s1496 + $0x48] sm:$0xff]
    %v1507 = vld [vmem:[%s1496 + $0x50] sm:$0xff]
    %v1508 = vld [vmem:[%s1496 + $0x58] sm:$0xff]
    %v1509 = vld [vmem:[%s1496 + $0x60] sm:$0xff]
    %v1510 = vld [vmem:[%s1496 + $0x68] sm:$0xff]
    %v1511 = vld [vmem:[%s1496 + $0x70] sm:$0xff]
    %v1512 = vld [vmem:[%s1496 + $0x78] sm:$0xff]
    %v1513 = vld [vmem:[%s1496 + $0x80] sm:$0xff]
    %v1514 = vld [vmem:[%s1496 + $0x88] sm:$0xff]
    %v1515 = vld [vmem:[%s1496 + $0x90] sm:$0xff]
    %v1516 = vld [vmem:[%s1496 + $0x98] sm:$0xff]
    %v1517 = vld [vmem:[%s1496 + $0xa0] sm:$0xff]
    %v1518 = vld [vmem:[%s1496 + $0xa8] sm:$0xff]
    %v1519 = vld [vmem:[%s1496 + $0xb0] sm:$0xff]
    %v1520 = vld [vmem:[%s1496 + $0xb8] sm:$0xff]
    %v1521 = vld [vmem:[%s1496 + $0xc0] sm:$0xff]
    %v1522 = vld [vmem:[%s1496 + $0xc8] sm:$0xff]
    %v1523 = vld [vmem:[%s1496 + $0xd0] sm:$0xff]
    %v1524 = vld [vmem:[%s1496 + $0xd8] sm:$0xff]
    %v1525 = vld [vmem:[%s1496 + $0xe0] sm:$0xff]
    %v1526 = vld [vmem:[%s1496 + $0xe8] sm:$0xff]
    %v1527 = vld [vmem:[%s1496 + $0xf0] sm:$0xff]
    %v1528 = vld [vmem:[%s1496 + $0xf8] sm:$0xff]
    %v1529 = vld [vmem:[%s1496 + $0x100] sm:$0xff]
    %v1530 = vld [vmem:[%s1496 + $0x108] sm:$0xff]
    %v1531 = vld [vmem:[%s1496 + $0x110] sm:$0xff]
    %v1532 = vld [vmem:[%s1496 + $0x118] sm:$0xff]
    %v1533 = vld [vmem:[%s1496 + $0x120] sm:$0xff]
    %v1534 = vld [vmem:[%s1496 + $0x128] sm:$0xff]
    %v1535 = vld [vmem:[%s1496 + $0x130] sm:$0xff]
    %v1536 = vld [vmem:[%s1496 + $0x138] sm:$0xff]
    %v1537 = vld [vmem:[%s1496 + $0x140] sm:$0xff]
    %v1538 = vld [vmem:[%s1496 + $0x148] sm:$0xff]
    %v1539 = vld [vmem:[%s1496 + $0x150] sm:$0xff]
    %v1540 = vld [vmem:[%s1496 + $0x158] sm:$0xff]
    %v1541 = vld [vmem:[%s1496 + $0x160] sm:$0xff]
    %v1542 = vld [vmem:[%s1496 + $0x168] sm:$0xff]
    %v1543 = vld [vmem:[%s1496 + $0x170] sm:$0xff]
    %v1544 = vld [vmem:[%s1496 + $0x178] sm:$0xff]
    %v1545 = vld [vmem:[%s1496 + $0x180] sm:$0xff]
    %v1546 = vld [vmem:[%s1496 + $0x188] sm:$0xff]
    %v1547 = vld [vmem:[%s1496 + $0x190] sm:$0xff]
    %v1548 = vld [vmem:[%s1496 + $0x198] sm:$0xff]
    %v1549 = vld [vmem:[%s1496 + $0x1a0] sm:$0xff]
    %v1550 = vld [vmem:[%s1496 + $0x1a8] sm:$0xff]
    %v1551 = vld [vmem:[%s1496 + $0x1b0] sm:$0xff]
    %v1552 = vld [vmem:[%s1496 + $0x1b8] sm:$0xff]
    %v1553 = vld [vmem:[%s1496 + $0x1c0] sm:$0xff]
    %v1554 = vld [vmem:[%s1496 + $0x1c8] sm:$0xff]
    %v1555 = vld [vmem:[%s1496 + $0x1d0] sm:$0xff]
    %v1556 = vld [vmem:[%s1496 + $0x1d8] sm:$0xff]
    %v1557 = vld [vmem:[%s1496 + $0x1e0] sm:$0xff]
    %v1558 = vld [vmem:[%s1496 + $0x1e8] sm:$0xff]
    %v1559 = vld [vmem:[%s1496 + $0x1f0] sm:$0xff]
    %v1560 = vld [vmem:[%s1496 + $0x1f8] sm:$0xff]
    %v1625 = vunpack.c.l.b16 %v1497
    %v1626 = vunpack.c.h.b16 %v1497
    %v1627 = vunpack.c.l.b16 %v1498
    %v1628 = vunpack.c.h.b16 %v1498
    %v1629 = vunpack.c.l.b16 %v1499
    %v1630 = vunpack.c.h.b16 %v1499
    %v1631 = vunpack.c.l.b16 %v1500
    %v1632 = vunpack.c.h.b16 %v1500
    %v1633 = vunpack.c.l.b16 %v1501
    %v1634 = vunpack.c.h.b16 %v1501
    %v1635 = vunpack.c.l.b16 %v1502
    %v1636 = vunpack.c.h.b16 %v1502
    %v1637 = vunpack.c.l.b16 %v1503
    %v1638 = vunpack.c.h.b16 %v1503
    %v1639 = vunpack.c.l.b16 %v1504
    %v1640 = vunpack.c.h.b16 %v1504
    %v1641 = vunpack.c.l.b16 %v1505
    %v1642 = vunpack.c.h.b16 %v1505
    %v1643 = vunpack.c.l.b16 %v1506
    %v1644 = vunpack.c.h.b16 %v1506
    %v1645 = vunpack.c.l.b16 %v1507
    %v1646 = vunpack.c.h.b16 %v1507
    %v1647 = vunpack.c.l.b16 %v1508
    %v1648 = vunpack.c.h.b16 %v1508
    %v1649 = vunpack.c.l.b16 %v1509
    %v1650 = vunpack.c.h.b16 %v1509
    %v1651 = vunpack.c.l.b16 %v1510
    %v1652 = vunpack.c.h.b16 %v1510
    %v1653 = vunpack.c.l.b16 %v1511
    %v1654 = vunpack.c.h.b16 %v1511
    %v1655 = vunpack.c.l.b16 %v1512
    %v1656 = vunpack.c.h.b16 %v1512
    %v1657 = vunpack.c.l.b16 %v1513
    %v1658 = vunpack.c.h.b16 %v1513
    %v1659 = vunpack.c.l.b16 %v1514
    %v1660 = vunpack.c.h.b16 %v1514
    %v1661 = vunpack.c.l.b16 %v1515
    %v1662 = vunpack.c.h.b16 %v1515
    %v1663 = vunpack.c.l.b16 %v1516
    %v1664 = vunpack.c.h.b16 %v1516
    %v1665 = vunpack.c.l.b16 %v1517
    %v1666 = vunpack.c.h.b16 %v1517
    %v1667 = vunpack.c.l.b16 %v1518
    %v1668 = vunpack.c.h.b16 %v1518
    %v1669 = vunpack.c.l.b16 %v1519
    %v1670 = vunpack.c.h.b16 %v1519
    %v1671 = vunpack.c.l.b16 %v1520
    %v1672 = vunpack.c.h.b16 %v1520
    %v1673 = vunpack.c.l.b16 %v1521
    %v1674 = vunpack.c.h.b16 %v1521
    %v1675 = vunpack.c.l.b16 %v1522
    %v1676 = vunpack.c.h.b16 %v1522
    %v1677 = vunpack.c.l.b16 %v1523
    %v1678 = vunpack.c.h.b16 %v1523
    %v1679 = vunpack.c.l.b16 %v1524
    %v1680 = vunpack.c.h.b16 %v1524
    %v1681 = vunpack.c.l.b16 %v1525
    %v1682 = vunpack.c.h.b16 %v1525
    %v1683 = vunpack.c.l.b16 %v1526
    %v1684 = vunpack.c.h.b16 %v1526
    %v1685 = vunpack.c.l.b16 %v1527
    %v1686 = vunpack.c.h.b16 %v1527
    %v1687 = vunpack.c.l.b16 %v1528
    %v1688 = vunpack.c.h.b16 %v1528
    %v1689 = vunpack.c.l.b16 %v1529
    %v1690 = vunpack.c.h.b16 %v1529
    %v1691 = vunpack.c.l.b16 %v1530
    %v1692 = vunpack.c.h.b16 %v1530
    %v1693 = vunpack.c.l.b16 %v1531
    %v1694 = vunpack.c.h.b16 %v1531
    %v1695 = vunpack.c.l.b16 %v1532
    %v1696 = vunpack.c.h.b16 %v1532
    %v1697 = vunpack.c.l.b16 %v1533
    %v1698 = vunpack.c.h.b16 %v1533
    %v1699 = vunpack.c.l.b16 %v1534
    %v1700 = vunpack.c.h.b16 %v1534
    %v1701 = vunpack.c.l.b16 %v1535
    %v1702 = vunpack.c.h.b16 %v1535
    %v1703 = vunpack.c.l.b16 %v1536
    %v1704 = vunpack.c.h.b16 %v1536
    %v1705 = vunpack.c.l.b16 %v1537
    %v1706 = vunpack.c.h.b16 %v1537
    %v1707 = vunpack.c.l.b16 %v1538
    %v1708 = vunpack.c.h.b16 %v1538
    %v1709 = vunpack.c.l.b16 %v1539
    %v1710 = vunpack.c.h.b16 %v1539
    %v1711 = vunpack.c.l.b16 %v1540
    %v1712 = vunpack.c.h.b16 %v1540
    %v1713 = vunpack.c.l.b16 %v1541
    %v1714 = vunpack.c.h.b16 %v1541
    %v1715 = vunpack.c.l.b16 %v1542
    %v1716 = vunpack.c.h.b16 %v1542
    %v1717 = vunpack.c.l.b16 %v1543
    %v1718 = vunpack.c.h.b16 %v1543
    %v1719 = vunpack.c.l.b16 %v1544
    %v1720 = vunpack.c.h.b16 %v1544
    %v1721 = vunpack.c.l.b16 %v1545
    %v1722 = vunpack.c.h.b16 %v1545
    %v1723 = vunpack.c.l.b16 %v1546
    %v1724 = vunpack.c.h.b16 %v1546
    %v1725 = vunpack.c.l.b16 %v1547
    %v1726 = vunpack.c.h.b16 %v1547
    %v1727 = vunpack.c.l.b16 %v1548
    %v1728 = vunpack.c.h.b16 %v1548
    %v1729 = vunpack.c.l.b16 %v1549
    %v1730 = vunpack.c.h.b16 %v1549
    %v1731 = vunpack.c.l.b16 %v1550
    %v1732 = vunpack.c.h.b16 %v1550
    %v1733 = vunpack.c.l.b16 %v1551
    %v1734 = vunpack.c.h.b16 %v1551
    %v1735 = vunpack.c.l.b16 %v1552
    %v1736 = vunpack.c.h.b16 %v1552
    %v1737 = vunpack.c.l.b16 %v1553
    %v1738 = vunpack.c.h.b16 %v1553
    %v1739 = vunpack.c.l.b16 %v1554
    %v1740 = vunpack.c.h.b16 %v1554
    %v1741 = vunpack.c.l.b16 %v1555
    %v1742 = vunpack.c.h.b16 %v1555
    %v1743 = vunpack.c.l.b16 %v1556
    %v1744 = vunpack.c.h.b16 %v1556
    %v1745 = vunpack.c.l.b16 %v1557
    %v1746 = vunpack.c.h.b16 %v1557
    %v1747 = vunpack.c.l.b16 %v1558
    %v1748 = vunpack.c.h.b16 %v1558
    %v1749 = vunpack.c.l.b16 %v1559
    %v1750 = vunpack.c.h.b16 %v1559
    %v1751 = vunpack.c.l.b16 %v1560
    %v1752 = vunpack.c.h.b16 %v1560
    %v1753 = vpack.c.b16 %v1629, %v1625
    %v1754 = vpack.c.b16 %v1630, %v1626
    %v1755 = vpack.c.b16 %v1631, %v1627
    %v1756 = vpack.c.b16 %v1632, %v1628
    %v1757 = vpack.c.b16 %v1637, %v1633
    %v1758 = vpack.c.b16 %v1638, %v1634
    %v1759 = vpack.c.b16 %v1639, %v1635
    %v1760 = vpack.c.b16 %v1640, %v1636
    %v1761 = vpack.c.b16 %v1645, %v1641
    %v1762 = vpack.c.b16 %v1646, %v1642
    %v1763 = vpack.c.b16 %v1647, %v1643
    %v1764 = vpack.c.b16 %v1648, %v1644
    %v1765 = vpack.c.b16 %v1653, %v1649
    %v1766 = vpack.c.b16 %v1654, %v1650
    %v1767 = vpack.c.b16 %v1655, %v1651
    %v1768 = vpack.c.b16 %v1656, %v1652
    %v1769 = vpack.c.b16 %v1661, %v1657
    %v1770 = vpack.c.b16 %v1662, %v1658
    %v1771 = vpack.c.b16 %v1663, %v1659
    %v1772 = vpack.c.b16 %v1664, %v1660
    %v1773 = vpack.c.b16 %v1669, %v1665
    %v1774 = vpack.c.b16 %v1670, %v1666
    %v1775 = vpack.c.b16 %v1671, %v1667
    %v1776 = vpack.c.b16 %v1672, %v1668
    %v1777 = vpack.c.b16 %v1677, %v1673
    %v1778 = vpack.c.b16 %v1678, %v1674
    %v1779 = vpack.c.b16 %v1679, %v1675
    %v1780 = vpack.c.b16 %v1680, %v1676
    %v1781 = vpack.c.b16 %v1685, %v1681
    %v1782 = vpack.c.b16 %v1686, %v1682
    %v1783 = vpack.c.b16 %v1687, %v1683
    %v1784 = vpack.c.b16 %v1688, %v1684
    %v1785 = vpack.c.b16 %v1693, %v1689
    %v1786 = vpack.c.b16 %v1694, %v1690
    %v1787 = vpack.c.b16 %v1695, %v1691
    %v1788 = vpack.c.b16 %v1696, %v1692
    %v1789 = vpack.c.b16 %v1701, %v1697
    %v1790 = vpack.c.b16 %v1702, %v1698
    %v1791 = vpack.c.b16 %v1703, %v1699
    %v1792 = vpack.c.b16 %v1704, %v1700
    %v1793 = vpack.c.b16 %v1709, %v1705
    %v1794 = vpack.c.b16 %v1710, %v1706
    %v1795 = vpack.c.b16 %v1711, %v1707
    %v1796 = vpack.c.b16 %v1712, %v1708
    %v1797 = vpack.c.b16 %v1717, %v1713
    %v1798 = vpack.c.b16 %v1718, %v1714
    %v1799 = vpack.c.b16 %v1719, %v1715
    %v1800 = vpack.c.b16 %v1720, %v1716
    %v1801 = vpack.c.b16 %v1725, %v1721
    %v1802 = vpack.c.b16 %v1726, %v1722
    %v1803 = vpack.c.b16 %v1727, %v1723
    %v1804 = vpack.c.b16 %v1728, %v1724
    %v1805 = vpack.c.b16 %v1733, %v1729
    %v1806 = vpack.c.b16 %v1734, %v1730
    %v1807 = vpack.c.b16 %v1735, %v1731
    %v1808 = vpack.c.b16 %v1736, %v1732
    %v1809 = vpack.c.b16 %v1741, %v1737
    %v1810 = vpack.c.b16 %v1742, %v1738
    %v1811 = vpack.c.b16 %v1743, %v1739
    %v1812 = vpack.c.b16 %v1744, %v1740
    %v1813 = vpack.c.b16 %v1749, %v1745
    %v1814 = vpack.c.b16 %v1750, %v1746
    %v1815 = vpack.c.b16 %v1751, %v1747
    %v1816 = vpack.c.b16 %v1752, %v1748
    %1881 = vmatprep.subr.bf16.mxu0 %v1754
    %1882 = vmatpush1.bf16.msra.mxu0 %v1753
    %1883 = vmatprep.subr.bf16.mxu0 %v1758
    %1884 = vmatpush1.bf16.msra.mxu0 %v1757
    %1885 = vmatprep.subr.bf16.mxu0 %v1762
    %1886 = vmatpush1.bf16.msra.mxu0 %v1761
    %1887 = vmatprep.subr.bf16.mxu0 %v1766
    %1888 = vmatpush1.bf16.msra.mxu0 %v1765
    %1889 = vmatprep.subr.bf16.mxu0 %v1770
    %1890 = vmatpush1.bf16.msra.mxu0 %v1769
    %1891 = vmatprep.subr.bf16.mxu0 %v1774
    %1892 = vmatpush1.bf16.msra.mxu0 %v1773
    %1893 = vmatprep.subr.bf16.mxu0 %v1778
    %1894 = vmatpush1.bf16.msra.mxu0 %v1777
    %1895 = vmatprep.subr.bf16.mxu0 %v1782
    %1896 = vmatpush1.bf16.msra.mxu0 %v1781
    %1897 = vmatprep.subr.bf16.mxu0 %v1786
    %1898 = vmatpush1.bf16.msra.mxu0 %v1785
    %1899 = vmatprep.subr.bf16.mxu0 %v1790
    %1900 = vmatpush1.bf16.msra.mxu0 %v1789
    %1901 = vmatprep.subr.bf16.mxu0 %v1794
    %1902 = vmatpush1.bf16.msra.mxu0 %v1793
    %1903 = vmatprep.subr.bf16.mxu0 %v1798
    %1904 = vmatpush1.bf16.msra.mxu0 %v1797
    %1905 = vmatprep.subr.bf16.mxu0 %v1802
    %1906 = vmatpush1.bf16.msra.mxu0 %v1801
    %1907 = vmatprep.subr.bf16.mxu0 %v1806
    %1908 = vmatpush1.bf16.msra.mxu0 %v1805
    %1909 = vmatprep.subr.bf16.mxu0 %v1810
    %1910 = vmatpush1.bf16.msra.mxu0 %v1809
    %1911 = vmatprep.subr.bf16.mxu0 %v1814
    %1912 = vmatpush1.bf16.msra.mxu0 %v1813
    %1913 = vmatprep.mubr.bf16.mxu0 %v530
    %1914 = vmatmul.mubr.bf16.gmra.mrb[0].mxu0 %v529
    %v1915 = vpop.f32.mrb[0].mxu0
    %v1916 = vadd.f32 0.0, %v1915
    %v1917 = vpop.f32.mrb[0].mxu0
    %v1918 = vadd.f32 0.0, %v1917
    %v1919 = vpop.f32.mrb[0].mxu0
    %v1920 = vadd.f32 0.0, %v1919
    %v1921 = vpop.f32.mrb[0].mxu0
    %v1922 = vadd.f32 0.0, %v1921
    %1923 = vdwg.mxu0
    %1924 = vmatprep.subr.bf16.mxu0 %v1756
    %1925 = vmatpush1.bf16.msra.mxu0 %v1755
    %1926 = vmatprep.subr.bf16.mxu0 %v1760
    %1927 = vmatpush1.bf16.msra.mxu0 %v1759
    %1928 = vmatprep.subr.bf16.mxu0 %v1764
    %1929 = vmatpush1.bf16.msra.mxu0 %v1763
    %1930 = vmatprep.subr.bf16.mxu0 %v1768
    %1931 = vmatpush1.bf16.msra.mxu0 %v1767
    %1932 = vmatprep.subr.bf16.mxu0 %v1772
    %1933 = vmatpush1.bf16.msra.mxu0 %v1771
    %1934 = vmatprep.subr.bf16.mxu0 %v1776
    %1935 = vmatpush1.bf16.msra.mxu0 %v1775
    %1936 = vmatprep.subr.bf16.mxu0 %v1780
    %1937 = vmatpush1.bf16.msra.mxu0 %v1779
    %1938 = vmatprep.subr.bf16.mxu0 %v1784
    %1939 = vmatpush1.bf16.msra.mxu0 %v1783
    %1940 = vmatprep.subr.bf16.mxu0 %v1788
    %1941 = vmatpush1.bf16.msra.mxu0 %v1787
    %1942 = vmatprep.subr.bf16.mxu0 %v1792
    %1943 = vmatpush1.bf16.msra.mxu0 %v1791
    %1944 = vmatprep.subr.bf16.mxu0 %v1796
    %1945 = vmatpush1.bf16.msra.mxu0 %v1795
    %1946 = vmatprep.subr.bf16.mxu0 %v1800
    %1947 = vmatpush1.bf16.msra.mxu0 %v1799
    %1948 = vmatprep.subr.bf16.mxu0 %v1804
    %1949 = vmatpush1.bf16.msra.mxu0 %v1803
    %1950 = vmatprep.subr.bf16.mxu0 %v1808
    %1951 = vmatpush1.bf16.msra.mxu0 %v1807
    %1952 = vmatprep.subr.bf16.mxu0 %v1812
    %1953 = vmatpush1.bf16.msra.mxu0 %v1811
    %1954 = vmatprep.subr.bf16.mxu0 %v1816
    %1955 = vmatpush1.bf16.msra.mxu0 %v1815
    %1956 = vmatprep.mubr.bf16.mxu0 %v530
    %1957 = vmatmul.mubr.bf16.gmra.mrb[0].mxu0 %v529
    %v1958 = vpop.f32.mrb[0].mxu0
    %v1959 = vadd.f32 0.0, %v1958
    %v1960 = vpop.f32.mrb[0].mxu0
    %v1961 = vadd.f32 0.0, %v1960
    %v1962 = vpop.f32.mrb[0].mxu0
    %v1963 = vadd.f32 0.0, %v1962
    %v1964 = vpop.f32.mrb[0].mxu0
    %v1965 = vadd.f32 0.0, %v1964
    %1966 = vdwg.mxu0
    %v1967 = vrot.slane %v1916, 1
    %v1968 = vrot.slane %v1918, 1
    %v1969 = vrot.slane %v1959, 1
    %v1970 = vrot.slane %v1961, 1
    %v1971 = vrot.slane %v1920, 1
    %v1972 = vrot.slane %v1922, 1
    %v1973 = vrot.slane %v1963, 1
    %v1974 = vrot.slane %v1965, 1
    %v1975 = vsel %vm490, %v1967, %v1971
    %v1976 = vsel %vm490, %v1968, %v1972
    %v1977 = vsel %vm490, %v1969, %v1973
    %v1978 = vsel %vm490, %v1970, %v1974
    %v1979 = vsel %vm490, %v1971, %v1967
    %v1980 = vsel %vm490, %v1972, %v1968
    %v1981 = vsel %vm490, %v1973, %v1969
    %v1982 = vsel %vm490, %v1974, %v1970
    %v1983 = vsel %vm499, %v1975, 0.0
    %v1984 = vsel %vm499, %v1976, 0.0
    %v1985 = vsel %vm499, %v1977, 0.0
    %v1986 = vsel %vm499, %v1978, 0.0
    %v1987 = vsel %vm500, %v1979, 0.0
    %v1988 = vsel %vm500, %v1980, 0.0
    %v1989 = vsel %vm500, %v1981, 0.0
    %v1990 = vsel %vm500, %v1982, 0.0
    %v1991 = vadd.f32 %v1445, %v1983
    %v1992 = vadd.f32 %v1447, %v1984
    %v1993 = vadd.f32 %v1488, %v1985
    %v1994 = vadd.f32 %v1490, %v1986
    %v1995 = vadd.f32 %v1449, %v1987
    %v1996 = vadd.f32 %v1451, %v1988
    %v1997 = vadd.f32 %v1492, %v1989
    %v1998 = vadd.f32 %v1494, %v1990
    %v1999 = vld [vmem:[#allocation9] sm:$0xf]
    %v2002 = vunpack.c.l.s4 1966171168
    %v2003 = vunpack.c.0.s8 %v2002
    %v2004 = vlaneseq
    %v2005 = vshrl.u32 %v2004, 7
    %v2006 = vsub.s32 %v2003, %v2005
    %v2007 = vrot.slane %v1999, %v2006
    %v2008 = vcombine.high %v2007, %v2007
    %v2010 = vunpack.c.l.s4 1966171168
    %v2011 = vunpack.c.0.s8 %v2010
    %v2012 = vlaneseq
    %v2013 = vshrl.u32 %v2012, 7
    %v2014 = vsub.s32 %v2011, %v2013
    %v2015 = vrot.slane %v2007, %v2014
    %v2017 = vunpack.c.l.s4 1966171168
    %v2018 = vunpack.c.0.s8 %v2017
    %v2019 = vlaneseq
    %v2020 = vshrl.u32 %v2019, 7
    %v2021 = vsub.s32 %v2018, %v2020
    %v2022 = vrot.slane %v2008, %v2021
    %v2023 = vcombine.high %v2015, %v2015
    %v2024 = vcombine.high %v2022, %v2022
    %v2026 = vsel %vm267, %v240, 0
    %v2029 = vsel %vm271, %v2015, 0
    %v2032 = vsel %vm271, %v2022, 0
    %v2035 = vsel %vm271, %v2023, 0
    %v2038 = vsel %vm271, %v2024, 0
    %2040 = vmatprep.subr.bf16.mxu0 %v2032
    %2041 = vmatpush1.bf16.msra.mxu0 %v2029
    %2042 = vmatprep.subr.bf16.mxu0 0
    %2043 = vmatpush1.bf16.msra.mxu0 0
    %2044 = vmatprep.subr.bf16.mxu0 0
    %2045 = vmatpush1.bf16.msra.mxu0 0
    %2046 = vmatprep.subr.bf16.mxu0 0
    %2047 = vmatpush1.bf16.msra.mxu0 0
    %2048 = vmatprep.subr.bf16.mxu0 0
    %2049 = vmatpush1.bf16.msra.mxu0 0
    %2050 = vmatprep.subr.bf16.mxu0 0
    %2051 = vmatpush1.bf16.msra.mxu0 0
    %2052 = vmatprep.subr.bf16.mxu0 0
    %2053 = vmatpush1.bf16.msra.mxu0 0
    %2054 = vmatprep.subr.bf16.mxu0 0
    %2055 = vmatpush1.bf16.msra.mxu0 0
    %2056 = vmatprep.subr.bf16.mxu0 0
    %2057 = vmatpush1.bf16.msra.mxu0 0
    %2058 = vmatprep.subr.bf16.mxu0 0
    %2059 = vmatpush1.bf16.msra.mxu0 0
    %2060 = vmatprep.subr.bf16.mxu0 0
    %2061 = vmatpush1.bf16.msra.mxu0 0
    %2062 = vmatprep.subr.bf16.mxu0 0
    %2063 = vmatpush1.bf16.msra.mxu0 0
    %2064 = vmatprep.subr.bf16.mxu0 0
    %2065 = vmatpush1.bf16.msra.mxu0 0
    %2066 = vmatprep.subr.bf16.mxu0 0
    %2067 = vmatpush1.bf16.msra.mxu0 0
    %2068 = vmatprep.subr.bf16.mxu0 0
    %2069 = vmatpush1.bf16.msra.mxu0 0
    %2070 = vmatprep.subr.bf16.mxu0 0
    %2071 = vmatpush1.bf16.msra.mxu0 0
    %2072 = vmatprep.mubr.bf16.mxu0 0
    %2073 = vmatmul.mubr.bf16.gmra.mrb[0].mxu0 %v2026
    %v2074 = vpop.f32.mrb[0].mxu0
    %v2075 = vadd.f32 0.0, %v2074
    %v2076 = vpop.f32.mrb[0].mxu0
    %v2077 = vadd.f32 0.0, %v2076
    %v2078 = vpop.f32.mrb[0].mxu0
    %v2079 = vadd.f32 0.0, %v2078
    %v2080 = vpop.f32.mrb[0].mxu0
    %v2081 = vadd.f32 0.0, %v2080
    %2082 = vdwg.mxu0
    %2083 = vmatprep.subr.bf16.mxu0 %v2038
    %2084 = vmatpush1.bf16.msra.mxu0 %v2035
    %2085 = vmatprep.subr.bf16.mxu0 0
    %2086 = vmatpush1.bf16.msra.mxu0 0
    %2087 = vmatprep.subr.bf16.mxu0 0
    %2088 = vmatpush1.bf16.msra.mxu0 0
    %2089 = vmatprep.subr.bf16.mxu0 0
    %2090 = vmatpush1.bf16.msra.mxu0 0
    %2091 = vmatprep.subr.bf16.mxu0 0
    %2092 = vmatpush1.bf16.msra.mxu0 0
    %2093 = vmatprep.subr.bf16.mxu0 0
    %2094 = vmatpush1.bf16.msra.mxu0 0
    %2095 = vmatprep.subr.bf16.mxu0 0
    %2096 = vmatpush1.bf16.msra.mxu0 0
    %2097 = vmatprep.subr.bf16.mxu0 0
    %2098 = vmatpush1.bf16.msra.mxu0 0
    %2099 = vmatprep.subr.bf16.mxu0 0
    %2100 = vmatpush1.bf16.msra.mxu0 0
    %2101 = vmatprep.subr.bf16.mxu0 0
    %2102 = vmatpush1.bf16.msra.mxu0 0
    %2103 = vmatprep.subr.bf16.mxu0 0
    %2104 = vmatpush1.bf16.msra.mxu0 0
    %2105 = vmatprep.subr.bf16.mxu0 0
    %2106 = vmatpush1.bf16.msra.mxu0 0
    %2107 = vmatprep.subr.bf16.mxu0 0
    %2108 = vmatpush1.bf16.msra.mxu0 0
    %2109 = vmatprep.subr.bf16.mxu0 0
    %2110 = vmatpush1.bf16.msra.mxu0 0
    %2111 = vmatprep.subr.bf16.mxu0 0
    %2112 = vmatpush1.bf16.msra.mxu0 0
    %2113 = vmatprep.subr.bf16.mxu0 0
    %2114 = vmatpush1.bf16.msra.mxu0 0
    %2115 = vmatprep.mubr.bf16.mxu0 0
    %2116 = vmatmul.mubr.bf16.gmra.mrb[0].mxu0 %v2026
    %v2117 = vpop.f32.mrb[0].mxu0
    %v2118 = vadd.f32 0.0, %v2117
    %v2119 = vpop.f32.mrb[0].mxu0
    %v2120 = vadd.f32 0.0, %v2119
    %v2121 = vpop.f32.mrb[0].mxu0
    %v2122 = vadd.f32 0.0, %v2121
    %v2123 = vpop.f32.mrb[0].mxu0
    %v2124 = vadd.f32 0.0, %v2123
    %2125 = vdwg.mxu0
    %v2126 = vadd.f32 %v1991, %v2075
    %v2127 = vadd.f32 %v1992, %v2077
    %v2128 = vadd.f32 %v1993, %v2118
    %v2129 = vadd.f32 %v1994, %v2120
    %v2130 = vadd.f32 %v1995, %v2079
    %v2131 = vadd.f32 %v1996, %v2081
    %v2132 = vadd.f32 %v1997, %v2122
    %v2133 = vadd.f32 %v1998, %v2124
    %v2134 = vld [vmem:[#allocation7] sm:$0xf]
    %v2136 = vlaneseq
    %v2137 = vshrl.u32 %v2136, 7
    %v2138 = vsub.s32 0, %v2137
    %v2139 = vrot.slane %v2134, %v2138
    %v2140 = vlaneseq
    %v2141 = vshrl.u32 %v2140, 7
    %v2142 = vsub.s32 1, %v2141
    %v2143 = vrot.slane %v2134, %v2142
    %v2144 = vlaneseq
    %v2145 = vshrl.u32 %v2144, 7
    %v2146 = vsub.s32 2, %v2145
    %v2147 = vrot.slane %v2134, %v2146
    %v2148 = vlaneseq
    %v2149 = vshrl.u32 %v2148, 7
    %v2150 = vsub.s32 3, %v2149
    %v2151 = vrot.slane %v2134, %v2150
    %v2156 = vadd.f32 %v2126, %v2139
    %v2157 = vadd.f32 %v2127, %v2143
    %v2158 = vadd.f32 %v2128, %v2147
    %v2159 = vadd.f32 %v2129, %v2151
    %v2160 = vadd.f32 %v2130, %v2139
    %v2161 = vadd.f32 %v2131, %v2143
    %v2162 = vadd.f32 %v2132, %v2147
    %v2163 = vadd.f32 %v2133, %v2151
    %v2164 = vtanh.pop %v2156
    %v2165 = vtanh.pop %v2157
    %v2166 = vtanh.pop %v2160
    %v2167 = vtanh.pop %v2161
    %v2168 = vxor.u32 %v2158, 2147483648
    %v2169 = vxor.u32 %v2159, 2147483648
    %v2170 = vxor.u32 %v2162, 2147483648
    %v2171 = vxor.u32 %v2163, 2147483648
    %v2172 = vmul.f32 %v2168, 1.442695
    %v2173 = vpow.pop %v2172
    %v2174 = vmul.f32 %v2169, 1.442695
    %v2175 = vpow.pop %v2174
    %v2176 = vmul.f32 %v2170, 1.442695
    %v2177 = vpow.pop %v2176
    %v2178 = vmul.f32 %v2171, 1.442695
    %v2179 = vpow.pop %v2178
    %v2180 = vadd.f32 %v2173, 1.0
    %v2181 = vadd.f32 %v2175, 1.0
    %v2182 = vadd.f32 %v2177, 1.0
    %v2183 = vadd.f32 %v2179, 1.0
    %v2184 = vrcp.pop %v2180
    %v2185 = vmul.f32 1.0, %v2184
    %v2186 = vrcp.pop %v2181
    %v2187 = vmul.f32 1.0, %v2186
    %v2188 = vrcp.pop %v2182
    %v2189 = vmul.f32 1.0, %v2188
    %v2190 = vrcp.pop %v2183
    %v2191 = vmul.f32 1.0, %v2190
    %v2192 = vmul.f32 %v2164, %v2185
    %v2193 = vmul.f32 %v2165, %v2187
    %v2194 = vmul.f32 %v2166, %v2189
    %v2195 = vmul.f32 %v2167, %v2191
    %v2196 = vpack.c.bf16 %v2194, %v2192
    %v2197 = vpack.c.bf16 %v2195, %v2193
    %v2198 = vld [vmem:[#allocation10] sm:$0xff]
    %v2199 = vld [vmem:[#allocation10 + $0x8] sm:$0xff]
    %v2200 = vld [vmem:[#allocation10 + $0x10] sm:$0xff]
    %v2201 = vld [vmem:[#allocation10 + $0x18] sm:$0xff]
    %v2202 = vld [vmem:[#allocation10 + $0x20] sm:$0xff]
    %v2203 = vld [vmem:[#allocation10 + $0x28] sm:$0xff]
    %v2204 = vld [vmem:[#allocation10 + $0x30] sm:$0xff]
    %v2205 = vld [vmem:[#allocation10 + $0x38] sm:$0xff]
    %v2206 = vld [vmem:[#allocation10 + $0x40] sm:$0xff]
    %v2207 = vld [vmem:[#allocation10 + $0x48] sm:$0xff]
    %v2208 = vld [vmem:[#allocation10 + $0x50] sm:$0xff]
    %v2209 = vld [vmem:[#allocation10 + $0x58] sm:$0xff]
    %v2210 = vld [vmem:[#allocation10 + $0x60] sm:$0xff]
    %v2211 = vld [vmem:[#allocation10 + $0x68] sm:$0xff]
    %v2212 = vld [vmem:[#allocation10 + $0x70] sm:$0xff]
    %v2213 = vld [vmem:[#allocation10 + $0x78] sm:$0xff]
    %v2214 = vld [vmem:[#allocation10 + $0x80] sm:$0xff]
    %v2215 = vld [vmem:[#allocation10 + $0x88] sm:$0xff]
    %v2216 = vld [vmem:[#allocation10 + $0x90] sm:$0xff]
    %v2217 = vld [vmem:[#allocation10 + $0x98] sm:$0xff]
    %v2218 = vld [vmem:[#allocation10 + $0xa0] sm:$0xff]
    %v2219 = vld [vmem:[#allocation10 + $0xa8] sm:$0xff]
    %v2220 = vld [vmem:[#allocation10 + $0xb0] sm:$0xff]
    %v2221 = vld [vmem:[#allocation10 + $0xb8] sm:$0xff]
    %v2222 = vld [vmem:[#allocation10 + $0xc0] sm:$0xff]
    %v2223 = vld [vmem:[#allocation10 + $0xc8] sm:$0xff]
    %v2224 = vld [vmem:[#allocation10 + $0xd0] sm:$0xff]
    %v2225 = vld [vmem:[#allocation10 + $0xd8] sm:$0xff]
    %v2226 = vld [vmem:[#allocation10 + $0xe0] sm:$0xff]
    %v2227 = vld [vmem:[#allocation10 + $0xe8] sm:$0xff]
    %v2228 = vld [vmem:[#allocation10 + $0xf0] sm:$0xff]
    %v2229 = vld [vmem:[#allocation10 + $0xf8] sm:$0xff]
    %v2230 = vld [vmem:[#allocation10 + $0x100] sm:$0xff]
    %v2231 = vld [vmem:[#allocation10 + $0x108] sm:$0xff]
    %v2232 = vld [vmem:[#allocation10 + $0x110] sm:$0xff]
    %v2233 = vld [vmem:[#allocation10 + $0x118] sm:$0xff]
    %v2234 = vld [vmem:[#allocation10 + $0x120] sm:$0xff]
    %v2235 = vld [vmem:[#allocation10 + $0x128] sm:$0xff]
    %v2236 = vld [vmem:[#allocation10 + $0x130] sm:$0xff]
    %v2237 = vld [vmem:[#allocation10 + $0x138] sm:$0xff]
    %v2238 = vld [vmem:[#allocation10 + $0x140] sm:$0xff]
    %v2239 = vld [vmem:[#allocation10 + $0x148] sm:$0xff]
    %v2240 = vld [vmem:[#allocation10 + $0x150] sm:$0xff]
    %v2241 = vld [vmem:[#allocation10 + $0x158] sm:$0xff]
    %v2242 = vld [vmem:[#allocation10 + $0x160] sm:$0xff]
    %v2243 = vld [vmem:[#allocation10 + $0x168] sm:$0xff]
    %v2244 = vld [vmem:[#allocation10 + $0x170] sm:$0xff]
    %v2245 = vld [vmem:[#allocation10 + $0x178] sm:$0xff]
    %v2246 = vld [vmem:[#allocation10 + $0x180] sm:$0xff]
    %v2247 = vld [vmem:[#allocation10 + $0x188] sm:$0xff]
    %v2248 = vld [vmem:[#allocation10 + $0x190] sm:$0xff]
    %v2249 = vld [vmem:[#allocation10 + $0x198] sm:$0xff]
    %v2250 = vld [vmem:[#allocation10 + $0x1a0] sm:$0xff]
    %v2251 = vld [vmem:[#allocation10 + $0x1a8] sm:$0xff]
    %v2252 = vld [vmem:[#allocation10 + $0x1b0] sm:$0xff]
    %v2253 = vld [vmem:[#allocation10 + $0x1b8] sm:$0xff]
    %v2254 = vld [vmem:[#allocation10 + $0x1c0] sm:$0xff]
    %v2255 = vld [vmem:[#allocation10 + $0x1c8] sm:$0xff]
    %v2256 = vld [vmem:[#allocation10 + $0x1d0] sm:$0xff]
    %v2257 = vld [vmem:[#allocation10 + $0x1d8] sm:$0xff]
    %v2258 = vld [vmem:[#allocation10 + $0x1e0] sm:$0xff]
    %v2259 = vld [vmem:[#allocation10 + $0x1e8] sm:$0xff]
    %v2260 = vld [vmem:[#allocation10 + $0x1f0] sm:$0xff]
    %v2261 = vld [vmem:[#allocation10 + $0x1f8] sm:$0xff]
    %v2262 = vld [vmem:[#allocation12] sm:$0xf]
    %v2264 = vlaneseq
    %v2265 = vshrl.u32 %v2264, 7
    %v2266 = vsub.s32 0, %v2265
    %v2267 = vrot.slane %v2262, %v2266
    %v2268 = vlaneseq
    %v2269 = vshrl.u32 %v2268, 7
    %v2270 = vsub.s32 1, %v2269
    %v2271 = vrot.slane %v2262, %v2270
    %v2272 = vlaneseq
    %v2273 = vshrl.u32 %v2272, 7
    %v2274 = vsub.s32 2, %v2273
    %v2275 = vrot.slane %v2262, %v2274
    %v2276 = vlaneseq
    %v2277 = vshrl.u32 %v2276, 7
    %v2278 = vsub.s32 3, %v2277
    %v2279 = vrot.slane %v2262, %v2278
    %v2348 = vunpack.c.l.b16 %v2198
    %v2349 = vunpack.c.h.b16 %v2198
    %v2350 = vunpack.c.l.b16 %v2199
    %v2351 = vunpack.c.h.b16 %v2199
    %v2352 = vunpack.c.l.b16 %v2200
    %v2353 = vunpack.c.h.b16 %v2200
    %v2354 = vunpack.c.l.b16 %v2201
    %v2355 = vunpack.c.h.b16 %v2201
    %v2356 = vunpack.c.l.b16 %v2202
    %v2357 = vunpack.c.h.b16 %v2202
    %v2358 = vunpack.c.l.b16 %v2203
    %v2359 = vunpack.c.h.b16 %v2203
    %v2360 = vunpack.c.l.b16 %v2204
    %v2361 = vunpack.c.h.b16 %v2204
    %v2362 = vunpack.c.l.b16 %v2205
    %v2363 = vunpack.c.h.b16 %v2205
    %v2364 = vunpack.c.l.b16 %v2206
    %v2365 = vunpack.c.h.b16 %v2206
    %v2366 = vunpack.c.l.b16 %v2207
    %v2367 = vunpack.c.h.b16 %v2207
    %v2368 = vunpack.c.l.b16 %v2208
    %v2369 = vunpack.c.h.b16 %v2208
    %v2370 = vunpack.c.l.b16 %v2209
    %v2371 = vunpack.c.h.b16 %v2209
    %v2372 = vunpack.c.l.b16 %v2210
    %v2373 = vunpack.c.h.b16 %v2210
    %v2374 = vunpack.c.l.b16 %v2211
    %v2375 = vunpack.c.h.b16 %v2211
    %v2376 = vunpack.c.l.b16 %v2212
    %v2377 = vunpack.c.h.b16 %v2212
    %v2378 = vunpack.c.l.b16 %v2213
    %v2379 = vunpack.c.h.b16 %v2213
    %v2380 = vunpack.c.l.b16 %v2214
    %v2381 = vunpack.c.h.b16 %v2214
    %v2382 = vunpack.c.l.b16 %v2215
    %v2383 = vunpack.c.h.b16 %v2215
    %v2384 = vunpack.c.l.b16 %v2216
    %v2385 = vunpack.c.h.b16 %v2216
    %v2386 = vunpack.c.l.b16 %v2217
    %v2387 = vunpack.c.h.b16 %v2217
    %v2388 = vunpack.c.l.b16 %v2218
    %v2389 = vunpack.c.h.b16 %v2218
    %v2390 = vunpack.c.l.b16 %v2219
    %v2391 = vunpack.c.h.b16 %v2219
    %v2392 = vunpack.c.l.b16 %v2220
    %v2393 = vunpack.c.h.b16 %v2220
    %v2394 = vunpack.c.l.b16 %v2221
    %v2395 = vunpack.c.h.b16 %v2221
    %v2396 = vunpack.c.l.b16 %v2222
    %v2397 = vunpack.c.h.b16 %v2222
    %v2398 = vunpack.c.l.b16 %v2223
    %v2399 = vunpack.c.h.b16 %v2223
    %v2400 = vunpack.c.l.b16 %v2224
    %v2401 = vunpack.c.h.b16 %v2224
    %v2402 = vunpack.c.l.b16 %v2225
    %v2403 = vunpack.c.h.b16 %v2225
    %v2404 = vunpack.c.l.b16 %v2226
    %v2405 = vunpack.c.h.b16 %v2226
    %v2406 = vunpack.c.l.b16 %v2227
    %v2407 = vunpack.c.h.b16 %v2227
    %v2408 = vunpack.c.l.b16 %v2228
    %v2409 = vunpack.c.h.b16 %v2228
    %v2410 = vunpack.c.l.b16 %v2229
    %v2411 = vunpack.c.h.b16 %v2229
    %v2412 = vunpack.c.l.b16 %v2230
    %v2413 = vunpack.c.h.b16 %v2230
    %v2414 = vunpack.c.l.b16 %v2231
    %v2415 = vunpack.c.h.b16 %v2231
    %v2416 = vunpack.c.l.b16 %v2232
    %v2417 = vunpack.c.h.b16 %v2232
    %v2418 = vunpack.c.l.b16 %v2233
    %v2419 = vunpack.c.h.b16 %v2233
    %v2420 = vunpack.c.l.b16 %v2234
    %v2421 = vunpack.c.h.b16 %v2234
    %v2422 = vunpack.c.l.b16 %v2235
    %v2423 = vunpack.c.h.b16 %v2235
    %v2424 = vunpack.c.l.b16 %v2236
    %v2425 = vunpack.c.h.b16 %v2236
    %v2426 = vunpack.c.l.b16 %v2237
    %v2427 = vunpack.c.h.b16 %v2237
    %v2428 = vunpack.c.l.b16 %v2238
    %v2429 = vunpack.c.h.b16 %v2238
    %v2430 = vunpack.c.l.b16 %v2239
    %v2431 = vunpack.c.h.b16 %v2239
    %v2432 = vunpack.c.l.b16 %v2240
    %v2433 = vunpack.c.h.b16 %v2240
    %v2434 = vunpack.c.l.b16 %v2241
    %v2435 = vunpack.c.h.b16 %v2241
    %v2436 = vunpack.c.l.b16 %v2242
    %v2437 = vunpack.c.h.b16 %v2242
    %v2438 = vunpack.c.l.b16 %v2243
    %v2439 = vunpack.c.h.b16 %v2243
    %v2440 = vunpack.c.l.b16 %v2244
    %v2441 = vunpack.c.h.b16 %v2244
    %v2442 = vunpack.c.l.b16 %v2245
    %v2443 = vunpack.c.h.b16 %v2245
    %v2444 = vunpack.c.l.b16 %v2246
    %v2445 = vunpack.c.h.b16 %v2246
    %v2446 = vunpack.c.l.b16 %v2247
    %v2447 = vunpack.c.h.b16 %v2247
    %v2448 = vunpack.c.l.b16 %v2248
    %v2449 = vunpack.c.h.b16 %v2248
    %v2450 = vunpack.c.l.b16 %v2249
    %v2451 = vunpack.c.h.b16 %v2249
    %v2452 = vunpack.c.l.b16 %v2250
    %v2453 = vunpack.c.h.b16 %v2250
    %v2454 = vunpack.c.l.b16 %v2251
    %v2455 = vunpack.c.h.b16 %v2251
    %v2456 = vunpack.c.l.b16 %v2252
    %v2457 = vunpack.c.h.b16 %v2252
    %v2458 = vunpack.c.l.b16 %v2253
    %v2459 = vunpack.c.h.b16 %v2253
    %v2460 = vunpack.c.l.b16 %v2254
    %v2461 = vunpack.c.h.b16 %v2254
    %v2462 = vunpack.c.l.b16 %v2255
    %v2463 = vunpack.c.h.b16 %v2255
    %v2464 = vunpack.c.l.b16 %v2256
    %v2465 = vunpack.c.h.b16 %v2256
    %v2466 = vunpack.c.l.b16 %v2257
    %v2467 = vunpack.c.h.b16 %v2257
    %v2468 = vunpack.c.l.b16 %v2258
    %v2469 = vunpack.c.h.b16 %v2258
    %v2470 = vunpack.c.l.b16 %v2259
    %v2471 = vunpack.c.h.b16 %v2259
    %v2472 = vunpack.c.l.b16 %v2260
    %v2473 = vunpack.c.h.b16 %v2260
    %v2474 = vunpack.c.l.b16 %v2261
    %v2475 = vunpack.c.h.b16 %v2261
    %v2476 = vpack.c.b16 %v2352, %v2348
    %v2477 = vpack.c.b16 %v2353, %v2349
    %v2478 = vpack.c.b16 %v2354, %v2350
    %v2479 = vpack.c.b16 %v2355, %v2351
    %v2480 = vpack.c.b16 %v2360, %v2356
    %v2481 = vpack.c.b16 %v2361, %v2357
    %v2482 = vpack.c.b16 %v2362, %v2358
    %v2483 = vpack.c.b16 %v2363, %v2359
    %v2484 = vpack.c.b16 %v2368, %v2364
    %v2485 = vpack.c.b16 %v2369, %v2365
    %v2486 = vpack.c.b16 %v2370, %v2366
    %v2487 = vpack.c.b16 %v2371, %v2367
    %v2488 = vpack.c.b16 %v2376, %v2372
    %v2489 = vpack.c.b16 %v2377, %v2373
    %v2490 = vpack.c.b16 %v2378, %v2374
    %v2491 = vpack.c.b16 %v2379, %v2375
    %v2492 = vpack.c.b16 %v2384, %v2380
    %v2493 = vpack.c.b16 %v2385, %v2381
    %v2494 = vpack.c.b16 %v2386, %v2382
    %v2495 = vpack.c.b16 %v2387, %v2383
    %v2496 = vpack.c.b16 %v2392, %v2388
    %v2497 = vpack.c.b16 %v2393, %v2389
    %v2498 = vpack.c.b16 %v2394, %v2390
    %v2499 = vpack.c.b16 %v2395, %v2391
    %v2500 = vpack.c.b16 %v2400, %v2396
    %v2501 = vpack.c.b16 %v2401, %v2397
    %v2502 = vpack.c.b16 %v2402, %v2398
    %v2503 = vpack.c.b16 %v2403, %v2399
    %v2504 = vpack.c.b16 %v2408, %v2404
    %v2505 = vpack.c.b16 %v2409, %v2405
    %v2506 = vpack.c.b16 %v2410, %v2406
    %v2507 = vpack.c.b16 %v2411, %v2407
    %v2508 = vpack.c.b16 %v2416, %v2412
    %v2509 = vpack.c.b16 %v2417, %v2413
    %v2510 = vpack.c.b16 %v2418, %v2414
    %v2511 = vpack.c.b16 %v2419, %v2415
    %v2512 = vpack.c.b16 %v2424, %v2420
    %v2513 = vpack.c.b16 %v2425, %v2421
    %v2514 = vpack.c.b16 %v2426, %v2422
    %v2515 = vpack.c.b16 %v2427, %v2423
    %v2516 = vpack.c.b16 %v2432, %v2428
    %v2517 = vpack.c.b16 %v2433, %v2429
    %v2518 = vpack.c.b16 %v2434, %v2430
    %v2519 = vpack.c.b16 %v2435, %v2431
    %v2520 = vpack.c.b16 %v2440, %v2436
    %v2521 = vpack.c.b16 %v2441, %v2437
    %v2522 = vpack.c.b16 %v2442, %v2438
    %v2523 = vpack.c.b16 %v2443, %v2439
    %v2524 = vpack.c.b16 %v2448, %v2444
    %v2525 = vpack.c.b16 %v2449, %v2445
    %v2526 = vpack.c.b16 %v2450, %v2446
    %v2527 = vpack.c.b16 %v2451, %v2447
    %v2528 = vpack.c.b16 %v2456, %v2452
    %v2529 = vpack.c.b16 %v2457, %v2453
    %v2530 = vpack.c.b16 %v2458, %v2454
    %v2531 = vpack.c.b16 %v2459, %v2455
    %v2532 = vpack.c.b16 %v2464, %v2460
    %v2533 = vpack.c.b16 %v2465, %v2461
    %v2534 = vpack.c.b16 %v2466, %v2462
    %v2535 = vpack.c.b16 %v2467, %v2463
    %v2536 = vpack.c.b16 %v2472, %v2468
    %v2537 = vpack.c.b16 %v2473, %v2469
    %v2538 = vpack.c.b16 %v2474, %v2470
    %v2539 = vpack.c.b16 %v2475, %v2471
    %2604 = vmatprep.subr.bf16.mxu0 %v2477
    %2605 = vmatpush1.bf16.msra.mxu0 %v2476
    %2606 = vmatprep.subr.bf16.mxu0 %v2481
    %2607 = vmatpush1.bf16.msra.mxu0 %v2480
    %2608 = vmatprep.subr.bf16.mxu0 %v2485
    %2609 = vmatpush1.bf16.msra.mxu0 %v2484
    %2610 = vmatprep.subr.bf16.mxu0 %v2489
    %2611 = vmatpush1.bf16.msra.mxu0 %v2488
    %2612 = vmatprep.subr.bf16.mxu0 %v2493
    %2613 = vmatpush1.bf16.msra.mxu0 %v2492
    %2614 = vmatprep.subr.bf16.mxu0 %v2497
    %2615 = vmatpush1.bf16.msra.mxu0 %v2496
    %2616 = vmatprep.subr.bf16.mxu0 %v2501
    %2617 = vmatpush1.bf16.msra.mxu0 %v2500
    %2618 = vmatprep.subr.bf16.mxu0 %v2505
    %2619 = vmatpush1.bf16.msra.mxu0 %v2504
    %2620 = vmatprep.subr.bf16.mxu0 %v2509
    %2621 = vmatpush1.bf16.msra.mxu0 %v2508
    %2622 = vmatprep.subr.bf16.mxu0 %v2513
    %2623 = vmatpush1.bf16.msra.mxu0 %v2512
    %2624 = vmatprep.subr.bf16.mxu0 %v2517
    %2625 = vmatpush1.bf16.msra.mxu0 %v2516
    %2626 = vmatprep.subr.bf16.mxu0 %v2521
    %2627 = vmatpush1.bf16.msra.mxu0 %v2520
    %2628 = vmatprep.subr.bf16.mxu0 %v2525
    %2629 = vmatpush1.bf16.msra.mxu0 %v2524
    %2630 = vmatprep.subr.bf16.mxu0 %v2529
    %2631 = vmatpush1.bf16.msra.mxu0 %v2528
    %2632 = vmatprep.subr.bf16.mxu0 %v2533
    %2633 = vmatpush1.bf16.msra.mxu0 %v2532
    %2634 = vmatprep.subr.bf16.mxu0 %v2537
    %2635 = vmatpush1.bf16.msra.mxu0 %v2536
    %2636 = vmatprep.mubr.bf16.mxu0 %v2197
    %2637 = vmatmul.mubr.bf16.gmra.mrb[0].mxu0 %v2196
    %v2638 = vpop.f32.mrb[0].mxu0
    %v2639 = vadd.f32 %v2267, %v2638
    %v2640 = vpop.f32.mrb[0].mxu0
    %v2641 = vadd.f32 %v2271, %v2640
    %v2642 = vpop.f32.mrb[0].mxu0
    %v2643 = vadd.f32 %v2267, %v2642
    %v2644 = vpop.f32.mrb[0].mxu0
    %v2645 = vadd.f32 %v2271, %v2644
    %2646 = vdwg.mxu0
    %2647 = vmatprep.subr.bf16.mxu0 %v2479
    %2648 = vmatpush1.bf16.msra.mxu0 %v2478
    %2649 = vmatprep.subr.bf16.mxu0 %v2483
    %2650 = vmatpush1.bf16.msra.mxu0 %v2482
    %2651 = vmatprep.subr.bf16.mxu0 %v2487
    %2652 = vmatpush1.bf16.msra.mxu0 %v2486
    %2653 = vmatprep.subr.bf16.mxu0 %v2491
    %2654 = vmatpush1.bf16.msra.mxu0 %v2490
    %2655 = vmatprep.subr.bf16.mxu0 %v2495
    %2656 = vmatpush1.bf16.msra.mxu0 %v2494
    %2657 = vmatprep.subr.bf16.mxu0 %v2499
    %2658 = vmatpush1.bf16.msra.mxu0 %v2498
    %2659 = vmatprep.subr.bf16.mxu0 %v2503
    %2660 = vmatpush1.bf16.msra.mxu0 %v2502
    %2661 = vmatprep.subr.bf16.mxu0 %v2507
    %2662 = vmatpush1.bf16.msra.mxu0 %v2506
    %2663 = vmatprep.subr.bf16.mxu0 %v2511
    %2664 = vmatpush1.bf16.msra.mxu0 %v2510
    %2665 = vmatprep.subr.bf16.mxu0 %v2515
    %2666 = vmatpush1.bf16.msra.mxu0 %v2514
    %2667 = vmatprep.subr.bf16.mxu0 %v2519
    %2668 = vmatpush1.bf16.msra.mxu0 %v2518
    %2669 = vmatprep.subr.bf16.mxu0 %v2523
    %2670 = vmatpush1.bf16.msra.mxu0 %v2522
    %2671 = vmatprep.subr.bf16.mxu0 %v2527
    %2672 = vmatpush1.bf16.msra.mxu0 %v2526
    %2673 = vmatprep.subr.bf16.mxu0 %v2531
    %2674 = vmatpush1.bf16.msra.mxu0 %v2530
    %2675 = vmatprep.subr.bf16.mxu0 %v2535
    %2676 = vmatpush1.bf16.msra.mxu0 %v2534
    %2677 = vmatprep.subr.bf16.mxu0 %v2539
    %2678 = vmatpush1.bf16.msra.mxu0 %v2538
    %2679 = vmatprep.mubr.bf16.mxu0 %v2197
    %2680 = vmatmul.mubr.bf16.gmra.mrb[0].mxu0 %v2196
    %v2681 = vpop.f32.mrb[0].mxu0
    %v2682 = vadd.f32 %v2275, %v2681
    %v2683 = vpop.f32.mrb[0].mxu0
    %v2684 = vadd.f32 %v2279, %v2683
    %v2685 = vpop.f32.mrb[0].mxu0
    %v2686 = vadd.f32 %v2275, %v2685
    %v2687 = vpop.f32.mrb[0].mxu0
    %v2688 = vadd.f32 %v2279, %v2687
    %2689 = vdwg.mxu0
    %v2690 = vadd.f32 %v525, %v2639
    %v2691 = vadd.f32 %v526, %v2641
    %v2692 = vadd.f32 %v527, %v2643
    %v2693 = vadd.f32 %v528, %v2645
    %v2694 = vmul.f32 %v2690, 0.70710677
    %v2695 = vmul.f32 %v2691, 0.70710677
    %v2696 = vmul.f32 %v2692, 0.70710677
    %v2697 = vmul.f32 %v2693, 0.70710677
    %v2698 = vadd.f32 %v2682, 0.0
    %v2699 = vadd.f32 %v2684, 0.0
    %v2700 = vadd.f32 %v2686, 0.0
    %v2701 = vadd.f32 %v2688, 0.0
    %v2702 = vpack.c.bf16 %v2696, %v2694
    %v2703 = vpack.c.bf16 %v2697, %v2695
    %s2704 = scalar_lea.vmem [#allocation6], 2048
    %v2705 = vld [vmem:[%s2704] sm:$0xff]
    %v2706 = vld [vmem:[%s2704 + $0x8] sm:$0xff]
    %v2707 = vld [vmem:[%s2704 + $0x10] sm:$0xff]
    %v2708 = vld [vmem:[%s2704 + $0x18] sm:$0xff]
    %v2709 = vld [vmem:[%s2704 + $0x20] sm:$0xff]
    %v2710 = vld [vmem:[%s2704 + $0x28] sm:$0xff]
    %v2711 = vld [vmem:[%s2704 + $0x30] sm:$0xff]
    %v2712 = vld [vmem:[%s2704 + $0x38] sm:$0xff]
    %v2713 = vld [vmem:[%s2704 + $0x40] sm:$0xff]
    %v2714 = vld [vmem:[%s2704 + $0x48] sm:$0xff]
    %v2715 = vld [vmem:[%s2704 + $0x50] sm:$0xff]
    %v2716 = vld [vmem:[%s2704 + $0x58] sm:$0xff]
    %v2717 = vld [vmem:[%s2704 + $0x60] sm:$0xff]
    %v2718 = vld [vmem:[%s2704 + $0x68] sm:$0xff]
    %v2719 = vld [vmem:[%s2704 + $0x70] sm:$0xff]
    %v2720 = vld [vmem:[%s2704 + $0x78] sm:$0xff]
    %v2721 = vld [vmem:[%s2704 + $0x80] sm:$0xff]
    %v2722 = vld [vmem:[%s2704 + $0x88] sm:$0xff]
    %v2723 = vld [vmem:[%s2704 + $0x90] sm:$0xff]
    %v2724 = vld [vmem:[%s2704 + $0x98] sm:$0xff]
    %v2725 = vld [vmem:[%s2704 + $0xa0] sm:$0xff]
    %v2726 = vld [vmem:[%s2704 + $0xa8] sm:$0xff]
    %v2727 = vld [vmem:[%s2704 + $0xb0] sm:$0xff]
    %v2728 = vld [vmem:[%s2704 + $0xb8] sm:$0xff]
    %v2729 = vld [vmem:[%s2704 + $0xc0] sm:$0xff]
    %v2730 = vld [vmem:[%s2704 + $0xc8] sm:$0xff]
    %v2731 = vld [vmem:[%s2704 + $0xd0] sm:$0xff]
    %v2732 = vld [vmem:[%s2704 + $0xd8] sm:$0xff]
    %v2733 = vld [vmem:[%s2704 + $0xe0] sm:$0xff]
    %v2734 = vld [vmem:[%s2704 + $0xe8] sm:$0xff]
    %v2735 = vld [vmem:[%s2704 + $0xf0] sm:$0xff]
    %v2736 = vld [vmem:[%s2704 + $0xf8] sm:$0xff]
    %v2737 = vld [vmem:[%s2704 + $0x100] sm:$0xff]
    %v2738 = vld [vmem:[%s2704 + $0x108] sm:$0xff]
    %v2739 = vld [vmem:[%s2704 + $0x110] sm:$0xff]
    %v2740 = vld [vmem:[%s2704 + $0x118] sm:$0xff]
    %v2741 = vld [vmem:[%s2704 + $0x120] sm:$0xff]
    %v2742 = vld [vmem:[%s2704 + $0x128] sm:$0xff]
    %v2743 = vld [vmem:[%s2704 + $0x130] sm:$0xff]
    %v2744 = vld [vmem:[%s2704 + $0x138] sm:$0xff]
    %v2745 = vld [vmem:[%s2704 + $0x140] sm:$0xff]
    %v2746 = vld [vmem:[%s2704 + $0x148] sm:$0xff]
    %v2747 = vld [vmem:[%s2704 + $0x150] sm:$0xff]
    %v2748 = vld [vmem:[%s2704 + $0x158] sm:$0xff]
    %v2749 = vld [vmem:[%s2704 + $0x160] sm:$0xff]
    %v2750 = vld [vmem:[%s2704 + $0x168] sm:$0xff]
    %v2751 = vld [vmem:[%s2704 + $0x170] sm:$0xff]
    %v2752 = vld [vmem:[%s2704 + $0x178] sm:$0xff]
    %v2753 = vld [vmem:[%s2704 + $0x180] sm:$0xff]
    %v2754 = vld [vmem:[%s2704 + $0x188] sm:$0xff]
    %v2755 = vld [vmem:[%s2704 + $0x190] sm:$0xff]
    %v2756 = vld [vmem:[%s2704 + $0x198] sm:$0xff]
    %v2757 = vld [vmem:[%s2704 + $0x1a0] sm:$0xff]
    %v2758 = vld [vmem:[%s2704 + $0x1a8] sm:$0xff]
    %v2759 = vld [vmem:[%s2704 + $0x1b0] sm:$0xff]
    %v2760 = vld [vmem:[%s2704 + $0x1b8] sm:$0xff]
    %v2761 = vld [vmem:[%s2704 + $0x1c0] sm:$0xff]
    %v2762 = vld [vmem:[%s2704 + $0x1c8] sm:$0xff]
    %v2763 = vld [vmem:[%s2704 + $0x1d0] sm:$0xff]
    %v2764 = vld [vmem:[%s2704 + $0x1d8] sm:$0xff]
    %v2765 = vld [vmem:[%s2704 + $0x1e0] sm:$0xff]
    %v2766 = vld [vmem:[%s2704 + $0x1e8] sm:$0xff]
    %v2767 = vld [vmem:[%s2704 + $0x1f0] sm:$0xff]
    %v2768 = vld [vmem:[%s2704 + $0x1f8] sm:$0xff]
    %s2769 = scalar_lea.vmem [#allocation6], 1536
    %v2770 = vld [vmem:[%s2769] sm:$0xff]
    %v2771 = vld [vmem:[%s2769 + $0x8] sm:$0xff]
    %v2772 = vld [vmem:[%s2769 + $0x10] sm:$0xff]
    %v2773 = vld [vmem:[%s2769 + $0x18] sm:$0xff]
    %v2774 = vld [vmem:[%s2769 + $0x20] sm:$0xff]
    %v2775 = vld [vmem:[%s2769 + $0x28] sm:$0xff]
    %v2776 = vld [vmem:[%s2769 + $0x30] sm:$0xff]
    %v2777 = vld [vmem:[%s2769 + $0x38] sm:$0xff]
    %v2778 = vld [vmem:[%s2769 + $0x40] sm:$0xff]
    %v2779 = vld [vmem:[%s2769 + $0x48] sm:$0xff]
    %v2780 = vld [vmem:[%s2769 + $0x50] sm:$0xff]
    %v2781 = vld [vmem:[%s2769 + $0x58] sm:$0xff]
    %v2782 = vld [vmem:[%s2769 + $0x60] sm:$0xff]
    %v2783 = vld [vmem:[%s2769 + $0x68] sm:$0xff]
    %v2784 = vld [vmem:[%s2769 + $0x70] sm:$0xff]
    %v2785 = vld [vmem:[%s2769 + $0x78] sm:$0xff]
    %v2786 = vld [vmem:[%s2769 + $0x80] sm:$0xff]
    %v2787 = vld [vmem:[%s2769 + $0x88] sm:$0xff]
    %v2788 = vld [vmem:[%s2769 + $0x90] sm:$0xff]
    %v2789 = vld [vmem:[%s2769 + $0x98] sm:$0xff]
    %v2790 = vld [vmem:[%s2769 + $0xa0] sm:$0xff]
    %v2791 = vld [vmem:[%s2769 + $0xa8] sm:$0xff]
    %v2792 = vld [vmem:[%s2769 + $0xb0] sm:$0xff]
    %v2793 = vld [vmem:[%s2769 + $0xb8] sm:$0xff]
    %v2794 = vld [vmem:[%s2769 + $0xc0] sm:$0xff]
    %v2795 = vld [vmem:[%s2769 + $0xc8] sm:$0xff]
    %v2796 = vld [vmem:[%s2769 + $0xd0] sm:$0xff]
    %v2797 = vld [vmem:[%s2769 + $0xd8] sm:$0xff]
    %v2798 = vld [vmem:[%s2769 + $0xe0] sm:$0xff]
    %v2799 = vld [vmem:[%s2769 + $0xe8] sm:$0xff]
    %v2800 = vld [vmem:[%s2769 + $0xf0] sm:$0xff]
    %v2801 = vld [vmem:[%s2769 + $0xf8] sm:$0xff]
    %v2802 = vld [vmem:[%s2769 + $0x100] sm:$0xff]
    %v2803 = vld [vmem:[%s2769 + $0x108] sm:$0xff]
    %v2804 = vld [vmem:[%s2769 + $0x110] sm:$0xff]
    %v2805 = vld [vmem:[%s2769 + $0x118] sm:$0xff]
    %v2806 = vld [vmem:[%s2769 + $0x120] sm:$0xff]
    %v2807 = vld [vmem:[%s2769 + $0x128] sm:$0xff]
    %v2808 = vld [vmem:[%s2769 + $0x130] sm:$0xff]
    %v2809 = vld [vmem:[%s2769 + $0x138] sm:$0xff]
    %v2810 = vld [vmem:[%s2769 + $0x140] sm:$0xff]
    %v2811 = vld [vmem:[%s2769 + $0x148] sm:$0xff]
    %v2812 = vld [vmem:[%s2769 + $0x150] sm:$0xff]
    %v2813 = vld [vmem:[%s2769 + $0x158] sm:$0xff]
    %v2814 = vld [vmem:[%s2769 + $0x160] sm:$0xff]
    %v2815 = vld [vmem:[%s2769 + $0x168] sm:$0xff]
    %v2816 = vld [vmem:[%s2769 + $0x170] sm:$0xff]
    %v2817 = vld [vmem:[%s2769 + $0x178] sm:$0xff]
    %v2818 = vld [vmem:[%s2769 + $0x180] sm:$0xff]
    %v2819 = vld [vmem:[%s2769 + $0x188] sm:$0xff]
    %v2820 = vld [vmem:[%s2769 + $0x190] sm:$0xff]
    %v2821 = vld [vmem:[%s2769 + $0x198] sm:$0xff]
    %v2822 = vld [vmem:[%s2769 + $0x1a0] sm:$0xff]
    %v2823 = vld [vmem:[%s2769 + $0x1a8] sm:$0xff]
    %v2824 = vld [vmem:[%s2769 + $0x1b0] sm:$0xff]
    %v2825 = vld [vmem:[%s2769 + $0x1b8] sm:$0xff]
    %v2826 = vld [vmem:[%s2769 + $0x1c0] sm:$0xff]
    %v2827 = vld [vmem:[%s2769 + $0x1c8] sm:$0xff]
    %v2828 = vld [vmem:[%s2769 + $0x1d0] sm:$0xff]
    %v2829 = vld [vmem:[%s2769 + $0x1d8] sm:$0xff]
    %v2830 = vld [vmem:[%s2769 + $0x1e0] sm:$0xff]
    %v2831 = vld [vmem:[%s2769 + $0x1e8] sm:$0xff]
    %v2832 = vld [vmem:[%s2769 + $0x1f0] sm:$0xff]
    %v2833 = vld [vmem:[%s2769 + $0x1f8] sm:$0xff]
    %v2898 = vunpack.c.l.b16 %v2770
    %v2899 = vunpack.c.h.b16 %v2770
    %v2900 = vunpack.c.l.b16 %v2771
    %v2901 = vunpack.c.h.b16 %v2771
    %v2902 = vunpack.c.l.b16 %v2772
    %v2903 = vunpack.c.h.b16 %v2772
    %v2904 = vunpack.c.l.b16 %v2773
    %v2905 = vunpack.c.h.b16 %v2773
    %v2906 = vunpack.c.l.b16 %v2774
    %v2907 = vunpack.c.h.b16 %v2774
    %v2908 = vunpack.c.l.b16 %v2775
    %v2909 = vunpack.c.h.b16 %v2775
    %v2910 = vunpack.c.l.b16 %v2776
    %v2911 = vunpack.c.h.b16 %v2776
    %v2912 = vunpack.c.l.b16 %v2777
    %v2913 = vunpack.c.h.b16 %v2777
    %v2914 = vunpack.c.l.b16 %v2778
    %v2915 = vunpack.c.h.b16 %v2778
    %v2916 = vunpack.c.l.b16 %v2779
    %v2917 = vunpack.c.h.b16 %v2779
    %v2918 = vunpack.c.l.b16 %v2780
    %v2919 = vunpack.c.h.b16 %v2780
    %v2920 = vunpack.c.l.b16 %v2781
    %v2921 = vunpack.c.h.b16 %v2781
    %v2922 = vunpack.c.l.b16 %v2782
    %v2923 = vunpack.c.h.b16 %v2782
    %v2924 = vunpack.c.l.b16 %v2783
    %v2925 = vunpack.c.h.b16 %v2783
    %v2926 = vunpack.c.l.b16 %v2784
    %v2927 = vunpack.c.h.b16 %v2784
    %v2928 = vunpack.c.l.b16 %v2785
    %v2929 = vunpack.c.h.b16 %v2785
    %v2930 = vunpack.c.l.b16 %v2786
    %v2931 = vunpack.c.h.b16 %v2786
    %v2932 = vunpack.c.l.b16 %v2787
    %v2933 = vunpack.c.h.b16 %v2787
    %v2934 = vunpack.c.l.b16 %v2788
    %v2935 = vunpack.c.h.b16 %v2788
    %v2936 = vunpack.c.l.b16 %v2789
    %v2937 = vunpack.c.h.b16 %v2789
    %v2938 = vunpack.c.l.b16 %v2790
    %v2939 = vunpack.c.h.b16 %v2790
    %v2940 = vunpack.c.l.b16 %v2791
    %v2941 = vunpack.c.h.b16 %v2791
    %v2942 = vunpack.c.l.b16 %v2792
    %v2943 = vunpack.c.h.b16 %v2792
    %v2944 = vunpack.c.l.b16 %v2793
    %v2945 = vunpack.c.h.b16 %v2793
    %v2946 = vunpack.c.l.b16 %v2794
    %v2947 = vunpack.c.h.b16 %v2794
    %v2948 = vunpack.c.l.b16 %v2795
    %v2949 = vunpack.c.h.b16 %v2795
    %v2950 = vunpack.c.l.b16 %v2796
    %v2951 = vunpack.c.h.b16 %v2796
    %v2952 = vunpack.c.l.b16 %v2797
    %v2953 = vunpack.c.h.b16 %v2797
    %v2954 = vunpack.c.l.b16 %v2798
    %v2955 = vunpack.c.h.b16 %v2798
    %v2956 = vunpack.c.l.b16 %v2799
    %v2957 = vunpack.c.h.b16 %v2799
    %v2958 = vunpack.c.l.b16 %v2800
    %v2959 = vunpack.c.h.b16 %v2800
    %v2960 = vunpack.c.l.b16 %v2801
    %v2961 = vunpack.c.h.b16 %v2801
    %v2962 = vunpack.c.l.b16 %v2802
    %v2963 = vunpack.c.h.b16 %v2802
    %v2964 = vunpack.c.l.b16 %v2803
    %v2965 = vunpack.c.h.b16 %v2803
    %v2966 = vunpack.c.l.b16 %v2804
    %v2967 = vunpack.c.h.b16 %v2804
    %v2968 = vunpack.c.l.b16 %v2805
    %v2969 = vunpack.c.h.b16 %v2805
    %v2970 = vunpack.c.l.b16 %v2806
    %v2971 = vunpack.c.h.b16 %v2806
    %v2972 = vunpack.c.l.b16 %v2807
    %v2973 = vunpack.c.h.b16 %v2807
    %v2974 = vunpack.c.l.b16 %v2808
    %v2975 = vunpack.c.h.b16 %v2808
    %v2976 = vunpack.c.l.b16 %v2809
    %v2977 = vunpack.c.h.b16 %v2809
    %v2978 = vunpack.c.l.b16 %v2810
    %v2979 = vunpack.c.h.b16 %v2810
    %v2980 = vunpack.c.l.b16 %v2811
    %v2981 = vunpack.c.h.b16 %v2811
    %v2982 = vunpack.c.l.b16 %v2812
    %v2983 = vunpack.c.h.b16 %v2812
    %v2984 = vunpack.c.l.b16 %v2813
    %v2985 = vunpack.c.h.b16 %v2813
    %v2986 = vunpack.c.l.b16 %v2814
    %v2987 = vunpack.c.h.b16 %v2814
    %v2988 = vunpack.c.l.b16 %v2815
    %v2989 = vunpack.c.h.b16 %v2815
    %v2990 = vunpack.c.l.b16 %v2816
    %v2991 = vunpack.c.h.b16 %v2816
    %v2992 = vunpack.c.l.b16 %v2817
    %v2993 = vunpack.c.h.b16 %v2817
    %v2994 = vunpack.c.l.b16 %v2818
    %v2995 = vunpack.c.h.b16 %v2818
    %v2996 = vunpack.c.l.b16 %v2819
    %v2997 = vunpack.c.h.b16 %v2819
    %v2998 = vunpack.c.l.b16 %v2820
    %v2999 = vunpack.c.h.b16 %v2820
    %v3000 = vunpack.c.l.b16 %v2821
    %v3001 = vunpack.c.h.b16 %v2821
    %v3002 = vunpack.c.l.b16 %v2822
    %v3003 = vunpack.c.h.b16 %v2822
    %v3004 = vunpack.c.l.b16 %v2823
    %v3005 = vunpack.c.h.b16 %v2823
    %v3006 = vunpack.c.l.b16 %v2824
    %v3007 = vunpack.c.h.b16 %v2824
    %v3008 = vunpack.c.l.b16 %v2825
    %v3009 = vunpack.c.h.b16 %v2825
    %v3010 = vunpack.c.l.b16 %v2826
    %v3011 = vunpack.c.h.b16 %v2826
    %v3012 = vunpack.c.l.b16 %v2827
    %v3013 = vunpack.c.h.b16 %v2827
    %v3014 = vunpack.c.l.b16 %v2828
    %v3015 = vunpack.c.h.b16 %v2828
    %v3016 = vunpack.c.l.b16 %v2829
    %v3017 = vunpack.c.h.b16 %v2829
    %v3018 = vunpack.c.l.b16 %v2830
    %v3019 = vunpack.c.h.b16 %v2830
    %v3020 = vunpack.c.l.b16 %v2831
    %v3021 = vunpack.c.h.b16 %v2831
    %v3022 = vunpack.c.l.b16 %v2832
    %v3023 = vunpack.c.h.b16 %v2832
    %v3024 = vunpack.c.l.b16 %v2833
    %v3025 = vunpack.c.h.b16 %v2833
    %v3026 = vpack.c.b16 %v2902, %v2898
    %v3027 = vpack.c.b16 %v2903, %v2899
    %v3028 = vpack.c.b16 %v2904, %v2900
    %v3029 = vpack.c.b16 %v2905, %v2901
    %v3030 = vpack.c.b16 %v2910, %v2906
    %v3031 = vpack.c.b16 %v2911, %v2907
    %v3032 = vpack.c.b16 %v2912, %v2908
    %v3033 = vpack.c.b16 %v2913, %v2909
    %v3034 = vpack.c.b16 %v2918, %v2914
    %v3035 = vpack.c.b16 %v2919, %v2915
    %v3036 = vpack.c.b16 %v2920, %v2916
    %v3037 = vpack.c.b16 %v2921, %v2917
    %v3038 = vpack.c.b16 %v2926, %v2922
    %v3039 = vpack.c.b16 %v2927, %v2923
    %v3040 = vpack.c.b16 %v2928, %v2924
    %v3041 = vpack.c.b16 %v2929, %v2925
    %v3042 = vpack.c.b16 %v2934, %v2930
    %v3043 = vpack.c.b16 %v2935, %v2931
    %v3044 = vpack.c.b16 %v2936, %v2932
    %v3045 = vpack.c.b16 %v2937, %v2933
    %v3046 = vpack.c.b16 %v2942, %v2938
    %v3047 = vpack.c.b16 %v2943, %v2939
    %v3048 = vpack.c.b16 %v2944, %v2940
    %v3049 = vpack.c.b16 %v2945, %v2941
    %v3050 = vpack.c.b16 %v2950, %v2946
    %v3051 = vpack.c.b16 %v2951, %v2947
    %v3052 = vpack.c.b16 %v2952, %v2948
    %v3053 = vpack.c.b16 %v2953, %v2949
    %v3054 = vpack.c.b16 %v2958, %v2954
    %v3055 = vpack.c.b16 %v2959, %v2955
    %v3056 = vpack.c.b16 %v2960, %v2956
    %v3057 = vpack.c.b16 %v2961, %v2957
    %v3058 = vpack.c.b16 %v2966, %v2962
    %v3059 = vpack.c.b16 %v2967, %v2963
    %v3060 = vpack.c.b16 %v2968, %v2964
    %v3061 = vpack.c.b16 %v2969, %v2965
    %v3062 = vpack.c.b16 %v2974, %v2970
    %v3063 = vpack.c.b16 %v2975, %v2971
    %v3064 = vpack.c.b16 %v2976, %v2972
    %v3065 = vpack.c.b16 %v2977, %v2973
    %v3066 = vpack.c.b16 %v2982, %v2978
    %v3067 = vpack.c.b16 %v2983, %v2979
    %v3068 = vpack.c.b16 %v2984, %v2980
    %v3069 = vpack.c.b16 %v2985, %v2981
    %v3070 = vpack.c.b16 %v2990, %v2986
    %v3071 = vpack.c.b16 %v2991, %v2987
    %v3072 = vpack.c.b16 %v2992, %v2988
    %v3073 = vpack.c.b16 %v2993, %v2989
    %v3074 = vpack.c.b16 %v2998, %v2994
    %v3075 = vpack.c.b16 %v2999, %v2995
    %v3076 = vpack.c.b16 %v3000, %v2996
    %v3077 = vpack.c.b16 %v3001, %v2997
    %v3078 = vpack.c.b16 %v3006, %v3002
    %v3079 = vpack.c.b16 %v3007, %v3003
    %v3080 = vpack.c.b16 %v3008, %v3004
    %v3081 = vpack.c.b16 %v3009, %v3005
    %v3082 = vpack.c.b16 %v3014, %v3010
    %v3083 = vpack.c.b16 %v3015, %v3011
    %v3084 = vpack.c.b16 %v3016, %v3012
    %v3085 = vpack.c.b16 %v3017, %v3013
    %v3086 = vpack.c.b16 %v3022, %v3018
    %v3087 = vpack.c.b16 %v3023, %v3019
    %v3088 = vpack.c.b16 %v3024, %v3020
    %v3089 = vpack.c.b16 %v3025, %v3021
    %3154 = vmatprep.subr.bf16.mxu0 %v3027
    %3155 = vmatpush1.bf16.msra.mxu0 %v3026
    %3156 = vmatprep.subr.bf16.mxu0 %v3031
    %3157 = vmatpush1.bf16.msra.mxu0 %v3030
    %3158 = vmatprep.subr.bf16.mxu0 %v3035
    %3159 = vmatpush1.bf16.msra.mxu0 %v3034
    %3160 = vmatprep.subr.bf16.mxu0 %v3039
    %3161 = vmatpush1.bf16.msra.mxu0 %v3038
    %3162 = vmatprep.subr.bf16.mxu0 %v3043
    %3163 = vmatpush1.bf16.msra.mxu0 %v3042
    %3164 = vmatprep.subr.bf16.mxu0 %v3047
    %3165 = vmatpush1.bf16.msra.mxu0 %v3046
    %3166 = vmatprep.subr.bf16.mxu0 %v3051
    %3167 = vmatpush1.bf16.msra.mxu0 %v3050
    %3168 = vmatprep.subr.bf16.mxu0 %v3055
    %3169 = vmatpush1.bf16.msra.mxu0 %v3054
    %3170 = vmatprep.subr.bf16.mxu0 %v3059
    %3171 = vmatpush1.bf16.msra.mxu0 %v3058
    %3172 = vmatprep.subr.bf16.mxu0 %v3063
    %3173 = vmatpush1.bf16.msra.mxu0 %v3062
    %3174 = vmatprep.subr.bf16.mxu0 %v3067
    %3175 = vmatpush1.bf16.msra.mxu0 %v3066
    %3176 = vmatprep.subr.bf16.mxu0 %v3071
    %3177 = vmatpush1.bf16.msra.mxu0 %v3070
    %3178 = vmatprep.subr.bf16.mxu0 %v3075
    %3179 = vmatpush1.bf16.msra.mxu0 %v3074
    %3180 = vmatprep.subr.bf16.mxu0 %v3079
    %3181 = vmatpush1.bf16.msra.mxu0 %v3078
    %3182 = vmatprep.subr.bf16.mxu0 %v3083
    %3183 = vmatpush1.bf16.msra.mxu0 %v3082
    %3184 = vmatprep.subr.bf16.mxu0 %v3087
    %3185 = vmatpush1.bf16.msra.mxu0 %v3086
    %3186 = vmatprep.mubr.bf16.mxu0 %v2703
    %3187 = vmatmul.mubr.bf16.gmra.mrb[0].mxu0 %v2702
    %v3188 = vpop.f32.mrb[0].mxu0
    %v3189 = vadd.f32 0.0, %v3188
    %v3190 = vpop.f32.mrb[0].mxu0
    %v3191 = vadd.f32 0.0, %v3190
    %v3192 = vpop.f32.mrb[0].mxu0
    %v3193 = vadd.f32 0.0, %v3192
    %v3194 = vpop.f32.mrb[0].mxu0
    %v3195 = vadd.f32 0.0, %v3194
    %3196 = vdwg.mxu0
    %3197 = vmatprep.subr.bf16.mxu0 %v3029
    %3198 = vmatpush1.bf16.msra.mxu0 %v3028
    %3199 = vmatprep.subr.bf16.mxu0 %v3033
    %3200 = vmatpush1.bf16.msra.mxu0 %v3032
    %3201 = vmatprep.subr.bf16.mxu0 %v3037
    %3202 = vmatpush1.bf16.msra.mxu0 %v3036
    %3203 = vmatprep.subr.bf16.mxu0 %v3041
    %3204 = vmatpush1.bf16.msra.mxu0 %v3040
    %3205 = vmatprep.subr.bf16.mxu0 %v3045
    %3206 = vmatpush1.bf16.msra.mxu0 %v3044
    %3207 = vmatprep.subr.bf16.mxu0 %v3049
    %3208 = vmatpush1.bf16.msra.mxu0 %v3048
    %3209 = vmatprep.subr.bf16.mxu0 %v3053
    %3210 = vmatpush1.bf16.msra.mxu0 %v3052
    %3211 = vmatprep.subr.bf16.mxu0 %v3057
    %3212 = vmatpush1.bf16.msra.mxu0 %v3056
    %3213 = vmatprep.subr.bf16.mxu0 %v3061
    %3214 = vmatpush1.bf16.msra.mxu0 %v3060
    %3215 = vmatprep.subr.bf16.mxu0 %v3065
    %3216 = vmatpush1.bf16.msra.mxu0 %v3064
    %3217 = vmatprep.subr.bf16.mxu0 %v3069
    %3218 = vmatpush1.bf16.msra.mxu0 %v3068
    %3219 = vmatprep.subr.bf16.mxu0 %v3073
    %3220 = vmatpush1.bf16.msra.mxu0 %v3072
    %3221 = vmatprep.subr.bf16.mxu0 %v3077
    %3222 = vmatpush1.bf16.msra.mxu0 %v3076
    %3223 = vmatprep.subr.bf16.mxu0 %v3081
    %3224 = vmatpush1.bf16.msra.mxu0 %v3080
    %3225 = vmatprep.subr.bf16.mxu0 %v3085
    %3226 = vmatpush1.bf16.msra.mxu0 %v3084
    %3227 = vmatprep.subr.bf16.mxu0 %v3089
    %3228 = vmatpush1.bf16.msra.mxu0 %v3088
    %3229 = vmatprep.mubr.bf16.mxu0 %v2703
    %3230 = vmatmul.mubr.bf16.gmra.mrb[0].mxu0 %v2702
    %v3231 = vpop.f32.mrb[0].mxu0
    %v3232 = vadd.f32 0.0, %v3231
    %v3233 = vpop.f32.mrb[0].mxu0
    %v3234 = vadd.f32 0.0, %v3233
    %v3235 = vpop.f32.mrb[0].mxu0
    %v3236 = vadd.f32 0.0, %v3235
    %v3237 = vpop.f32.mrb[0].mxu0
    %v3238 = vadd.f32 0.0, %v3237
    %3239 = vdwg.mxu0
    %v3240 = vrot.slane %v3189, 6
    %v3241 = vrot.slane %v3191, 6
    %v3242 = vrot.slane %v3232, 6
    %v3243 = vrot.slane %v3234, 6
    %v3244 = vrot.slane %v3193, 6
    %v3245 = vrot.slane %v3195, 6
    %v3246 = vrot.slane %v3236, 6
    %v3247 = vrot.slane %v3238, 6
    %vm3248 = vcmp.lt.s32.totalorder %v209, 2
    %v3249 = vsel %vm3248, %v3240, %v3244
    %v3250 = vsel %vm3248, %v3241, %v3245
    %v3251 = vsel %vm3248, %v3242, %v3246
    %v3252 = vsel %vm3248, %v3243, %v3247
    %v3253 = vsel %vm3248, %v3244, %v3240
    %v3254 = vsel %vm3248, %v3245, %v3241
    %v3255 = vsel %vm3248, %v3246, %v3242
    %v3256 = vsel %vm3248, %v3247, %v3243
    %vm3257 = vcmp.ge.s32.totalorder %v233, 2
    %vm3258 = vcmp.ge.s32.totalorder %v234, 2
    %v3259 = vsel %vm3257, 1, 0
    %v3260 = vsel %vm3258, 1, 0
    %vm3261 = vcmp.eq.s32.totalorder %v3259, 1
    %vm3262 = vcmp.eq.s32.totalorder %v3260, 1
    %v3263 = vsel %vm3261, %v3253, 0.0
    %v3264 = vsel %vm3261, %v3254, 0.0
    %v3265 = vsel %vm3261, %v3255, 0.0
    %v3266 = vsel %vm3261, %v3256, 0.0
    %v3267 = vsel %vm3262, %v3249, 0.0
    %v3268 = vsel %vm3262, %v3250, 0.0
    %v3269 = vsel %vm3262, %v3251, 0.0
    %v3270 = vsel %vm3262, %v3252, 0.0
    %v3335 = vunpack.c.l.b16 %v2705
    %v3336 = vunpack.c.h.b16 %v2705
    %v3337 = vunpack.c.l.b16 %v2706
    %v3338 = vunpack.c.h.b16 %v2706
    %v3339 = vunpack.c.l.b16 %v2707
    %v3340 = vunpack.c.h.b16 %v2707
    %v3341 = vunpack.c.l.b16 %v2708
    %v3342 = vunpack.c.h.b16 %v2708
    %v3343 = vunpack.c.l.b16 %v2709
    %v3344 = vunpack.c.h.b16 %v2709
    %v3345 = vunpack.c.l.b16 %v2710
    %v3346 = vunpack.c.h.b16 %v2710
    %v3347 = vunpack.c.l.b16 %v2711
    %v3348 = vunpack.c.h.b16 %v2711
    %v3349 = vunpack.c.l.b16 %v2712
    %v3350 = vunpack.c.h.b16 %v2712
    %v3351 = vunpack.c.l.b16 %v2713
    %v3352 = vunpack.c.h.b16 %v2713
    %v3353 = vunpack.c.l.b16 %v2714
    %v3354 = vunpack.c.h.b16 %v2714
    %v3355 = vunpack.c.l.b16 %v2715
    %v3356 = vunpack.c.h.b16 %v2715
    %v3357 = vunpack.c.l.b16 %v2716
    %v3358 = vunpack.c.h.b16 %v2716
    %v3359 = vunpack.c.l.b16 %v2717
    %v3360 = vunpack.c.h.b16 %v2717
    %v3361 = vunpack.c.l.b16 %v2718
    %v3362 = vunpack.c.h.b16 %v2718
    %v3363 = vunpack.c.l.b16 %v2719
    %v3364 = vunpack.c.h.b16 %v2719
    %v3365 = vunpack.c.l.b16 %v2720
    %v3366 = vunpack.c.h.b16 %v2720
    %v3367 = vunpack.c.l.b16 %v2721
    %v3368 = vunpack.c.h.b16 %v2721
    %v3369 = vunpack.c.l.b16 %v2722
    %v3370 = vunpack.c.h.b16 %v2722
    %v3371 = vunpack.c.l.b16 %v2723
    %v3372 = vunpack.c.h.b16 %v2723
    %v3373 = vunpack.c.l.b16 %v2724
    %v3374 = vunpack.c.h.b16 %v2724
    %v3375 = vunpack.c.l.b16 %v2725
    %v3376 = vunpack.c.h.b16 %v2725
    %v3377 = vunpack.c.l.b16 %v2726
    %v3378 = vunpack.c.h.b16 %v2726
    %v3379 = vunpack.c.l.b16 %v2727
    %v3380 = vunpack.c.h.b16 %v2727
    %v3381 = vunpack.c.l.b16 %v2728
    %v3382 = vunpack.c.h.b16 %v2728
    %v3383 = vunpack.c.l.b16 %v2729
    %v3384 = vunpack.c.h.b16 %v2729
    %v3385 = vunpack.c.l.b16 %v2730
    %v3386 = vunpack.c.h.b16 %v2730
    %v3387 = vunpack.c.l.b16 %v2731
    %v3388 = vunpack.c.h.b16 %v2731
    %v3389 = vunpack.c.l.b16 %v2732
    %v3390 = vunpack.c.h.b16 %v2732
    %v3391 = vunpack.c.l.b16 %v2733
    %v3392 = vunpack.c.h.b16 %v2733
    %v3393 = vunpack.c.l.b16 %v2734
    %v3394 = vunpack.c.h.b16 %v2734
    %v3395 = vunpack.c.l.b16 %v2735
    %v3396 = vunpack.c.h.b16 %v2735
    %v3397 = vunpack.c.l.b16 %v2736
    %v3398 = vunpack.c.h.b16 %v2736
    %v3399 = vunpack.c.l.b16 %v2737
    %v3400 = vunpack.c.h.b16 %v2737
    %v3401 = vunpack.c.l.b16 %v2738
    %v3402 = vunpack.c.h.b16 %v2738
    %v3403 = vunpack.c.l.b16 %v2739
    %v3404 = vunpack.c.h.b16 %v2739
    %v3405 = vunpack.c.l.b16 %v2740
    %v3406 = vunpack.c.h.b16 %v2740
    %v3407 = vunpack.c.l.b16 %v2741
    %v3408 = vunpack.c.h.b16 %v2741
    %v3409 = vunpack.c.l.b16 %v2742
    %v3410 = vunpack.c.h.b16 %v2742
    %v3411 = vunpack.c.l.b16 %v2743
    %v3412 = vunpack.c.h.b16 %v2743
    %v3413 = vunpack.c.l.b16 %v2744
    %v3414 = vunpack.c.h.b16 %v2744
    %v3415 = vunpack.c.l.b16 %v2745
    %v3416 = vunpack.c.h.b16 %v2745
    %v3417 = vunpack.c.l.b16 %v2746
    %v3418 = vunpack.c.h.b16 %v2746
    %v3419 = vunpack.c.l.b16 %v2747
    %v3420 = vunpack.c.h.b16 %v2747
    %v3421 = vunpack.c.l.b16 %v2748
    %v3422 = vunpack.c.h.b16 %v2748
    %v3423 = vunpack.c.l.b16 %v2749
    %v3424 = vunpack.c.h.b16 %v2749
    %v3425 = vunpack.c.l.b16 %v2750
    %v3426 = vunpack.c.h.b16 %v2750
    %v3427 = vunpack.c.l.b16 %v2751
    %v3428 = vunpack.c.h.b16 %v2751
    %v3429 = vunpack.c.l.b16 %v2752
    %v3430 = vunpack.c.h.b16 %v2752
    %v3431 = vunpack.c.l.b16 %v2753
    %v3432 = vunpack.c.h.b16 %v2753
    %v3433 = vunpack.c.l.b16 %v2754
    %v3434 = vunpack.c.h.b16 %v2754
    %v3435 = vunpack.c.l.b16 %v2755
    %v3436 = vunpack.c.h.b16 %v2755
    %v3437 = vunpack.c.l.b16 %v2756
    %v3438 = vunpack.c.h.b16 %v2756
    %v3439 = vunpack.c.l.b16 %v2757
    %v3440 = vunpack.c.h.b16 %v2757
    %v3441 = vunpack.c.l.b16 %v2758
    %v3442 = vunpack.c.h.b16 %v2758
    %v3443 = vunpack.c.l.b16 %v2759
    %v3444 = vunpack.c.h.b16 %v2759
    %v3445 = vunpack.c.l.b16 %v2760
    %v3446 = vunpack.c.h.b16 %v2760
    %v3447 = vunpack.c.l.b16 %v2761
    %v3448 = vunpack.c.h.b16 %v2761
    %v3449 = vunpack.c.l.b16 %v2762
    %v3450 = vunpack.c.h.b16 %v2762
    %v3451 = vunpack.c.l.b16 %v2763
    %v3452 = vunpack.c.h.b16 %v2763
    %v3453 = vunpack.c.l.b16 %v2764
    %v3454 = vunpack.c.h.b16 %v2764
    %v3455 = vunpack.c.l.b16 %v2765
    %v3456 = vunpack.c.h.b16 %v2765
    %v3457 = vunpack.c.l.b16 %v2766
    %v3458 = vunpack.c.h.b16 %v2766
    %v3459 = vunpack.c.l.b16 %v2767
    %v3460 = vunpack.c.h.b16 %v2767
    %v3461 = vunpack.c.l.b16 %v2768
    %v3462 = vunpack.c.h.b16 %v2768
    %v3463 = vpack.c.b16 %v3339, %v3335
    %v3464 = vpack.c.b16 %v3340, %v3336
    %v3465 = vpack.c.b16 %v3341, %v3337
    %v3466 = vpack.c.b16 %v3342, %v3338
    %v3467 = vpack.c.b16 %v3347, %v3343
    %v3468 = vpack.c.b16 %v3348, %v3344
    %v3469 = vpack.c.b16 %v3349, %v3345
    %v3470 = vpack.c.b16 %v3350, %v3346
    %v3471 = vpack.c.b16 %v3355, %v3351
    %v3472 = vpack.c.b16 %v3356, %v3352
    %v3473 = vpack.c.b16 %v3357, %v3353
    %v3474 = vpack.c.b16 %v3358, %v3354
    %v3475 = vpack.c.b16 %v3363, %v3359
    %v3476 = vpack.c.b16 %v3364, %v3360
    %v3477 = vpack.c.b16 %v3365, %v3361
    %v3478 = vpack.c.b16 %v3366, %v3362
    %v3479 = vpack.c.b16 %v3371, %v3367
    %v3480 = vpack.c.b16 %v3372, %v3368
    %v3481 = vpack.c.b16 %v3373, %v3369
    %v3482 = vpack.c.b16 %v3374, %v3370
    %v3483 = vpack.c.b16 %v3379, %v3375
    %v3484 = vpack.c.b16 %v3380, %v3376
    %v3485 = vpack.c.b16 %v3381, %v3377
    %v3486 = vpack.c.b16 %v3382, %v3378
    %v3487 = vpack.c.b16 %v3387, %v3383
    %v3488 = vpack.c.b16 %v3388, %v3384
    %v3489 = vpack.c.b16 %v3389, %v3385
    %v3490 = vpack.c.b16 %v3390, %v3386
    %v3491 = vpack.c.b16 %v3395, %v3391
    %v3492 = vpack.c.b16 %v3396, %v3392
    %v3493 = vpack.c.b16 %v3397, %v3393
    %v3494 = vpack.c.b16 %v3398, %v3394
    %v3495 = vpack.c.b16 %v3403, %v3399
    %v3496 = vpack.c.b16 %v3404, %v3400
    %v3497 = vpack.c.b16 %v3405, %v3401
    %v3498 = vpack.c.b16 %v3406, %v3402
    %v3499 = vpack.c.b16 %v3411, %v3407
    %v3500 = vpack.c.b16 %v3412, %v3408
    %v3501 = vpack.c.b16 %v3413, %v3409
    %v3502 = vpack.c.b16 %v3414, %v3410
    %v3503 = vpack.c.b16 %v3419, %v3415
    %v3504 = vpack.c.b16 %v3420, %v3416
    %v3505 = vpack.c.b16 %v3421, %v3417
    %v3506 = vpack.c.b16 %v3422, %v3418
    %v3507 = vpack.c.b16 %v3427, %v3423
    %v3508 = vpack.c.b16 %v3428, %v3424
    %v3509 = vpack.c.b16 %v3429, %v3425
    %v3510 = vpack.c.b16 %v3430, %v3426
    %v3511 = vpack.c.b16 %v3435, %v3431
    %v3512 = vpack.c.b16 %v3436, %v3432
    %v3513 = vpack.c.b16 %v3437, %v3433
    %v3514 = vpack.c.b16 %v3438, %v3434
    %v3515 = vpack.c.b16 %v3443, %v3439
    %v3516 = vpack.c.b16 %v3444, %v3440
    %v3517 = vpack.c.b16 %v3445, %v3441
    %v3518 = vpack.c.b16 %v3446, %v3442
    %v3519 = vpack.c.b16 %v3451, %v3447
    %v3520 = vpack.c.b16 %v3452, %v3448
    %v3521 = vpack.c.b16 %v3453, %v3449
    %v3522 = vpack.c.b16 %v3454, %v3450
    %v3523 = vpack.c.b16 %v3459, %v3455
    %v3524 = vpack.c.b16 %v3460, %v3456
    %v3525 = vpack.c.b16 %v3461, %v3457
    %v3526 = vpack.c.b16 %v3462, %v3458
    %3591 = vmatprep.subr.bf16.mxu0 %v3464
    %3592 = vmatpush1.bf16.msra.mxu0 %v3463
    %3593 = vmatprep.subr.bf16.mxu0 %v3468
    %3594 = vmatpush1.bf16.msra.mxu0 %v3467
    %3595 = vmatprep.subr.bf16.mxu0 %v3472
    %3596 = vmatpush1.bf16.msra.mxu0 %v3471
    %3597 = vmatprep.subr.bf16.mxu0 %v3476
    %3598 = vmatpush1.bf16.msra.mxu0 %v3475
    %3599 = vmatprep.subr.bf16.mxu0 %v3480
    %3600 = vmatpush1.bf16.msra.mxu0 %v3479
    %3601 = vmatprep.subr.bf16.mxu0 %v3484
    %3602 = vmatpush1.bf16.msra.mxu0 %v3483
    %3603 = vmatprep.subr.bf16.mxu0 %v3488
    %3604 = vmatpush1.bf16.msra.mxu0 %v3487
    %3605 = vmatprep.subr.bf16.mxu0 %v3492
    %3606 = vmatpush1.bf16.msra.mxu0 %v3491
    %3607 = vmatprep.subr.bf16.mxu0 %v3496
    %3608 = vmatpush1.bf16.msra.mxu0 %v3495
    %3609 = vmatprep.subr.bf16.mxu0 %v3500
    %3610 = vmatpush1.bf16.msra.mxu0 %v3499
    %3611 = vmatprep.subr.bf16.mxu0 %v3504
    %3612 = vmatpush1.bf16.msra.mxu0 %v3503
    %3613 = vmatprep.subr.bf16.mxu0 %v3508
    %3614 = vmatpush1.bf16.msra.mxu0 %v3507
    %3615 = vmatprep.subr.bf16.mxu0 %v3512
    %3616 = vmatpush1.bf16.msra.mxu0 %v3511
    %3617 = vmatprep.subr.bf16.mxu0 %v3516
    %3618 = vmatpush1.bf16.msra.mxu0 %v3515
    %3619 = vmatprep.subr.bf16.mxu0 %v3520
    %3620 = vmatpush1.bf16.msra.mxu0 %v3519
    %3621 = vmatprep.subr.bf16.mxu0 %v3524
    %3622 = vmatpush1.bf16.msra.mxu0 %v3523
    %3623 = vmatprep.mubr.bf16.mxu0 %v2703
    %3624 = vmatmul.mubr.bf16.gmra.mrb[0].mxu0 %v2702
    %v3625 = vpop.f32.mrb[0].mxu0
    %v3626 = vadd.f32 %v3263, %v3625
    %v3627 = vpop.f32.mrb[0].mxu0
    %v3628 = vadd.f32 %v3264, %v3627
    %v3629 = vpop.f32.mrb[0].mxu0
    %v3630 = vadd.f32 %v3267, %v3629
    %v3631 = vpop.f32.mrb[0].mxu0
    %v3632 = vadd.f32 %v3268, %v3631
    %3633 = vdwg.mxu0
    %3634 = vmatprep.subr.bf16.mxu0 %v3466
    %3635 = vmatpush1.bf16.msra.mxu0 %v3465
    %3636 = vmatprep.subr.bf16.mxu0 %v3470
    %3637 = vmatpush1.bf16.msra.mxu0 %v3469
    %3638 = vmatprep.subr.bf16.mxu0 %v3474
    %3639 = vmatpush1.bf16.msra.mxu0 %v3473
    %3640 = vmatprep.subr.bf16.mxu0 %v3478
    %3641 = vmatpush1.bf16.msra.mxu0 %v3477
    %3642 = vmatprep.subr.bf16.mxu0 %v3482
    %3643 = vmatpush1.bf16.msra.mxu0 %v3481
    %3644 = vmatprep.subr.bf16.mxu0 %v3486
    %3645 = vmatpush1.bf16.msra.mxu0 %v3485
    %3646 = vmatprep.subr.bf16.mxu0 %v3490
    %3647 = vmatpush1.bf16.msra.mxu0 %v3489
    %3648 = vmatprep.subr.bf16.mxu0 %v3494
    %3649 = vmatpush1.bf16.msra.mxu0 %v3493
    %3650 = vmatprep.subr.bf16.mxu0 %v3498
    %3651 = vmatpush1.bf16.msra.mxu0 %v3497
    %3652 = vmatprep.subr.bf16.mxu0 %v3502
    %3653 = vmatpush1.bf16.msra.mxu0 %v3501
    %3654 = vmatprep.subr.bf16.mxu0 %v3506
    %3655 = vmatpush1.bf16.msra.mxu0 %v3505
    %3656 = vmatprep.subr.bf16.mxu0 %v3510
    %3657 = vmatpush1.bf16.msra.mxu0 %v3509
    %3658 = vmatprep.subr.bf16.mxu0 %v3514
    %3659 = vmatpush1.bf16.msra.mxu0 %v3513
    %3660 = vmatprep.subr.bf16.mxu0 %v3518
    %3661 = vmatpush1.bf16.msra.mxu0 %v3517
    %3662 = vmatprep.subr.bf16.mxu0 %v3522
    %3663 = vmatpush1.bf16.msra.mxu0 %v3521
    %3664 = vmatprep.subr.bf16.mxu0 %v3526
    %3665 = vmatpush1.bf16.msra.mxu0 %v3525
    %3666 = vmatprep.mubr.bf16.mxu0 %v2703
    %3667 = vmatmul.mubr.bf16.gmra.mrb[0].mxu0 %v2702
    %v3668 = vpop.f32.mrb[0].mxu0
    %v3669 = vadd.f32 %v3265, %v3668
    %v3670 = vpop.f32.mrb[0].mxu0
    %v3671 = vadd.f32 %v3266, %v3670
    %v3672 = vpop.f32.mrb[0].mxu0
    %v3673 = vadd.f32 %v3269, %v3672
    %v3674 = vpop.f32.mrb[0].mxu0
    %v3675 = vadd.f32 %v3270, %v3674
    %3676 = vdwg.mxu0
    %s3677 = scalar_lea.vmem [#allocation6], 2560
    %v3678 = vld [vmem:[%s3677] sm:$0xff]
    %v3679 = vld [vmem:[%s3677 + $0x8] sm:$0xff]
    %v3680 = vld [vmem:[%s3677 + $0x10] sm:$0xff]
    %v3681 = vld [vmem:[%s3677 + $0x18] sm:$0xff]
    %v3682 = vld [vmem:[%s3677 + $0x20] sm:$0xff]
    %v3683 = vld [vmem:[%s3677 + $0x28] sm:$0xff]
    %v3684 = vld [vmem:[%s3677 + $0x30] sm:$0xff]
    %v3685 = vld [vmem:[%s3677 + $0x38] sm:$0xff]
    %v3686 = vld [vmem:[%s3677 + $0x40] sm:$0xff]
    %v3687 = vld [vmem:[%s3677 + $0x48] sm:$0xff]
    %v3688 = vld [vmem:[%s3677 + $0x50] sm:$0xff]
    %v3689 = vld [vmem:[%s3677 + $0x58] sm:$0xff]
    %v3690 = vld [vmem:[%s3677 + $0x60] sm:$0xff]
    %v3691 = vld [vmem:[%s3677 + $0x68] sm:$0xff]
    %v3692 = vld [vmem:[%s3677 + $0x70] sm:$0xff]
    %v3693 = vld [vmem:[%s3677 + $0x78] sm:$0xff]
    %v3694 = vld [vmem:[%s3677 + $0x80] sm:$0xff]
    %v3695 = vld [vmem:[%s3677 + $0x88] sm:$0xff]
    %v3696 = vld [vmem:[%s3677 + $0x90] sm:$0xff]
    %v3697 = vld [vmem:[%s3677 + $0x98] sm:$0xff]
    %v3698 = vld [vmem:[%s3677 + $0xa0] sm:$0xff]
    %v3699 = vld [vmem:[%s3677 + $0xa8] sm:$0xff]
    %v3700 = vld [vmem:[%s3677 + $0xb0] sm:$0xff]
    %v3701 = vld [vmem:[%s3677 + $0xb8] sm:$0xff]
    %v3702 = vld [vmem:[%s3677 + $0xc0] sm:$0xff]
    %v3703 = vld [vmem:[%s3677 + $0xc8] sm:$0xff]
    %v3704 = vld [vmem:[%s3677 + $0xd0] sm:$0xff]
    %v3705 = vld [vmem:[%s3677 + $0xd8] sm:$0xff]
    %v3706 = vld [vmem:[%s3677 + $0xe0] sm:$0xff]
    %v3707 = vld [vmem:[%s3677 + $0xe8] sm:$0xff]
    %v3708 = vld [vmem:[%s3677 + $0xf0] sm:$0xff]
    %v3709 = vld [vmem:[%s3677 + $0xf8] sm:$0xff]
    %v3710 = vld [vmem:[%s3677 + $0x100] sm:$0xff]
    %v3711 = vld [vmem:[%s3677 + $0x108] sm:$0xff]
    %v3712 = vld [vmem:[%s3677 + $0x110] sm:$0xff]
    %v3713 = vld [vmem:[%s3677 + $0x118] sm:$0xff]
    %v3714 = vld [vmem:[%s3677 + $0x120] sm:$0xff]
    %v3715 = vld [vmem:[%s3677 + $0x128] sm:$0xff]
    %v3716 = vld [vmem:[%s3677 + $0x130] sm:$0xff]
    %v3717 = vld [vmem:[%s3677 + $0x138] sm:$0xff]
    %v3718 = vld [vmem:[%s3677 + $0x140] sm:$0xff]
    %v3719 = vld [vmem:[%s3677 + $0x148] sm:$0xff]
    %v3720 = vld [vmem:[%s3677 + $0x150] sm:$0xff]
    %v3721 = vld [vmem:[%s3677 + $0x158] sm:$0xff]
    %v3722 = vld [vmem:[%s3677 + $0x160] sm:$0xff]
    %v3723 = vld [vmem:[%s3677 + $0x168] sm:$0xff]
    %v3724 = vld [vmem:[%s3677 + $0x170] sm:$0xff]
    %v3725 = vld [vmem:[%s3677 + $0x178] sm:$0xff]
    %v3726 = vld [vmem:[%s3677 + $0x180] sm:$0xff]
    %v3727 = vld [vmem:[%s3677 + $0x188] sm:$0xff]
    %v3728 = vld [vmem:[%s3677 + $0x190] sm:$0xff]
    %v3729 = vld [vmem:[%s3677 + $0x198] sm:$0xff]
    %v3730 = vld [vmem:[%s3677 + $0x1a0] sm:$0xff]
    %v3731 = vld [vmem:[%s3677 + $0x1a8] sm:$0xff]
    %v3732 = vld [vmem:[%s3677 + $0x1b0] sm:$0xff]
    %v3733 = vld [vmem:[%s3677 + $0x1b8] sm:$0xff]
    %v3734 = vld [vmem:[%s3677 + $0x1c0] sm:$0xff]
    %v3735 = vld [vmem:[%s3677 + $0x1c8] sm:$0xff]
    %v3736 = vld [vmem:[%s3677 + $0x1d0] sm:$0xff]
    %v3737 = vld [vmem:[%s3677 + $0x1d8] sm:$0xff]
    %v3738 = vld [vmem:[%s3677 + $0x1e0] sm:$0xff]
    %v3739 = vld [vmem:[%s3677 + $0x1e8] sm:$0xff]
    %v3740 = vld [vmem:[%s3677 + $0x1f0] sm:$0xff]
    %v3741 = vld [vmem:[%s3677 + $0x1f8] sm:$0xff]
    %v3806 = vunpack.c.l.b16 %v3678
    %v3807 = vunpack.c.h.b16 %v3678
    %v3808 = vunpack.c.l.b16 %v3679
    %v3809 = vunpack.c.h.b16 %v3679
    %v3810 = vunpack.c.l.b16 %v3680
    %v3811 = vunpack.c.h.b16 %v3680
    %v3812 = vunpack.c.l.b16 %v3681
    %v3813 = vunpack.c.h.b16 %v3681
    %v3814 = vunpack.c.l.b16 %v3682
    %v3815 = vunpack.c.h.b16 %v3682
    %v3816 = vunpack.c.l.b16 %v3683
    %v3817 = vunpack.c.h.b16 %v3683
    %v3818 = vunpack.c.l.b16 %v3684
    %v3819 = vunpack.c.h.b16 %v3684
    %v3820 = vunpack.c.l.b16 %v3685
    %v3821 = vunpack.c.h.b16 %v3685
    %v3822 = vunpack.c.l.b16 %v3686
    %v3823 = vunpack.c.h.b16 %v3686
    %v3824 = vunpack.c.l.b16 %v3687
    %v3825 = vunpack.c.h.b16 %v3687
    %v3826 = vunpack.c.l.b16 %v3688
    %v3827 = vunpack.c.h.b16 %v3688
    %v3828 = vunpack.c.l.b16 %v3689
    %v3829 = vunpack.c.h.b16 %v3689
    %v3830 = vunpack.c.l.b16 %v3690
    %v3831 = vunpack.c.h.b16 %v3690
    %v3832 = vunpack.c.l.b16 %v3691
    %v3833 = vunpack.c.h.b16 %v3691
    %v3834 = vunpack.c.l.b16 %v3692
    %v3835 = vunpack.c.h.b16 %v3692
    %v3836 = vunpack.c.l.b16 %v3693
    %v3837 = vunpack.c.h.b16 %v3693
    %v3838 = vunpack.c.l.b16 %v3694
    %v3839 = vunpack.c.h.b16 %v3694
    %v3840 = vunpack.c.l.b16 %v3695
    %v3841 = vunpack.c.h.b16 %v3695
    %v3842 = vunpack.c.l.b16 %v3696
    %v3843 = vunpack.c.h.b16 %v3696
    %v3844 = vunpack.c.l.b16 %v3697
    %v3845 = vunpack.c.h.b16 %v3697
    %v3846 = vunpack.c.l.b16 %v3698
    %v3847 = vunpack.c.h.b16 %v3698
    %v3848 = vunpack.c.l.b16 %v3699
    %v3849 = vunpack.c.h.b16 %v3699
    %v3850 = vunpack.c.l.b16 %v3700
    %v3851 = vunpack.c.h.b16 %v3700
    %v3852 = vunpack.c.l.b16 %v3701
    %v3853 = vunpack.c.h.b16 %v3701
    %v3854 = vunpack.c.l.b16 %v3702
    %v3855 = vunpack.c.h.b16 %v3702
    %v3856 = vunpack.c.l.b16 %v3703
    %v3857 = vunpack.c.h.b16 %v3703
    %v3858 = vunpack.c.l.b16 %v3704
    %v3859 = vunpack.c.h.b16 %v3704
    %v3860 = vunpack.c.l.b16 %v3705
    %v3861 = vunpack.c.h.b16 %v3705
    %v3862 = vunpack.c.l.b16 %v3706
    %v3863 = vunpack.c.h.b16 %v3706
    %v3864 = vunpack.c.l.b16 %v3707
    %v3865 = vunpack.c.h.b16 %v3707
    %v3866 = vunpack.c.l.b16 %v3708
    %v3867 = vunpack.c.h.b16 %v3708
    %v3868 = vunpack.c.l.b16 %v3709
    %v3869 = vunpack.c.h.b16 %v3709
    %v3870 = vunpack.c.l.b16 %v3710
    %v3871 = vunpack.c.h.b16 %v3710
    %v3872 = vunpack.c.l.b16 %v3711
    %v3873 = vunpack.c.h.b16 %v3711
    %v3874 = vunpack.c.l.b16 %v3712
    %v3875 = vunpack.c.h.b16 %v3712
    %v3876 = vunpack.c.l.b16 %v3713
    %v3877 = vunpack.c.h.b16 %v3713
    %v3878 = vunpack.c.l.b16 %v3714
    %v3879 = vunpack.c.h.b16 %v3714
    %v3880 = vunpack.c.l.b16 %v3715
    %v3881 = vunpack.c.h.b16 %v3715
    %v3882 = vunpack.c.l.b16 %v3716
    %v3883 = vunpack.c.h.b16 %v3716
    %v3884 = vunpack.c.l.b16 %v3717
    %v3885 = vunpack.c.h.b16 %v3717
    %v3886 = vunpack.c.l.b16 %v3718
    %v3887 = vunpack.c.h.b16 %v3718
    %v3888 = vunpack.c.l.b16 %v3719
    %v3889 = vunpack.c.h.b16 %v3719
    %v3890 = vunpack.c.l.b16 %v3720
    %v3891 = vunpack.c.h.b16 %v3720
    %v3892 = vunpack.c.l.b16 %v3721
    %v3893 = vunpack.c.h.b16 %v3721
    %v3894 = vunpack.c.l.b16 %v3722
    %v3895 = vunpack.c.h.b16 %v3722
    %v3896 = vunpack.c.l.b16 %v3723
    %v3897 = vunpack.c.h.b16 %v3723
    %v3898 = vunpack.c.l.b16 %v3724
    %v3899 = vunpack.c.h.b16 %v3724
    %v3900 = vunpack.c.l.b16 %v3725
    %v3901 = vunpack.c.h.b16 %v3725
    %v3902 = vunpack.c.l.b16 %v3726
    %v3903 = vunpack.c.h.b16 %v3726
    %v3904 = vunpack.c.l.b16 %v3727
    %v3905 = vunpack.c.h.b16 %v3727
    %v3906 = vunpack.c.l.b16 %v3728
    %v3907 = vunpack.c.h.b16 %v3728
    %v3908 = vunpack.c.l.b16 %v3729
    %v3909 = vunpack.c.h.b16 %v3729
    %v3910 = vunpack.c.l.b16 %v3730
    %v3911 = vunpack.c.h.b16 %v3730
    %v3912 = vunpack.c.l.b16 %v3731
    %v3913 = vunpack.c.h.b16 %v3731
    %v3914 = vunpack.c.l.b16 %v3732
    %v3915 = vunpack.c.h.b16 %v3732
    %v3916 = vunpack.c.l.b16 %v3733
    %v3917 = vunpack.c.h.b16 %v3733
    %v3918 = vunpack.c.l.b16 %v3734
    %v3919 = vunpack.c.h.b16 %v3734
    %v3920 = vunpack.c.l.b16 %v3735
    %v3921 = vunpack.c.h.b16 %v3735
    %v3922 = vunpack.c.l.b16 %v3736
    %v3923 = vunpack.c.h.b16 %v3736
    %v3924 = vunpack.c.l.b16 %v3737
    %v3925 = vunpack.c.h.b16 %v3737
    %v3926 = vunpack.c.l.b16 %v3738
    %v3927 = vunpack.c.h.b16 %v3738
    %v3928 = vunpack.c.l.b16 %v3739
    %v3929 = vunpack.c.h.b16 %v3739
    %v3930 = vunpack.c.l.b16 %v3740
    %v3931 = vunpack.c.h.b16 %v3740
    %v3932 = vunpack.c.l.b16 %v3741
    %v3933 = vunpack.c.h.b16 %v3741
    %v3934 = vpack.c.b16 %v3810, %v3806
    %v3935 = vpack.c.b16 %v3811, %v3807
    %v3936 = vpack.c.b16 %v3812, %v3808
    %v3937 = vpack.c.b16 %v3813, %v3809
    %v3938 = vpack.c.b16 %v3818, %v3814
    %v3939 = vpack.c.b16 %v3819, %v3815
    %v3940 = vpack.c.b16 %v3820, %v3816
    %v3941 = vpack.c.b16 %v3821, %v3817
    %v3942 = vpack.c.b16 %v3826, %v3822
    %v3943 = vpack.c.b16 %v3827, %v3823
    %v3944 = vpack.c.b16 %v3828, %v3824
    %v3945 = vpack.c.b16 %v3829, %v3825
    %v3946 = vpack.c.b16 %v3834, %v3830
    %v3947 = vpack.c.b16 %v3835, %v3831
    %v3948 = vpack.c.b16 %v3836, %v3832
    %v3949 = vpack.c.b16 %v3837, %v3833
    %v3950 = vpack.c.b16 %v3842, %v3838
    %v3951 = vpack.c.b16 %v3843, %v3839
    %v3952 = vpack.c.b16 %v3844, %v3840
    %v3953 = vpack.c.b16 %v3845, %v3841
    %v3954 = vpack.c.b16 %v3850, %v3846
    %v3955 = vpack.c.b16 %v3851, %v3847
    %v3956 = vpack.c.b16 %v3852, %v3848
    %v3957 = vpack.c.b16 %v3853, %v3849
    %v3958 = vpack.c.b16 %v3858, %v3854
    %v3959 = vpack.c.b16 %v3859, %v3855
    %v3960 = vpack.c.b16 %v3860, %v3856
    %v3961 = vpack.c.b16 %v3861, %v3857
    %v3962 = vpack.c.b16 %v3866, %v3862
    %v3963 = vpack.c.b16 %v3867, %v3863
    %v3964 = vpack.c.b16 %v3868, %v3864
    %v3965 = vpack.c.b16 %v3869, %v3865
    %v3966 = vpack.c.b16 %v3874, %v3870
    %v3967 = vpack.c.b16 %v3875, %v3871
    %v3968 = vpack.c.b16 %v3876, %v3872
    %v3969 = vpack.c.b16 %v3877, %v3873
    %v3970 = vpack.c.b16 %v3882, %v3878
    %v3971 = vpack.c.b16 %v3883, %v3879
    %v3972 = vpack.c.b16 %v3884, %v3880
    %v3973 = vpack.c.b16 %v3885, %v3881
    %v3974 = vpack.c.b16 %v3890, %v3886
    %v3975 = vpack.c.b16 %v3891, %v3887
    %v3976 = vpack.c.b16 %v3892, %v3888
    %v3977 = vpack.c.b16 %v3893, %v3889
    %v3978 = vpack.c.b16 %v3898, %v3894
    %v3979 = vpack.c.b16 %v3899, %v3895
    %v3980 = vpack.c.b16 %v3900, %v3896
    %v3981 = vpack.c.b16 %v3901, %v3897
    %v3982 = vpack.c.b16 %v3906, %v3902
    %v3983 = vpack.c.b16 %v3907, %v3903
    %v3984 = vpack.c.b16 %v3908, %v3904
    %v3985 = vpack.c.b16 %v3909, %v3905
    %v3986 = vpack.c.b16 %v3914, %v3910
    %v3987 = vpack.c.b16 %v3915, %v3911
    %v3988 = vpack.c.b16 %v3916, %v3912
    %v3989 = vpack.c.b16 %v3917, %v3913
    %v3990 = vpack.c.b16 %v3922, %v3918
    %v3991 = vpack.c.b16 %v3923, %v3919
    %v3992 = vpack.c.b16 %v3924, %v3920
    %v3993 = vpack.c.b16 %v3925, %v3921
    %v3994 = vpack.c.b16 %v3930, %v3926
    %v3995 = vpack.c.b16 %v3931, %v3927
    %v3996 = vpack.c.b16 %v3932, %v3928
    %v3997 = vpack.c.b16 %v3933, %v3929
    %4062 = vmatprep.subr.bf16.mxu0 %v3935
    %4063 = vmatpush1.bf16.msra.mxu0 %v3934
    %4064 = vmatprep.subr.bf16.mxu0 %v3939
    %4065 = vmatpush1.bf16.msra.mxu0 %v3938
    %4066 = vmatprep.subr.bf16.mxu0 %v3943
    %4067 = vmatpush1.bf16.msra.mxu0 %v3942
    %4068 = vmatprep.subr.bf16.mxu0 %v3947
    %4069 = vmatpush1.bf16.msra.mxu0 %v3946
    %4070 = vmatprep.subr.bf16.mxu0 %v3951
    %4071 = vmatpush1.bf16.msra.mxu0 %v3950
    %4072 = vmatprep.subr.bf16.mxu0 %v3955
    %4073 = vmatpush1.bf16.msra.mxu0 %v3954
    %4074 = vmatprep.subr.bf16.mxu0 %v3959
    %4075 = vmatpush1.bf16.msra.mxu0 %v3958
    %4076 = vmatprep.subr.bf16.mxu0 %v3963
    %4077 = vmatpush1.bf16.msra.mxu0 %v3962
    %4078 = vmatprep.subr.bf16.mxu0 %v3967
    %4079 = vmatpush1.bf16.msra.mxu0 %v3966
    %4080 = vmatprep.subr.bf16.mxu0 %v3971
    %4081 = vmatpush1.bf16.msra.mxu0 %v3970
    %4082 = vmatprep.subr.bf16.mxu0 %v3975
    %4083 = vmatpush1.bf16.msra.mxu0 %v3974
    %4084 = vmatprep.subr.bf16.mxu0 %v3979
    %4085 = vmatpush1.bf16.msra.mxu0 %v3978
    %4086 = vmatprep.subr.bf16.mxu0 %v3983
    %4087 = vmatpush1.bf16.msra.mxu0 %v3982
    %4088 = vmatprep.subr.bf16.mxu0 %v3987
    %4089 = vmatpush1.bf16.msra.mxu0 %v3986
    %4090 = vmatprep.subr.bf16.mxu0 %v3991
    %4091 = vmatpush1.bf16.msra.mxu0 %v3990
    %4092 = vmatprep.subr.bf16.mxu0 %v3995
    %4093 = vmatpush1.bf16.msra.mxu0 %v3994
    %4094 = vmatprep.mubr.bf16.mxu0 %v2703
    %4095 = vmatmul.mubr.bf16.gmra.mrb[0].mxu0 %v2702
    %v4096 = vpop.f32.mrb[0].mxu0
    %v4097 = vadd.f32 0.0, %v4096
    %v4098 = vpop.f32.mrb[0].mxu0
    %v4099 = vadd.f32 0.0, %v4098
    %v4100 = vpop.f32.mrb[0].mxu0
    %v4101 = vadd.f32 0.0, %v4100
    %v4102 = vpop.f32.mrb[0].mxu0
    %v4103 = vadd.f32 0.0, %v4102
    %4104 = vdwg.mxu0
    %4105 = vmatprep.subr.bf16.mxu0 %v3937
    %4106 = vmatpush1.bf16.msra.mxu0 %v3936
    %4107 = vmatprep.subr.bf16.mxu0 %v3941
    %4108 = vmatpush1.bf16.msra.mxu0 %v3940
    %4109 = vmatprep.subr.bf16.mxu0 %v3945
    %4110 = vmatpush1.bf16.msra.mxu0 %v3944
    %4111 = vmatprep.subr.bf16.mxu0 %v3949
    %4112 = vmatpush1.bf16.msra.mxu0 %v3948
    %4113 = vmatprep.subr.bf16.mxu0 %v3953
    %4114 = vmatpush1.bf16.msra.mxu0 %v3952
    %4115 = vmatprep.subr.bf16.mxu0 %v3957
    %4116 = vmatpush1.bf16.msra.mxu0 %v3956
    %4117 = vmatprep.subr.bf16.mxu0 %v3961
    %4118 = vmatpush1.bf16.msra.mxu0 %v3960
    %4119 = vmatprep.subr.bf16.mxu0 %v3965
    %4120 = vmatpush1.bf16.msra.mxu0 %v3964
    %4121 = vmatprep.subr.bf16.mxu0 %v3969
    %4122 = vmatpush1.bf16.msra.mxu0 %v3968
    %4123 = vmatprep.subr.bf16.mxu0 %v3973
    %4124 = vmatpush1.bf16.msra.mxu0 %v3972
    %4125 = vmatprep.subr.bf16.mxu0 %v3977
    %4126 = vmatpush1.bf16.msra.mxu0 %v3976
    %4127 = vmatprep.subr.bf16.mxu0 %v3981
    %4128 = vmatpush1.bf16.msra.mxu0 %v3980
    %4129 = vmatprep.subr.bf16.mxu0 %v3985
    %4130 = vmatpush1.bf16.msra.mxu0 %v3984
    %4131 = vmatprep.subr.bf16.mxu0 %v3989
    %4132 = vmatpush1.bf16.msra.mxu0 %v3988
    %4133 = vmatprep.subr.bf16.mxu0 %v3993
    %4134 = vmatpush1.bf16.msra.mxu0 %v3992
    %4135 = vmatprep.subr.bf16.mxu0 %v3997
    %4136 = vmatpush1.bf16.msra.mxu0 %v3996
    %4137 = vmatprep.mubr.bf16.mxu0 %v2703
    %4138 = vmatmul.mubr.bf16.gmra.mrb[0].mxu0 %v2702
    %v4139 = vpop.f32.mrb[0].mxu0
    %v4140 = vadd.f32 0.0, %v4139
    %v4141 = vpop.f32.mrb[0].mxu0
    %v4142 = vadd.f32 0.0, %v4141
    %v4143 = vpop.f32.mrb[0].mxu0
    %v4144 = vadd.f32 0.0, %v4143
    %v4145 = vpop.f32.mrb[0].mxu0
    %v4146 = vadd.f32 0.0, %v4145
    %4147 = vdwg.mxu0
    %v4148 = vrot.slane %v4097, 2
    %v4149 = vrot.slane %v4099, 2
    %v4150 = vrot.slane %v4140, 2
    %v4151 = vrot.slane %v4142, 2
    %v4152 = vrot.slane %v4101, 2
    %v4153 = vrot.slane %v4103, 2
    %v4154 = vrot.slane %v4144, 2
    %v4155 = vrot.slane %v4146, 2
    %vm4156 = vcmp.lt.s32.totalorder %v209, 6
    %v4157 = vsel %vm4156, %v4148, %v4152
    %v4158 = vsel %vm4156, %v4149, %v4153
    %v4159 = vsel %vm4156, %v4150, %v4154
    %v4160 = vsel %vm4156, %v4151, %v4155
    %v4161 = vsel %vm4156, %v4152, %v4148
    %v4162 = vsel %vm4156, %v4153, %v4149
    %v4163 = vsel %vm4156, %v4154, %v4150
    %v4164 = vsel %vm4156, %v4155, %v4151
    %vm4165 = vcmp.lt.s32.totalorder %v233, 6
    %vm4166 = vcmp.lt.s32.totalorder %v234, 6
    %v4167 = vsel %vm4165, 1, 0
    %v4168 = vsel %vm4166, 1, 0
    %vm4169 = vcmp.eq.s32.totalorder %v4167, 1
    %vm4170 = vcmp.eq.s32.totalorder %v4168, 1
    %v4171 = vsel %vm4169, %v4157, 0.0
    %v4172 = vsel %vm4169, %v4158, 0.0
    %v4173 = vsel %vm4169, %v4159, 0.0
    %v4174 = vsel %vm4169, %v4160, 0.0
    %v4175 = vsel %vm4170, %v4161, 0.0
    %v4176 = vsel %vm4170, %v4162, 0.0
    %v4177 = vsel %vm4170, %v4163, 0.0
    %v4178 = vsel %vm4170, %v4164, 0.0
    %v4179 = vadd.f32 %v3626, %v4171
    %v4180 = vadd.f32 %v3628, %v4172
    %v4181 = vadd.f32 %v3669, %v4173
    %v4182 = vadd.f32 %v3671, %v4174
    %v4183 = vadd.f32 %v3630, %v4175
    %v4184 = vadd.f32 %v3632, %v4176
    %v4185 = vadd.f32 %v3673, %v4177
    %v4186 = vadd.f32 %v3675, %v4178
    %s4187 = scalar_lea.vmem [#allocation9], 4
    %v4188 = vld [vmem:[%s4187] sm:$0xf]
    %v4191 = vunpack.c.l.s4 1966171168
    %v4192 = vunpack.c.0.s8 %v4191
    %v4193 = vlaneseq
    %v4194 = vshrl.u32 %v4193, 7
    %v4195 = vsub.s32 %v4192, %v4194
    %v4196 = vrot.slane %v4188, %v4195
    %v4197 = vcombine.high %v4196, %v4196
    %v4199 = vunpack.c.l.s4 1966171168
    %v4200 = vunpack.c.0.s8 %v4199
    %v4201 = vlaneseq
    %v4202 = vshrl.u32 %v4201, 7
    %v4203 = vsub.s32 %v4200, %v4202
    %v4204 = vrot.slane %v4196, %v4203
    %v4206 = vunpack.c.l.s4 1966171168
    %v4207 = vunpack.c.0.s8 %v4206
    %v4208 = vlaneseq
    %v4209 = vshrl.u32 %v4208, 7
    %v4210 = vsub.s32 %v4207, %v4209
    %v4211 = vrot.slane %v4197, %v4210
    %v4212 = vcombine.high %v4204, %v4204
    %v4213 = vcombine.high %v4211, %v4211
    %v4215 = vsel %vm271, %v4204, 0
    %v4218 = vsel %vm271, %v4211, 0
    %v4221 = vsel %vm271, %v4212, 0
    %v4224 = vsel %vm271, %v4213, 0
    %4226 = vmatprep.subr.bf16.mxu0 %v4218
    %4227 = vmatpush1.bf16.msra.mxu0 %v4215
    %4228 = vmatprep.subr.bf16.mxu0 0
    %4229 = vmatpush1.bf16.msra.mxu0 0
    %4230 = vmatprep.subr.bf16.mxu0 0
    %4231 = vmatpush1.bf16.msra.mxu0 0
    %4232 = vmatprep.subr.bf16.mxu0 0
    %4233 = vmatpush1.bf16.msra.mxu0 0
    %4234 = vmatprep.subr.bf16.mxu0 0
    %4235 = vmatpush1.bf16.msra.mxu0 0
    %4236 = vmatprep.subr.bf16.mxu0 0
    %4237 = vmatpush1.bf16.msra.mxu0 0
    %4238 = vmatprep.subr.bf16.mxu0 0
    %4239 = vmatpush1.bf16.msra.mxu0 0
    %4240 = vmatprep.subr.bf16.mxu0 0
    %4241 = vmatpush1.bf16.msra.mxu0 0
    %4242 = vmatprep.subr.bf16.mxu0 0
    %4243 = vmatpush1.bf16.msra.mxu0 0
    %4244 = vmatprep.subr.bf16.mxu0 0
    %4245 = vmatpush1.bf16.msra.mxu0 0
    %4246 = vmatprep.subr.bf16.mxu0 0
    %4247 = vmatpush1.bf16.msra.mxu0 0
    %4248 = vmatprep.subr.bf16.mxu0 0
    %4249 = vmatpush1.bf16.msra.mxu0 0
    %4250 = vmatprep.subr.bf16.mxu0 0
    %4251 = vmatpush1.bf16.msra.mxu0 0
    %4252 = vmatprep.subr.bf16.mxu0 0
    %4253 = vmatpush1.bf16.msra.mxu0 0
    %4254 = vmatprep.subr.bf16.mxu0 0
    %4255 = vmatpush1.bf16.msra.mxu0 0
    %4256 = vmatprep.subr.bf16.mxu0 0
    %4257 = vmatpush1.bf16.msra.mxu0 0
    %4258 = vmatprep.mubr.bf16.mxu0 0
    %4259 = vmatmul.mubr.bf16.gmra.mrb[0].mxu0 %v2026
    %v4260 = vpop.f32.mrb[0].mxu0
    %v4261 = vadd.f32 0.0, %v4260
    %v4262 = vpop.f32.mrb[0].mxu0
    %v4263 = vadd.f32 0.0, %v4262
    %v4264 = vpop.f32.mrb[0].mxu0
    %v4265 = vadd.f32 0.0, %v4264
    %v4266 = vpop.f32.mrb[0].mxu0
    %v4267 = vadd.f32 0.0, %v4266
    %4268 = vdwg.mxu0
    %4269 = vmatprep.subr.bf16.mxu0 %v4224
    %4270 = vmatpush1.bf16.msra.mxu0 %v4221
    %4271 = vmatprep.subr.bf16.mxu0 0
    %4272 = vmatpush1.bf16.msra.mxu0 0
    %4273 = vmatprep.subr.bf16.mxu0 0
    %4274 = vmatpush1.bf16.msra.mxu0 0
    %4275 = vmatprep.subr.bf16.mxu0 0
    %4276 = vmatpush1.bf16.msra.mxu0 0
    %4277 = vmatprep.subr.bf16.mxu0 0
    %4278 = vmatpush1.bf16.msra.mxu0 0
    %4279 = vmatprep.subr.bf16.mxu0 0
    %4280 = vmatpush1.bf16.msra.mxu0 0
    %4281 = vmatprep.subr.bf16.mxu0 0
    %4282 = vmatpush1.bf16.msra.mxu0 0
    %4283 = vmatprep.subr.bf16.mxu0 0
    %4284 = vmatpush1.bf16.msra.mxu0 0
    %4285 = vmatprep.subr.bf16.mxu0 0
    %4286 = vmatpush1.bf16.msra.mxu0 0
    %4287 = vmatprep.subr.bf16.mxu0 0
    %4288 = vmatpush1.bf16.msra.mxu0 0
    %4289 = vmatprep.subr.bf16.mxu0 0
    %4290 = vmatpush1.bf16.msra.mxu0 0
    %4291 = vmatprep.subr.bf16.mxu0 0
    %4292 = vmatpush1.bf16.msra.mxu0 0
    %4293 = vmatprep.subr.bf16.mxu0 0
    %4294 = vmatpush1.bf16.msra.mxu0 0
    %4295 = vmatprep.subr.bf16.mxu0 0
    %4296 = vmatpush1.bf16.msra.mxu0 0
    %4297 = vmatprep.subr.bf16.mxu0 0
    %4298 = vmatpush1.bf16.msra.mxu0 0
    %4299 = vmatprep.subr.bf16.mxu0 0
    %4300 = vmatpush1.bf16.msra.mxu0 0
    %4301 = vmatprep.mubr.bf16.mxu0 0
    %4302 = vmatmul.mubr.bf16.gmra.mrb[0].mxu0 %v2026
    %v4303 = vpop.f32.mrb[0].mxu0
    %v4304 = vadd.f32 0.0, %v4303
    %v4305 = vpop.f32.mrb[0].mxu0
    %v4306 = vadd.f32 0.0, %v4305
    %v4307 = vpop.f32.mrb[0].mxu0
    %v4308 = vadd.f32 0.0, %v4307
    %v4309 = vpop.f32.mrb[0].mxu0
    %v4310 = vadd.f32 0.0, %v4309
    %4311 = vdwg.mxu0
    %v4312 = vadd.f32 %v4179, %v4261
    %v4313 = vadd.f32 %v4180, %v4263
    %v4314 = vadd.f32 %v4181, %v4304
    %v4315 = vadd.f32 %v4182, %v4306
    %v4316 = vadd.f32 %v4183, %v4265
    %v4317 = vadd.f32 %v4184, %v4267
    %v4318 = vadd.f32 %v4185, %v4308
    %v4319 = vadd.f32 %v4186, %v4310
    %s4320 = scalar_lea.vmem [#allocation7], 4
    %v4321 = vld [vmem:[%s4320] sm:$0xf]
    %v4323 = vlaneseq
    %v4324 = vshrl.u32 %v4323, 7
    %v4325 = vsub.s32 0, %v4324
    %v4326 = vrot.slane %v4321, %v4325
    %v4327 = vlaneseq
    %v4328 = vshrl.u32 %v4327, 7
    %v4329 = vsub.s32 1, %v4328
    %v4330 = vrot.slane %v4321, %v4329
    %v4331 = vlaneseq
    %v4332 = vshrl.u32 %v4331, 7
    %v4333 = vsub.s32 2, %v4332
    %v4334 = vrot.slane %v4321, %v4333
    %v4335 = vlaneseq
    %v4336 = vshrl.u32 %v4335, 7
    %v4337 = vsub.s32 3, %v4336
    %v4338 = vrot.slane %v4321, %v4337
    %v4343 = vadd.f32 %v4312, %v4326
    %v4344 = vadd.f32 %v4313, %v4330
    %v4345 = vadd.f32 %v4314, %v4334
    %v4346 = vadd.f32 %v4315, %v4338
    %v4347 = vadd.f32 %v4316, %v4326
    %v4348 = vadd.f32 %v4317, %v4330
    %v4349 = vadd.f32 %v4318, %v4334
    %v4350 = vadd.f32 %v4319, %v4338
    %v4351 = vtanh.pop %v4343
    %v4352 = vtanh.pop %v4344
    %v4353 = vtanh.pop %v4347
    %v4354 = vtanh.pop %v4348
    %v4355 = vxor.u32 %v4345, 2147483648
    %v4356 = vxor.u32 %v4346, 2147483648
    %v4357 = vxor.u32 %v4349, 2147483648
    %v4358 = vxor.u32 %v4350, 2147483648
    %v4359 = vmul.f32 %v4355, 1.442695
    %v4360 = vpow.pop %v4359
    %v4361 = vmul.f32 %v4356, 1.442695
    %v4362 = vpow.pop %v4361
    %v4363 = vmul.f32 %v4357, 1.442695
    %v4364 = vpow.pop %v4363
    %v4365 = vmul.f32 %v4358, 1.442695
    %v4366 = vpow.pop %v4365
    %v4367 = vadd.f32 %v4360, 1.0
    %v4368 = vadd.f32 %v4362, 1.0
    %v4369 = vadd.f32 %v4364, 1.0
    %v4370 = vadd.f32 %v4366, 1.0
    %v4371 = vrcp.pop %v4367
    %v4372 = vmul.f32 1.0, %v4371
    %v4373 = vrcp.pop %v4368
    %v4374 = vmul.f32 1.0, %v4373
    %v4375 = vrcp.pop %v4369
    %v4376 = vmul.f32 1.0, %v4375
    %v4377 = vrcp.pop %v4370
    %v4378 = vmul.f32 1.0, %v4377
    %v4379 = vmul.f32 %v4351, %v4372
    %v4380 = vmul.f32 %v4352, %v4374
    %v4381 = vmul.f32 %v4353, %v4376
    %v4382 = vmul.f32 %v4354, %v4378
    %v4383 = vpack.c.bf16 %v4381, %v4379
    %v4384 = vpack.c.bf16 %v4382, %v4380
    %s4385 = scalar_lea.vmem [#allocation10], 512
    %v4386 = vld [vmem:[%s4385 + $0x8] sm:$0xff]
    %v4387 = vld [vmem:[%s4385 + $0x18] sm:$0xff]
    %v4388 = vld [vmem:[%s4385 + $0x28] sm:$0xff]
    %v4389 = vld [vmem:[%s4385 + $0x38] sm:$0xff]
    %v4390 = vld [vmem:[%s4385 + $0x48] sm:$0xff]
    %v4391 = vld [vmem:[%s4385 + $0x58] sm:$0xff]
    %v4392 = vld [vmem:[%s4385 + $0x68] sm:$0xff]
    %v4393 = vld [vmem:[%s4385 + $0x78] sm:$0xff]
    %v4394 = vld [vmem:[%s4385 + $0x88] sm:$0xff]
    %v4395 = vld [vmem:[%s4385 + $0x98] sm:$0xff]
    %v4396 = vld [vmem:[%s4385 + $0xa8] sm:$0xff]
    %v4397 = vld [vmem:[%s4385 + $0xb8] sm:$0xff]
    %v4398 = vld [vmem:[%s4385 + $0xc8] sm:$0xff]
    %v4399 = vld [vmem:[%s4385 + $0xd8] sm:$0xff]
    %v4400 = vld [vmem:[%s4385 + $0xe8] sm:$0xff]
    %v4401 = vld [vmem:[%s4385 + $0xf8] sm:$0xff]
    %v4402 = vld [vmem:[%s4385 + $0x108] sm:$0xff]
    %v4403 = vld [vmem:[%s4385 + $0x118] sm:$0xff]
    %v4404 = vld [vmem:[%s4385 + $0x128] sm:$0xff]
    %v4405 = vld [vmem:[%s4385 + $0x138] sm:$0xff]
    %v4406 = vld [vmem:[%s4385 + $0x148] sm:$0xff]
    %v4407 = vld [vmem:[%s4385 + $0x158] sm:$0xff]
    %v4408 = vld [vmem:[%s4385 + $0x168] sm:$0xff]
    %v4409 = vld [vmem:[%s4385 + $0x178] sm:$0xff]
    %v4410 = vld [vmem:[%s4385 + $0x188] sm:$0xff]
    %v4411 = vld [vmem:[%s4385 + $0x198] sm:$0xff]
    %v4412 = vld [vmem:[%s4385 + $0x1a8] sm:$0xff]
    %v4413 = vld [vmem:[%s4385 + $0x1b8] sm:$0xff]
    %v4414 = vld [vmem:[%s4385 + $0x1c8] sm:$0xff]
    %v4415 = vld [vmem:[%s4385 + $0x1d8] sm:$0xff]
    %v4416 = vld [vmem:[%s4385 + $0x1e8] sm:$0xff]
    %v4417 = vld [vmem:[%s4385 + $0x1f8] sm:$0xff]
    %s4418 = scalar_lea.vmem [#allocation12], 4
    %v4419 = vld [vmem:[%s4418] sm:$0xf]
    %v4421 = vlaneseq
    %v4422 = vshrl.u32 %v4421, 7
    %v4423 = vsub.s32 2, %v4422
    %v4424 = vrot.slane %v4419, %v4423
    %v4425 = vlaneseq
    %v4426 = vshrl.u32 %v4425, 7
    %v4427 = vsub.s32 3, %v4426
    %v4428 = vrot.slane %v4419, %v4427
    %v4463 = vunpack.c.l.b16 %v4386
    %v4464 = vunpack.c.h.b16 %v4386
    %v4465 = vunpack.c.l.b16 %v4387
    %v4466 = vunpack.c.h.b16 %v4387
    %v4467 = vunpack.c.l.b16 %v4388
    %v4468 = vunpack.c.h.b16 %v4388
    %v4469 = vunpack.c.l.b16 %v4389
    %v4470 = vunpack.c.h.b16 %v4389
    %v4471 = vunpack.c.l.b16 %v4390
    %v4472 = vunpack.c.h.b16 %v4390
    %v4473 = vunpack.c.l.b16 %v4391
    %v4474 = vunpack.c.h.b16 %v4391
    %v4475 = vunpack.c.l.b16 %v4392
    %v4476 = vunpack.c.h.b16 %v4392
    %v4477 = vunpack.c.l.b16 %v4393
    %v4478 = vunpack.c.h.b16 %v4393
    %v4479 = vunpack.c.l.b16 %v4394
    %v4480 = vunpack.c.h.b16 %v4394
    %v4481 = vunpack.c.l.b16 %v4395
    %v4482 = vunpack.c.h.b16 %v4395
    %v4483 = vunpack.c.l.b16 %v4396
    %v4484 = vunpack.c.h.b16 %v4396
    %v4485 = vunpack.c.l.b16 %v4397
    %v4486 = vunpack.c.h.b16 %v4397
    %v4487 = vunpack.c.l.b16 %v4398
    %v4488 = vunpack.c.h.b16 %v4398
    %v4489 = vunpack.c.l.b16 %v4399
    %v4490 = vunpack.c.h.b16 %v4399
    %v4491 = vunpack.c.l.b16 %v4400
    %v4492 = vunpack.c.h.b16 %v4400
    %v4493 = vunpack.c.l.b16 %v4401
    %v4494 = vunpack.c.h.b16 %v4401
    %v4495 = vunpack.c.l.b16 %v4402
    %v4496 = vunpack.c.h.b16 %v4402
    %v4497 = vunpack.c.l.b16 %v4403
    %v4498 = vunpack.c.h.b16 %v4403
    %v4499 = vunpack.c.l.b16 %v4404
    %v4500 = vunpack.c.h.b16 %v4404
    %v4501 = vunpack.c.l.b16 %v4405
    %v4502 = vunpack.c.h.b16 %v4405
    %v4503 = vunpack.c.l.b16 %v4406
    %v4504 = vunpack.c.h.b16 %v4406
    %v4505 = vunpack.c.l.b16 %v4407
    %v4506 = vunpack.c.h.b16 %v4407
    %v4507 = vunpack.c.l.b16 %v4408
    %v4508 = vunpack.c.h.b16 %v4408
    %v4509 = vunpack.c.l.b16 %v4409
    %v4510 = vunpack.c.h.b16 %v4409
    %v4511 = vunpack.c.l.b16 %v4410
    %v4512 = vunpack.c.h.b16 %v4410
    %v4513 = vunpack.c.l.b16 %v4411
    %v4514 = vunpack.c.h.b16 %v4411
    %v4515 = vunpack.c.l.b16 %v4412
    %v4516 = vunpack.c.h.b16 %v4412
    %v4517 = vunpack.c.l.b16 %v4413
    %v4518 = vunpack.c.h.b16 %v4413
    %v4519 = vunpack.c.l.b16 %v4414
    %v4520 = vunpack.c.h.b16 %v4414
    %v4521 = vunpack.c.l.b16 %v4415
    %v4522 = vunpack.c.h.b16 %v4415
    %v4523 = vunpack.c.l.b16 %v4416
    %v4524 = vunpack.c.h.b16 %v4416
    %v4525 = vunpack.c.l.b16 %v4417
    %v4526 = vunpack.c.h.b16 %v4417
    %v4527 = vpack.c.b16 %v4465, %v4463
    %v4528 = vpack.c.b16 %v4466, %v4464
    %v4529 = vpack.c.b16 %v4469, %v4467
    %v4530 = vpack.c.b16 %v4470, %v4468
    %v4531 = vpack.c.b16 %v4473, %v4471
    %v4532 = vpack.c.b16 %v4474, %v4472
    %v4533 = vpack.c.b16 %v4477, %v4475
    %v4534 = vpack.c.b16 %v4478, %v4476
    %v4535 = vpack.c.b16 %v4481, %v4479
    %v4536 = vpack.c.b16 %v4482, %v4480
    %v4537 = vpack.c.b16 %v4485, %v4483
    %v4538 = vpack.c.b16 %v4486, %v4484
    %v4539 = vpack.c.b16 %v4489, %v4487
    %v4540 = vpack.c.b16 %v4490, %v4488
    %v4541 = vpack.c.b16 %v4493, %v4491
    %v4542 = vpack.c.b16 %v4494, %v4492
    %v4543 = vpack.c.b16 %v4497, %v4495
    %v4544 = vpack.c.b16 %v4498, %v4496
    %v4545 = vpack.c.b16 %v4501, %v4499
    %v4546 = vpack.c.b16 %v4502, %v4500
    %v4547 = vpack.c.b16 %v4505, %v4503
    %v4548 = vpack.c.b16 %v4506, %v4504
    %v4549 = vpack.c.b16 %v4509, %v4507
    %v4550 = vpack.c.b16 %v4510, %v4508
    %v4551 = vpack.c.b16 %v4513, %v4511
    %v4552 = vpack.c.b16 %v4514, %v4512
    %v4553 = vpack.c.b16 %v4517, %v4515
    %v4554 = vpack.c.b16 %v4518, %v4516
    %v4555 = vpack.c.b16 %v4521, %v4519
    %v4556 = vpack.c.b16 %v4522, %v4520
    %v4557 = vpack.c.b16 %v4525, %v4523
    %v4558 = vpack.c.b16 %v4526, %v4524
    %4591 = vmatprep.subr.bf16.mxu0 %v4528
    %4592 = vmatpush1.bf16.msra.mxu0 %v4527
    %4593 = vmatprep.subr.bf16.mxu0 %v4530
    %4594 = vmatpush1.bf16.msra.mxu0 %v4529
    %4595 = vmatprep.subr.bf16.mxu0 %v4532
    %4596 = vmatpush1.bf16.msra.mxu0 %v4531
    %4597 = vmatprep.subr.bf16.mxu0 %v4534
    %4598 = vmatpush1.bf16.msra.mxu0 %v4533
    %4599 = vmatprep.subr.bf16.mxu0 %v4536
    %4600 = vmatpush1.bf16.msra.mxu0 %v4535
    %4601 = vmatprep.subr.bf16.mxu0 %v4538
    %4602 = vmatpush1.bf16.msra.mxu0 %v4537
    %4603 = vmatprep.subr.bf16.mxu0 %v4540
    %4604 = vmatpush1.bf16.msra.mxu0 %v4539
    %4605 = vmatprep.subr.bf16.mxu0 %v4542
    %4606 = vmatpush1.bf16.msra.mxu0 %v4541
    %4607 = vmatprep.subr.bf16.mxu0 %v4544
    %4608 = vmatpush1.bf16.msra.mxu0 %v4543
    %4609 = vmatprep.subr.bf16.mxu0 %v4546
    %4610 = vmatpush1.bf16.msra.mxu0 %v4545
    %4611 = vmatprep.subr.bf16.mxu0 %v4548
    %4612 = vmatpush1.bf16.msra.mxu0 %v4547
    %4613 = vmatprep.subr.bf16.mxu0 %v4550
    %4614 = vmatpush1.bf16.msra.mxu0 %v4549
    %4615 = vmatprep.subr.bf16.mxu0 %v4552
    %4616 = vmatpush1.bf16.msra.mxu0 %v4551
    %4617 = vmatprep.subr.bf16.mxu0 %v4554
    %4618 = vmatpush1.bf16.msra.mxu0 %v4553
    %4619 = vmatprep.subr.bf16.mxu0 %v4556
    %4620 = vmatpush1.bf16.msra.mxu0 %v4555
    %4621 = vmatprep.subr.bf16.mxu0 %v4558
    %4622 = vmatpush1.bf16.msra.mxu0 %v4557
    %4623 = vmatprep.mubr.bf16.mxu0 %v4384
    %4624 = vmatmul.mubr.bf16.gmra.mrb[0].mxu0 %v4383
    %v4625 = vpop.f32.mrb[0].mxu0
    %v4626 = vadd.f32 %v4424, %v4625
    %v4627 = vpop.f32.mrb[0].mxu0
    %v4628 = vadd.f32 %v4428, %v4627
    %v4629 = vpop.f32.mrb[0].mxu0
    %v4630 = vadd.f32 %v4424, %v4629
    %v4631 = vpop.f32.mrb[0].mxu0
    %v4632 = vadd.f32 %v4428, %v4631
    %4633 = vdwg.mxu0
    %v4634 = vadd.f32 %v2698, %v4626
    %v4635 = vadd.f32 %v2699, %v4628
    %v4636 = vadd.f32 %v2700, %v4630
    %v4637 = vadd.f32 %v2701, %v4632
    %v4638 = vmax.f32 %v4634, 0.0
    %v4639 = vmax.f32 %v4635, 0.0
    %v4640 = vmax.f32 %v4636, 0.0
    %v4641 = vmax.f32 %v4637, 0.0
    %v4642 = vpack.c.bf16 %v4640, %v4638
    %v4643 = vpack.c.bf16 %v4641, %v4639
    %v4644 = vld [vmem:[#allocation13] sm:$0xff]
    %v4645 = vld [vmem:[#allocation13 + $0x8] sm:$0xff]
    %v4646 = vld [vmem:[#allocation13 + $0x10] sm:$0xff]
    %v4647 = vld [vmem:[#allocation13 + $0x18] sm:$0xff]
    %v4648 = vld [vmem:[#allocation13 + $0x20] sm:$0xff]
    %v4649 = vld [vmem:[#allocation13 + $0x28] sm:$0xff]
    %v4650 = vld [vmem:[#allocation13 + $0x30] sm:$0xff]
    %v4651 = vld [vmem:[#allocation13 + $0x38] sm:$0xff]
    %v4652 = vld [vmem:[#allocation13 + $0x40] sm:$0xff]
    %v4653 = vld [vmem:[#allocation13 + $0x48] sm:$0xff]
    %v4654 = vld [vmem:[#allocation13 + $0x50] sm:$0xff]
    %v4655 = vld [vmem:[#allocation13 + $0x58] sm:$0xff]
    %v4656 = vld [vmem:[#allocation13 + $0x60] sm:$0xff]
    %v4657 = vld [vmem:[#allocation13 + $0x68] sm:$0xff]
    %v4658 = vld [vmem:[#allocation13 + $0x70] sm:$0xff]
    %v4659 = vld [vmem:[#allocation13 + $0x78] sm:$0xff]
    %v4660 = vld [vmem:[#allocation13 + $0x80] sm:$0xff]
    %v4661 = vld [vmem:[#allocation13 + $0x88] sm:$0xff]
    %v4662 = vld [vmem:[#allocation13 + $0x90] sm:$0xff]
    %v4663 = vld [vmem:[#allocation13 + $0x98] sm:$0xff]
    %v4664 = vld [vmem:[#allocation13 + $0xa0] sm:$0xff]
    %v4665 = vld [vmem:[#allocation13 + $0xa8] sm:$0xff]
    %v4666 = vld [vmem:[#allocation13 + $0xb0] sm:$0xff]
    %v4667 = vld [vmem:[#allocation13 + $0xb8] sm:$0xff]
    %v4668 = vld [vmem:[#allocation13 + $0xc0] sm:$0xff]
    %v4669 = vld [vmem:[#allocation13 + $0xc8] sm:$0xff]
    %v4670 = vld [vmem:[#allocation13 + $0xd0] sm:$0xff]
    %v4671 = vld [vmem:[#allocation13 + $0xd8] sm:$0xff]
    %v4672 = vld [vmem:[#allocation13 + $0xe0] sm:$0xff]
    %v4673 = vld [vmem:[#allocation13 + $0xe8] sm:$0xff]
    %v4674 = vld [vmem:[#allocation13 + $0xf0] sm:$0xff]
    %v4675 = vld [vmem:[#allocation13 + $0xf8] sm:$0xff]
    %v4676 = vld [vmem:[#allocation15] sm:$0x3]
    %v4678 = vlaneseq
    %v4679 = vshrl.u32 %v4678, 7
    %v4680 = vsub.s32 0, %v4679
    %v4681 = vrot.slane %v4676, %v4680
    %v4682 = vlaneseq
    %v4683 = vshrl.u32 %v4682, 7
    %v4684 = vsub.s32 1, %v4683
    %v4685 = vrot.slane %v4676, %v4684
    %v4720 = vunpack.c.l.b16 %v4644
    %v4721 = vunpack.c.h.b16 %v4644
    %v4722 = vunpack.c.l.b16 %v4645
    %v4723 = vunpack.c.h.b16 %v4645
    %v4724 = vunpack.c.l.b16 %v4646
    %v4725 = vunpack.c.h.b16 %v4646
    %v4726 = vunpack.c.l.b16 %v4647
    %v4727 = vunpack.c.h.b16 %v4647
    %v4728 = vunpack.c.l.b16 %v4648
    %v4729 = vunpack.c.h.b16 %v4648
    %v4730 = vunpack.c.l.b16 %v4649
    %v4731 = vunpack.c.h.b16 %v4649
    %v4732 = vunpack.c.l.b16 %v4650
    %v4733 = vunpack.c.h.b16 %v4650
    %v4734 = vunpack.c.l.b16 %v4651
    %v4735 = vunpack.c.h.b16 %v4651
    %v4736 = vunpack.c.l.b16 %v4652
    %v4737 = vunpack.c.h.b16 %v4652
    %v4738 = vunpack.c.l.b16 %v4653
    %v4739 = vunpack.c.h.b16 %v4653
    %v4740 = vunpack.c.l.b16 %v4654
    %v4741 = vunpack.c.h.b16 %v4654
    %v4742 = vunpack.c.l.b16 %v4655
    %v4743 = vunpack.c.h.b16 %v4655
    %v4744 = vunpack.c.l.b16 %v4656
    %v4745 = vunpack.c.h.b16 %v4656
    %v4746 = vunpack.c.l.b16 %v4657
    %v4747 = vunpack.c.h.b16 %v4657
    %v4748 = vunpack.c.l.b16 %v4658
    %v4749 = vunpack.c.h.b16 %v4658
    %v4750 = vunpack.c.l.b16 %v4659
    %v4751 = vunpack.c.h.b16 %v4659
    %v4752 = vunpack.c.l.b16 %v4660
    %v4753 = vunpack.c.h.b16 %v4660
    %v4754 = vunpack.c.l.b16 %v4661
    %v4755 = vunpack.c.h.b16 %v4661
    %v4756 = vunpack.c.l.b16 %v4662
    %v4757 = vunpack.c.h.b16 %v4662
    %v4758 = vunpack.c.l.b16 %v4663
    %v4759 = vunpack.c.h.b16 %v4663
    %v4760 = vunpack.c.l.b16 %v4664
    %v4761 = vunpack.c.h.b16 %v4664
    %v4762 = vunpack.c.l.b16 %v4665
    %v4763 = vunpack.c.h.b16 %v4665
    %v4764 = vunpack.c.l.b16 %v4666
    %v4765 = vunpack.c.h.b16 %v4666
    %v4766 = vunpack.c.l.b16 %v4667
    %v4767 = vunpack.c.h.b16 %v4667
    %v4768 = vunpack.c.l.b16 %v4668
    %v4769 = vunpack.c.h.b16 %v4668
    %v4770 = vunpack.c.l.b16 %v4669
    %v4771 = vunpack.c.h.b16 %v4669
    %v4772 = vunpack.c.l.b16 %v4670
    %v4773 = vunpack.c.h.b16 %v4670
    %v4774 = vunpack.c.l.b16 %v4671
    %v4775 = vunpack.c.h.b16 %v4671
    %v4776 = vunpack.c.l.b16 %v4672
    %v4777 = vunpack.c.h.b16 %v4672
    %v4778 = vunpack.c.l.b16 %v4673
    %v4779 = vunpack.c.h.b16 %v4673
    %v4780 = vunpack.c.l.b16 %v4674
    %v4781 = vunpack.c.h.b16 %v4674
    %v4782 = vunpack.c.l.b16 %v4675
    %v4783 = vunpack.c.h.b16 %v4675
    %v4784 = vpack.c.b16 %v4722, %v4720
    %v4785 = vpack.c.b16 %v4723, %v4721
    %v4786 = vpack.c.b16 %v4726, %v4724
    %v4787 = vpack.c.b16 %v4727, %v4725
    %v4788 = vpack.c.b16 %v4730, %v4728
    %v4789 = vpack.c.b16 %v4731, %v4729
    %v4790 = vpack.c.b16 %v4734, %v4732
    %v4791 = vpack.c.b16 %v4735, %v4733
    %v4792 = vpack.c.b16 %v4738, %v4736
    %v4793 = vpack.c.b16 %v4739, %v4737
    %v4794 = vpack.c.b16 %v4742, %v4740
    %v4795 = vpack.c.b16 %v4743, %v4741
    %v4796 = vpack.c.b16 %v4746, %v4744
    %v4797 = vpack.c.b16 %v4747, %v4745
    %v4798 = vpack.c.b16 %v4750, %v4748
    %v4799 = vpack.c.b16 %v4751, %v4749
    %v4800 = vpack.c.b16 %v4754, %v4752
    %v4801 = vpack.c.b16 %v4755, %v4753
    %v4802 = vpack.c.b16 %v4758, %v4756
    %v4803 = vpack.c.b16 %v4759, %v4757
    %v4804 = vpack.c.b16 %v4762, %v4760
    %v4805 = vpack.c.b16 %v4763, %v4761
    %v4806 = vpack.c.b16 %v4766, %v4764
    %v4807 = vpack.c.b16 %v4767, %v4765
    %v4808 = vpack.c.b16 %v4770, %v4768
    %v4809 = vpack.c.b16 %v4771, %v4769
    %v4810 = vpack.c.b16 %v4774, %v4772
    %v4811 = vpack.c.b16 %v4775, %v4773
    %v4812 = vpack.c.b16 %v4778, %v4776
    %v4813 = vpack.c.b16 %v4779, %v4777
    %v4814 = vpack.c.b16 %v4782, %v4780
    %v4815 = vpack.c.b16 %v4783, %v4781
    %4848 = vmatprep.subr.bf16.mxu0 %v4785
    %4849 = vmatpush1.bf16.msra.mxu0 %v4784
    %4850 = vmatprep.subr.bf16.mxu0 %v4787
    %4851 = vmatpush1.bf16.msra.mxu0 %v4786
    %4852 = vmatprep.subr.bf16.mxu0 %v4789
    %4853 = vmatpush1.bf16.msra.mxu0 %v4788
    %4854 = vmatprep.subr.bf16.mxu0 %v4791
    %4855 = vmatpush1.bf16.msra.mxu0 %v4790
    %4856 = vmatprep.subr.bf16.mxu0 %v4793
    %4857 = vmatpush1.bf16.msra.mxu0 %v4792
    %4858 = vmatprep.subr.bf16.mxu0 %v4795
    %4859 = vmatpush1.bf16.msra.mxu0 %v4794
    %4860 = vmatprep.subr.bf16.mxu0 %v4797
    %4861 = vmatpush1.bf16.msra.mxu0 %v4796
    %4862 = vmatprep.subr.bf16.mxu0 %v4799
    %4863 = vmatpush1.bf16.msra.mxu0 %v4798
    %4864 = vmatprep.subr.bf16.mxu0 %v4801
    %4865 = vmatpush1.bf16.msra.mxu0 %v4800
    %4866 = vmatprep.subr.bf16.mxu0 %v4803
    %4867 = vmatpush1.bf16.msra.mxu0 %v4802
    %4868 = vmatprep.subr.bf16.mxu0 %v4805
    %4869 = vmatpush1.bf16.msra.mxu0 %v4804
    %4870 = vmatprep.subr.bf16.mxu0 %v4807
    %4871 = vmatpush1.bf16.msra.mxu0 %v4806
    %4872 = vmatprep.subr.bf16.mxu0 %v4809
    %4873 = vmatpush1.bf16.msra.mxu0 %v4808
    %4874 = vmatprep.subr.bf16.mxu0 %v4811
    %4875 = vmatpush1.bf16.msra.mxu0 %v4810
    %4876 = vmatprep.subr.bf16.mxu0 %v4813
    %4877 = vmatpush1.bf16.msra.mxu0 %v4812
    %4878 = vmatprep.subr.bf16.mxu0 %v4815
    %4879 = vmatpush1.bf16.msra.mxu0 %v4814
    %4880 = vmatprep.mubr.bf16.mxu0 %v4643
    %4881 = vmatmul.mubr.bf16.gmra.mrb[0].mxu0 %v4642
    %v4882 = vpop.f32.mrb[0].mxu0
    %v4883 = vadd.f32 %v4681, %v4882
    %v4884 = vpop.f32.mrb[0].mxu0
    %v4885 = vadd.f32 %v4685, %v4884
    %v4886 = vpop.f32.mrb[0].mxu0
    %v4887 = vadd.f32 %v4681, %v4886
    %v4888 = vpop.f32.mrb[0].mxu0
    %v4889 = vadd.f32 %v4685, %v4888
    %4890 = vdwg.mxu0
    %v4891 = vmax.f32 %v4883, 0.0
    %v4892 = vmax.f32 %v4885, 0.0
    %v4893 = vmax.f32 %v4887, 0.0
    %v4894 = vmax.f32 %v4889, 0.0
    %v4895 = vpack.c.bf16 %v4893, %v4891
    %v4896 = vpack.c.bf16 %v4894, %v4892
    %v4897 = vld [vmem:[#allocation16] sm:$0xff]
    %v4898 = vld [vmem:[#allocation16 + $0x8] sm:$0xff]
    %v4899 = vld [vmem:[#allocation16 + $0x10] sm:$0xff]
    %v4900 = vld [vmem:[#allocation16 + $0x18] sm:$0xff]
    %v4901 = vld [vmem:[#allocation16 + $0x20] sm:$0xff]
    %v4902 = vld [vmem:[#allocation16 + $0x28] sm:$0xff]
    %v4903 = vld [vmem:[#allocation16 + $0x30] sm:$0xff]
    %v4904 = vld [vmem:[#allocation16 + $0x38] sm:$0xff]
    %v4905 = vld [vmem:[#allocation16 + $0x40] sm:$0xff]
    %v4906 = vld [vmem:[#allocation16 + $0x48] sm:$0xff]
    %v4907 = vld [vmem:[#allocation16 + $0x50] sm:$0xff]
    %v4908 = vld [vmem:[#allocation16 + $0x58] sm:$0xff]
    %v4909 = vld [vmem:[#allocation16 + $0x60] sm:$0xff]
    %v4910 = vld [vmem:[#allocation16 + $0x68] sm:$0xff]
    %v4911 = vld [vmem:[#allocation16 + $0x70] sm:$0xff]
    %v4912 = vld [vmem:[#allocation16 + $0x78] sm:$0xff]
    %v4913 = vld [vmem:[#allocation16 + $0x80] sm:$0xff]
    %v4914 = vld [vmem:[#allocation16 + $0x88] sm:$0xff]
    %v4915 = vld [vmem:[#allocation16 + $0x90] sm:$0xff]
    %v4916 = vld [vmem:[#allocation16 + $0x98] sm:$0xff]
    %v4917 = vld [vmem:[#allocation16 + $0xa0] sm:$0xff]
    %v4918 = vld [vmem:[#allocation16 + $0xa8] sm:$0xff]
    %v4919 = vld [vmem:[#allocation16 + $0xb0] sm:$0xff]
    %v4920 = vld [vmem:[#allocation16 + $0xb8] sm:$0xff]
    %v4921 = vld [vmem:[#allocation16 + $0xc0] sm:$0xff]
    %v4922 = vld [vmem:[#allocation16 + $0xc8] sm:$0xff]
    %v4923 = vld [vmem:[#allocation16 + $0xd0] sm:$0xff]
    %v4924 = vld [vmem:[#allocation16 + $0xd8] sm:$0xff]
    %v4925 = vld [vmem:[#allocation16 + $0xe0] sm:$0xff]
    %v4926 = vld [vmem:[#allocation16 + $0xe8] sm:$0xff]
    %v4927 = vld [vmem:[#allocation16 + $0xf0] sm:$0xff]
    %v4928 = vld [vmem:[#allocation16 + $0xf8] sm:$0xff]
    %v4929 = vld [vmem:[#allocation18] sm:$0x3]
    %v4931 = vlaneseq
    %v4932 = vshrl.u32 %v4931, 7
    %v4933 = vsub.s32 0, %v4932
    %v4934 = vrot.slane %v4929, %v4933
    %v4935 = vlaneseq
    %v4936 = vshrl.u32 %v4935, 7
    %v4937 = vsub.s32 1, %v4936
    %v4938 = vrot.slane %v4929, %v4937
    %v4973 = vunpack.c.l.b16 %v4897
    %v4974 = vunpack.c.h.b16 %v4897
    %v4975 = vunpack.c.l.b16 %v4898
    %v4976 = vunpack.c.h.b16 %v4898
    %v4977 = vunpack.c.l.b16 %v4899
    %v4978 = vunpack.c.h.b16 %v4899
    %v4979 = vunpack.c.l.b16 %v4900
    %v4980 = vunpack.c.h.b16 %v4900
    %v4981 = vunpack.c.l.b16 %v4901
    %v4982 = vunpack.c.h.b16 %v4901
    %v4983 = vunpack.c.l.b16 %v4902
    %v4984 = vunpack.c.h.b16 %v4902
    %v4985 = vunpack.c.l.b16 %v4903
    %v4986 = vunpack.c.h.b16 %v4903
    %v4987 = vunpack.c.l.b16 %v4904
    %v4988 = vunpack.c.h.b16 %v4904
    %v4989 = vunpack.c.l.b16 %v4905
    %v4990 = vunpack.c.h.b16 %v4905
    %v4991 = vunpack.c.l.b16 %v4906
    %v4992 = vunpack.c.h.b16 %v4906
    %v4993 = vunpack.c.l.b16 %v4907
    %v4994 = vunpack.c.h.b16 %v4907
    %v4995 = vunpack.c.l.b16 %v4908
    %v4996 = vunpack.c.h.b16 %v4908
    %v4997 = vunpack.c.l.b16 %v4909
    %v4998 = vunpack.c.h.b16 %v4909
    %v4999 = vunpack.c.l.b16 %v4910
    %v5000 = vunpack.c.h.b16 %v4910
    %v5001 = vunpack.c.l.b16 %v4911
    %v5002 = vunpack.c.h.b16 %v4911
    %v5003 = vunpack.c.l.b16 %v4912
    %v5004 = vunpack.c.h.b16 %v4912
    %v5005 = vunpack.c.l.b16 %v4913
    %v5006 = vunpack.c.h.b16 %v4913
    %v5007 = vunpack.c.l.b16 %v4914
    %v5008 = vunpack.c.h.b16 %v4914
    %v5009 = vunpack.c.l.b16 %v4915
    %v5010 = vunpack.c.h.b16 %v4915
    %v5011 = vunpack.c.l.b16 %v4916
    %v5012 = vunpack.c.h.b16 %v4916
    %v5013 = vunpack.c.l.b16 %v4917
    %v5014 = vunpack.c.h.b16 %v4917
    %v5015 = vunpack.c.l.b16 %v4918
    %v5016 = vunpack.c.h.b16 %v4918
    %v5017 = vunpack.c.l.b16 %v4919
    %v5018 = vunpack.c.h.b16 %v4919
    %v5019 = vunpack.c.l.b16 %v4920
    %v5020 = vunpack.c.h.b16 %v4920
    %v5021 = vunpack.c.l.b16 %v4921
    %v5022 = vunpack.c.h.b16 %v4921
    %v5023 = vunpack.c.l.b16 %v4922
    %v5024 = vunpack.c.h.b16 %v4922
    %v5025 = vunpack.c.l.b16 %v4923
    %v5026 = vunpack.c.h.b16 %v4923
    %v5027 = vunpack.c.l.b16 %v4924
    %v5028 = vunpack.c.h.b16 %v4924
    %v5029 = vunpack.c.l.b16 %v4925
    %v5030 = vunpack.c.h.b16 %v4925
    %v5031 = vunpack.c.l.b16 %v4926
    %v5032 = vunpack.c.h.b16 %v4926
    %v5033 = vunpack.c.l.b16 %v4927
    %v5034 = vunpack.c.h.b16 %v4927
    %v5035 = vunpack.c.l.b16 %v4928
    %v5036 = vunpack.c.h.b16 %v4928
    %v5037 = vpack.c.b16 %v4975, %v4973
    %v5038 = vpack.c.b16 %v4976, %v4974
    %v5039 = vpack.c.b16 %v4979, %v4977
    %v5040 = vpack.c.b16 %v4980, %v4978
    %v5041 = vpack.c.b16 %v4983, %v4981
    %v5042 = vpack.c.b16 %v4984, %v4982
    %v5043 = vpack.c.b16 %v4987, %v4985
    %v5044 = vpack.c.b16 %v4988, %v4986
    %v5045 = vpack.c.b16 %v4991, %v4989
    %v5046 = vpack.c.b16 %v4992, %v4990
    %v5047 = vpack.c.b16 %v4995, %v4993
    %v5048 = vpack.c.b16 %v4996, %v4994
    %v5049 = vpack.c.b16 %v4999, %v4997
    %v5050 = vpack.c.b16 %v5000, %v4998
    %v5051 = vpack.c.b16 %v5003, %v5001
    %v5052 = vpack.c.b16 %v5004, %v5002
    %v5053 = vpack.c.b16 %v5007, %v5005
    %v5054 = vpack.c.b16 %v5008, %v5006
    %v5055 = vpack.c.b16 %v5011, %v5009
    %v5056 = vpack.c.b16 %v5012, %v5010
    %v5057 = vpack.c.b16 %v5015, %v5013
    %v5058 = vpack.c.b16 %v5016, %v5014
    %v5059 = vpack.c.b16 %v5019, %v5017
    %v5060 = vpack.c.b16 %v5020, %v5018
    %v5061 = vpack.c.b16 %v5023, %v5021
    %v5062 = vpack.c.b16 %v5024, %v5022
    %v5063 = vpack.c.b16 %v5027, %v5025
    %v5064 = vpack.c.b16 %v5028, %v5026
    %v5065 = vpack.c.b16 %v5031, %v5029
    %v5066 = vpack.c.b16 %v5032, %v5030
    %v5067 = vpack.c.b16 %v5035, %v5033
    %v5068 = vpack.c.b16 %v5036, %v5034
    %5101 = vmatprep.subr.bf16.mxu0 %v5038
    %5102 = vmatpush1.bf16.msra.mxu0 %v5037
    %5103 = vmatprep.subr.bf16.mxu0 %v5040
    %5104 = vmatpush1.bf16.msra.mxu0 %v5039
    %5105 = vmatprep.subr.bf16.mxu0 %v5042
    %5106 = vmatpush1.bf16.msra.mxu0 %v5041
    %5107 = vmatprep.subr.bf16.mxu0 %v5044
    %5108 = vmatpush1.bf16.msra.mxu0 %v5043
    %5109 = vmatprep.subr.bf16.mxu0 %v5046
    %5110 = vmatpush1.bf16.msra.mxu0 %v5045
    %5111 = vmatprep.subr.bf16.mxu0 %v5048
    %5112 = vmatpush1.bf16.msra.mxu0 %v5047
    %5113 = vmatprep.subr.bf16.mxu0 %v5050
    %5114 = vmatpush1.bf16.msra.mxu0 %v5049
    %5115 = vmatprep.subr.bf16.mxu0 %v5052
    %5116 = vmatpush1.bf16.msra.mxu0 %v5051
    %5117 = vmatprep.subr.bf16.mxu0 %v5054
    %5118 = vmatpush1.bf16.msra.mxu0 %v5053
    %5119 = vmatprep.subr.bf16.mxu0 %v5056
    %5120 = vmatpush1.bf16.msra.mxu0 %v5055
    %5121 = vmatprep.subr.bf16.mxu0 %v5058
    %5122 = vmatpush1.bf16.msra.mxu0 %v5057
    %5123 = vmatprep.subr.bf16.mxu0 %v5060
    %5124 = vmatpush1.bf16.msra.mxu0 %v5059
    %5125 = vmatprep.subr.bf16.mxu0 %v5062
    %5126 = vmatpush1.bf16.msra.mxu0 %v5061
    %5127 = vmatprep.subr.bf16.mxu0 %v5064
    %5128 = vmatpush1.bf16.msra.mxu0 %v5063
    %5129 = vmatprep.subr.bf16.mxu0 %v5066
    %5130 = vmatpush1.bf16.msra.mxu0 %v5065
    %5131 = vmatprep.subr.bf16.mxu0 %v5068
    %5132 = vmatpush1.bf16.msra.mxu0 %v5067
    %5133 = vmatprep.mubr.bf16.mxu0 %v4896
    %5134 = vmatmul.mubr.bf16.gmra.mrb[0].mxu0 %v4895
    %v5135 = vpop.f32.mrb[0].mxu0
    %v5136 = vadd.f32 %v4934, %v5135
    %v5137 = vpop.f32.mrb[0].mxu0
    %v5138 = vadd.f32 %v4938, %v5137
    %v5139 = vpop.f32.mrb[0].mxu0
    %v5140 = vadd.f32 %v4934, %v5139
    %v5141 = vpop.f32.mrb[0].mxu0
    %v5142 = vadd.f32 %v4938, %v5141
    %5143 = vdwg.mxu0
    %v5144 = vld [vmem:[#allocation19] sm:$0x3]
    %v5145 = vmul.f32 %v5144, 3.0
    %v5146 = vmul.f32 %v5145, 1.442695
    %v5147 = vpow.pop %v5146
    %v5149 = vlaneseq
    %v5150 = vshrl.u32 %v5149, 7
    %v5151 = vsub.s32 0, %v5150
    %v5152 = vrot.slane %v5147, %v5151
    %v5153 = vlaneseq
    %v5154 = vshrl.u32 %v5153, 7
    %v5155 = vsub.s32 1, %v5154
    %v5156 = vrot.slane %v5147, %v5155
    %v5159 = vmul.f32 %v5136, %v5152
    %v5160 = vmul.f32 %v5138, %v5156
    %v5161 = vmul.f32 %v5140, %v5152
    %v5162 = vmul.f32 %v5142, %v5156
    %v5163 = vld [vmem:[%s2] sm:$0xff]
    %v5164 = vld [vmem:[%s2 + $0x8] sm:$0xff]
    %v5165 = vsub.f32 %v5163, %v5160
    %v5166 = vsub.f32 %v5164, %v5162
    %v5167 = vsub.f32 0.0, %v5159
    %v5168 = vsub.f32 0.0, %v5161
    %v5169 = vmul.f32 %v5167, 1.442695
    %v5170 = vpow.pop %v5169
    %v5171 = vmul.f32 %v5168, 1.442695
    %v5172 = vpow.pop %v5171
    %v5173 = vmul.f32 %v5165, %v5170
    %v5174 = vmul.f32 %v5166, %v5172
    %5175 = vst [vmem:[%s15] sm:$0xff] %v5173
    %5176 = vst [vmem:[%s15 + $0x8] sm:$0xff] %v5174
    %v5177 = vadd.f32 %v5159, %v5161
    %v5178 = vrot.slane %v5177, 4
    %v5179 = vadd.f32 %v5177, %v5178
    %v5180 = vrot.slane %v5179, 2
    %v5181 = vadd.f32 %v5179, %v5180
    %v5182 = vrot.slane %v5181, 1
    %v5183 = vadd.f32 %v5181, %v5182
    %v5184 = vsub.f32 0.0, %v5183
    %5185 = vst [vmem:[%s16] sm:$0xff] %v5184
    // Predicated region
    $region110: #{block_forward.2} parent=1 // pred_check
      _
    $region111: #{block_forward.2} parent=1 // pred_check_branch
      %5187 = sbr.rel (0) target = $region113
    $region112: #{block_forward.2} parent=1 // pred_region
      _
    $region113: #{block_forward.2} parent=1 // pred_fallthru
      _
    // Predicated region
    $region114: #{block_forward.2} parent=1 // pred_check
      _
    $region115: #{block_forward.2} parent=1 // pred_check_branch
      %5189 = sbr.rel (0) target = $region117
    $region116: #{block_forward.2} parent=1 // pred_region
      _
    $region117: #{block_forward.2} parent=1 // pred_fallthru
      _
    // Predicated region
    $region118: #{block_forward.2} parent=1 // pred_check
      _
    $region119: #{block_forward.2} parent=1 // pred_check_branch
      %5191 = sbr.rel (0) target = $region121
    $region120: #{block_forward.2} parent=1 // pred_region
      _
    $region121: #{block_forward.2} parent=1 // pred_fallthru
      _
    // Predicated region
    $region122: #{block_forward.2} parent=1 // pred_check
      _
    $region123: #{block_forward.2} parent=1 // pred_check_branch
      %5193 = sbr.rel (0) target = $region125
    $region124: #{block_forward.2} parent=1 // pred_region
      _
    $region125: #{block_forward.2} parent=1 // pred_fallthru
      _
    %5194 = vsyncpa [#allocation3], 1
    %5195 = vsyncpa [#allocation5], 1
    %5196 = vsyncpa [#allocation8], 1
    %5197 = vsyncpa [#allocation11], 1
    %5198 = vsyncpa [#allocation14], 1
    %5199 = vsyncpa [#allocation17], 1
    %5200 = vsyncpa [#allocation20], 1

// kernel: block_forward.3
$region0: #{block_forward.3}
  #allocation0 [shape = 'u32[]', space=smem, size = 0x4, offset = 0x4, fixed_abs, tag = 'smem constant byte address 0x4 - core index']
  #allocation1 [shape = 'u32[144,128]{1,0:T(1,128)}', space=vmem, size = 0x12000, scoped, tag = 'internal scratch']
  %s0 = inlined_call_operand.vmem [shape: f32[16,2], index: 0, kind: input, shape index: {}]
  %s1 = inlined_call_operand.vmem [shape: f32[16,2], index: 1, kind: input, shape index: {}]
  %s2 = inlined_call_operand.vmem [shape: f32[16,128], index: 2, kind: input, shape index: {}]
  %s3 = inlined_call_operand.vmem [shape: bf16[3,2,256], index: 3, kind: input, shape index: {}]
  %s4 = inlined_call_operand.vmem [shape: f32[1,256], index: 4, kind: input, shape index: {}]
  %s5 = inlined_call_operand.vmem [shape: bf16[6,256,512], index: 5, kind: input, shape index: {}]
  %s6 = inlined_call_operand.vmem [shape: f32[2,1,512], index: 6, kind: input, shape index: {}]
  %s7 = inlined_call_operand.vmem [shape: bf16[2,2,512], index: 7, kind: input, shape index: {}]
  %s8 = inlined_call_operand.vmem [shape: bf16[2,256,512], index: 8, kind: input, shape index: {}]
  %s9 = inlined_call_operand.vmem [shape: f32[2,1,512], index: 9, kind: input, shape index: {}]
  %s10 = inlined_call_operand.vmem [shape: bf16[256,256], index: 10, kind: input, shape index: {}]
  %s11 = inlined_call_operand.vmem [shape: f32[1,256], index: 11, kind: input, shape index: {}]
  %s12 = inlined_call_operand.vmem [shape: bf16[256,256], index: 12, kind: input, shape index: {}]
  %s13 = inlined_call_operand.vmem [shape: f32[1,256], index: 13, kind: input, shape index: {}]
  %s14 = inlined_call_operand.vmem [shape: f32[1,256], index: 14, kind: input, shape index: {}]
  %s15 = inlined_call_operand.vmem [shape: f32[16,128], index: 15, kind: output, shape index: {0}]
  %s16 = inlined_call_operand.vmem [shape: f32[1,8,128], index: 16, kind: output, shape index: {1}]
  %17 = xla_tuple %s15, %s16
  %s18 = sld [smem:[#allocation0]]
  $region78: #{block_forward.3} parent=0
    _
  %s20 = ssub.s32 1, %s18
  %s21 = scalar_select 0, %s20, %s18
  // Predicated region
  $region2: #{block_forward.3} parent=0 // pred_check
    _
  $region3: #{block_forward.3} parent=0 // pred_check_branch
    %23 = sbr.rel (0) target = $region5
  $region4: #{block_forward.3} parent=0 // pred_region
    _
  $region5: #{block_forward.3} parent=0 // pred_fallthru
    _
  // Predicated region
  $region6: #{block_forward.3} parent=0 // pred_check
    _
  $region7: #{block_forward.3} parent=0 // pred_check_branch
    %25 = sbr.rel (0) target = $region9
  $region8: #{block_forward.3} parent=0 // pred_region
    _
  $region9: #{block_forward.3} parent=0 // pred_fallthru
    _
  // Predicated region
  $region10: #{block_forward.3} parent=0 // pred_check
    _
  $region11: #{block_forward.3} parent=0 // pred_check_branch
    %27 = sbr.rel (0) target = $region13
  $region12: #{block_forward.3} parent=0 // pred_region
    _
  $region13: #{block_forward.3} parent=0 // pred_fallthru
    _
  // Predicated region
  $region14: #{block_forward.3} parent=0 // pred_check
    _
  $region15: #{block_forward.3} parent=0 // pred_check_branch
    %29 = sbr.rel (0) target = $region17
  $region16: #{block_forward.3} parent=0 // pred_region
    _
  $region17: #{block_forward.3} parent=0 // pred_fallthru
    _
  // Predicated region
  $region18: #{block_forward.3} parent=0 // pred_check
    _
  $region19: #{block_forward.3} parent=0 // pred_check_branch
    %31 = sbr.rel (0) target = $region21
  $region20: #{block_forward.3} parent=0 // pred_region
    _
  $region21: #{block_forward.3} parent=0 // pred_fallthru
    _
  // Predicated region
  $region22: #{block_forward.3} parent=0 // pred_check
    _
  $region23: #{block_forward.3} parent=0 // pred_check_branch
    %33 = sbr.rel (0) target = $region25
  $region24: #{block_forward.3} parent=0 // pred_region
    _
  $region25: #{block_forward.3} parent=0 // pred_fallthru
    _
  // Predicated region
  $region26: #{block_forward.3} parent=0 // pred_check
    _
  $region27: #{block_forward.3} parent=0 // pred_check_branch
    %35 = sbr.rel (0) target = $region29
  $region28: #{block_forward.3} parent=0 // pred_region
    _
  $region29: #{block_forward.3} parent=0 // pred_fallthru
    _
  // Predicated region
  $region30: #{block_forward.3} parent=0 // pred_check
    _
  $region31: #{block_forward.3} parent=0 // pred_check_branch
    %37 = sbr.rel (0) target = $region33
  $region32: #{block_forward.3} parent=0 // pred_region
    _
  $region33: #{block_forward.3} parent=0 // pred_fallthru
    _
  // Predicated region
  $region34: #{block_forward.3} parent=0 // pred_check
    _
  $region35: #{block_forward.3} parent=0 // pred_check_branch
    %39 = sbr.rel (0) target = $region37
  $region36: #{block_forward.3} parent=0 // pred_region
    _
  $region37: #{block_forward.3} parent=0 // pred_fallthru
    _
  // Predicated region
  $region38: #{block_forward.3} parent=0 // pred_check
    _
  $region39: #{block_forward.3} parent=0 // pred_check_branch
    %41 = sbr.rel (0) target = $region41
  $region40: #{block_forward.3} parent=0 // pred_region
    _
  $region41: #{block_forward.3} parent=0 // pred_fallthru
    _
  // Predicated region
  $region42: #{block_forward.3} parent=0 // pred_check
    _
  $region43: #{block_forward.3} parent=0 // pred_check_branch
    %43 = sbr.rel (0) target = $region45
  $region44: #{block_forward.3} parent=0 // pred_region
    _
  $region45: #{block_forward.3} parent=0 // pred_fallthru
    _
  // Predicated region
  $region46: #{block_forward.3} parent=0 // pred_check
    _
  $region47: #{block_forward.3} parent=0 // pred_check_branch
    %45 = sbr.rel (0) target = $region49
  $region48: #{block_forward.3} parent=0 // pred_region
    _
  $region49: #{block_forward.3} parent=0 // pred_fallthru
    _
  // Predicated region
  $region50: #{block_forward.3} parent=0 // pred_check
    _
  $region51: #{block_forward.3} parent=0 // pred_check_branch
    %47 = sbr.rel (0) target = $region53
  $region52: #{block_forward.3} parent=0 // pred_region
    _
  $region53: #{block_forward.3} parent=0 // pred_fallthru
    _
  // Predicated region
  $region54: #{block_forward.3} parent=0 // pred_check
    _
  $region55: #{block_forward.3} parent=0 // pred_check_branch
    %49 = sbr.rel (0) target = $region57
  $region56: #{block_forward.3} parent=0 // pred_region
    _
  $region57: #{block_forward.3} parent=0 // pred_fallthru
    _
  // Predicated region
  $region58: #{block_forward.3} parent=0 // pred_check
    _
  $region59: #{block_forward.3} parent=0 // pred_check_branch
    %51 = sbr.rel (0) target = $region61
  $region60: #{block_forward.3} parent=0 // pred_region
    _
  $region61: #{block_forward.3} parent=0 // pred_fallthru
    _
  %v53 = vlaneseq
  %v54 = vshrl.u32 %v53, 7
  %v55 = vadd.s32 %v54, 8
  %vm56 = vcmp.lt.s32.totalorder %v54, 0
  %v57 = vsub.s32 0, %v54
  %v58 = vsel %vm56, %v57, %v54
  %v59 = vshrl.u32 %v58, 3
  %v60 = vand.u32 %v58, 7
  %v61 = vsub.s32 0, %v60
  %v62 = vsel %vm56, %v61, %v60
  %vm63 = vcmp.lt.s32.totalorder %v55, 0
  %v64 = vsub.s32 0, %v55
  %v65 = vsel %vm63, %v64, %v55
  %v66 = vshrl.u32 %v65, 3
  %v67 = vand.u32 %v65, 7
  %v68 = vsub.s32 0, %v67
  %v69 = vsel %vm63, %v68, %v67
  %vm70 = vcmp.ne.s32.totalorder %v62, 0
  %vm71 = vcmp.ne.s32.totalorder %v69, 0
  %vm72 = vcmp.lt.s32.totalorder %v62, 0
  %vm73 = vcmp.lt.s32.totalorder %v69, 0
  %vm74 = vmand %vm72, %vm70
  %vm75 = vmand %vm73, %vm71
  %v76 = vadd.s32 %v62, 8
  %v77 = vadd.s32 %v69, 8
  %v78 = vsel %vm74, %v76, %v62
  %v79 = vsel %vm75, %v77, %v69
  %v80 = vld [vmem:[%s0] sm:$0xff]
  %v81 = vld [vmem:[%s0 + $0x8] sm:$0xff]
  %v82 = vpack.c.bf16 %v81, %v80
  %v83 = vld [vmem:[%s1] sm:$0xff]
  %v84 = vld [vmem:[%s1 + $0x8] sm:$0xff]
  %v85 = vpack.c.bf16 %v84, %v83
  %s86 = scalar_lea.vmem %s3, 2
  %v87 = vld [vmem:[%s86] sm:$0x3]
  %v88 = vld [vmem:[%s3] sm:$0x3]
  %v91 = vunpack.c.l.s4 1966171168
  %v92 = vunpack.c.0.s8 %v91
  %v93 = vlaneseq
  %v94 = vshrl.u32 %v93, 7
  %v95 = vsub.s32 %v92, %v94
  %v96 = vrot.slane %v88, %v95
  %v97 = vcombine.high %v96, %v96
  %v99 = vunpack.c.l.s4 1966171168
  %v100 = vunpack.c.0.s8 %v99
  %v101 = vlaneseq
  %v102 = vshrl.u32 %v101, 7
  %v103 = vsub.s32 %v100, %v102
  %v104 = vrot.slane %v96, %v103
  %v106 = vunpack.c.l.s4 1966171168
  %v107 = vunpack.c.0.s8 %v106
  %v108 = vlaneseq
  %v109 = vshrl.u32 %v108, 7
  %v110 = vsub.s32 %v107, %v109
  %v111 = vrot.slane %v97, %v110
  %vm112 = vcmask 15360
  %v114 = vsel %vm112, %v82, 0
  %vm116 = vcmask 1040384
  %v118 = vsel %vm116, %v104, 0
  %v121 = vsel %vm116, %v111, 0
  %123 = vmatprep.subr.bf16.mxu0 %v121
  %124 = vmatpush1.bf16.msra.mxu0 %v118
  %125 = vmatprep.subr.bf16.mxu0 0
  %126 = vmatpush1.bf16.msra.mxu0 0
  %127 = vmatprep.subr.bf16.mxu0 0
  %128 = vmatpush1.bf16.msra.mxu0 0
  %129 = vmatprep.subr.bf16.mxu0 0
  %130 = vmatpush1.bf16.msra.mxu0 0
  %131 = vmatprep.subr.bf16.mxu0 0
  %132 = vmatpush1.bf16.msra.mxu0 0
  %133 = vmatprep.subr.bf16.mxu0 0
  %134 = vmatpush1.bf16.msra.mxu0 0
  %135 = vmatprep.subr.bf16.mxu0 0
  %136 = vmatpush1.bf16.msra.mxu0 0
  %137 = vmatprep.subr.bf16.mxu0 0
  %138 = vmatpush1.bf16.msra.mxu0 0
  %139 = vmatprep.subr.bf16.mxu0 0
  %140 = vmatpush1.bf16.msra.mxu0 0
  %141 = vmatprep.subr.bf16.mxu0 0
  %142 = vmatpush1.bf16.msra.mxu0 0
  %143 = vmatprep.subr.bf16.mxu0 0
  %144 = vmatpush1.bf16.msra.mxu0 0
  %145 = vmatprep.subr.bf16.mxu0 0
  %146 = vmatpush1.bf16.msra.mxu0 0
  %147 = vmatprep.subr.bf16.mxu0 0
  %148 = vmatpush1.bf16.msra.mxu0 0
  %149 = vmatprep.subr.bf16.mxu0 0
  %150 = vmatpush1.bf16.msra.mxu0 0
  %151 = vmatprep.subr.bf16.mxu0 0
  %152 = vmatpush1.bf16.msra.mxu0 0
  %153 = vmatprep.subr.bf16.mxu0 0
  %154 = vmatpush1.bf16.msra.mxu0 0
  %155 = vmatprep.mubr.bf16.mxu0 0
  %156 = vmatmul.mubr.bf16.gmra.mrb[0].mxu0 %v114
  %v157 = vpop.f32.mrb[0].mxu0
  %v158 = vadd.f32 0.0, %v157
  %v159 = vpop.f32.mrb[0].mxu0
  %v160 = vadd.f32 0.0, %v159
  %v161 = vpop.f32.mrb[0].mxu0
  %v162 = vadd.f32 0.0, %v161
  %v163 = vpop.f32.mrb[0].mxu0
  %v164 = vadd.f32 0.0, %v163
  %165 = vdwg.mxu0
  %v166 = vrot.slane %v158, 7
  %v167 = vrot.slane %v160, 7
  %v168 = vrot.slane %v162, 7
  %v169 = vrot.slane %v164, 7
  %vm170 = vcmp.lt.s32.totalorder %v54, 1
  %v171 = vsel %vm170, %v166, %v168
  %v172 = vsel %vm170, %v167, %v169
  %v173 = vsel %vm170, %v168, %v166
  %v174 = vsel %vm170, %v169, %v167
  %vm175 = vcmp.ge.s32.totalorder %v78, 1
  %vm176 = vcmp.ge.s32.totalorder %v79, 1
  %v177 = vsel %vm175, 1, 0
  %v178 = vsel %vm176, 1, 0
  %vm179 = vcmp.eq.s32.totalorder %v177, 1
  %vm180 = vcmp.eq.s32.totalorder %v178, 1
  %v181 = vsel %vm179, %v173, 0.0
  %v182 = vsel %vm179, %v174, 0.0
  %v183 = vsel %vm180, %v171, 0.0
  %v184 = vsel %vm180, %v172, 0.0
  %v187 = vunpack.c.l.s4 1966171168
  %v188 = vunpack.c.0.s8 %v187
  %v189 = vlaneseq
  %v190 = vshrl.u32 %v189, 7
  %v191 = vsub.s32 %v188, %v190
  %v192 = vrot.slane %v87, %v191
  %v193 = vcombine.high %v192, %v192
  %v195 = vunpack.c.l.s4 1966171168
  %v196 = vunpack.c.0.s8 %v195
  %v197 = vlaneseq
  %v198 = vshrl.u32 %v197, 7
  %v199 = vsub.s32 %v196, %v198
  %v200 = vrot.slane %v192, %v199
  %v202 = vunpack.c.l.s4 1966171168
  %v203 = vunpack.c.0.s8 %v202
  %v204 = vlaneseq
  %v205 = vshrl.u32 %v204, 7
  %v206 = vsub.s32 %v203, %v205
  %v207 = vrot.slane %v193, %v206
  %v209 = vsel %vm116, %v200, 0
  %v212 = vsel %vm116, %v207, 0
  %214 = vmatprep.subr.bf16.mxu0 %v212
  %215 = vmatpush1.bf16.msra.mxu0 %v209
  %216 = vmatprep.subr.bf16.mxu0 0
  %217 = vmatpush1.bf16.msra.mxu0 0
  %218 = vmatprep.subr.bf16.mxu0 0
  %219 = vmatpush1.bf16.msra.mxu0 0
  %220 = vmatprep.subr.bf16.mxu0 0
  %221 = vmatpush1.bf16.msra.mxu0 0
  %222 = vmatprep.subr.bf16.mxu0 0
  %223 = vmatpush1.bf16.msra.mxu0 0
  %224 = vmatprep.subr.bf16.mxu0 0
  %225 = vmatpush1.bf16.msra.mxu0 0
  %226 = vmatprep.subr.bf16.mxu0 0
  %227 = vmatpush1.bf16.msra.mxu0 0
  %228 = vmatprep.subr.bf16.mxu0 0
  %229 = vmatpush1.bf16.msra.mxu0 0
  %230 = vmatprep.subr.bf16.mxu0 0
  %231 = vmatpush1.bf16.msra.mxu0 0
  %232 = vmatprep.subr.bf16.mxu0 0
  %233 = vmatpush1.bf16.msra.mxu0 0
  %234 = vmatprep.subr.bf16.mxu0 0
  %235 = vmatpush1.bf16.msra.mxu0 0
  %236 = vmatprep.subr.bf16.mxu0 0
  %237 = vmatpush1.bf16.msra.mxu0 0
  %238 = vmatprep.subr.bf16.mxu0 0
  %239 = vmatpush1.bf16.msra.mxu0 0
  %240 = vmatprep.subr.bf16.mxu0 0
  %241 = vmatpush1.bf16.msra.mxu0 0
  %242 = vmatprep.subr.bf16.mxu0 0
  %243 = vmatpush1.bf16.msra.mxu0 0
  %244 = vmatprep.subr.bf16.mxu0 0
  %245 = vmatpush1.bf16.msra.mxu0 0
  %246 = vmatprep.mubr.bf16.mxu0 0
  %247 = vmatmul.mubr.bf16.gmra.mrb[0].mxu0 %v114
  %v248 = vpop.f32.mrb[0].mxu0
  %v249 = vadd.f32 %v181, %v248
  %v250 = vpop.f32.mrb[0].mxu0
  %v251 = vadd.f32 %v182, %v250
  %v252 = vpop.f32.mrb[0].mxu0
  %v253 = vadd.f32 %v183, %v252
  %v254 = vpop.f32.mrb[0].mxu0
  %v255 = vadd.f32 %v184, %v254
  %256 = vdwg.mxu0
  %s257 = scalar_lea.vmem %s3, 4
  %v258 = vld [vmem:[%s257] sm:$0x3]
  %v261 = vunpack.c.l.s4 1966171168
  %v262 = vunpack.c.0.s8 %v261
  %v263 = vlaneseq
  %v264 = vshrl.u32 %v263, 7
  %v265 = vsub.s32 %v262, %v264
  %v266 = vrot.slane %v258, %v265
  %v267 = vcombine.high %v266, %v266
  %v269 = vunpack.c.l.s4 1966171168
  %v270 = vunpack.c.0.s8 %v269
  %v271 = vlaneseq
  %v272 = vshrl.u32 %v271, 7
  %v273 = vsub.s32 %v270, %v272
  %v274 = vrot.slane %v266, %v273
  %v276 = vunpack.c.l.s4 1966171168
  %v277 = vunpack.c.0.s8 %v276
  %v278 = vlaneseq
  %v279 = vshrl.u32 %v278, 7
  %v280 = vsub.s32 %v277, %v279
  %v281 = vrot.slane %v267, %v280
  %v283 = vsel %vm116, %v274, 0
  %v286 = vsel %vm116, %v281, 0
  %288 = vmatprep.subr.bf16.mxu0 %v286
  %289 = vmatpush1.bf16.msra.mxu0 %v283
  %290 = vmatprep.subr.bf16.mxu0 0
  %291 = vmatpush1.bf16.msra.mxu0 0
  %292 = vmatprep.subr.bf16.mxu0 0
  %293 = vmatpush1.bf16.msra.mxu0 0
  %294 = vmatprep.subr.bf16.mxu0 0
  %295 = vmatpush1.bf16.msra.mxu0 0
  %296 = vmatprep.subr.bf16.mxu0 0
  %297 = vmatpush1.bf16.msra.mxu0 0
  %298 = vmatprep.subr.bf16.mxu0 0
  %299 = vmatpush1.bf16.msra.mxu0 0
  %300 = vmatprep.subr.bf16.mxu0 0
  %301 = vmatpush1.bf16.msra.mxu0 0
  %302 = vmatprep.subr.bf16.mxu0 0
  %303 = vmatpush1.bf16.msra.mxu0 0
  %304 = vmatprep.subr.bf16.mxu0 0
  %305 = vmatpush1.bf16.msra.mxu0 0
  %306 = vmatprep.subr.bf16.mxu0 0
  %307 = vmatpush1.bf16.msra.mxu0 0
  %308 = vmatprep.subr.bf16.mxu0 0
  %309 = vmatpush1.bf16.msra.mxu0 0
  %310 = vmatprep.subr.bf16.mxu0 0
  %311 = vmatpush1.bf16.msra.mxu0 0
  %312 = vmatprep.subr.bf16.mxu0 0
  %313 = vmatpush1.bf16.msra.mxu0 0
  %314 = vmatprep.subr.bf16.mxu0 0
  %315 = vmatpush1.bf16.msra.mxu0 0
  %316 = vmatprep.subr.bf16.mxu0 0
  %317 = vmatpush1.bf16.msra.mxu0 0
  %318 = vmatprep.subr.bf16.mxu0 0
  %319 = vmatpush1.bf16.msra.mxu0 0
  %320 = vmatprep.mubr.bf16.mxu0 0
  %321 = vmatmul.mubr.bf16.gmra.mrb[0].mxu0 %v114
  %v322 = vpop.f32.mrb[0].mxu0
  %v323 = vadd.f32 0.0, %v322
  %v324 = vpop.f32.mrb[0].mxu0
  %v325 = vadd.f32 0.0, %v324
  %v326 = vpop.f32.mrb[0].mxu0
  %v327 = vadd.f32 0.0, %v326
  %v328 = vpop.f32.mrb[0].mxu0
  %v329 = vadd.f32 0.0, %v328
  %330 = vdwg.mxu0
  %v331 = vrot.slane %v323, 1
  %v332 = vrot.slane %v325, 1
  %v333 = vrot.slane %v327, 1
  %v334 = vrot.slane %v329, 1
  %vm335 = vcmp.lt.s32.totalorder %v54, 7
  %v336 = vsel %vm335, %v331, %v333
  %v337 = vsel %vm335, %v332, %v334
  %v338 = vsel %vm335, %v333, %v331
  %v339 = vsel %vm335, %v334, %v332
  %vm340 = vcmp.lt.s32.totalorder %v78, 7
  %vm341 = vcmp.lt.s32.totalorder %v79, 7
  %v342 = vsel %vm340, 1, 0
  %v343 = vsel %vm341, 1, 0
  %vm344 = vcmp.eq.s32.totalorder %v342, 1
  %vm345 = vcmp.eq.s32.totalorder %v343, 1
  %v346 = vsel %vm344, %v336, 0.0
  %v347 = vsel %vm344, %v337, 0.0
  %v348 = vsel %vm345, %v338, 0.0
  %v349 = vsel %vm345, %v339, 0.0
  %v350 = vadd.f32 %v249, %v346
  %v351 = vadd.f32 %v251, %v347
  %v352 = vadd.f32 %v253, %v348
  %v353 = vadd.f32 %v255, %v349
  %v354 = vld [vmem:[%s4] sm:$0x3]
  %v356 = vlaneseq
  %v357 = vshrl.u32 %v356, 7
  %v358 = vsub.s32 0, %v357
  %v359 = vrot.slane %v354, %v358
  %v360 = vlaneseq
  %v361 = vshrl.u32 %v360, 7
  %v362 = vsub.s32 1, %v361
  %v363 = vrot.slane %v354, %v362
  %v366 = vadd.f32 %v350, %v359
  %v367 = vadd.f32 %v351, %v363
  %v368 = vadd.f32 %v352, %v359
  %v369 = vadd.f32 %v353, %v363
  %v370 = vmax.f32 %v366, 0.0
  %v371 = vmax.f32 %v367, 0.0
  %v372 = vmax.f32 %v368, 0.0
  %v373 = vmax.f32 %v369, 0.0
  %v374 = vpack.c.bf16 %v372, %v370
  %v375 = vpack.c.bf16 %v373, %v371
  %s376 = scalar_lea.vmem %s5, 512
  %v377 = vld [vmem:[%s376] sm:$0xff]
  %v378 = vld [vmem:[%s376 + $0x8] sm:$0xff]
  %v379 = vld [vmem:[%s376 + $0x10] sm:$0xff]
  %v380 = vld [vmem:[%s376 + $0x18] sm:$0xff]
  %v381 = vld [vmem:[%s376 + $0x20] sm:$0xff]
  %v382 = vld [vmem:[%s376 + $0x28] sm:$0xff]
  %v383 = vld [vmem:[%s376 + $0x30] sm:$0xff]
  %v384 = vld [vmem:[%s376 + $0x38] sm:$0xff]
  %v385 = vld [vmem:[%s376 + $0x40] sm:$0xff]
  %v386 = vld [vmem:[%s376 + $0x48] sm:$0xff]
  %v387 = vld [vmem:[%s376 + $0x50] sm:$0xff]
  %v388 = vld [vmem:[%s376 + $0x58] sm:$0xff]
  %v389 = vld [vmem:[%s376 + $0x60] sm:$0xff]
  %v390 = vld [vmem:[%s376 + $0x68] sm:$0xff]
  %v391 = vld [vmem:[%s376 + $0x70] sm:$0xff]
  %v392 = vld [vmem:[%s376 + $0x78] sm:$0xff]
  %v393 = vld [vmem:[%s376 + $0x80] sm:$0xff]
  %v394 = vld [vmem:[%s376 + $0x88] sm:$0xff]
  %v395 = vld [vmem:[%s376 + $0x90] sm:$0xff]
  %v396 = vld [vmem:[%s376 + $0x98] sm:$0xff]
  %v397 = vld [vmem:[%s376 + $0xa0] sm:$0xff]
  %v398 = vld [vmem:[%s376 + $0xa8] sm:$0xff]
  %v399 = vld [vmem:[%s376 + $0xb0] sm:$0xff]
  %v400 = vld [vmem:[%s376 + $0xb8] sm:$0xff]
  %v401 = vld [vmem:[%s376 + $0xc0] sm:$0xff]
  %v402 = vld [vmem:[%s376 + $0xc8] sm:$0xff]
  %v403 = vld [vmem:[%s376 + $0xd0] sm:$0xff]
  %v404 = vld [vmem:[%s376 + $0xd8] sm:$0xff]
  %v405 = vld [vmem:[%s376 + $0xe0] sm:$0xff]
  %v406 = vld [vmem:[%s376 + $0xe8] sm:$0xff]
  %v407 = vld [vmem:[%s376 + $0xf0] sm:$0xff]
  %v408 = vld [vmem:[%s376 + $0xf8] sm:$0xff]
  %v409 = vld [vmem:[%s376 + $0x100] sm:$0xff]
  %v410 = vld [vmem:[%s376 + $0x108] sm:$0xff]
  %v411 = vld [vmem:[%s376 + $0x110] sm:$0xff]
  %v412 = vld [vmem:[%s376 + $0x118] sm:$0xff]
  %v413 = vld [vmem:[%s376 + $0x120] sm:$0xff]
  %v414 = vld [vmem:[%s376 + $0x128] sm:$0xff]
  %v415 = vld [vmem:[%s376 + $0x130] sm:$0xff]
  %v416 = vld [vmem:[%s376 + $0x138] sm:$0xff]
  %v417 = vld [vmem:[%s376 + $0x140] sm:$0xff]
  %v418 = vld [vmem:[%s376 + $0x148] sm:$0xff]
  %v419 = vld [vmem:[%s376 + $0x150] sm:$0xff]
  %v420 = vld [vmem:[%s376 + $0x158] sm:$0xff]
  %v421 = vld [vmem:[%s376 + $0x160] sm:$0xff]
  %v422 = vld [vmem:[%s376 + $0x168] sm:$0xff]
  %v423 = vld [vmem:[%s376 + $0x170] sm:$0xff]
  %v424 = vld [vmem:[%s376 + $0x178] sm:$0xff]
  %v425 = vld [vmem:[%s376 + $0x180] sm:$0xff]
  %v426 = vld [vmem:[%s376 + $0x188] sm:$0xff]
  %v427 = vld [vmem:[%s376 + $0x190] sm:$0xff]
  %v428 = vld [vmem:[%s376 + $0x198] sm:$0xff]
  %v429 = vld [vmem:[%s376 + $0x1a0] sm:$0xff]
  %v430 = vld [vmem:[%s376 + $0x1a8] sm:$0xff]
  %v431 = vld [vmem:[%s376 + $0x1b0] sm:$0xff]
  %v432 = vld [vmem:[%s376 + $0x1b8] sm:$0xff]
  %v433 = vld [vmem:[%s376 + $0x1c0] sm:$0xff]
  %v434 = vld [vmem:[%s376 + $0x1c8] sm:$0xff]
  %v435 = vld [vmem:[%s376 + $0x1d0] sm:$0xff]
  %v436 = vld [vmem:[%s376 + $0x1d8] sm:$0xff]
  %v437 = vld [vmem:[%s376 + $0x1e0] sm:$0xff]
  %v438 = vld [vmem:[%s376 + $0x1e8] sm:$0xff]
  %v439 = vld [vmem:[%s376 + $0x1f0] sm:$0xff]
  %v440 = vld [vmem:[%s376 + $0x1f8] sm:$0xff]
  %v441 = vld [vmem:[%s5] sm:$0xff]
  %v442 = vld [vmem:[%s5 + $0x8] sm:$0xff]
  %v443 = vld [vmem:[%s5 + $0x10] sm:$0xff]
  %v444 = vld [vmem:[%s5 + $0x18] sm:$0xff]
  %v445 = vld [vmem:[%s5 + $0x20] sm:$0xff]
  %v446 = vld [vmem:[%s5 + $0x28] sm:$0xff]
  %v447 = vld [vmem:[%s5 + $0x30] sm:$0xff]
  %v448 = vld [vmem:[%s5 + $0x38] sm:$0xff]
  %v449 = vld [vmem:[%s5 + $0x40] sm:$0xff]
  %v450 = vld [vmem:[%s5 + $0x48] sm:$0xff]
  %v451 = vld [vmem:[%s5 + $0x50] sm:$0xff]
  %v452 = vld [vmem:[%s5 + $0x58] sm:$0xff]
  %v453 = vld [vmem:[%s5 + $0x60] sm:$0xff]
  %v454 = vld [vmem:[%s5 + $0x68] sm:$0xff]
  %v455 = vld [vmem:[%s5 + $0x70] sm:$0xff]
  %v456 = vld [vmem:[%s5 + $0x78] sm:$0xff]
  %v457 = vld [vmem:[%s5 + $0x80] sm:$0xff]
  %v458 = vld [vmem:[%s5 + $0x88] sm:$0xff]
  %v459 = vld [vmem:[%s5 + $0x90] sm:$0xff]
  %v460 = vld [vmem:[%s5 + $0x98] sm:$0xff]
  %v461 = vld [vmem:[%s5 + $0xa0] sm:$0xff]
  %v462 = vld [vmem:[%s5 + $0xa8] sm:$0xff]
  %v463 = vld [vmem:[%s5 + $0xb0] sm:$0xff]
  %v464 = vld [vmem:[%s5 + $0xb8] sm:$0xff]
  %v465 = vld [vmem:[%s5 + $0xc0] sm:$0xff]
  %v466 = vld [vmem:[%s5 + $0xc8] sm:$0xff]
  %v467 = vld [vmem:[%s5 + $0xd0] sm:$0xff]
  %v468 = vld [vmem:[%s5 + $0xd8] sm:$0xff]
  %v469 = vld [vmem:[%s5 + $0xe0] sm:$0xff]
  %v470 = vld [vmem:[%s5 + $0xe8] sm:$0xff]
  %v471 = vld [vmem:[%s5 + $0xf0] sm:$0xff]
  %v472 = vld [vmem:[%s5 + $0xf8] sm:$0xff]
  %v473 = vld [vmem:[%s5 + $0x100] sm:$0xff]
  %v474 = vld [vmem:[%s5 + $0x108] sm:$0xff]
  %v475 = vld [vmem:[%s5 + $0x110] sm:$0xff]
  %v476 = vld [vmem:[%s5 + $0x118] sm:$0xff]
  %v477 = vld [vmem:[%s5 + $0x120] sm:$0xff]
  %v478 = vld [vmem:[%s5 + $0x128] sm:$0xff]
  %v479 = vld [vmem:[%s5 + $0x130] sm:$0xff]
  %v480 = vld [vmem:[%s5 + $0x138] sm:$0xff]
  %v481 = vld [vmem:[%s5 + $0x140] sm:$0xff]
  %v482 = vld [vmem:[%s5 + $0x148] sm:$0xff]
  %v483 = vld [vmem:[%s5 + $0x150] sm:$0xff]
  %v484 = vld [vmem:[%s5 + $0x158] sm:$0xff]
  %v485 = vld [vmem:[%s5 + $0x160] sm:$0xff]
  %v486 = vld [vmem:[%s5 + $0x168] sm:$0xff]
  %v487 = vld [vmem:[%s5 + $0x170] sm:$0xff]
  %v488 = vld [vmem:[%s5 + $0x178] sm:$0xff]
  %v489 = vld [vmem:[%s5 + $0x180] sm:$0xff]
  %v490 = vld [vmem:[%s5 + $0x188] sm:$0xff]
  %v491 = vld [vmem:[%s5 + $0x190] sm:$0xff]
  %v492 = vld [vmem:[%s5 + $0x198] sm:$0xff]
  %v493 = vld [vmem:[%s5 + $0x1a0] sm:$0xff]
  %v494 = vld [vmem:[%s5 + $0x1a8] sm:$0xff]
  %v495 = vld [vmem:[%s5 + $0x1b0] sm:$0xff]
  %v496 = vld [vmem:[%s5 + $0x1b8] sm:$0xff]
  %v497 = vld [vmem:[%s5 + $0x1c0] sm:$0xff]
  %v498 = vld [vmem:[%s5 + $0x1c8] sm:$0xff]
  %v499 = vld [vmem:[%s5 + $0x1d0] sm:$0xff]
  %v500 = vld [vmem:[%s5 + $0x1d8] sm:$0xff]
  %v501 = vld [vmem:[%s5 + $0x1e0] sm:$0xff]
  %v502 = vld [vmem:[%s5 + $0x1e8] sm:$0xff]
  %v503 = vld [vmem:[%s5 + $0x1f0] sm:$0xff]
  %v504 = vld [vmem:[%s5 + $0x1f8] sm:$0xff]
  %v569 = vunpack.c.l.b16 %v441
  %v570 = vunpack.c.h.b16 %v441
  %v571 = vunpack.c.l.b16 %v442
  %v572 = vunpack.c.h.b16 %v442
  %v573 = vunpack.c.l.b16 %v443
  %v574 = vunpack.c.h.b16 %v443
  %v575 = vunpack.c.l.b16 %v444
  %v576 = vunpack.c.h.b16 %v444
  %v577 = vunpack.c.l.b16 %v445
  %v578 = vunpack.c.h.b16 %v445
  %v579 = vunpack.c.l.b16 %v446
  %v580 = vunpack.c.h.b16 %v446
  %v581 = vunpack.c.l.b16 %v447
  %v582 = vunpack.c.h.b16 %v447
  %v583 = vunpack.c.l.b16 %v448
  %v584 = vunpack.c.h.b16 %v448
  %v585 = vunpack.c.l.b16 %v449
  %v586 = vunpack.c.h.b16 %v449
  %v587 = vunpack.c.l.b16 %v450
  %v588 = vunpack.c.h.b16 %v450
  %v589 = vunpack.c.l.b16 %v451
  %v590 = vunpack.c.h.b16 %v451
  %v591 = vunpack.c.l.b16 %v452
  %v592 = vunpack.c.h.b16 %v452
  %v593 = vunpack.c.l.b16 %v453
  %v594 = vunpack.c.h.b16 %v453
  %v595 = vunpack.c.l.b16 %v454
  %v596 = vunpack.c.h.b16 %v454
  %v597 = vunpack.c.l.b16 %v455
  %v598 = vunpack.c.h.b16 %v455
  %v599 = vunpack.c.l.b16 %v456
  %v600 = vunpack.c.h.b16 %v456
  %v601 = vunpack.c.l.b16 %v457
  %v602 = vunpack.c.h.b16 %v457
  %v603 = vunpack.c.l.b16 %v458
  %v604 = vunpack.c.h.b16 %v458
  %v605 = vunpack.c.l.b16 %v459
  %v606 = vunpack.c.h.b16 %v459
  %v607 = vunpack.c.l.b16 %v460
  %v608 = vunpack.c.h.b16 %v460
  %v609 = vunpack.c.l.b16 %v461
  %v610 = vunpack.c.h.b16 %v461
  %v611 = vunpack.c.l.b16 %v462
  %v612 = vunpack.c.h.b16 %v462
  %v613 = vunpack.c.l.b16 %v463
  %v614 = vunpack.c.h.b16 %v463
  %v615 = vunpack.c.l.b16 %v464
  %v616 = vunpack.c.h.b16 %v464
  %v617 = vunpack.c.l.b16 %v465
  %v618 = vunpack.c.h.b16 %v465
  %v619 = vunpack.c.l.b16 %v466
  %v620 = vunpack.c.h.b16 %v466
  %v621 = vunpack.c.l.b16 %v467
  %v622 = vunpack.c.h.b16 %v467
  %v623 = vunpack.c.l.b16 %v468
  %v624 = vunpack.c.h.b16 %v468
  %v625 = vunpack.c.l.b16 %v469
  %v626 = vunpack.c.h.b16 %v469
  %v627 = vunpack.c.l.b16 %v470
  %v628 = vunpack.c.h.b16 %v470
  %v629 = vunpack.c.l.b16 %v471
  %v630 = vunpack.c.h.b16 %v471
  %v631 = vunpack.c.l.b16 %v472
  %v632 = vunpack.c.h.b16 %v472
  %v633 = vunpack.c.l.b16 %v473
  %v634 = vunpack.c.h.b16 %v473
  %v635 = vunpack.c.l.b16 %v474
  %v636 = vunpack.c.h.b16 %v474
  %v637 = vunpack.c.l.b16 %v475
  %v638 = vunpack.c.h.b16 %v475
  %v639 = vunpack.c.l.b16 %v476
  %v640 = vunpack.c.h.b16 %v476
  %v641 = vunpack.c.l.b16 %v477
  %v642 = vunpack.c.h.b16 %v477
  %v643 = vunpack.c.l.b16 %v478
  %v644 = vunpack.c.h.b16 %v478
  %v645 = vunpack.c.l.b16 %v479
  %v646 = vunpack.c.h.b16 %v479
  %v647 = vunpack.c.l.b16 %v480
  %v648 = vunpack.c.h.b16 %v480
  %v649 = vunpack.c.l.b16 %v481
  %v650 = vunpack.c.h.b16 %v481
  %v651 = vunpack.c.l.b16 %v482
  %v652 = vunpack.c.h.b16 %v482
  %v653 = vunpack.c.l.b16 %v483
  %v654 = vunpack.c.h.b16 %v483
  %v655 = vunpack.c.l.b16 %v484
  %v656 = vunpack.c.h.b16 %v484
  %v657 = vunpack.c.l.b16 %v485
  %v658 = vunpack.c.h.b16 %v485
  %v659 = vunpack.c.l.b16 %v486
  %v660 = vunpack.c.h.b16 %v486
  %v661 = vunpack.c.l.b16 %v487
  %v662 = vunpack.c.h.b16 %v487
  %v663 = vunpack.c.l.b16 %v488
  %v664 = vunpack.c.h.b16 %v488
  %v665 = vunpack.c.l.b16 %v489
  %v666 = vunpack.c.h.b16 %v489
  %v667 = vunpack.c.l.b16 %v490
  %v668 = vunpack.c.h.b16 %v490
  %v669 = vunpack.c.l.b16 %v491
  %v670 = vunpack.c.h.b16 %v491
  %v671 = vunpack.c.l.b16 %v492
  %v672 = vunpack.c.h.b16 %v492
  %v673 = vunpack.c.l.b16 %v493
  %v674 = vunpack.c.h.b16 %v493
  %v675 = vunpack.c.l.b16 %v494
  %v676 = vunpack.c.h.b16 %v494
  %v677 = vunpack.c.l.b16 %v495
  %v678 = vunpack.c.h.b16 %v495
  %v679 = vunpack.c.l.b16 %v496
  %v680 = vunpack.c.h.b16 %v496
  %v681 = vunpack.c.l.b16 %v497
  %v682 = vunpack.c.h.b16 %v497
  %v683 = vunpack.c.l.b16 %v498
  %v684 = vunpack.c.h.b16 %v498
  %v685 = vunpack.c.l.b16 %v499
  %v686 = vunpack.c.h.b16 %v499
  %v687 = vunpack.c.l.b16 %v500
  %v688 = vunpack.c.h.b16 %v500
  %v689 = vunpack.c.l.b16 %v501
  %v690 = vunpack.c.h.b16 %v501
  %v691 = vunpack.c.l.b16 %v502
  %v692 = vunpack.c.h.b16 %v502
  %v693 = vunpack.c.l.b16 %v503
  %v694 = vunpack.c.h.b16 %v503
  %v695 = vunpack.c.l.b16 %v504
  %v696 = vunpack.c.h.b16 %v504
  %v697 = vpack.c.b16 %v573, %v569
  %v698 = vpack.c.b16 %v574, %v570
  %v699 = vpack.c.b16 %v575, %v571
  %v700 = vpack.c.b16 %v576, %v572
  %v701 = vpack.c.b16 %v581, %v577
  %v702 = vpack.c.b16 %v582, %v578
  %v703 = vpack.c.b16 %v583, %v579
  %v704 = vpack.c.b16 %v584, %v580
  %v705 = vpack.c.b16 %v589, %v585
  %v706 = vpack.c.b16 %v590, %v586
  %v707 = vpack.c.b16 %v591, %v587
  %v708 = vpack.c.b16 %v592, %v588
  %v709 = vpack.c.b16 %v597, %v593
  %v710 = vpack.c.b16 %v598, %v594
  %v711 = vpack.c.b16 %v599, %v595
  %v712 = vpack.c.b16 %v600, %v596
  %v713 = vpack.c.b16 %v605, %v601
  %v714 = vpack.c.b16 %v606, %v602
  %v715 = vpack.c.b16 %v607, %v603
  %v716 = vpack.c.b16 %v608, %v604
  %v717 = vpack.c.b16 %v613, %v609
  %v718 = vpack.c.b16 %v614, %v610
  %v719 = vpack.c.b16 %v615, %v611
  %v720 = vpack.c.b16 %v616, %v612
  %v721 = vpack.c.b16 %v621, %v617
  %v722 = vpack.c.b16 %v622, %v618
  %v723 = vpack.c.b16 %v623, %v619
  %v724 = vpack.c.b16 %v624, %v620
  %v725 = vpack.c.b16 %v629, %v625
  %v726 = vpack.c.b16 %v630, %v626
  %v727 = vpack.c.b16 %v631, %v627
  %v728 = vpack.c.b16 %v632, %v628
  %v729 = vpack.c.b16 %v637, %v633
  %v730 = vpack.c.b16 %v638, %v634
  %v731 = vpack.c.b16 %v639, %v635
  %v732 = vpack.c.b16 %v640, %v636
  %v733 = vpack.c.b16 %v645, %v641
  %v734 = vpack.c.b16 %v646, %v642
  %v735 = vpack.c.b16 %v647, %v643
  %v736 = vpack.c.b16 %v648, %v644
  %v737 = vpack.c.b16 %v653, %v649
  %v738 = vpack.c.b16 %v654, %v650
  %v739 = vpack.c.b16 %v655, %v651
  %v740 = vpack.c.b16 %v656, %v652
  %v741 = vpack.c.b16 %v661, %v657
  %v742 = vpack.c.b16 %v662, %v658
  %v743 = vpack.c.b16 %v663, %v659
  %v744 = vpack.c.b16 %v664, %v660
  %v745 = vpack.c.b16 %v669, %v665
  %v746 = vpack.c.b16 %v670, %v666
  %v747 = vpack.c.b16 %v671, %v667
  %v748 = vpack.c.b16 %v672, %v668
  %v749 = vpack.c.b16 %v677, %v673
  %v750 = vpack.c.b16 %v678, %v674
  %v751 = vpack.c.b16 %v679, %v675
  %v752 = vpack.c.b16 %v680, %v676
  %v753 = vpack.c.b16 %v685, %v681
  %v754 = vpack.c.b16 %v686, %v682
  %v755 = vpack.c.b16 %v687, %v683
  %v756 = vpack.c.b16 %v688, %v684
  %v757 = vpack.c.b16 %v693, %v689
  %v758 = vpack.c.b16 %v694, %v690
  %v759 = vpack.c.b16 %v695, %v691
  %v760 = vpack.c.b16 %v696, %v692
  %825 = vmatprep.subr.bf16.mxu0 %v698
  %826 = vmatpush1.bf16.msra.mxu0 %v697
  %827 = vmatprep.subr.bf16.mxu0 %v702
  %828 = vmatpush1.bf16.msra.mxu0 %v701
  %829 = vmatprep.subr.bf16.mxu0 %v706
  %830 = vmatpush1.bf16.msra.mxu0 %v705
  %831 = vmatprep.subr.bf16.mxu0 %v710
  %832 = vmatpush1.bf16.msra.mxu0 %v709
  %833 = vmatprep.subr.bf16.mxu0 %v714
  %834 = vmatpush1.bf16.msra.mxu0 %v713
  %835 = vmatprep.subr.bf16.mxu0 %v718
  %836 = vmatpush1.bf16.msra.mxu0 %v717
  %837 = vmatprep.subr.bf16.mxu0 %v722
  %838 = vmatpush1.bf16.msra.mxu0 %v721
  %839 = vmatprep.subr.bf16.mxu0 %v726
  %840 = vmatpush1.bf16.msra.mxu0 %v725
  %841 = vmatprep.subr.bf16.mxu0 %v730
  %842 = vmatpush1.bf16.msra.mxu0 %v729
  %843 = vmatprep.subr.bf16.mxu0 %v734
  %844 = vmatpush1.bf16.msra.mxu0 %v733
  %845 = vmatprep.subr.bf16.mxu0 %v738
  %846 = vmatpush1.bf16.msra.mxu0 %v737
  %847 = vmatprep.subr.bf16.mxu0 %v742
  %848 = vmatpush1.bf16.msra.mxu0 %v741
  %849 = vmatprep.subr.bf16.mxu0 %v746
  %850 = vmatpush1.bf16.msra.mxu0 %v745
  %851 = vmatprep.subr.bf16.mxu0 %v750
  %852 = vmatpush1.bf16.msra.mxu0 %v749
  %853 = vmatprep.subr.bf16.mxu0 %v754
  %854 = vmatpush1.bf16.msra.mxu0 %v753
  %855 = vmatprep.subr.bf16.mxu0 %v758
  %856 = vmatpush1.bf16.msra.mxu0 %v757
  %857 = vmatprep.mubr.bf16.mxu0 %v375
  %858 = vmatmul.mubr.bf16.gmra.mrb[0].mxu0 %v374
  %v859 = vpop.f32.mrb[0].mxu0
  %v860 = vadd.f32 0.0, %v859
  %v861 = vpop.f32.mrb[0].mxu0
  %v862 = vadd.f32 0.0, %v861
  %v863 = vpop.f32.mrb[0].mxu0
  %v864 = vadd.f32 0.0, %v863
  %v865 = vpop.f32.mrb[0].mxu0
  %v866 = vadd.f32 0.0, %v865
  %867 = vdwg.mxu0
  %868 = vmatprep.subr.bf16.mxu0 %v700
  %869 = vmatpush1.bf16.msra.mxu0 %v699
  %870 = vmatprep.subr.bf16.mxu0 %v704
  %871 = vmatpush1.bf16.msra.mxu0 %v703
  %872 = vmatprep.subr.bf16.mxu0 %v708
  %873 = vmatpush1.bf16.msra.mxu0 %v707
  %874 = vmatprep.subr.bf16.mxu0 %v712
  %875 = vmatpush1.bf16.msra.mxu0 %v711
  %876 = vmatprep.subr.bf16.mxu0 %v716
  %877 = vmatpush1.bf16.msra.mxu0 %v715
  %878 = vmatprep.subr.bf16.mxu0 %v720
  %879 = vmatpush1.bf16.msra.mxu0 %v719
  %880 = vmatprep.subr.bf16.mxu0 %v724
  %881 = vmatpush1.bf16.msra.mxu0 %v723
  %882 = vmatprep.subr.bf16.mxu0 %v728
  %883 = vmatpush1.bf16.msra.mxu0 %v727
  %884 = vmatprep.subr.bf16.mxu0 %v732
  %885 = vmatpush1.bf16.msra.mxu0 %v731
  %886 = vmatprep.subr.bf16.mxu0 %v736
  %887 = vmatpush1.bf16.msra.mxu0 %v735
  %888 = vmatprep.subr.bf16.mxu0 %v740
  %889 = vmatpush1.bf16.msra.mxu0 %v739
  %890 = vmatprep.subr.bf16.mxu0 %v744
  %891 = vmatpush1.bf16.msra.mxu0 %v743
  %892 = vmatprep.subr.bf16.mxu0 %v748
  %893 = vmatpush1.bf16.msra.mxu0 %v747
  %894 = vmatprep.subr.bf16.mxu0 %v752
  %895 = vmatpush1.bf16.msra.mxu0 %v751
  %896 = vmatprep.subr.bf16.mxu0 %v756
  %897 = vmatpush1.bf16.msra.mxu0 %v755
  %898 = vmatprep.subr.bf16.mxu0 %v760
  %899 = vmatpush1.bf16.msra.mxu0 %v759
  %900 = vmatprep.mubr.bf16.mxu0 %v375
  %901 = vmatmul.mubr.bf16.gmra.mrb[0].mxu0 %v374
  %v902 = vpop.f32.mrb[0].mxu0
  %v903 = vadd.f32 0.0, %v902
  %v904 = vpop.f32.mrb[0].mxu0
  %v905 = vadd.f32 0.0, %v904
  %v906 = vpop.f32.mrb[0].mxu0
  %v907 = vadd.f32 0.0, %v906
  %v908 = vpop.f32.mrb[0].mxu0
  %v909 = vadd.f32 0.0, %v908
  %910 = vdwg.mxu0
  %v911 = vrot.slane %v860, 7
  %v912 = vrot.slane %v862, 7
  %v913 = vrot.slane %v903, 7
  %v914 = vrot.slane %v905, 7
  %v915 = vrot.slane %v864, 7
  %v916 = vrot.slane %v866, 7
  %v917 = vrot.slane %v907, 7
  %v918 = vrot.slane %v909, 7
  %v919 = vsel %vm170, %v911, %v915
  %v920 = vsel %vm170, %v912, %v916
  %v921 = vsel %vm170, %v913, %v917
  %v922 = vsel %vm170, %v914, %v918
  %v923 = vsel %vm170, %v915, %v911
  %v924 = vsel %vm170, %v916, %v912
  %v925 = vsel %vm170, %v917, %v913
  %v926 = vsel %vm170, %v918, %v914
  %v927 = vsel %vm179, %v923, 0.0
  %v928 = vsel %vm179, %v924, 0.0
  %v929 = vsel %vm179, %v925, 0.0
  %v930 = vsel %vm179, %v926, 0.0
  %v931 = vsel %vm180, %v919, 0.0
  %v932 = vsel %vm180, %v920, 0.0
  %v933 = vsel %vm180, %v921, 0.0
  %v934 = vsel %vm180, %v922, 0.0
  %v999 = vunpack.c.l.b16 %v377
  %v1000 = vunpack.c.h.b16 %v377
  %v1001 = vunpack.c.l.b16 %v378
  %v1002 = vunpack.c.h.b16 %v378
  %v1003 = vunpack.c.l.b16 %v379
  %v1004 = vunpack.c.h.b16 %v379
  %v1005 = vunpack.c.l.b16 %v380
  %v1006 = vunpack.c.h.b16 %v380
  %v1007 = vunpack.c.l.b16 %v381
  %v1008 = vunpack.c.h.b16 %v381
  %v1009 = vunpack.c.l.b16 %v382
  %v1010 = vunpack.c.h.b16 %v382
  %v1011 = vunpack.c.l.b16 %v383
  %v1012 = vunpack.c.h.b16 %v383
  %v1013 = vunpack.c.l.b16 %v384
  %v1014 = vunpack.c.h.b16 %v384
  %v1015 = vunpack.c.l.b16 %v385
  %v1016 = vunpack.c.h.b16 %v385
  %v1017 = vunpack.c.l.b16 %v386
  %v1018 = vunpack.c.h.b16 %v386
  %v1019 = vunpack.c.l.b16 %v387
  %v1020 = vunpack.c.h.b16 %v387
  %v1021 = vunpack.c.l.b16 %v388
  %v1022 = vunpack.c.h.b16 %v388
  %v1023 = vunpack.c.l.b16 %v389
  %v1024 = vunpack.c.h.b16 %v389
  %v1025 = vunpack.c.l.b16 %v390
  %v1026 = vunpack.c.h.b16 %v390
  %v1027 = vunpack.c.l.b16 %v391
  %v1028 = vunpack.c.h.b16 %v391
  %v1029 = vunpack.c.l.b16 %v392
  %v1030 = vunpack.c.h.b16 %v392
  %v1031 = vunpack.c.l.b16 %v393
  %v1032 = vunpack.c.h.b16 %v393
  %v1033 = vunpack.c.l.b16 %v394
  %v1034 = vunpack.c.h.b16 %v394
  %v1035 = vunpack.c.l.b16 %v395
  %v1036 = vunpack.c.h.b16 %v395
  %v1037 = vunpack.c.l.b16 %v396
  %v1038 = vunpack.c.h.b16 %v396
  %v1039 = vunpack.c.l.b16 %v397
  %v1040 = vunpack.c.h.b16 %v397
  %v1041 = vunpack.c.l.b16 %v398
  %v1042 = vunpack.c.h.b16 %v398
  %v1043 = vunpack.c.l.b16 %v399
  %v1044 = vunpack.c.h.b16 %v399
  %v1045 = vunpack.c.l.b16 %v400
  %v1046 = vunpack.c.h.b16 %v400
  %v1047 = vunpack.c.l.b16 %v401
  %v1048 = vunpack.c.h.b16 %v401
  %v1049 = vunpack.c.l.b16 %v402
  %v1050 = vunpack.c.h.b16 %v402
  %v1051 = vunpack.c.l.b16 %v403
  %v1052 = vunpack.c.h.b16 %v403
  %v1053 = vunpack.c.l.b16 %v404
  %v1054 = vunpack.c.h.b16 %v404
  %v1055 = vunpack.c.l.b16 %v405
  %v1056 = vunpack.c.h.b16 %v405
  %v1057 = vunpack.c.l.b16 %v406
  %v1058 = vunpack.c.h.b16 %v406
  %v1059 = vunpack.c.l.b16 %v407
  %v1060 = vunpack.c.h.b16 %v407
  %v1061 = vunpack.c.l.b16 %v408
  %v1062 = vunpack.c.h.b16 %v408
  %v1063 = vunpack.c.l.b16 %v409
  %v1064 = vunpack.c.h.b16 %v409
  %v1065 = vunpack.c.l.b16 %v410
  %v1066 = vunpack.c.h.b16 %v410
  %v1067 = vunpack.c.l.b16 %v411
  %v1068 = vunpack.c.h.b16 %v411
  %v1069 = vunpack.c.l.b16 %v412
  %v1070 = vunpack.c.h.b16 %v412
  %v1071 = vunpack.c.l.b16 %v413
  %v1072 = vunpack.c.h.b16 %v413
  %v1073 = vunpack.c.l.b16 %v414
  %v1074 = vunpack.c.h.b16 %v414
  %v1075 = vunpack.c.l.b16 %v415
  %v1076 = vunpack.c.h.b16 %v415
  %v1077 = vunpack.c.l.b16 %v416
  %v1078 = vunpack.c.h.b16 %v416
  %v1079 = vunpack.c.l.b16 %v417
  %v1080 = vunpack.c.h.b16 %v417
  %v1081 = vunpack.c.l.b16 %v418
  %v1082 = vunpack.c.h.b16 %v418
  %v1083 = vunpack.c.l.b16 %v419
  %v1084 = vunpack.c.h.b16 %v419
  %v1085 = vunpack.c.l.b16 %v420
  %v1086 = vunpack.c.h.b16 %v420
  %v1087 = vunpack.c.l.b16 %v421
  %v1088 = vunpack.c.h.b16 %v421
  %v1089 = vunpack.c.l.b16 %v422
  %v1090 = vunpack.c.h.b16 %v422
  %v1091 = vunpack.c.l.b16 %v423
  %v1092 = vunpack.c.h.b16 %v423
  %v1093 = vunpack.c.l.b16 %v424
  %v1094 = vunpack.c.h.b16 %v424
  %v1095 = vunpack.c.l.b16 %v425
  %v1096 = vunpack.c.h.b16 %v425
  %v1097 = vunpack.c.l.b16 %v426
  %v1098 = vunpack.c.h.b16 %v426
  %v1099 = vunpack.c.l.b16 %v427
  %v1100 = vunpack.c.h.b16 %v427
  %v1101 = vunpack.c.l.b16 %v428
  %v1102 = vunpack.c.h.b16 %v428
  %v1103 = vunpack.c.l.b16 %v429
  %v1104 = vunpack.c.h.b16 %v429
  %v1105 = vunpack.c.l.b16 %v430
  %v1106 = vunpack.c.h.b16 %v430
  %v1107 = vunpack.c.l.b16 %v431
  %v1108 = vunpack.c.h.b16 %v431
  %v1109 = vunpack.c.l.b16 %v432
  %v1110 = vunpack.c.h.b16 %v432
  %v1111 = vunpack.c.l.b16 %v433
  %v1112 = vunpack.c.h.b16 %v433
  %v1113 = vunpack.c.l.b16 %v434
  %v1114 = vunpack.c.h.b16 %v434
  %v1115 = vunpack.c.l.b16 %v435
  %v1116 = vunpack.c.h.b16 %v435
  %v1117 = vunpack.c.l.b16 %v436
  %v1118 = vunpack.c.h.b16 %v436
  %v1119 = vunpack.c.l.b16 %v437
  %v1120 = vunpack.c.h.b16 %v437
  %v1121 = vunpack.c.l.b16 %v438
  %v1122 = vunpack.c.h.b16 %v438
  %v1123 = vunpack.c.l.b16 %v439
  %v1124 = vunpack.c.h.b16 %v439
  %v1125 = vunpack.c.l.b16 %v440
  %v1126 = vunpack.c.h.b16 %v440
  %v1127 = vpack.c.b16 %v1003, %v999
  %v1128 = vpack.c.b16 %v1004, %v1000
  %v1129 = vpack.c.b16 %v1005, %v1001
  %v1130 = vpack.c.b16 %v1006, %v1002
  %v1131 = vpack.c.b16 %v1011, %v1007
  %v1132 = vpack.c.b16 %v1012, %v1008
  %v1133 = vpack.c.b16 %v1013, %v1009
  %v1134 = vpack.c.b16 %v1014, %v1010
  %v1135 = vpack.c.b16 %v1019, %v1015
  %v1136 = vpack.c.b16 %v1020, %v1016
  %v1137 = vpack.c.b16 %v1021, %v1017
  %v1138 = vpack.c.b16 %v1022, %v1018
  %v1139 = vpack.c.b16 %v1027, %v1023
  %v1140 = vpack.c.b16 %v1028, %v1024
  %v1141 = vpack.c.b16 %v1029, %v1025
  %v1142 = vpack.c.b16 %v1030, %v1026
  %v1143 = vpack.c.b16 %v1035, %v1031
  %v1144 = vpack.c.b16 %v1036, %v1032
  %v1145 = vpack.c.b16 %v1037, %v1033
  %v1146 = vpack.c.b16 %v1038, %v1034
  %v1147 = vpack.c.b16 %v1043, %v1039
  %v1148 = vpack.c.b16 %v1044, %v1040
  %v1149 = vpack.c.b16 %v1045, %v1041
  %v1150 = vpack.c.b16 %v1046, %v1042
  %v1151 = vpack.c.b16 %v1051, %v1047
  %v1152 = vpack.c.b16 %v1052, %v1048
  %v1153 = vpack.c.b16 %v1053, %v1049
  %v1154 = vpack.c.b16 %v1054, %v1050
  %v1155 = vpack.c.b16 %v1059, %v1055
  %v1156 = vpack.c.b16 %v1060, %v1056
  %v1157 = vpack.c.b16 %v1061, %v1057
  %v1158 = vpack.c.b16 %v1062, %v1058
  %v1159 = vpack.c.b16 %v1067, %v1063
  %v1160 = vpack.c.b16 %v1068, %v1064
  %v1161 = vpack.c.b16 %v1069, %v1065
  %v1162 = vpack.c.b16 %v1070, %v1066
  %v1163 = vpack.c.b16 %v1075, %v1071
  %v1164 = vpack.c.b16 %v1076, %v1072
  %v1165 = vpack.c.b16 %v1077, %v1073
  %v1166 = vpack.c.b16 %v1078, %v1074
  %v1167 = vpack.c.b16 %v1083, %v1079
  %v1168 = vpack.c.b16 %v1084, %v1080
  %v1169 = vpack.c.b16 %v1085, %v1081
  %v1170 = vpack.c.b16 %v1086, %v1082
  %v1171 = vpack.c.b16 %v1091, %v1087
  %v1172 = vpack.c.b16 %v1092, %v1088
  %v1173 = vpack.c.b16 %v1093, %v1089
  %v1174 = vpack.c.b16 %v1094, %v1090
  %v1175 = vpack.c.b16 %v1099, %v1095
  %v1176 = vpack.c.b16 %v1100, %v1096
  %v1177 = vpack.c.b16 %v1101, %v1097
  %v1178 = vpack.c.b16 %v1102, %v1098
  %v1179 = vpack.c.b16 %v1107, %v1103
  %v1180 = vpack.c.b16 %v1108, %v1104
  %v1181 = vpack.c.b16 %v1109, %v1105
  %v1182 = vpack.c.b16 %v1110, %v1106
  %v1183 = vpack.c.b16 %v1115, %v1111
  %v1184 = vpack.c.b16 %v1116, %v1112
  %v1185 = vpack.c.b16 %v1117, %v1113
  %v1186 = vpack.c.b16 %v1118, %v1114
  %v1187 = vpack.c.b16 %v1123, %v1119
  %v1188 = vpack.c.b16 %v1124, %v1120
  %v1189 = vpack.c.b16 %v1125, %v1121
  %v1190 = vpack.c.b16 %v1126, %v1122
  %1255 = vmatprep.subr.bf16.mxu0 %v1128
  %1256 = vmatpush1.bf16.msra.mxu0 %v1127
  %1257 = vmatprep.subr.bf16.mxu0 %v1132
  %1258 = vmatpush1.bf16.msra.mxu0 %v1131
  %1259 = vmatprep.subr.bf16.mxu0 %v1136
  %1260 = vmatpush1.bf16.msra.mxu0 %v1135
  %1261 = vmatprep.subr.bf16.mxu0 %v1140
  %1262 = vmatpush1.bf16.msra.mxu0 %v1139
  %1263 = vmatprep.subr.bf16.mxu0 %v1144
  %1264 = vmatpush1.bf16.msra.mxu0 %v1143
  %1265 = vmatprep.subr.bf16.mxu0 %v1148
  %1266 = vmatpush1.bf16.msra.mxu0 %v1147
  %1267 = vmatprep.subr.bf16.mxu0 %v1152
  %1268 = vmatpush1.bf16.msra.mxu0 %v1151
  %1269 = vmatprep.subr.bf16.mxu0 %v1156
  %1270 = vmatpush1.bf16.msra.mxu0 %v1155
  %1271 = vmatprep.subr.bf16.mxu0 %v1160
  %1272 = vmatpush1.bf16.msra.mxu0 %v1159
  %1273 = vmatprep.subr.bf16.mxu0 %v1164
  %1274 = vmatpush1.bf16.msra.mxu0 %v1163
  %1275 = vmatprep.subr.bf16.mxu0 %v1168
  %1276 = vmatpush1.bf16.msra.mxu0 %v1167
  %1277 = vmatprep.subr.bf16.mxu0 %v1172
  %1278 = vmatpush1.bf16.msra.mxu0 %v1171
  %1279 = vmatprep.subr.bf16.mxu0 %v1176
  %1280 = vmatpush1.bf16.msra.mxu0 %v1175
  %1281 = vmatprep.subr.bf16.mxu0 %v1180
  %1282 = vmatpush1.bf16.msra.mxu0 %v1179
  %1283 = vmatprep.subr.bf16.mxu0 %v1184
  %1284 = vmatpush1.bf16.msra.mxu0 %v1183
  %1285 = vmatprep.subr.bf16.mxu0 %v1188
  %1286 = vmatpush1.bf16.msra.mxu0 %v1187
  %1287 = vmatprep.mubr.bf16.mxu0 %v375
  %1288 = vmatmul.mubr.bf16.gmra.mrb[0].mxu0 %v374
  %v1289 = vpop.f32.mrb[0].mxu0
  %v1290 = vadd.f32 %v927, %v1289
  %v1291 = vpop.f32.mrb[0].mxu0
  %v1292 = vadd.f32 %v928, %v1291
  %v1293 = vpop.f32.mrb[0].mxu0
  %v1294 = vadd.f32 %v931, %v1293
  %v1295 = vpop.f32.mrb[0].mxu0
  %v1296 = vadd.f32 %v932, %v1295
  %1297 = vdwg.mxu0
  %1298 = vmatprep.subr.bf16.mxu0 %v1130
  %1299 = vmatpush1.bf16.msra.mxu0 %v1129
  %1300 = vmatprep.subr.bf16.mxu0 %v1134
  %1301 = vmatpush1.bf16.msra.mxu0 %v1133
  %1302 = vmatprep.subr.bf16.mxu0 %v1138
  %1303 = vmatpush1.bf16.msra.mxu0 %v1137
  %1304 = vmatprep.subr.bf16.mxu0 %v1142
  %1305 = vmatpush1.bf16.msra.mxu0 %v1141
  %1306 = vmatprep.subr.bf16.mxu0 %v1146
  %1307 = vmatpush1.bf16.msra.mxu0 %v1145
  %1308 = vmatprep.subr.bf16.mxu0 %v1150
  %1309 = vmatpush1.bf16.msra.mxu0 %v1149
  %1310 = vmatprep.subr.bf16.mxu0 %v1154
  %1311 = vmatpush1.bf16.msra.mxu0 %v1153
  %1312 = vmatprep.subr.bf16.mxu0 %v1158
  %1313 = vmatpush1.bf16.msra.mxu0 %v1157
  %1314 = vmatprep.subr.bf16.mxu0 %v1162
  %1315 = vmatpush1.bf16.msra.mxu0 %v1161
  %1316 = vmatprep.subr.bf16.mxu0 %v1166
  %1317 = vmatpush1.bf16.msra.mxu0 %v1165
  %1318 = vmatprep.subr.bf16.mxu0 %v1170
  %1319 = vmatpush1.bf16.msra.mxu0 %v1169
  %1320 = vmatprep.subr.bf16.mxu0 %v1174
  %1321 = vmatpush1.bf16.msra.mxu0 %v1173
  %1322 = vmatprep.subr.bf16.mxu0 %v1178
  %1323 = vmatpush1.bf16.msra.mxu0 %v1177
  %1324 = vmatprep.subr.bf16.mxu0 %v1182
  %1325 = vmatpush1.bf16.msra.mxu0 %v1181
  %1326 = vmatprep.subr.bf16.mxu0 %v1186
  %1327 = vmatpush1.bf16.msra.mxu0 %v1185
  %1328 = vmatprep.subr.bf16.mxu0 %v1190
  %1329 = vmatpush1.bf16.msra.mxu0 %v1189
  %1330 = vmatprep.mubr.bf16.mxu0 %v375
  %1331 = vmatmul.mubr.bf16.gmra.mrb[0].mxu0 %v374
  %v1332 = vpop.f32.mrb[0].mxu0
  %v1333 = vadd.f32 %v929, %v1332
  %v1334 = vpop.f32.mrb[0].mxu0
  %v1335 = vadd.f32 %v930, %v1334
  %v1336 = vpop.f32.mrb[0].mxu0
  %v1337 = vadd.f32 %v933, %v1336
  %v1338 = vpop.f32.mrb[0].mxu0
  %v1339 = vadd.f32 %v934, %v1338
  %1340 = vdwg.mxu0
  %s1341 = scalar_lea.vmem %s5, 1024
  %v1342 = vld [vmem:[%s1341] sm:$0xff]
  %v1343 = vld [vmem:[%s1341 + $0x8] sm:$0xff]
  %v1344 = vld [vmem:[%s1341 + $0x10] sm:$0xff]
  %v1345 = vld [vmem:[%s1341 + $0x18] sm:$0xff]
  %v1346 = vld [vmem:[%s1341 + $0x20] sm:$0xff]
  %v1347 = vld [vmem:[%s1341 + $0x28] sm:$0xff]
  %v1348 = vld [vmem:[%s1341 + $0x30] sm:$0xff]
  %v1349 = vld [vmem:[%s1341 + $0x38] sm:$0xff]
  %v1350 = vld [vmem:[%s1341 + $0x40] sm:$0xff]
  %v1351 = vld [vmem:[%s1341 + $0x48] sm:$0xff]
  %v1352 = vld [vmem:[%s1341 + $0x50] sm:$0xff]
  %v1353 = vld [vmem:[%s1341 + $0x58] sm:$0xff]
  %v1354 = vld [vmem:[%s1341 + $0x60] sm:$0xff]
  %v1355 = vld [vmem:[%s1341 + $0x68] sm:$0xff]
  %v1356 = vld [vmem:[%s1341 + $0x70] sm:$0xff]
  %v1357 = vld [vmem:[%s1341 + $0x78] sm:$0xff]
  %v1358 = vld [vmem:[%s1341 + $0x80] sm:$0xff]
  %v1359 = vld [vmem:[%s1341 + $0x88] sm:$0xff]
  %v1360 = vld [vmem:[%s1341 + $0x90] sm:$0xff]
  %v1361 = vld [vmem:[%s1341 + $0x98] sm:$0xff]
  %v1362 = vld [vmem:[%s1341 + $0xa0] sm:$0xff]
  %v1363 = vld [vmem:[%s1341 + $0xa8] sm:$0xff]
  %v1364 = vld [vmem:[%s1341 + $0xb0] sm:$0xff]
  %v1365 = vld [vmem:[%s1341 + $0xb8] sm:$0xff]
  %v1366 = vld [vmem:[%s1341 + $0xc0] sm:$0xff]
  %v1367 = vld [vmem:[%s1341 + $0xc8] sm:$0xff]
  %v1368 = vld [vmem:[%s1341 + $0xd0] sm:$0xff]
  %v1369 = vld [vmem:[%s1341 + $0xd8] sm:$0xff]
  %v1370 = vld [vmem:[%s1341 + $0xe0] sm:$0xff]
  %v1371 = vld [vmem:[%s1341 + $0xe8] sm:$0xff]
  %v1372 = vld [vmem:[%s1341 + $0xf0] sm:$0xff]
  %v1373 = vld [vmem:[%s1341 + $0xf8] sm:$0xff]
  %v1374 = vld [vmem:[%s1341 + $0x100] sm:$0xff]
  %v1375 = vld [vmem:[%s1341 + $0x108] sm:$0xff]
  %v1376 = vld [vmem:[%s1341 + $0x110] sm:$0xff]
  %v1377 = vld [vmem:[%s1341 + $0x118] sm:$0xff]
  %v1378 = vld [vmem:[%s1341 + $0x120] sm:$0xff]
  %v1379 = vld [vmem:[%s1341 + $0x128] sm:$0xff]
  %v1380 = vld [vmem:[%s1341 + $0x130] sm:$0xff]
  %v1381 = vld [vmem:[%s1341 + $0x138] sm:$0xff]
  %v1382 = vld [vmem:[%s1341 + $0x140] sm:$0xff]
  %v1383 = vld [vmem:[%s1341 + $0x148] sm:$0xff]
  %v1384 = vld [vmem:[%s1341 + $0x150] sm:$0xff]
  %v1385 = vld [vmem:[%s1341 + $0x158] sm:$0xff]
  %v1386 = vld [vmem:[%s1341 + $0x160] sm:$0xff]
  %v1387 = vld [vmem:[%s1341 + $0x168] sm:$0xff]
  %v1388 = vld [vmem:[%s1341 + $0x170] sm:$0xff]
  %v1389 = vld [vmem:[%s1341 + $0x178] sm:$0xff]
  %v1390 = vld [vmem:[%s1341 + $0x180] sm:$0xff]
  %v1391 = vld [vmem:[%s1341 + $0x188] sm:$0xff]
  %v1392 = vld [vmem:[%s1341 + $0x190] sm:$0xff]
  %v1393 = vld [vmem:[%s1341 + $0x198] sm:$0xff]
  %v1394 = vld [vmem:[%s1341 + $0x1a0] sm:$0xff]
  %v1395 = vld [vmem:[%s1341 + $0x1a8] sm:$0xff]
  %v1396 = vld [vmem:[%s1341 + $0x1b0] sm:$0xff]
  %v1397 = vld [vmem:[%s1341 + $0x1b8] sm:$0xff]
  %v1398 = vld [vmem:[%s1341 + $0x1c0] sm:$0xff]
  %v1399 = vld [vmem:[%s1341 + $0x1c8] sm:$0xff]
  %v1400 = vld [vmem:[%s1341 + $0x1d0] sm:$0xff]
  %v1401 = vld [vmem:[%s1341 + $0x1d8] sm:$0xff]
  %v1402 = vld [vmem:[%s1341 + $0x1e0] sm:$0xff]
  %v1403 = vld [vmem:[%s1341 + $0x1e8] sm:$0xff]
  %v1404 = vld [vmem:[%s1341 + $0x1f0] sm:$0xff]
  %v1405 = vld [vmem:[%s1341 + $0x1f8] sm:$0xff]
  %v1470 = vunpack.c.l.b16 %v1342
  %v1471 = vunpack.c.h.b16 %v1342
  %v1472 = vunpack.c.l.b16 %v1343
  %v1473 = vunpack.c.h.b16 %v1343
  %v1474 = vunpack.c.l.b16 %v1344
  %v1475 = vunpack.c.h.b16 %v1344
  %v1476 = vunpack.c.l.b16 %v1345
  %v1477 = vunpack.c.h.b16 %v1345
  %v1478 = vunpack.c.l.b16 %v1346
  %v1479 = vunpack.c.h.b16 %v1346
  %v1480 = vunpack.c.l.b16 %v1347
  %v1481 = vunpack.c.h.b16 %v1347
  %v1482 = vunpack.c.l.b16 %v1348
  %v1483 = vunpack.c.h.b16 %v1348
  %v1484 = vunpack.c.l.b16 %v1349
  %v1485 = vunpack.c.h.b16 %v1349
  %v1486 = vunpack.c.l.b16 %v1350
  %v1487 = vunpack.c.h.b16 %v1350
  %v1488 = vunpack.c.l.b16 %v1351
  %v1489 = vunpack.c.h.b16 %v1351
  %v1490 = vunpack.c.l.b16 %v1352
  %v1491 = vunpack.c.h.b16 %v1352
  %v1492 = vunpack.c.l.b16 %v1353
  %v1493 = vunpack.c.h.b16 %v1353
  %v1494 = vunpack.c.l.b16 %v1354
  %v1495 = vunpack.c.h.b16 %v1354
  %v1496 = vunpack.c.l.b16 %v1355
  %v1497 = vunpack.c.h.b16 %v1355
  %v1498 = vunpack.c.l.b16 %v1356
  %v1499 = vunpack.c.h.b16 %v1356
  %v1500 = vunpack.c.l.b16 %v1357
  %v1501 = vunpack.c.h.b16 %v1357
  %v1502 = vunpack.c.l.b16 %v1358
  %v1503 = vunpack.c.h.b16 %v1358
  %v1504 = vunpack.c.l.b16 %v1359
  %v1505 = vunpack.c.h.b16 %v1359
  %v1506 = vunpack.c.l.b16 %v1360
  %v1507 = vunpack.c.h.b16 %v1360
  %v1508 = vunpack.c.l.b16 %v1361
  %v1509 = vunpack.c.h.b16 %v1361
  %v1510 = vunpack.c.l.b16 %v1362
  %v1511 = vunpack.c.h.b16 %v1362
  %v1512 = vunpack.c.l.b16 %v1363
  %v1513 = vunpack.c.h.b16 %v1363
  %v1514 = vunpack.c.l.b16 %v1364
  %v1515 = vunpack.c.h.b16 %v1364
  %v1516 = vunpack.c.l.b16 %v1365
  %v1517 = vunpack.c.h.b16 %v1365
  %v1518 = vunpack.c.l.b16 %v1366
  %v1519 = vunpack.c.h.b16 %v1366
  %v1520 = vunpack.c.l.b16 %v1367
  %v1521 = vunpack.c.h.b16 %v1367
  %v1522 = vunpack.c.l.b16 %v1368
  %v1523 = vunpack.c.h.b16 %v1368
  %v1524 = vunpack.c.l.b16 %v1369
  %v1525 = vunpack.c.h.b16 %v1369
  %v1526 = vunpack.c.l.b16 %v1370
  %v1527 = vunpack.c.h.b16 %v1370
  %v1528 = vunpack.c.l.b16 %v1371
  %v1529 = vunpack.c.h.b16 %v1371
  %v1530 = vunpack.c.l.b16 %v1372
  %v1531 = vunpack.c.h.b16 %v1372
  %v1532 = vunpack.c.l.b16 %v1373
  %v1533 = vunpack.c.h.b16 %v1373
  %v1534 = vunpack.c.l.b16 %v1374
  %v1535 = vunpack.c.h.b16 %v1374
  %v1536 = vunpack.c.l.b16 %v1375
  %v1537 = vunpack.c.h.b16 %v1375
  %v1538 = vunpack.c.l.b16 %v1376
  %v1539 = vunpack.c.h.b16 %v1376
  %v1540 = vunpack.c.l.b16 %v1377
  %v1541 = vunpack.c.h.b16 %v1377
  %v1542 = vunpack.c.l.b16 %v1378
  %v1543 = vunpack.c.h.b16 %v1378
  %v1544 = vunpack.c.l.b16 %v1379
  %v1545 = vunpack.c.h.b16 %v1379
  %v1546 = vunpack.c.l.b16 %v1380
  %v1547 = vunpack.c.h.b16 %v1380
  %v1548 = vunpack.c.l.b16 %v1381
  %v1549 = vunpack.c.h.b16 %v1381
  %v1550 = vunpack.c.l.b16 %v1382
  %v1551 = vunpack.c.h.b16 %v1382
  %v1552 = vunpack.c.l.b16 %v1383
  %v1553 = vunpack.c.h.b16 %v1383
  %v1554 = vunpack.c.l.b16 %v1384
  %v1555 = vunpack.c.h.b16 %v1384
  %v1556 = vunpack.c.l.b16 %v1385
  %v1557 = vunpack.c.h.b16 %v1385
  %v1558 = vunpack.c.l.b16 %v1386
  %v1559 = vunpack.c.h.b16 %v1386
  %v1560 = vunpack.c.l.b16 %v1387
  %v1561 = vunpack.c.h.b16 %v1387
  %v1562 = vunpack.c.l.b16 %v1388
  %v1563 = vunpack.c.h.b16 %v1388
  %v1564 = vunpack.c.l.b16 %v1389
  %v1565 = vunpack.c.h.b16 %v1389
  %v1566 = vunpack.c.l.b16 %v1390
  %v1567 = vunpack.c.h.b16 %v1390
  %v1568 = vunpack.c.l.b16 %v1391
  %v1569 = vunpack.c.h.b16 %v1391
  %v1570 = vunpack.c.l.b16 %v1392
  %v1571 = vunpack.c.h.b16 %v1392
  %v1572 = vunpack.c.l.b16 %v1393
  %v1573 = vunpack.c.h.b16 %v1393
  %v1574 = vunpack.c.l.b16 %v1394
  %v1575 = vunpack.c.h.b16 %v1394
  %v1576 = vunpack.c.l.b16 %v1395
  %v1577 = vunpack.c.h.b16 %v1395
  %v1578 = vunpack.c.l.b16 %v1396
  %v1579 = vunpack.c.h.b16 %v1396
  %v1580 = vunpack.c.l.b16 %v1397
  %v1581 = vunpack.c.h.b16 %v1397
  %v1582 = vunpack.c.l.b16 %v1398
  %v1583 = vunpack.c.h.b16 %v1398
  %v1584 = vunpack.c.l.b16 %v1399
  %v1585 = vunpack.c.h.b16 %v1399
  %v1586 = vunpack.c.l.b16 %v1400
  %v1587 = vunpack.c.h.b16 %v1400
  %v1588 = vunpack.c.l.b16 %v1401
  %v1589 = vunpack.c.h.b16 %v1401
  %v1590 = vunpack.c.l.b16 %v1402
  %v1591 = vunpack.c.h.b16 %v1402
  %v1592 = vunpack.c.l.b16 %v1403
  %v1593 = vunpack.c.h.b16 %v1403
  %v1594 = vunpack.c.l.b16 %v1404
  %v1595 = vunpack.c.h.b16 %v1404
  %v1596 = vunpack.c.l.b16 %v1405
  %v1597 = vunpack.c.h.b16 %v1405
  %v1598 = vpack.c.b16 %v1474, %v1470
  %v1599 = vpack.c.b16 %v1475, %v1471
  %v1600 = vpack.c.b16 %v1476, %v1472
  %v1601 = vpack.c.b16 %v1477, %v1473
  %v1602 = vpack.c.b16 %v1482, %v1478
  %v1603 = vpack.c.b16 %v1483, %v1479
  %v1604 = vpack.c.b16 %v1484, %v1480
  %v1605 = vpack.c.b16 %v1485, %v1481
  %v1606 = vpack.c.b16 %v1490, %v1486
  %v1607 = vpack.c.b16 %v1491, %v1487
  %v1608 = vpack.c.b16 %v1492, %v1488
  %v1609 = vpack.c.b16 %v1493, %v1489
  %v1610 = vpack.c.b16 %v1498, %v1494
  %v1611 = vpack.c.b16 %v1499, %v1495
  %v1612 = vpack.c.b16 %v1500, %v1496
  %v1613 = vpack.c.b16 %v1501, %v1497
  %v1614 = vpack.c.b16 %v1506, %v1502
  %v1615 = vpack.c.b16 %v1507, %v1503
  %v1616 = vpack.c.b16 %v1508, %v1504
  %v1617 = vpack.c.b16 %v1509, %v1505
  %v1618 = vpack.c.b16 %v1514, %v1510
  %v1619 = vpack.c.b16 %v1515, %v1511
  %v1620 = vpack.c.b16 %v1516, %v1512
  %v1621 = vpack.c.b16 %v1517, %v1513
  %v1622 = vpack.c.b16 %v1522, %v1518
  %v1623 = vpack.c.b16 %v1523, %v1519
  %v1624 = vpack.c.b16 %v1524, %v1520
  %v1625 = vpack.c.b16 %v1525, %v1521
  %v1626 = vpack.c.b16 %v1530, %v1526
  %v1627 = vpack.c.b16 %v1531, %v1527
  %v1628 = vpack.c.b16 %v1532, %v1528
  %v1629 = vpack.c.b16 %v1533, %v1529
  %v1630 = vpack.c.b16 %v1538, %v1534
  %v1631 = vpack.c.b16 %v1539, %v1535
  %v1632 = vpack.c.b16 %v1540, %v1536
  %v1633 = vpack.c.b16 %v1541, %v1537
  %v1634 = vpack.c.b16 %v1546, %v1542
  %v1635 = vpack.c.b16 %v1547, %v1543
  %v1636 = vpack.c.b16 %v1548, %v1544
  %v1637 = vpack.c.b16 %v1549, %v1545
  %v1638 = vpack.c.b16 %v1554, %v1550
  %v1639 = vpack.c.b16 %v1555, %v1551
  %v1640 = vpack.c.b16 %v1556, %v1552
  %v1641 = vpack.c.b16 %v1557, %v1553
  %v1642 = vpack.c.b16 %v1562, %v1558
  %v1643 = vpack.c.b16 %v1563, %v1559
  %v1644 = vpack.c.b16 %v1564, %v1560
  %v1645 = vpack.c.b16 %v1565, %v1561
  %v1646 = vpack.c.b16 %v1570, %v1566
  %v1647 = vpack.c.b16 %v1571, %v1567
  %v1648 = vpack.c.b16 %v1572, %v1568
  %v1649 = vpack.c.b16 %v1573, %v1569
  %v1650 = vpack.c.b16 %v1578, %v1574
  %v1651 = vpack.c.b16 %v1579, %v1575
  %v1652 = vpack.c.b16 %v1580, %v1576
  %v1653 = vpack.c.b16 %v1581, %v1577
  %v1654 = vpack.c.b16 %v1586, %v1582
  %v1655 = vpack.c.b16 %v1587, %v1583
  %v1656 = vpack.c.b16 %v1588, %v1584
  %v1657 = vpack.c.b16 %v1589, %v1585
  %v1658 = vpack.c.b16 %v1594, %v1590
  %v1659 = vpack.c.b16 %v1595, %v1591
  %v1660 = vpack.c.b16 %v1596, %v1592
  %v1661 = vpack.c.b16 %v1597, %v1593
  %1726 = vmatprep.subr.bf16.mxu0 %v1599
  %1727 = vmatpush1.bf16.msra.mxu0 %v1598
  %1728 = vmatprep.subr.bf16.mxu0 %v1603
  %1729 = vmatpush1.bf16.msra.mxu0 %v1602
  %1730 = vmatprep.subr.bf16.mxu0 %v1607
  %1731 = vmatpush1.bf16.msra.mxu0 %v1606
  %1732 = vmatprep.subr.bf16.mxu0 %v1611
  %1733 = vmatpush1.bf16.msra.mxu0 %v1610
  %1734 = vmatprep.subr.bf16.mxu0 %v1615
  %1735 = vmatpush1.bf16.msra.mxu0 %v1614
  %1736 = vmatprep.subr.bf16.mxu0 %v1619
  %1737 = vmatpush1.bf16.msra.mxu0 %v1618
  %1738 = vmatprep.subr.bf16.mxu0 %v1623
  %1739 = vmatpush1.bf16.msra.mxu0 %v1622
  %1740 = vmatprep.subr.bf16.mxu0 %v1627
  %1741 = vmatpush1.bf16.msra.mxu0 %v1626
  %1742 = vmatprep.subr.bf16.mxu0 %v1631
  %1743 = vmatpush1.bf16.msra.mxu0 %v1630
  %1744 = vmatprep.subr.bf16.mxu0 %v1635
  %1745 = vmatpush1.bf16.msra.mxu0 %v1634
  %1746 = vmatprep.subr.bf16.mxu0 %v1639
  %1747 = vmatpush1.bf16.msra.mxu0 %v1638
  %1748 = vmatprep.subr.bf16.mxu0 %v1643
  %1749 = vmatpush1.bf16.msra.mxu0 %v1642
  %1750 = vmatprep.subr.bf16.mxu0 %v1647
  %1751 = vmatpush1.bf16.msra.mxu0 %v1646
  %1752 = vmatprep.subr.bf16.mxu0 %v1651
  %1753 = vmatpush1.bf16.msra.mxu0 %v1650
  %1754 = vmatprep.subr.bf16.mxu0 %v1655
  %1755 = vmatpush1.bf16.msra.mxu0 %v1654
  %1756 = vmatprep.subr.bf16.mxu0 %v1659
  %1757 = vmatpush1.bf16.msra.mxu0 %v1658
  %1758 = vmatprep.mubr.bf16.mxu0 %v375
  %1759 = vmatmul.mubr.bf16.gmra.mrb[0].mxu0 %v374
  %v1760 = vpop.f32.mrb[0].mxu0
  %v1761 = vadd.f32 0.0, %v1760
  %v1762 = vpop.f32.mrb[0].mxu0
  %v1763 = vadd.f32 0.0, %v1762
  %v1764 = vpop.f32.mrb[0].mxu0
  %v1765 = vadd.f32 0.0, %v1764
  %v1766 = vpop.f32.mrb[0].mxu0
  %v1767 = vadd.f32 0.0, %v1766
  %1768 = vdwg.mxu0
  %1769 = vmatprep.subr.bf16.mxu0 %v1601
  %1770 = vmatpush1.bf16.msra.mxu0 %v1600
  %1771 = vmatprep.subr.bf16.mxu0 %v1605
  %1772 = vmatpush1.bf16.msra.mxu0 %v1604
  %1773 = vmatprep.subr.bf16.mxu0 %v1609
  %1774 = vmatpush1.bf16.msra.mxu0 %v1608
  %1775 = vmatprep.subr.bf16.mxu0 %v1613
  %1776 = vmatpush1.bf16.msra.mxu0 %v1612
  %1777 = vmatprep.subr.bf16.mxu0 %v1617
  %1778 = vmatpush1.bf16.msra.mxu0 %v1616
  %1779 = vmatprep.subr.bf16.mxu0 %v1621
  %1780 = vmatpush1.bf16.msra.mxu0 %v1620
  %1781 = vmatprep.subr.bf16.mxu0 %v1625
  %1782 = vmatpush1.bf16.msra.mxu0 %v1624
  %1783 = vmatprep.subr.bf16.mxu0 %v1629
  %1784 = vmatpush1.bf16.msra.mxu0 %v1628
  %1785 = vmatprep.subr.bf16.mxu0 %v1633
  %1786 = vmatpush1.bf16.msra.mxu0 %v1632
  %1787 = vmatprep.subr.bf16.mxu0 %v1637
  %1788 = vmatpush1.bf16.msra.mxu0 %v1636
  %1789 = vmatprep.subr.bf16.mxu0 %v1641
  %1790 = vmatpush1.bf16.msra.mxu0 %v1640
  %1791 = vmatprep.subr.bf16.mxu0 %v1645
  %1792 = vmatpush1.bf16.msra.mxu0 %v1644
  %1793 = vmatprep.subr.bf16.mxu0 %v1649
  %1794 = vmatpush1.bf16.msra.mxu0 %v1648
  %1795 = vmatprep.subr.bf16.mxu0 %v1653
  %1796 = vmatpush1.bf16.msra.mxu0 %v1652
  %1797 = vmatprep.subr.bf16.mxu0 %v1657
  %1798 = vmatpush1.bf16.msra.mxu0 %v1656
  %1799 = vmatprep.subr.bf16.mxu0 %v1661
  %1800 = vmatpush1.bf16.msra.mxu0 %v1660
  %1801 = vmatprep.mubr.bf16.mxu0 %v375
  %1802 = vmatmul.mubr.bf16.gmra.mrb[0].mxu0 %v374
  %v1803 = vpop.f32.mrb[0].mxu0
  %v1804 = vadd.f32 0.0, %v1803
  %v1805 = vpop.f32.mrb[0].mxu0
  %v1806 = vadd.f32 0.0, %v1805
  %v1807 = vpop.f32.mrb[0].mxu0
  %v1808 = vadd.f32 0.0, %v1807
  %v1809 = vpop.f32.mrb[0].mxu0
  %v1810 = vadd.f32 0.0, %v1809
  %1811 = vdwg.mxu0
  %v1812 = vrot.slane %v1761, 1
  %v1813 = vrot.slane %v1763, 1
  %v1814 = vrot.slane %v1804, 1
  %v1815 = vrot.slane %v1806, 1
  %v1816 = vrot.slane %v1765, 1
  %v1817 = vrot.slane %v1767, 1
  %v1818 = vrot.slane %v1808, 1
  %v1819 = vrot.slane %v1810, 1
  %v1820 = vsel %vm335, %v1812, %v1816
  %v1821 = vsel %vm335, %v1813, %v1817
  %v1822 = vsel %vm335, %v1814, %v1818
  %v1823 = vsel %vm335, %v1815, %v1819
  %v1824 = vsel %vm335, %v1816, %v1812
  %v1825 = vsel %vm335, %v1817, %v1813
  %v1826 = vsel %vm335, %v1818, %v1814
  %v1827 = vsel %vm335, %v1819, %v1815
  %v1828 = vsel %vm344, %v1820, 0.0
  %v1829 = vsel %vm344, %v1821, 0.0
  %v1830 = vsel %vm344, %v1822, 0.0
  %v1831 = vsel %vm344, %v1823, 0.0
  %v1832 = vsel %vm345, %v1824, 0.0
  %v1833 = vsel %vm345, %v1825, 0.0
  %v1834 = vsel %vm345, %v1826, 0.0
  %v1835 = vsel %vm345, %v1827, 0.0
  %v1836 = vadd.f32 %v1290, %v1828
  %v1837 = vadd.f32 %v1292, %v1829
  %v1838 = vadd.f32 %v1333, %v1830
  %v1839 = vadd.f32 %v1335, %v1831
  %v1840 = vadd.f32 %v1294, %v1832
  %v1841 = vadd.f32 %v1296, %v1833
  %v1842 = vadd.f32 %v1337, %v1834
  %v1843 = vadd.f32 %v1339, %v1835
  %v1844 = vld [vmem:[%s7] sm:$0xf]
  %v1847 = vunpack.c.l.s4 1966171168
  %v1848 = vunpack.c.0.s8 %v1847
  %v1849 = vlaneseq
  %v1850 = vshrl.u32 %v1849, 7
  %v1851 = vsub.s32 %v1848, %v1850
  %v1852 = vrot.slane %v1844, %v1851
  %v1853 = vcombine.high %v1852, %v1852
  %v1855 = vunpack.c.l.s4 1966171168
  %v1856 = vunpack.c.0.s8 %v1855
  %v1857 = vlaneseq
  %v1858 = vshrl.u32 %v1857, 7
  %v1859 = vsub.s32 %v1856, %v1858
  %v1860 = vrot.slane %v1852, %v1859
  %v1862 = vunpack.c.l.s4 1966171168
  %v1863 = vunpack.c.0.s8 %v1862
  %v1864 = vlaneseq
  %v1865 = vshrl.u32 %v1864, 7
  %v1866 = vsub.s32 %v1863, %v1865
  %v1867 = vrot.slane %v1853, %v1866
  %v1868 = vcombine.high %v1860, %v1860
  %v1869 = vcombine.high %v1867, %v1867
  %v1871 = vsel %vm112, %v85, 0
  %v1874 = vsel %vm116, %v1860, 0
  %v1877 = vsel %vm116, %v1867, 0
  %v1880 = vsel %vm116, %v1868, 0
  %v1883 = vsel %vm116, %v1869, 0
  %1885 = vmatprep.subr.bf16.mxu0 %v1877
  %1886 = vmatpush1.bf16.msra.mxu0 %v1874
  %1887 = vmatprep.subr.bf16.mxu0 0
  %1888 = vmatpush1.bf16.msra.mxu0 0
  %1889 = vmatprep.subr.bf16.mxu0 0
  %1890 = vmatpush1.bf16.msra.mxu0 0
  %1891 = vmatprep.subr.bf16.mxu0 0
  %1892 = vmatpush1.bf16.msra.mxu0 0
  %1893 = vmatprep.subr.bf16.mxu0 0
  %1894 = vmatpush1.bf16.msra.mxu0 0
  %1895 = vmatprep.subr.bf16.mxu0 0
  %1896 = vmatpush1.bf16.msra.mxu0 0
  %1897 = vmatprep.subr.bf16.mxu0 0
  %1898 = vmatpush1.bf16.msra.mxu0 0
  %1899 = vmatprep.subr.bf16.mxu0 0
  %1900 = vmatpush1.bf16.msra.mxu0 0
  %1901 = vmatprep.subr.bf16.mxu0 0
  %1902 = vmatpush1.bf16.msra.mxu0 0
  %1903 = vmatprep.subr.bf16.mxu0 0
  %1904 = vmatpush1.bf16.msra.mxu0 0
  %1905 = vmatprep.subr.bf16.mxu0 0
  %1906 = vmatpush1.bf16.msra.mxu0 0
  %1907 = vmatprep.subr.bf16.mxu0 0
  %1908 = vmatpush1.bf16.msra.mxu0 0
  %1909 = vmatprep.subr.bf16.mxu0 0
  %1910 = vmatpush1.bf16.msra.mxu0 0
  %1911 = vmatprep.subr.bf16.mxu0 0
  %1912 = vmatpush1.bf16.msra.mxu0 0
  %1913 = vmatprep.subr.bf16.mxu0 0
  %1914 = vmatpush1.bf16.msra.mxu0 0
  %1915 = vmatprep.subr.bf16.mxu0 0
  %1916 = vmatpush1.bf16.msra.mxu0 0
  %1917 = vmatprep.mubr.bf16.mxu0 0
  %1918 = vmatmul.mubr.bf16.gmra.mrb[0].mxu0 %v1871
  %v1919 = vpop.f32.mrb[0].mxu0
  %v1920 = vadd.f32 0.0, %v1919
  %v1921 = vpop.f32.mrb[0].mxu0
  %v1922 = vadd.f32 0.0, %v1921
  %v1923 = vpop.f32.mrb[0].mxu0
  %v1924 = vadd.f32 0.0, %v1923
  %v1925 = vpop.f32.mrb[0].mxu0
  %v1926 = vadd.f32 0.0, %v1925
  %1927 = vdwg.mxu0
  %1928 = vmatprep.subr.bf16.mxu0 %v1883
  %1929 = vmatpush1.bf16.msra.mxu0 %v1880
  %1930 = vmatprep.subr.bf16.mxu0 0
  %1931 = vmatpush1.bf16.msra.mxu0 0
  %1932 = vmatprep.subr.bf16.mxu0 0
  %1933 = vmatpush1.bf16.msra.mxu0 0
  %1934 = vmatprep.subr.bf16.mxu0 0
  %1935 = vmatpush1.bf16.msra.mxu0 0
  %1936 = vmatprep.subr.bf16.mxu0 0
  %1937 = vmatpush1.bf16.msra.mxu0 0
  %1938 = vmatprep.subr.bf16.mxu0 0
  %1939 = vmatpush1.bf16.msra.mxu0 0
  %1940 = vmatprep.subr.bf16.mxu0 0
  %1941 = vmatpush1.bf16.msra.mxu0 0
  %1942 = vmatprep.subr.bf16.mxu0 0
  %1943 = vmatpush1.bf16.msra.mxu0 0
  %1944 = vmatprep.subr.bf16.mxu0 0
  %1945 = vmatpush1.bf16.msra.mxu0 0
  %1946 = vmatprep.subr.bf16.mxu0 0
  %1947 = vmatpush1.bf16.msra.mxu0 0
  %1948 = vmatprep.subr.bf16.mxu0 0
  %1949 = vmatpush1.bf16.msra.mxu0 0
  %1950 = vmatprep.subr.bf16.mxu0 0
  %1951 = vmatpush1.bf16.msra.mxu0 0
  %1952 = vmatprep.subr.bf16.mxu0 0
  %1953 = vmatpush1.bf16.msra.mxu0 0
  %1954 = vmatprep.subr.bf16.mxu0 0
  %1955 = vmatpush1.bf16.msra.mxu0 0
  %1956 = vmatprep.subr.bf16.mxu0 0
  %1957 = vmatpush1.bf16.msra.mxu0 0
  %1958 = vmatprep.subr.bf16.mxu0 0
  %1959 = vmatpush1.bf16.msra.mxu0 0
  %1960 = vmatprep.mubr.bf16.mxu0 0
  %1961 = vmatmul.mubr.bf16.gmra.mrb[0].mxu0 %v1871
  %v1962 = vpop.f32.mrb[0].mxu0
  %v1963 = vadd.f32 0.0, %v1962
  %v1964 = vpop.f32.mrb[0].mxu0
  %v1965 = vadd.f32 0.0, %v1964
  %v1966 = vpop.f32.mrb[0].mxu0
  %v1967 = vadd.f32 0.0, %v1966
  %v1968 = vpop.f32.mrb[0].mxu0
  %v1969 = vadd.f32 0.0, %v1968
  %1970 = vdwg.mxu0
  %v1971 = vadd.f32 %v1836, %v1920
  %v1972 = vadd.f32 %v1837, %v1922
  %v1973 = vadd.f32 %v1838, %v1963
  %v1974 = vadd.f32 %v1839, %v1965
  %v1975 = vadd.f32 %v1840, %v1924
  %v1976 = vadd.f32 %v1841, %v1926
  %v1977 = vadd.f32 %v1842, %v1967
  %v1978 = vadd.f32 %v1843, %v1969
  %v1979 = vld [vmem:[%s6] sm:$0xf]
  %v1981 = vlaneseq
  %v1982 = vshrl.u32 %v1981, 7
  %v1983 = vsub.s32 0, %v1982
  %v1984 = vrot.slane %v1979, %v1983
  %v1985 = vlaneseq
  %v1986 = vshrl.u32 %v1985, 7
  %v1987 = vsub.s32 1, %v1986
  %v1988 = vrot.slane %v1979, %v1987
  %v1989 = vlaneseq
  %v1990 = vshrl.u32 %v1989, 7
  %v1991 = vsub.s32 2, %v1990
  %v1992 = vrot.slane %v1979, %v1991
  %v1993 = vlaneseq
  %v1994 = vshrl.u32 %v1993, 7
  %v1995 = vsub.s32 3, %v1994
  %v1996 = vrot.slane %v1979, %v1995
  %v2001 = vadd.f32 %v1971, %v1984
  %v2002 = vadd.f32 %v1972, %v1988
  %v2003 = vadd.f32 %v1973, %v1992
  %v2004 = vadd.f32 %v1974, %v1996
  %v2005 = vadd.f32 %v1975, %v1984
  %v2006 = vadd.f32 %v1976, %v1988
  %v2007 = vadd.f32 %v1977, %v1992
  %v2008 = vadd.f32 %v1978, %v1996
  %v2009 = vtanh.pop %v2001
  %v2010 = vtanh.pop %v2002
  %v2011 = vtanh.pop %v2005
  %v2012 = vtanh.pop %v2006
  %v2013 = vxor.u32 %v2003, 2147483648
  %v2014 = vxor.u32 %v2004, 2147483648
  %v2015 = vxor.u32 %v2007, 2147483648
  %v2016 = vxor.u32 %v2008, 2147483648
  %v2017 = vmul.f32 %v2013, 1.442695
  %v2018 = vpow.pop %v2017
  %v2019 = vmul.f32 %v2014, 1.442695
  %v2020 = vpow.pop %v2019
  %v2021 = vmul.f32 %v2015, 1.442695
  %v2022 = vpow.pop %v2021
  %v2023 = vmul.f32 %v2016, 1.442695
  %v2024 = vpow.pop %v2023
  %v2025 = vadd.f32 %v2018, 1.0
  %v2026 = vadd.f32 %v2020, 1.0
  %v2027 = vadd.f32 %v2022, 1.0
  %v2028 = vadd.f32 %v2024, 1.0
  %v2029 = vrcp.pop %v2025
  %v2030 = vmul.f32 1.0, %v2029
  %v2031 = vrcp.pop %v2026
  %v2032 = vmul.f32 1.0, %v2031
  %v2033 = vrcp.pop %v2027
  %v2034 = vmul.f32 1.0, %v2033
  %v2035 = vrcp.pop %v2028
  %v2036 = vmul.f32 1.0, %v2035
  %v2037 = vmul.f32 %v2009, %v2030
  %v2038 = vmul.f32 %v2010, %v2032
  %v2039 = vmul.f32 %v2011, %v2034
  %v2040 = vmul.f32 %v2012, %v2036
  %v2041 = vpack.c.bf16 %v2039, %v2037
  %v2042 = vpack.c.bf16 %v2040, %v2038
  %v2043 = vld [vmem:[%s8] sm:$0xff]
  %v2044 = vld [vmem:[%s8 + $0x8] sm:$0xff]
  %v2045 = vld [vmem:[%s8 + $0x10] sm:$0xff]
  %v2046 = vld [vmem:[%s8 + $0x18] sm:$0xff]
  %v2047 = vld [vmem:[%s8 + $0x20] sm:$0xff]
  %v2048 = vld [vmem:[%s8 + $0x28] sm:$0xff]
  %v2049 = vld [vmem:[%s8 + $0x30] sm:$0xff]
  %v2050 = vld [vmem:[%s8 + $0x38] sm:$0xff]
  %v2051 = vld [vmem:[%s8 + $0x40] sm:$0xff]
  %v2052 = vld [vmem:[%s8 + $0x48] sm:$0xff]
  %v2053 = vld [vmem:[%s8 + $0x50] sm:$0xff]
  %v2054 = vld [vmem:[%s8 + $0x58] sm:$0xff]
  %v2055 = vld [vmem:[%s8 + $0x60] sm:$0xff]
  %v2056 = vld [vmem:[%s8 + $0x68] sm:$0xff]
  %v2057 = vld [vmem:[%s8 + $0x70] sm:$0xff]
  %v2058 = vld [vmem:[%s8 + $0x78] sm:$0xff]
  %v2059 = vld [vmem:[%s8 + $0x80] sm:$0xff]
  %v2060 = vld [vmem:[%s8 + $0x88] sm:$0xff]
  %v2061 = vld [vmem:[%s8 + $0x90] sm:$0xff]
  %v2062 = vld [vmem:[%s8 + $0x98] sm:$0xff]
  %v2063 = vld [vmem:[%s8 + $0xa0] sm:$0xff]
  %v2064 = vld [vmem:[%s8 + $0xa8] sm:$0xff]
  %v2065 = vld [vmem:[%s8 + $0xb0] sm:$0xff]
  %v2066 = vld [vmem:[%s8 + $0xb8] sm:$0xff]
  %v2067 = vld [vmem:[%s8 + $0xc0] sm:$0xff]
  %v2068 = vld [vmem:[%s8 + $0xc8] sm:$0xff]
  %v2069 = vld [vmem:[%s8 + $0xd0] sm:$0xff]
  %v2070 = vld [vmem:[%s8 + $0xd8] sm:$0xff]
  %v2071 = vld [vmem:[%s8 + $0xe0] sm:$0xff]
  %v2072 = vld [vmem:[%s8 + $0xe8] sm:$0xff]
  %v2073 = vld [vmem:[%s8 + $0xf0] sm:$0xff]
  %v2074 = vld [vmem:[%s8 + $0xf8] sm:$0xff]
  %v2075 = vld [vmem:[%s8 + $0x100] sm:$0xff]
  %v2076 = vld [vmem:[%s8 + $0x108] sm:$0xff]
  %v2077 = vld [vmem:[%s8 + $0x110] sm:$0xff]
  %v2078 = vld [vmem:[%s8 + $0x118] sm:$0xff]
  %v2079 = vld [vmem:[%s8 + $0x120] sm:$0xff]
  %v2080 = vld [vmem:[%s8 + $0x128] sm:$0xff]
  %v2081 = vld [vmem:[%s8 + $0x130] sm:$0xff]
  %v2082 = vld [vmem:[%s8 + $0x138] sm:$0xff]
  %v2083 = vld [vmem:[%s8 + $0x140] sm:$0xff]
  %v2084 = vld [vmem:[%s8 + $0x148] sm:$0xff]
  %v2085 = vld [vmem:[%s8 + $0x150] sm:$0xff]
  %v2086 = vld [vmem:[%s8 + $0x158] sm:$0xff]
  %v2087 = vld [vmem:[%s8 + $0x160] sm:$0xff]
  %v2088 = vld [vmem:[%s8 + $0x168] sm:$0xff]
  %v2089 = vld [vmem:[%s8 + $0x170] sm:$0xff]
  %v2090 = vld [vmem:[%s8 + $0x178] sm:$0xff]
  %v2091 = vld [vmem:[%s8 + $0x180] sm:$0xff]
  %v2092 = vld [vmem:[%s8 + $0x188] sm:$0xff]
  %v2093 = vld [vmem:[%s8 + $0x190] sm:$0xff]
  %v2094 = vld [vmem:[%s8 + $0x198] sm:$0xff]
  %v2095 = vld [vmem:[%s8 + $0x1a0] sm:$0xff]
  %v2096 = vld [vmem:[%s8 + $0x1a8] sm:$0xff]
  %v2097 = vld [vmem:[%s8 + $0x1b0] sm:$0xff]
  %v2098 = vld [vmem:[%s8 + $0x1b8] sm:$0xff]
  %v2099 = vld [vmem:[%s8 + $0x1c0] sm:$0xff]
  %v2100 = vld [vmem:[%s8 + $0x1c8] sm:$0xff]
  %v2101 = vld [vmem:[%s8 + $0x1d0] sm:$0xff]
  %v2102 = vld [vmem:[%s8 + $0x1d8] sm:$0xff]
  %v2103 = vld [vmem:[%s8 + $0x1e0] sm:$0xff]
  %v2104 = vld [vmem:[%s8 + $0x1e8] sm:$0xff]
  %v2105 = vld [vmem:[%s8 + $0x1f0] sm:$0xff]
  %v2106 = vld [vmem:[%s8 + $0x1f8] sm:$0xff]
  %v2107 = vld [vmem:[%s9] sm:$0xf]
  %v2109 = vlaneseq
  %v2110 = vshrl.u32 %v2109, 7
  %v2111 = vsub.s32 0, %v2110
  %v2112 = vrot.slane %v2107, %v2111
  %v2113 = vlaneseq
  %v2114 = vshrl.u32 %v2113, 7
  %v2115 = vsub.s32 1, %v2114
  %v2116 = vrot.slane %v2107, %v2115
  %v2117 = vlaneseq
  %v2118 = vshrl.u32 %v2117, 7
  %v2119 = vsub.s32 2, %v2118
  %v2120 = vrot.slane %v2107, %v2119
  %v2121 = vlaneseq
  %v2122 = vshrl.u32 %v2121, 7
  %v2123 = vsub.s32 3, %v2122
  %v2124 = vrot.slane %v2107, %v2123
  %v2193 = vunpack.c.l.b16 %v2043
  %v2194 = vunpack.c.h.b16 %v2043
  %v2195 = vunpack.c.l.b16 %v2044
  %v2196 = vunpack.c.h.b16 %v2044
  %v2197 = vunpack.c.l.b16 %v2045
  %v2198 = vunpack.c.h.b16 %v2045
  %v2199 = vunpack.c.l.b16 %v2046
  %v2200 = vunpack.c.h.b16 %v2046
  %v2201 = vunpack.c.l.b16 %v2047
  %v2202 = vunpack.c.h.b16 %v2047
  %v2203 = vunpack.c.l.b16 %v2048
  %v2204 = vunpack.c.h.b16 %v2048
  %v2205 = vunpack.c.l.b16 %v2049
  %v2206 = vunpack.c.h.b16 %v2049
  %v2207 = vunpack.c.l.b16 %v2050
  %v2208 = vunpack.c.h.b16 %v2050
  %v2209 = vunpack.c.l.b16 %v2051
  %v2210 = vunpack.c.h.b16 %v2051
  %v2211 = vunpack.c.l.b16 %v2052
  %v2212 = vunpack.c.h.b16 %v2052
  %v2213 = vunpack.c.l.b16 %v2053
  %v2214 = vunpack.c.h.b16 %v2053
  %v2215 = vunpack.c.l.b16 %v2054
  %v2216 = vunpack.c.h.b16 %v2054
  %v2217 = vunpack.c.l.b16 %v2055
  %v2218 = vunpack.c.h.b16 %v2055
  %v2219 = vunpack.c.l.b16 %v2056
  %v2220 = vunpack.c.h.b16 %v2056
  %v2221 = vunpack.c.l.b16 %v2057
  %v2222 = vunpack.c.h.b16 %v2057
  %v2223 = vunpack.c.l.b16 %v2058
  %v2224 = vunpack.c.h.b16 %v2058
  %v2225 = vunpack.c.l.b16 %v2059
  %v2226 = vunpack.c.h.b16 %v2059
  %v2227 = vunpack.c.l.b16 %v2060
  %v2228 = vunpack.c.h.b16 %v2060
  %v2229 = vunpack.c.l.b16 %v2061
  %v2230 = vunpack.c.h.b16 %v2061
  %v2231 = vunpack.c.l.b16 %v2062
  %v2232 = vunpack.c.h.b16 %v2062
  %v2233 = vunpack.c.l.b16 %v2063
  %v2234 = vunpack.c.h.b16 %v2063
  %v2235 = vunpack.c.l.b16 %v2064
  %v2236 = vunpack.c.h.b16 %v2064
  %v2237 = vunpack.c.l.b16 %v2065
  %v2238 = vunpack.c.h.b16 %v2065
  %v2239 = vunpack.c.l.b16 %v2066
  %v2240 = vunpack.c.h.b16 %v2066
  %v2241 = vunpack.c.l.b16 %v2067
  %v2242 = vunpack.c.h.b16 %v2067
  %v2243 = vunpack.c.l.b16 %v2068
  %v2244 = vunpack.c.h.b16 %v2068
  %v2245 = vunpack.c.l.b16 %v2069
  %v2246 = vunpack.c.h.b16 %v2069
  %v2247 = vunpack.c.l.b16 %v2070
  %v2248 = vunpack.c.h.b16 %v2070
  %v2249 = vunpack.c.l.b16 %v2071
  %v2250 = vunpack.c.h.b16 %v2071
  %v2251 = vunpack.c.l.b16 %v2072
  %v2252 = vunpack.c.h.b16 %v2072
  %v2253 = vunpack.c.l.b16 %v2073
  %v2254 = vunpack.c.h.b16 %v2073
  %v2255 = vunpack.c.l.b16 %v2074
  %v2256 = vunpack.c.h.b16 %v2074
  %v2257 = vunpack.c.l.b16 %v2075
  %v2258 = vunpack.c.h.b16 %v2075
  %v2259 = vunpack.c.l.b16 %v2076
  %v2260 = vunpack.c.h.b16 %v2076
  %v2261 = vunpack.c.l.b16 %v2077
  %v2262 = vunpack.c.h.b16 %v2077
  %v2263 = vunpack.c.l.b16 %v2078
  %v2264 = vunpack.c.h.b16 %v2078
  %v2265 = vunpack.c.l.b16 %v2079
  %v2266 = vunpack.c.h.b16 %v2079
  %v2267 = vunpack.c.l.b16 %v2080
  %v2268 = vunpack.c.h.b16 %v2080
  %v2269 = vunpack.c.l.b16 %v2081
  %v2270 = vunpack.c.h.b16 %v2081
  %v2271 = vunpack.c.l.b16 %v2082
  %v2272 = vunpack.c.h.b16 %v2082
  %v2273 = vunpack.c.l.b16 %v2083
  %v2274 = vunpack.c.h.b16 %v2083
  %v2275 = vunpack.c.l.b16 %v2084
  %v2276 = vunpack.c.h.b16 %v2084
  %v2277 = vunpack.c.l.b16 %v2085
  %v2278 = vunpack.c.h.b16 %v2085
  %v2279 = vunpack.c.l.b16 %v2086
  %v2280 = vunpack.c.h.b16 %v2086
  %v2281 = vunpack.c.l.b16 %v2087
  %v2282 = vunpack.c.h.b16 %v2087
  %v2283 = vunpack.c.l.b16 %v2088
  %v2284 = vunpack.c.h.b16 %v2088
  %v2285 = vunpack.c.l.b16 %v2089
  %v2286 = vunpack.c.h.b16 %v2089
  %v2287 = vunpack.c.l.b16 %v2090
  %v2288 = vunpack.c.h.b16 %v2090
  %v2289 = vunpack.c.l.b16 %v2091
  %v2290 = vunpack.c.h.b16 %v2091
  %v2291 = vunpack.c.l.b16 %v2092
  %v2292 = vunpack.c.h.b16 %v2092
  %v2293 = vunpack.c.l.b16 %v2093
  %v2294 = vunpack.c.h.b16 %v2093
  %v2295 = vunpack.c.l.b16 %v2094
  %v2296 = vunpack.c.h.b16 %v2094
  %v2297 = vunpack.c.l.b16 %v2095
  %v2298 = vunpack.c.h.b16 %v2095
  %v2299 = vunpack.c.l.b16 %v2096
  %v2300 = vunpack.c.h.b16 %v2096
  %v2301 = vunpack.c.l.b16 %v2097
  %v2302 = vunpack.c.h.b16 %v2097
  %v2303 = vunpack.c.l.b16 %v2098
  %v2304 = vunpack.c.h.b16 %v2098
  %v2305 = vunpack.c.l.b16 %v2099
  %v2306 = vunpack.c.h.b16 %v2099
  %v2307 = vunpack.c.l.b16 %v2100
  %v2308 = vunpack.c.h.b16 %v2100
  %v2309 = vunpack.c.l.b16 %v2101
  %v2310 = vunpack.c.h.b16 %v2101
  %v2311 = vunpack.c.l.b16 %v2102
  %v2312 = vunpack.c.h.b16 %v2102
  %v2313 = vunpack.c.l.b16 %v2103
  %v2314 = vunpack.c.h.b16 %v2103
  %v2315 = vunpack.c.l.b16 %v2104
  %v2316 = vunpack.c.h.b16 %v2104
  %v2317 = vunpack.c.l.b16 %v2105
  %v2318 = vunpack.c.h.b16 %v2105
  %v2319 = vunpack.c.l.b16 %v2106
  %v2320 = vunpack.c.h.b16 %v2106
  %v2321 = vpack.c.b16 %v2197, %v2193
  %v2322 = vpack.c.b16 %v2198, %v2194
  %v2323 = vpack.c.b16 %v2199, %v2195
  %v2324 = vpack.c.b16 %v2200, %v2196
  %v2325 = vpack.c.b16 %v2205, %v2201
  %v2326 = vpack.c.b16 %v2206, %v2202
  %v2327 = vpack.c.b16 %v2207, %v2203
  %v2328 = vpack.c.b16 %v2208, %v2204
  %v2329 = vpack.c.b16 %v2213, %v2209
  %v2330 = vpack.c.b16 %v2214, %v2210
  %v2331 = vpack.c.b16 %v2215, %v2211
  %v2332 = vpack.c.b16 %v2216, %v2212
  %v2333 = vpack.c.b16 %v2221, %v2217
  %v2334 = vpack.c.b16 %v2222, %v2218
  %v2335 = vpack.c.b16 %v2223, %v2219
  %v2336 = vpack.c.b16 %v2224, %v2220
  %v2337 = vpack.c.b16 %v2229, %v2225
  %v2338 = vpack.c.b16 %v2230, %v2226
  %v2339 = vpack.c.b16 %v2231, %v2227
  %v2340 = vpack.c.b16 %v2232, %v2228
  %v2341 = vpack.c.b16 %v2237, %v2233
  %v2342 = vpack.c.b16 %v2238, %v2234
  %v2343 = vpack.c.b16 %v2239, %v2235
  %v2344 = vpack.c.b16 %v2240, %v2236
  %v2345 = vpack.c.b16 %v2245, %v2241
  %v2346 = vpack.c.b16 %v2246, %v2242
  %v2347 = vpack.c.b16 %v2247, %v2243
  %v2348 = vpack.c.b16 %v2248, %v2244
  %v2349 = vpack.c.b16 %v2253, %v2249
  %v2350 = vpack.c.b16 %v2254, %v2250
  %v2351 = vpack.c.b16 %v2255, %v2251
  %v2352 = vpack.c.b16 %v2256, %v2252
  %v2353 = vpack.c.b16 %v2261, %v2257
  %v2354 = vpack.c.b16 %v2262, %v2258
  %v2355 = vpack.c.b16 %v2263, %v2259
  %v2356 = vpack.c.b16 %v2264, %v2260
  %v2357 = vpack.c.b16 %v2269, %v2265
  %v2358 = vpack.c.b16 %v2270, %v2266
  %v2359 = vpack.c.b16 %v2271, %v2267
  %v2360 = vpack.c.b16 %v2272, %v2268
  %v2361 = vpack.c.b16 %v2277, %v2273
  %v2362 = vpack.c.b16 %v2278, %v2274
  %v2363 = vpack.c.b16 %v2279, %v2275
  %v2364 = vpack.c.b16 %v2280, %v2276
  %v2365 = vpack.c.b16 %v2285, %v2281
  %v2366 = vpack.c.b16 %v2286, %v2282
  %v2367 = vpack.c.b16 %v2287, %v2283
  %v2368 = vpack.c.b16 %v2288, %v2284
  %v2369 = vpack.c.b16 %v2293, %v2289
  %v2370 = vpack.c.b16 %v2294, %v2290
  %v2371 = vpack.c.b16 %v2295, %v2291
  %v2372 = vpack.c.b16 %v2296, %v2292
  %v2373 = vpack.c.b16 %v2301, %v2297
  %v2374 = vpack.c.b16 %v2302, %v2298
  %v2375 = vpack.c.b16 %v2303, %v2299
  %v2376 = vpack.c.b16 %v2304, %v2300
  %v2377 = vpack.c.b16 %v2309, %v2305
  %v2378 = vpack.c.b16 %v2310, %v2306
  %v2379 = vpack.c.b16 %v2311, %v2307
  %v2380 = vpack.c.b16 %v2312, %v2308
  %v2381 = vpack.c.b16 %v2317, %v2313
  %v2382 = vpack.c.b16 %v2318, %v2314
  %v2383 = vpack.c.b16 %v2319, %v2315
  %v2384 = vpack.c.b16 %v2320, %v2316
  %2449 = vmatprep.subr.bf16.mxu0 %v2322
  %2450 = vmatpush1.bf16.msra.mxu0 %v2321
  %2451 = vmatprep.subr.bf16.mxu0 %v2326
  %2452 = vmatpush1.bf16.msra.mxu0 %v2325
  %2453 = vmatprep.subr.bf16.mxu0 %v2330
  %2454 = vmatpush1.bf16.msra.mxu0 %v2329
  %2455 = vmatprep.subr.bf16.mxu0 %v2334
  %2456 = vmatpush1.bf16.msra.mxu0 %v2333
  %2457 = vmatprep.subr.bf16.mxu0 %v2338
  %2458 = vmatpush1.bf16.msra.mxu0 %v2337
  %2459 = vmatprep.subr.bf16.mxu0 %v2342
  %2460 = vmatpush1.bf16.msra.mxu0 %v2341
  %2461 = vmatprep.subr.bf16.mxu0 %v2346
  %2462 = vmatpush1.bf16.msra.mxu0 %v2345
  %2463 = vmatprep.subr.bf16.mxu0 %v2350
  %2464 = vmatpush1.bf16.msra.mxu0 %v2349
  %2465 = vmatprep.subr.bf16.mxu0 %v2354
  %2466 = vmatpush1.bf16.msra.mxu0 %v2353
  %2467 = vmatprep.subr.bf16.mxu0 %v2358
  %2468 = vmatpush1.bf16.msra.mxu0 %v2357
  %2469 = vmatprep.subr.bf16.mxu0 %v2362
  %2470 = vmatpush1.bf16.msra.mxu0 %v2361
  %2471 = vmatprep.subr.bf16.mxu0 %v2366
  %2472 = vmatpush1.bf16.msra.mxu0 %v2365
  %2473 = vmatprep.subr.bf16.mxu0 %v2370
  %2474 = vmatpush1.bf16.msra.mxu0 %v2369
  %2475 = vmatprep.subr.bf16.mxu0 %v2374
  %2476 = vmatpush1.bf16.msra.mxu0 %v2373
  %2477 = vmatprep.subr.bf16.mxu0 %v2378
  %2478 = vmatpush1.bf16.msra.mxu0 %v2377
  %2479 = vmatprep.subr.bf16.mxu0 %v2382
  %2480 = vmatpush1.bf16.msra.mxu0 %v2381
  %2481 = vmatprep.mubr.bf16.mxu0 %v2042
  %2482 = vmatmul.mubr.bf16.gmra.mrb[0].mxu0 %v2041
  %v2483 = vpop.f32.mrb[0].mxu0
  %v2484 = vadd.f32 %v2112, %v2483
  %v2485 = vpop.f32.mrb[0].mxu0
  %v2486 = vadd.f32 %v2116, %v2485
  %v2487 = vpop.f32.mrb[0].mxu0
  %v2488 = vadd.f32 %v2112, %v2487
  %v2489 = vpop.f32.mrb[0].mxu0
  %v2490 = vadd.f32 %v2116, %v2489
  %2491 = vdwg.mxu0
  %2492 = vmatprep.subr.bf16.mxu0 %v2324
  %2493 = vmatpush1.bf16.msra.mxu0 %v2323
  %2494 = vmatprep.subr.bf16.mxu0 %v2328
  %2495 = vmatpush1.bf16.msra.mxu0 %v2327
  %2496 = vmatprep.subr.bf16.mxu0 %v2332
  %2497 = vmatpush1.bf16.msra.mxu0 %v2331
  %2498 = vmatprep.subr.bf16.mxu0 %v2336
  %2499 = vmatpush1.bf16.msra.mxu0 %v2335
  %2500 = vmatprep.subr.bf16.mxu0 %v2340
  %2501 = vmatpush1.bf16.msra.mxu0 %v2339
  %2502 = vmatprep.subr.bf16.mxu0 %v2344
  %2503 = vmatpush1.bf16.msra.mxu0 %v2343
  %2504 = vmatprep.subr.bf16.mxu0 %v2348
  %2505 = vmatpush1.bf16.msra.mxu0 %v2347
  %2506 = vmatprep.subr.bf16.mxu0 %v2352
  %2507 = vmatpush1.bf16.msra.mxu0 %v2351
  %2508 = vmatprep.subr.bf16.mxu0 %v2356
  %2509 = vmatpush1.bf16.msra.mxu0 %v2355
  %2510 = vmatprep.subr.bf16.mxu0 %v2360
  %2511 = vmatpush1.bf16.msra.mxu0 %v2359
  %2512 = vmatprep.subr.bf16.mxu0 %v2364
  %2513 = vmatpush1.bf16.msra.mxu0 %v2363
  %2514 = vmatprep.subr.bf16.mxu0 %v2368
  %2515 = vmatpush1.bf16.msra.mxu0 %v2367
  %2516 = vmatprep.subr.bf16.mxu0 %v2372
  %2517 = vmatpush1.bf16.msra.mxu0 %v2371
  %2518 = vmatprep.subr.bf16.mxu0 %v2376
  %2519 = vmatpush1.bf16.msra.mxu0 %v2375
  %2520 = vmatprep.subr.bf16.mxu0 %v2380
  %2521 = vmatpush1.bf16.msra.mxu0 %v2379
  %2522 = vmatprep.subr.bf16.mxu0 %v2384
  %2523 = vmatpush1.bf16.msra.mxu0 %v2383
  %2524 = vmatprep.mubr.bf16.mxu0 %v2042
  %2525 = vmatmul.mubr.bf16.gmra.mrb[0].mxu0 %v2041
  %v2526 = vpop.f32.mrb[0].mxu0
  %v2527 = vadd.f32 %v2120, %v2526
  %v2528 = vpop.f32.mrb[0].mxu0
  %v2529 = vadd.f32 %v2124, %v2528
  %v2530 = vpop.f32.mrb[0].mxu0
  %v2531 = vadd.f32 %v2120, %v2530
  %v2532 = vpop.f32.mrb[0].mxu0
  %v2533 = vadd.f32 %v2124, %v2532
  %2534 = vdwg.mxu0
  %v2535 = vadd.f32 %v370, %v2484
  %v2536 = vadd.f32 %v371, %v2486
  %v2537 = vadd.f32 %v372, %v2488
  %v2538 = vadd.f32 %v373, %v2490
  %v2539 = vmul.f32 %v2535, 0.70710677
  %v2540 = vmul.f32 %v2536, 0.70710677
  %v2541 = vmul.f32 %v2537, 0.70710677
  %v2542 = vmul.f32 %v2538, 0.70710677
  %v2543 = vadd.f32 %v2527, 0.0
  %v2544 = vadd.f32 %v2529, 0.0
  %v2545 = vadd.f32 %v2531, 0.0
  %v2546 = vadd.f32 %v2533, 0.0
  %v2547 = vpack.c.bf16 %v2541, %v2539
  %v2548 = vpack.c.bf16 %v2542, %v2540
  %s2549 = scalar_lea.vmem %s5, 2048
  %v2550 = vld [vmem:[%s2549] sm:$0xff]
  %v2551 = vld [vmem:[%s2549 + $0x8] sm:$0xff]
  %v2552 = vld [vmem:[%s2549 + $0x10] sm:$0xff]
  %v2553 = vld [vmem:[%s2549 + $0x18] sm:$0xff]
  %v2554 = vld [vmem:[%s2549 + $0x20] sm:$0xff]
  %v2555 = vld [vmem:[%s2549 + $0x28] sm:$0xff]
  %v2556 = vld [vmem:[%s2549 + $0x30] sm:$0xff]
  %v2557 = vld [vmem:[%s2549 + $0x38] sm:$0xff]
  %v2558 = vld [vmem:[%s2549 + $0x40] sm:$0xff]
  %v2559 = vld [vmem:[%s2549 + $0x48] sm:$0xff]
  %v2560 = vld [vmem:[%s2549 + $0x50] sm:$0xff]
  %v2561 = vld [vmem:[%s2549 + $0x58] sm:$0xff]
  %v2562 = vld [vmem:[%s2549 + $0x60] sm:$0xff]
  %v2563 = vld [vmem:[%s2549 + $0x68] sm:$0xff]
  %v2564 = vld [vmem:[%s2549 + $0x70] sm:$0xff]
  %v2565 = vld [vmem:[%s2549 + $0x78] sm:$0xff]
  %v2566 = vld [vmem:[%s2549 + $0x80] sm:$0xff]
  %v2567 = vld [vmem:[%s2549 + $0x88] sm:$0xff]
  %v2568 = vld [vmem:[%s2549 + $0x90] sm:$0xff]
  %v2569 = vld [vmem:[%s2549 + $0x98] sm:$0xff]
  %v2570 = vld [vmem:[%s2549 + $0xa0] sm:$0xff]
  %v2571 = vld [vmem:[%s2549 + $0xa8] sm:$0xff]
  %v2572 = vld [vmem:[%s2549 + $0xb0] sm:$0xff]
  %v2573 = vld [vmem:[%s2549 + $0xb8] sm:$0xff]
  %v2574 = vld [vmem:[%s2549 + $0xc0] sm:$0xff]
  %v2575 = vld [vmem:[%s2549 + $0xc8] sm:$0xff]
  %v2576 = vld [vmem:[%s2549 + $0xd0] sm:$0xff]
  %v2577 = vld [vmem:[%s2549 + $0xd8] sm:$0xff]
  %v2578 = vld [vmem:[%s2549 + $0xe0] sm:$0xff]
  %v2579 = vld [vmem:[%s2549 + $0xe8] sm:$0xff]
  %v2580 = vld [vmem:[%s2549 + $0xf0] sm:$0xff]
  %v2581 = vld [vmem:[%s2549 + $0xf8] sm:$0xff]
  %v2582 = vld [vmem:[%s2549 + $0x100] sm:$0xff]
  %v2583 = vld [vmem:[%s2549 + $0x108] sm:$0xff]
  %v2584 = vld [vmem:[%s2549 + $0x110] sm:$0xff]
  %v2585 = vld [vmem:[%s2549 + $0x118] sm:$0xff]
  %v2586 = vld [vmem:[%s2549 + $0x120] sm:$0xff]
  %v2587 = vld [vmem:[%s2549 + $0x128] sm:$0xff]
  %v2588 = vld [vmem:[%s2549 + $0x130] sm:$0xff]
  %v2589 = vld [vmem:[%s2549 + $0x138] sm:$0xff]
  %v2590 = vld [vmem:[%s2549 + $0x140] sm:$0xff]
  %v2591 = vld [vmem:[%s2549 + $0x148] sm:$0xff]
  %v2592 = vld [vmem:[%s2549 + $0x150] sm:$0xff]
  %v2593 = vld [vmem:[%s2549 + $0x158] sm:$0xff]
  %v2594 = vld [vmem:[%s2549 + $0x160] sm:$0xff]
  %v2595 = vld [vmem:[%s2549 + $0x168] sm:$0xff]
  %v2596 = vld [vmem:[%s2549 + $0x170] sm:$0xff]
  %v2597 = vld [vmem:[%s2549 + $0x178] sm:$0xff]
  %v2598 = vld [vmem:[%s2549 + $0x180] sm:$0xff]
  %v2599 = vld [vmem:[%s2549 + $0x188] sm:$0xff]
  %v2600 = vld [vmem:[%s2549 + $0x190] sm:$0xff]
  %v2601 = vld [vmem:[%s2549 + $0x198] sm:$0xff]
  %v2602 = vld [vmem:[%s2549 + $0x1a0] sm:$0xff]
  %v2603 = vld [vmem:[%s2549 + $0x1a8] sm:$0xff]
  %v2604 = vld [vmem:[%s2549 + $0x1b0] sm:$0xff]
  %v2605 = vld [vmem:[%s2549 + $0x1b8] sm:$0xff]
  %v2606 = vld [vmem:[%s2549 + $0x1c0] sm:$0xff]
  %v2607 = vld [vmem:[%s2549 + $0x1c8] sm:$0xff]
  %v2608 = vld [vmem:[%s2549 + $0x1d0] sm:$0xff]
  %v2609 = vld [vmem:[%s2549 + $0x1d8] sm:$0xff]
  %v2610 = vld [vmem:[%s2549 + $0x1e0] sm:$0xff]
  %v2611 = vld [vmem:[%s2549 + $0x1e8] sm:$0xff]
  %v2612 = vld [vmem:[%s2549 + $0x1f0] sm:$0xff]
  %v2613 = vld [vmem:[%s2549 + $0x1f8] sm:$0xff]
  %s2614 = scalar_lea.vmem %s5, 1536
  %v2615 = vld [vmem:[%s2614] sm:$0xff]
  %v2616 = vld [vmem:[%s2614 + $0x8] sm:$0xff]
  %v2617 = vld [vmem:[%s2614 + $0x10] sm:$0xff]
  %v2618 = vld [vmem:[%s2614 + $0x18] sm:$0xff]
  %v2619 = vld [vmem:[%s2614 + $0x20] sm:$0xff]
  %v2620 = vld [vmem:[%s2614 + $0x28] sm:$0xff]
  %v2621 = vld [vmem:[%s2614 + $0x30] sm:$0xff]
  %v2622 = vld [vmem:[%s2614 + $0x38] sm:$0xff]
  %v2623 = vld [vmem:[%s2614 + $0x40] sm:$0xff]
  %v2624 = vld [vmem:[%s2614 + $0x48] sm:$0xff]
  %v2625 = vld [vmem:[%s2614 + $0x50] sm:$0xff]
  %v2626 = vld [vmem:[%s2614 + $0x58] sm:$0xff]
  %v2627 = vld [vmem:[%s2614 + $0x60] sm:$0xff]
  %v2628 = vld [vmem:[%s2614 + $0x68] sm:$0xff]
  %v2629 = vld [vmem:[%s2614 + $0x70] sm:$0xff]
  %v2630 = vld [vmem:[%s2614 + $0x78] sm:$0xff]
  %v2631 = vld [vmem:[%s2614 + $0x80] sm:$0xff]
  %v2632 = vld [vmem:[%s2614 + $0x88] sm:$0xff]
  %v2633 = vld [vmem:[%s2614 + $0x90] sm:$0xff]
  %v2634 = vld [vmem:[%s2614 + $0x98] sm:$0xff]
  %v2635 = vld [vmem:[%s2614 + $0xa0] sm:$0xff]
  %v2636 = vld [vmem:[%s2614 + $0xa8] sm:$0xff]
  %v2637 = vld [vmem:[%s2614 + $0xb0] sm:$0xff]
  %v2638 = vld [vmem:[%s2614 + $0xb8] sm:$0xff]
  %v2639 = vld [vmem:[%s2614 + $0xc0] sm:$0xff]
  %v2640 = vld [vmem:[%s2614 + $0xc8] sm:$0xff]
  %v2641 = vld [vmem:[%s2614 + $0xd0] sm:$0xff]
  %v2642 = vld [vmem:[%s2614 + $0xd8] sm:$0xff]
  %v2643 = vld [vmem:[%s2614 + $0xe0] sm:$0xff]
  %v2644 = vld [vmem:[%s2614 + $0xe8] sm:$0xff]
  %v2645 = vld [vmem:[%s2614 + $0xf0] sm:$0xff]
  %v2646 = vld [vmem:[%s2614 + $0xf8] sm:$0xff]
  %v2647 = vld [vmem:[%s2614 + $0x100] sm:$0xff]
  %v2648 = vld [vmem:[%s2614 + $0x108] sm:$0xff]
  %v2649 = vld [vmem:[%s2614 + $0x110] sm:$0xff]
  %v2650 = vld [vmem:[%s2614 + $0x118] sm:$0xff]
  %v2651 = vld [vmem:[%s2614 + $0x120] sm:$0xff]
  %v2652 = vld [vmem:[%s2614 + $0x128] sm:$0xff]
  %v2653 = vld [vmem:[%s2614 + $0x130] sm:$0xff]
  %v2654 = vld [vmem:[%s2614 + $0x138] sm:$0xff]
  %v2655 = vld [vmem:[%s2614 + $0x140] sm:$0xff]
  %v2656 = vld [vmem:[%s2614 + $0x148] sm:$0xff]
  %v2657 = vld [vmem:[%s2614 + $0x150] sm:$0xff]
  %v2658 = vld [vmem:[%s2614 + $0x158] sm:$0xff]
  %v2659 = vld [vmem:[%s2614 + $0x160] sm:$0xff]
  %v2660 = vld [vmem:[%s2614 + $0x168] sm:$0xff]
  %v2661 = vld [vmem:[%s2614 + $0x170] sm:$0xff]
  %v2662 = vld [vmem:[%s2614 + $0x178] sm:$0xff]
  %v2663 = vld [vmem:[%s2614 + $0x180] sm:$0xff]
  %v2664 = vld [vmem:[%s2614 + $0x188] sm:$0xff]
  %v2665 = vld [vmem:[%s2614 + $0x190] sm:$0xff]
  %v2666 = vld [vmem:[%s2614 + $0x198] sm:$0xff]
  %v2667 = vld [vmem:[%s2614 + $0x1a0] sm:$0xff]
  %v2668 = vld [vmem:[%s2614 + $0x1a8] sm:$0xff]
  %v2669 = vld [vmem:[%s2614 + $0x1b0] sm:$0xff]
  %v2670 = vld [vmem:[%s2614 + $0x1b8] sm:$0xff]
  %v2671 = vld [vmem:[%s2614 + $0x1c0] sm:$0xff]
  %v2672 = vld [vmem:[%s2614 + $0x1c8] sm:$0xff]
  %v2673 = vld [vmem:[%s2614 + $0x1d0] sm:$0xff]
  %v2674 = vld [vmem:[%s2614 + $0x1d8] sm:$0xff]
  %v2675 = vld [vmem:[%s2614 + $0x1e0] sm:$0xff]
  %v2676 = vld [vmem:[%s2614 + $0x1e8] sm:$0xff]
  %v2677 = vld [vmem:[%s2614 + $0x1f0] sm:$0xff]
  %v2678 = vld [vmem:[%s2614 + $0x1f8] sm:$0xff]
  %v2743 = vunpack.c.l.b16 %v2615
  %v2744 = vunpack.c.h.b16 %v2615
  %v2745 = vunpack.c.l.b16 %v2616
  %v2746 = vunpack.c.h.b16 %v2616
  %v2747 = vunpack.c.l.b16 %v2617
  %v2748 = vunpack.c.h.b16 %v2617
  %v2749 = vunpack.c.l.b16 %v2618
  %v2750 = vunpack.c.h.b16 %v2618
  %v2751 = vunpack.c.l.b16 %v2619
  %v2752 = vunpack.c.h.b16 %v2619
  %v2753 = vunpack.c.l.b16 %v2620
  %v2754 = vunpack.c.h.b16 %v2620
  %v2755 = vunpack.c.l.b16 %v2621
  %v2756 = vunpack.c.h.b16 %v2621
  %v2757 = vunpack.c.l.b16 %v2622
  %v2758 = vunpack.c.h.b16 %v2622
  %v2759 = vunpack.c.l.b16 %v2623
  %v2760 = vunpack.c.h.b16 %v2623
  %v2761 = vunpack.c.l.b16 %v2624
  %v2762 = vunpack.c.h.b16 %v2624
  %v2763 = vunpack.c.l.b16 %v2625
  %v2764 = vunpack.c.h.b16 %v2625
  %v2765 = vunpack.c.l.b16 %v2626
  %v2766 = vunpack.c.h.b16 %v2626
  %v2767 = vunpack.c.l.b16 %v2627
  %v2768 = vunpack.c.h.b16 %v2627
  %v2769 = vunpack.c.l.b16 %v2628
  %v2770 = vunpack.c.h.b16 %v2628
  %v2771 = vunpack.c.l.b16 %v2629
  %v2772 = vunpack.c.h.b16 %v2629
  %v2773 = vunpack.c.l.b16 %v2630
  %v2774 = vunpack.c.h.b16 %v2630
  %v2775 = vunpack.c.l.b16 %v2631
  %v2776 = vunpack.c.h.b16 %v2631
  %v2777 = vunpack.c.l.b16 %v2632
  %v2778 = vunpack.c.h.b16 %v2632
  %v2779 = vunpack.c.l.b16 %v2633
  %v2780 = vunpack.c.h.b16 %v2633
  %v2781 = vunpack.c.l.b16 %v2634
  %v2782 = vunpack.c.h.b16 %v2634
  %v2783 = vunpack.c.l.b16 %v2635
  %v2784 = vunpack.c.h.b16 %v2635
  %v2785 = vunpack.c.l.b16 %v2636
  %v2786 = vunpack.c.h.b16 %v2636
  %v2787 = vunpack.c.l.b16 %v2637
  %v2788 = vunpack.c.h.b16 %v2637
  %v2789 = vunpack.c.l.b16 %v2638
  %v2790 = vunpack.c.h.b16 %v2638
  %v2791 = vunpack.c.l.b16 %v2639
  %v2792 = vunpack.c.h.b16 %v2639
  %v2793 = vunpack.c.l.b16 %v2640
  %v2794 = vunpack.c.h.b16 %v2640
  %v2795 = vunpack.c.l.b16 %v2641
  %v2796 = vunpack.c.h.b16 %v2641
  %v2797 = vunpack.c.l.b16 %v2642
  %v2798 = vunpack.c.h.b16 %v2642
  %v2799 = vunpack.c.l.b16 %v2643
  %v2800 = vunpack.c.h.b16 %v2643
  %v2801 = vunpack.c.l.b16 %v2644
  %v2802 = vunpack.c.h.b16 %v2644
  %v2803 = vunpack.c.l.b16 %v2645
  %v2804 = vunpack.c.h.b16 %v2645
  %v2805 = vunpack.c.l.b16 %v2646
  %v2806 = vunpack.c.h.b16 %v2646
  %v2807 = vunpack.c.l.b16 %v2647
  %v2808 = vunpack.c.h.b16 %v2647
  %v2809 = vunpack.c.l.b16 %v2648
  %v2810 = vunpack.c.h.b16 %v2648
  %v2811 = vunpack.c.l.b16 %v2649
  %v2812 = vunpack.c.h.b16 %v2649
  %v2813 = vunpack.c.l.b16 %v2650
  %v2814 = vunpack.c.h.b16 %v2650
  %v2815 = vunpack.c.l.b16 %v2651
  %v2816 = vunpack.c.h.b16 %v2651
  %v2817 = vunpack.c.l.b16 %v2652
  %v2818 = vunpack.c.h.b16 %v2652
  %v2819 = vunpack.c.l.b16 %v2653
  %v2820 = vunpack.c.h.b16 %v2653
  %v2821 = vunpack.c.l.b16 %v2654
  %v2822 = vunpack.c.h.b16 %v2654
  %v2823 = vunpack.c.l.b16 %v2655
  %v2824 = vunpack.c.h.b16 %v2655
  %v2825 = vunpack.c.l.b16 %v2656
  %v2826 = vunpack.c.h.b16 %v2656
  %v2827 = vunpack.c.l.b16 %v2657
  %v2828 = vunpack.c.h.b16 %v2657
  %v2829 = vunpack.c.l.b16 %v2658
  %v2830 = vunpack.c.h.b16 %v2658
  %v2831 = vunpack.c.l.b16 %v2659
  %v2832 = vunpack.c.h.b16 %v2659
  %v2833 = vunpack.c.l.b16 %v2660
  %v2834 = vunpack.c.h.b16 %v2660
  %v2835 = vunpack.c.l.b16 %v2661
  %v2836 = vunpack.c.h.b16 %v2661
  %v2837 = vunpack.c.l.b16 %v2662
  %v2838 = vunpack.c.h.b16 %v2662
  %v2839 = vunpack.c.l.b16 %v2663
  %v2840 = vunpack.c.h.b16 %v2663
  %v2841 = vunpack.c.l.b16 %v2664
  %v2842 = vunpack.c.h.b16 %v2664
  %v2843 = vunpack.c.l.b16 %v2665
  %v2844 = vunpack.c.h.b16 %v2665
  %v2845 = vunpack.c.l.b16 %v2666
  %v2846 = vunpack.c.h.b16 %v2666
  %v2847 = vunpack.c.l.b16 %v2667
  %v2848 = vunpack.c.h.b16 %v2667
  %v2849 = vunpack.c.l.b16 %v2668
  %v2850 = vunpack.c.h.b16 %v2668
  %v2851 = vunpack.c.l.b16 %v2669
  %v2852 = vunpack.c.h.b16 %v2669
  %v2853 = vunpack.c.l.b16 %v2670
  %v2854 = vunpack.c.h.b16 %v2670
  %v2855 = vunpack.c.l.b16 %v2671
  %v2856 = vunpack.c.h.b16 %v2671
  %v2857 = vunpack.c.l.b16 %v2672
  %v2858 = vunpack.c.h.b16 %v2672
  %v2859 = vunpack.c.l.b16 %v2673
  %v2860 = vunpack.c.h.b16 %v2673
  %v2861 = vunpack.c.l.b16 %v2674
  %v2862 = vunpack.c.h.b16 %v2674
  %v2863 = vunpack.c.l.b16 %v2675
  %v2864 = vunpack.c.h.b16 %v2675
  %v2865 = vunpack.c.l.b16 %v2676
  %v2866 = vunpack.c.h.b16 %v2676
  %v2867 = vunpack.c.l.b16 %v2677
  %v2868 = vunpack.c.h.b16 %v2677
  %v2869 = vunpack.c.l.b16 %v2678
  %v2870 = vunpack.c.h.b16 %v2678
  %v2871 = vpack.c.b16 %v2747, %v2743
  %v2872 = vpack.c.b16 %v2748, %v2744
  %v2873 = vpack.c.b16 %v2749, %v2745
  %v2874 = vpack.c.b16 %v2750, %v2746
  %v2875 = vpack.c.b16 %v2755, %v2751
  %v2876 = vpack.c.b16 %v2756, %v2752
  %v2877 = vpack.c.b16 %v2757, %v2753
  %v2878 = vpack.c.b16 %v2758, %v2754
  %v2879 = vpack.c.b16 %v2763, %v2759
  %v2880 = vpack.c.b16 %v2764, %v2760
  %v2881 = vpack.c.b16 %v2765, %v2761
  %v2882 = vpack.c.b16 %v2766, %v2762
  %v2883 = vpack.c.b16 %v2771, %v2767
  %v2884 = vpack.c.b16 %v2772, %v2768
  %v2885 = vpack.c.b16 %v2773, %v2769
  %v2886 = vpack.c.b16 %v2774, %v2770
  %v2887 = vpack.c.b16 %v2779, %v2775
  %v2888 = vpack.c.b16 %v2780, %v2776
  %v2889 = vpack.c.b16 %v2781, %v2777
  %v2890 = vpack.c.b16 %v2782, %v2778
  %v2891 = vpack.c.b16 %v2787, %v2783
  %v2892 = vpack.c.b16 %v2788, %v2784
  %v2893 = vpack.c.b16 %v2789, %v2785
  %v2894 = vpack.c.b16 %v2790, %v2786
  %v2895 = vpack.c.b16 %v2795, %v2791
  %v2896 = vpack.c.b16 %v2796, %v2792
  %v2897 = vpack.c.b16 %v2797, %v2793
  %v2898 = vpack.c.b16 %v2798, %v2794
  %v2899 = vpack.c.b16 %v2803, %v2799
  %v2900 = vpack.c.b16 %v2804, %v2800
  %v2901 = vpack.c.b16 %v2805, %v2801
  %v2902 = vpack.c.b16 %v2806, %v2802
  %v2903 = vpack.c.b16 %v2811, %v2807
  %v2904 = vpack.c.b16 %v2812, %v2808
  %v2905 = vpack.c.b16 %v2813, %v2809
  %v2906 = vpack.c.b16 %v2814, %v2810
  %v2907 = vpack.c.b16 %v2819, %v2815
  %v2908 = vpack.c.b16 %v2820, %v2816
  %v2909 = vpack.c.b16 %v2821, %v2817
  %v2910 = vpack.c.b16 %v2822, %v2818
  %v2911 = vpack.c.b16 %v2827, %v2823
  %v2912 = vpack.c.b16 %v2828, %v2824
  %v2913 = vpack.c.b16 %v2829, %v2825
  %v2914 = vpack.c.b16 %v2830, %v2826
  %v2915 = vpack.c.b16 %v2835, %v2831
  %v2916 = vpack.c.b16 %v2836, %v2832
  %v2917 = vpack.c.b16 %v2837, %v2833
  %v2918 = vpack.c.b16 %v2838, %v2834
  %v2919 = vpack.c.b16 %v2843, %v2839
  %v2920 = vpack.c.b16 %v2844, %v2840
  %v2921 = vpack.c.b16 %v2845, %v2841
  %v2922 = vpack.c.b16 %v2846, %v2842
  %v2923 = vpack.c.b16 %v2851, %v2847
  %v2924 = vpack.c.b16 %v2852, %v2848
  %v2925 = vpack.c.b16 %v2853, %v2849
  %v2926 = vpack.c.b16 %v2854, %v2850
  %v2927 = vpack.c.b16 %v2859, %v2855
  %v2928 = vpack.c.b16 %v2860, %v2856
  %v2929 = vpack.c.b16 %v2861, %v2857
  %v2930 = vpack.c.b16 %v2862, %v2858
  %v2931 = vpack.c.b16 %v2867, %v2863
  %v2932 = vpack.c.b16 %v2868, %v2864
  %v2933 = vpack.c.b16 %v2869, %v2865
  %v2934 = vpack.c.b16 %v2870, %v2866
  %2999 = vmatprep.subr.bf16.mxu0 %v2872
  %3000 = vmatpush1.bf16.msra.mxu0 %v2871
  %3001 = vmatprep.subr.bf16.mxu0 %v2876
  %3002 = vmatpush1.bf16.msra.mxu0 %v2875
  %3003 = vmatprep.subr.bf16.mxu0 %v2880
  %3004 = vmatpush1.bf16.msra.mxu0 %v2879
  %3005 = vmatprep.subr.bf16.mxu0 %v2884
  %3006 = vmatpush1.bf16.msra.mxu0 %v2883
  %3007 = vmatprep.subr.bf16.mxu0 %v2888
  %3008 = vmatpush1.bf16.msra.mxu0 %v2887
  %3009 = vmatprep.subr.bf16.mxu0 %v2892
  %3010 = vmatpush1.bf16.msra.mxu0 %v2891
  %3011 = vmatprep.subr.bf16.mxu0 %v2896
  %3012 = vmatpush1.bf16.msra.mxu0 %v2895
  %3013 = vmatprep.subr.bf16.mxu0 %v2900
  %3014 = vmatpush1.bf16.msra.mxu0 %v2899
  %3015 = vmatprep.subr.bf16.mxu0 %v2904
  %3016 = vmatpush1.bf16.msra.mxu0 %v2903
  %3017 = vmatprep.subr.bf16.mxu0 %v2908
  %3018 = vmatpush1.bf16.msra.mxu0 %v2907
  %3019 = vmatprep.subr.bf16.mxu0 %v2912
  %3020 = vmatpush1.bf16.msra.mxu0 %v2911
  %3021 = vmatprep.subr.bf16.mxu0 %v2916
  %3022 = vmatpush1.bf16.msra.mxu0 %v2915
  %3023 = vmatprep.subr.bf16.mxu0 %v2920
  %3024 = vmatpush1.bf16.msra.mxu0 %v2919
  %3025 = vmatprep.subr.bf16.mxu0 %v2924
  %3026 = vmatpush1.bf16.msra.mxu0 %v2923
  %3027 = vmatprep.subr.bf16.mxu0 %v2928
  %3028 = vmatpush1.bf16.msra.mxu0 %v2927
  %3029 = vmatprep.subr.bf16.mxu0 %v2932
  %3030 = vmatpush1.bf16.msra.mxu0 %v2931
  %3031 = vmatprep.mubr.bf16.mxu0 %v2548
  %3032 = vmatmul.mubr.bf16.gmra.mrb[0].mxu0 %v2547
  %v3033 = vpop.f32.mrb[0].mxu0
  %v3034 = vadd.f32 0.0, %v3033
  %v3035 = vpop.f32.mrb[0].mxu0
  %v3036 = vadd.f32 0.0, %v3035
  %v3037 = vpop.f32.mrb[0].mxu0
  %v3038 = vadd.f32 0.0, %v3037
  %v3039 = vpop.f32.mrb[0].mxu0
  %v3040 = vadd.f32 0.0, %v3039
  %3041 = vdwg.mxu0
  %3042 = vmatprep.subr.bf16.mxu0 %v2874
  %3043 = vmatpush1.bf16.msra.mxu0 %v2873
  %3044 = vmatprep.subr.bf16.mxu0 %v2878
  %3045 = vmatpush1.bf16.msra.mxu0 %v2877
  %3046 = vmatprep.subr.bf16.mxu0 %v2882
  %3047 = vmatpush1.bf16.msra.mxu0 %v2881
  %3048 = vmatprep.subr.bf16.mxu0 %v2886
  %3049 = vmatpush1.bf16.msra.mxu0 %v2885
  %3050 = vmatprep.subr.bf16.mxu0 %v2890
  %3051 = vmatpush1.bf16.msra.mxu0 %v2889
  %3052 = vmatprep.subr.bf16.mxu0 %v2894
  %3053 = vmatpush1.bf16.msra.mxu0 %v2893
  %3054 = vmatprep.subr.bf16.mxu0 %v2898
  %3055 = vmatpush1.bf16.msra.mxu0 %v2897
  %3056 = vmatprep.subr.bf16.mxu0 %v2902
  %3057 = vmatpush1.bf16.msra.mxu0 %v2901
  %3058 = vmatprep.subr.bf16.mxu0 %v2906
  %3059 = vmatpush1.bf16.msra.mxu0 %v2905
  %3060 = vmatprep.subr.bf16.mxu0 %v2910
  %3061 = vmatpush1.bf16.msra.mxu0 %v2909
  %3062 = vmatprep.subr.bf16.mxu0 %v2914
  %3063 = vmatpush1.bf16.msra.mxu0 %v2913
  %3064 = vmatprep.subr.bf16.mxu0 %v2918
  %3065 = vmatpush1.bf16.msra.mxu0 %v2917
  %3066 = vmatprep.subr.bf16.mxu0 %v2922
  %3067 = vmatpush1.bf16.msra.mxu0 %v2921
  %3068 = vmatprep.subr.bf16.mxu0 %v2926
  %3069 = vmatpush1.bf16.msra.mxu0 %v2925
  %3070 = vmatprep.subr.bf16.mxu0 %v2930
  %3071 = vmatpush1.bf16.msra.mxu0 %v2929
  %3072 = vmatprep.subr.bf16.mxu0 %v2934
  %3073 = vmatpush1.bf16.msra.mxu0 %v2933
  %3074 = vmatprep.mubr.bf16.mxu0 %v2548
  %3075 = vmatmul.mubr.bf16.gmra.mrb[0].mxu0 %v2547
  %v3076 = vpop.f32.mrb[0].mxu0
  %v3077 = vadd.f32 0.0, %v3076
  %v3078 = vpop.f32.mrb[0].mxu0
  %v3079 = vadd.f32 0.0, %v3078
  %v3080 = vpop.f32.mrb[0].mxu0
  %v3081 = vadd.f32 0.0, %v3080
  %v3082 = vpop.f32.mrb[0].mxu0
  %v3083 = vadd.f32 0.0, %v3082
  %3084 = vdwg.mxu0
  %v3085 = vrot.slane %v3034, 6
  %v3086 = vrot.slane %v3036, 6
  %v3087 = vrot.slane %v3077, 6
  %v3088 = vrot.slane %v3079, 6
  %v3089 = vrot.slane %v3038, 6
  %v3090 = vrot.slane %v3040, 6
  %v3091 = vrot.slane %v3081, 6
  %v3092 = vrot.slane %v3083, 6
  %vm3093 = vcmp.lt.s32.totalorder %v54, 2
  %v3094 = vsel %vm3093, %v3085, %v3089
  %v3095 = vsel %vm3093, %v3086, %v3090
  %v3096 = vsel %vm3093, %v3087, %v3091
  %v3097 = vsel %vm3093, %v3088, %v3092
  %v3098 = vsel %vm3093, %v3089, %v3085
  %v3099 = vsel %vm3093, %v3090, %v3086
  %v3100 = vsel %vm3093, %v3091, %v3087
  %v3101 = vsel %vm3093, %v3092, %v3088
  %vm3102 = vcmp.ge.s32.totalorder %v78, 2
  %vm3103 = vcmp.ge.s32.totalorder %v79, 2
  %v3104 = vsel %vm3102, 1, 0
  %v3105 = vsel %vm3103, 1, 0
  %vm3106 = vcmp.eq.s32.totalorder %v3104, 1
  %vm3107 = vcmp.eq.s32.totalorder %v3105, 1
  %v3108 = vsel %vm3106, %v3098, 0.0
  %v3109 = vsel %vm3106, %v3099, 0.0
  %v3110 = vsel %vm3106, %v3100, 0.0
  %v3111 = vsel %vm3106, %v3101, 0.0
  %v3112 = vsel %vm3107, %v3094, 0.0
  %v3113 = vsel %vm3107, %v3095, 0.0
  %v3114 = vsel %vm3107, %v3096, 0.0
  %v3115 = vsel %vm3107, %v3097, 0.0
  %v3180 = vunpack.c.l.b16 %v2550
  %v3181 = vunpack.c.h.b16 %v2550
  %v3182 = vunpack.c.l.b16 %v2551
  %v3183 = vunpack.c.h.b16 %v2551
  %v3184 = vunpack.c.l.b16 %v2552
  %v3185 = vunpack.c.h.b16 %v2552
  %v3186 = vunpack.c.l.b16 %v2553
  %v3187 = vunpack.c.h.b16 %v2553
  %v3188 = vunpack.c.l.b16 %v2554
  %v3189 = vunpack.c.h.b16 %v2554
  %v3190 = vunpack.c.l.b16 %v2555
  %v3191 = vunpack.c.h.b16 %v2555
  %v3192 = vunpack.c.l.b16 %v2556
  %v3193 = vunpack.c.h.b16 %v2556
  %v3194 = vunpack.c.l.b16 %v2557
  %v3195 = vunpack.c.h.b16 %v2557
  %v3196 = vunpack.c.l.b16 %v2558
  %v3197 = vunpack.c.h.b16 %v2558
  %v3198 = vunpack.c.l.b16 %v2559
  %v3199 = vunpack.c.h.b16 %v2559
  %v3200 = vunpack.c.l.b16 %v2560
  %v3201 = vunpack.c.h.b16 %v2560
  %v3202 = vunpack.c.l.b16 %v2561
  %v3203 = vunpack.c.h.b16 %v2561
  %v3204 = vunpack.c.l.b16 %v2562
  %v3205 = vunpack.c.h.b16 %v2562
  %v3206 = vunpack.c.l.b16 %v2563
  %v3207 = vunpack.c.h.b16 %v2563
  %v3208 = vunpack.c.l.b16 %v2564
  %v3209 = vunpack.c.h.b16 %v2564
  %v3210 = vunpack.c.l.b16 %v2565
  %v3211 = vunpack.c.h.b16 %v2565
  %v3212 = vunpack.c.l.b16 %v2566
  %v3213 = vunpack.c.h.b16 %v2566
  %v3214 = vunpack.c.l.b16 %v2567
  %v3215 = vunpack.c.h.b16 %v2567
  %v3216 = vunpack.c.l.b16 %v2568
  %v3217 = vunpack.c.h.b16 %v2568
  %v3218 = vunpack.c.l.b16 %v2569
  %v3219 = vunpack.c.h.b16 %v2569
  %v3220 = vunpack.c.l.b16 %v2570
  %v3221 = vunpack.c.h.b16 %v2570
  %v3222 = vunpack.c.l.b16 %v2571
  %v3223 = vunpack.c.h.b16 %v2571
  %v3224 = vunpack.c.l.b16 %v2572
  %v3225 = vunpack.c.h.b16 %v2572
  %v3226 = vunpack.c.l.b16 %v2573
  %v3227 = vunpack.c.h.b16 %v2573
  %v3228 = vunpack.c.l.b16 %v2574
  %v3229 = vunpack.c.h.b16 %v2574
  %v3230 = vunpack.c.l.b16 %v2575
  %v3231 = vunpack.c.h.b16 %v2575
  %v3232 = vunpack.c.l.b16 %v2576
  %v3233 = vunpack.c.h.b16 %v2576
  %v3234 = vunpack.c.l.b16 %v2577
  %v3235 = vunpack.c.h.b16 %v2577
  %v3236 = vunpack.c.l.b16 %v2578
  %v3237 = vunpack.c.h.b16 %v2578
  %v3238 = vunpack.c.l.b16 %v2579
  %v3239 = vunpack.c.h.b16 %v2579
  %v3240 = vunpack.c.l.b16 %v2580
  %v3241 = vunpack.c.h.b16 %v2580
  %v3242 = vunpack.c.l.b16 %v2581
  %v3243 = vunpack.c.h.b16 %v2581
  %v3244 = vunpack.c.l.b16 %v2582
  %v3245 = vunpack.c.h.b16 %v2582
  %v3246 = vunpack.c.l.b16 %v2583
  %v3247 = vunpack.c.h.b16 %v2583
  %v3248 = vunpack.c.l.b16 %v2584
  %v3249 = vunpack.c.h.b16 %v2584
  %v3250 = vunpack.c.l.b16 %v2585
  %v3251 = vunpack.c.h.b16 %v2585
  %v3252 = vunpack.c.l.b16 %v2586
  %v3253 = vunpack.c.h.b16 %v2586
  %v3254 = vunpack.c.l.b16 %v2587
  %v3255 = vunpack.c.h.b16 %v2587
  %v3256 = vunpack.c.l.b16 %v2588
  %v3257 = vunpack.c.h.b16 %v2588
  %v3258 = vunpack.c.l.b16 %v2589
  %v3259 = vunpack.c.h.b16 %v2589
  %v3260 = vunpack.c.l.b16 %v2590
  %v3261 = vunpack.c.h.b16 %v2590
  %v3262 = vunpack.c.l.b16 %v2591
  %v3263 = vunpack.c.h.b16 %v2591
  %v3264 = vunpack.c.l.b16 %v2592
  %v3265 = vunpack.c.h.b16 %v2592
  %v3266 = vunpack.c.l.b16 %v2593
  %v3267 = vunpack.c.h.b16 %v2593
  %v3268 = vunpack.c.l.b16 %v2594
  %v3269 = vunpack.c.h.b16 %v2594
  %v3270 = vunpack.c.l.b16 %v2595
  %v3271 = vunpack.c.h.b16 %v2595
  %v3272 = vunpack.c.l.b16 %v2596
  %v3273 = vunpack.c.h.b16 %v2596
  %v3274 = vunpack.c.l.b16 %v2597
  %v3275 = vunpack.c.h.b16 %v2597
  %v3276 = vunpack.c.l.b16 %v2598
  %v3277 = vunpack.c.h.b16 %v2598
  %v3278 = vunpack.c.l.b16 %v2599
  %v3279 = vunpack.c.h.b16 %v2599
  %v3280 = vunpack.c.l.b16 %v2600
  %v3281 = vunpack.c.h.b16 %v2600
  %v3282 = vunpack.c.l.b16 %v2601
  %v3283 = vunpack.c.h.b16 %v2601
  %v3284 = vunpack.c.l.b16 %v2602
  %v3285 = vunpack.c.h.b16 %v2602
  %v3286 = vunpack.c.l.b16 %v2603
  %v3287 = vunpack.c.h.b16 %v2603
  %v3288 = vunpack.c.l.b16 %v2604
  %v3289 = vunpack.c.h.b16 %v2604
  %v3290 = vunpack.c.l.b16 %v2605
  %v3291 = vunpack.c.h.b16 %v2605
  %v3292 = vunpack.c.l.b16 %v2606
  %v3293 = vunpack.c.h.b16 %v2606
  %v3294 = vunpack.c.l.b16 %v2607
  %v3295 = vunpack.c.h.b16 %v2607
  %v3296 = vunpack.c.l.b16 %v2608
  %v3297 = vunpack.c.h.b16 %v2608
  %v3298 = vunpack.c.l.b16 %v2609
  %v3299 = vunpack.c.h.b16 %v2609
  %v3300 = vunpack.c.l.b16 %v2610
  %v3301 = vunpack.c.h.b16 %v2610
  %v3302 = vunpack.c.l.b16 %v2611
  %v3303 = vunpack.c.h.b16 %v2611
  %v3304 = vunpack.c.l.b16 %v2612
  %v3305 = vunpack.c.h.b16 %v2612
  %v3306 = vunpack.c.l.b16 %v2613
  %v3307 = vunpack.c.h.b16 %v2613
  %v3308 = vpack.c.b16 %v3184, %v3180
  %v3309 = vpack.c.b16 %v3185, %v3181
  %v3310 = vpack.c.b16 %v3186, %v3182
  %v3311 = vpack.c.b16 %v3187, %v3183
  %v3312 = vpack.c.b16 %v3192, %v3188
  %v3313 = vpack.c.b16 %v3193, %v3189
  %v3314 = vpack.c.b16 %v3194, %v3190
  %v3315 = vpack.c.b16 %v3195, %v3191
  %v3316 = vpack.c.b16 %v3200, %v3196
  %v3317 = vpack.c.b16 %v3201, %v3197
  %v3318 = vpack.c.b16 %v3202, %v3198
  %v3319 = vpack.c.b16 %v3203, %v3199
  %v3320 = vpack.c.b16 %v3208, %v3204
  %v3321 = vpack.c.b16 %v3209, %v3205
  %v3322 = vpack.c.b16 %v3210, %v3206
  %v3323 = vpack.c.b16 %v3211, %v3207
  %v3324 = vpack.c.b16 %v3216, %v3212
  %v3325 = vpack.c.b16 %v3217, %v3213
  %v3326 = vpack.c.b16 %v3218, %v3214
  %v3327 = vpack.c.b16 %v3219, %v3215
  %v3328 = vpack.c.b16 %v3224, %v3220
  %v3329 = vpack.c.b16 %v3225, %v3221
  %v3330 = vpack.c.b16 %v3226, %v3222
  %v3331 = vpack.c.b16 %v3227, %v3223
  %v3332 = vpack.c.b16 %v3232, %v3228
  %v3333 = vpack.c.b16 %v3233, %v3229
  %v3334 = vpack.c.b16 %v3234, %v3230
  %v3335 = vpack.c.b16 %v3235, %v3231
  %v3336 = vpack.c.b16 %v3240, %v3236
  %v3337 = vpack.c.b16 %v3241, %v3237
  %v3338 = vpack.c.b16 %v3242, %v3238
  %v3339 = vpack.c.b16 %v3243, %v3239
  %v3340 = vpack.c.b16 %v3248, %v3244
  %v3341 = vpack.c.b16 %v3249, %v3245
  %v3342 = vpack.c.b16 %v3250, %v3246
  %v3343 = vpack.c.b16 %v3251, %v3247
  %v3344 = vpack.c.b16 %v3256, %v3252
  %v3345 = vpack.c.b16 %v3257, %v3253
  %v3346 = vpack.c.b16 %v3258, %v3254
  %v3347 = vpack.c.b16 %v3259, %v3255
  %v3348 = vpack.c.b16 %v3264, %v3260
  %v3349 = vpack.c.b16 %v3265, %v3261
  %v3350 = vpack.c.b16 %v3266, %v3262
  %v3351 = vpack.c.b16 %v3267, %v3263
  %v3352 = vpack.c.b16 %v3272, %v3268
  %v3353 = vpack.c.b16 %v3273, %v3269
  %v3354 = vpack.c.b16 %v3274, %v3270
  %v3355 = vpack.c.b16 %v3275, %v3271
  %v3356 = vpack.c.b16 %v3280, %v3276
  %v3357 = vpack.c.b16 %v3281, %v3277
  %v3358 = vpack.c.b16 %v3282, %v3278
  %v3359 = vpack.c.b16 %v3283, %v3279
  %v3360 = vpack.c.b16 %v3288, %v3284
  %v3361 = vpack.c.b16 %v3289, %v3285
  %v3362 = vpack.c.b16 %v3290, %v3286
  %v3363 = vpack.c.b16 %v3291, %v3287
  %v3364 = vpack.c.b16 %v3296, %v3292
  %v3365 = vpack.c.b16 %v3297, %v3293
  %v3366 = vpack.c.b16 %v3298, %v3294
  %v3367 = vpack.c.b16 %v3299, %v3295
  %v3368 = vpack.c.b16 %v3304, %v3300
  %v3369 = vpack.c.b16 %v3305, %v3301
  %v3370 = vpack.c.b16 %v3306, %v3302
  %v3371 = vpack.c.b16 %v3307, %v3303
  %3436 = vmatprep.subr.bf16.mxu0 %v3309
  %3437 = vmatpush1.bf16.msra.mxu0 %v3308
  %3438 = vmatprep.subr.bf16.mxu0 %v3313
  %3439 = vmatpush1.bf16.msra.mxu0 %v3312
  %3440 = vmatprep.subr.bf16.mxu0 %v3317
  %3441 = vmatpush1.bf16.msra.mxu0 %v3316
  %3442 = vmatprep.subr.bf16.mxu0 %v3321
  %3443 = vmatpush1.bf16.msra.mxu0 %v3320
  %3444 = vmatprep.subr.bf16.mxu0 %v3325
  %3445 = vmatpush1.bf16.msra.mxu0 %v3324
  %3446 = vmatprep.subr.bf16.mxu0 %v3329
  %3447 = vmatpush1.bf16.msra.mxu0 %v3328
  %3448 = vmatprep.subr.bf16.mxu0 %v3333
  %3449 = vmatpush1.bf16.msra.mxu0 %v3332
  %3450 = vmatprep.subr.bf16.mxu0 %v3337
  %3451 = vmatpush1.bf16.msra.mxu0 %v3336
  %3452 = vmatprep.subr.bf16.mxu0 %v3341
  %3453 = vmatpush1.bf16.msra.mxu0 %v3340
  %3454 = vmatprep.subr.bf16.mxu0 %v3345
  %3455 = vmatpush1.bf16.msra.mxu0 %v3344
  %3456 = vmatprep.subr.bf16.mxu0 %v3349
  %3457 = vmatpush1.bf16.msra.mxu0 %v3348
  %3458 = vmatprep.subr.bf16.mxu0 %v3353
  %3459 = vmatpush1.bf16.msra.mxu0 %v3352
  %3460 = vmatprep.subr.bf16.mxu0 %v3357
  %3461 = vmatpush1.bf16.msra.mxu0 %v3356
  %3462 = vmatprep.subr.bf16.mxu0 %v3361
  %3463 = vmatpush1.bf16.msra.mxu0 %v3360
  %3464 = vmatprep.subr.bf16.mxu0 %v3365
  %3465 = vmatpush1.bf16.msra.mxu0 %v3364
  %3466 = vmatprep.subr.bf16.mxu0 %v3369
  %3467 = vmatpush1.bf16.msra.mxu0 %v3368
  %3468 = vmatprep.mubr.bf16.mxu0 %v2548
  %3469 = vmatmul.mubr.bf16.gmra.mrb[0].mxu0 %v2547
  %v3470 = vpop.f32.mrb[0].mxu0
  %v3471 = vadd.f32 %v3108, %v3470
  %v3472 = vpop.f32.mrb[0].mxu0
  %v3473 = vadd.f32 %v3109, %v3472
  %v3474 = vpop.f32.mrb[0].mxu0
  %v3475 = vadd.f32 %v3112, %v3474
  %v3476 = vpop.f32.mrb[0].mxu0
  %v3477 = vadd.f32 %v3113, %v3476
  %3478 = vdwg.mxu0
  %3479 = vmatprep.subr.bf16.mxu0 %v3311
  %3480 = vmatpush1.bf16.msra.mxu0 %v3310
  %3481 = vmatprep.subr.bf16.mxu0 %v3315
  %3482 = vmatpush1.bf16.msra.mxu0 %v3314
  %3483 = vmatprep.subr.bf16.mxu0 %v3319
  %3484 = vmatpush1.bf16.msra.mxu0 %v3318
  %3485 = vmatprep.subr.bf16.mxu0 %v3323
  %3486 = vmatpush1.bf16.msra.mxu0 %v3322
  %3487 = vmatprep.subr.bf16.mxu0 %v3327
  %3488 = vmatpush1.bf16.msra.mxu0 %v3326
  %3489 = vmatprep.subr.bf16.mxu0 %v3331
  %3490 = vmatpush1.bf16.msra.mxu0 %v3330
  %3491 = vmatprep.subr.bf16.mxu0 %v3335
  %3492 = vmatpush1.bf16.msra.mxu0 %v3334
  %3493 = vmatprep.subr.bf16.mxu0 %v3339
  %3494 = vmatpush1.bf16.msra.mxu0 %v3338
  %3495 = vmatprep.subr.bf16.mxu0 %v3343
  %3496 = vmatpush1.bf16.msra.mxu0 %v3342
  %3497 = vmatprep.subr.bf16.mxu0 %v3347
  %3498 = vmatpush1.bf16.msra.mxu0 %v3346
  %3499 = vmatprep.subr.bf16.mxu0 %v3351
  %3500 = vmatpush1.bf16.msra.mxu0 %v3350
  %3501 = vmatprep.subr.bf16.mxu0 %v3355
  %3502 = vmatpush1.bf16.msra.mxu0 %v3354
  %3503 = vmatprep.subr.bf16.mxu0 %v3359
  %3504 = vmatpush1.bf16.msra.mxu0 %v3358
  %3505 = vmatprep.subr.bf16.mxu0 %v3363
  %3506 = vmatpush1.bf16.msra.mxu0 %v3362
  %3507 = vmatprep.subr.bf16.mxu0 %v3367
  %3508 = vmatpush1.bf16.msra.mxu0 %v3366
  %3509 = vmatprep.subr.bf16.mxu0 %v3371
  %3510 = vmatpush1.bf16.msra.mxu0 %v3370
  %3511 = vmatprep.mubr.bf16.mxu0 %v2548
  %3512 = vmatmul.mubr.bf16.gmra.mrb[0].mxu0 %v2547
  %v3513 = vpop.f32.mrb[0].mxu0
  %v3514 = vadd.f32 %v3110, %v3513
  %v3515 = vpop.f32.mrb[0].mxu0
  %v3516 = vadd.f32 %v3111, %v3515
  %v3517 = vpop.f32.mrb[0].mxu0
  %v3518 = vadd.f32 %v3114, %v3517
  %v3519 = vpop.f32.mrb[0].mxu0
  %v3520 = vadd.f32 %v3115, %v3519
  %3521 = vdwg.mxu0
  %s3522 = scalar_lea.vmem %s5, 2560
  %v3523 = vld [vmem:[%s3522] sm:$0xff]
  %v3524 = vld [vmem:[%s3522 + $0x8] sm:$0xff]
  %v3525 = vld [vmem:[%s3522 + $0x10] sm:$0xff]
  %v3526 = vld [vmem:[%s3522 + $0x18] sm:$0xff]
  %v3527 = vld [vmem:[%s3522 + $0x20] sm:$0xff]
  %v3528 = vld [vmem:[%s3522 + $0x28] sm:$0xff]
  %v3529 = vld [vmem:[%s3522 + $0x30] sm:$0xff]
  %v3530 = vld [vmem:[%s3522 + $0x38] sm:$0xff]
  %v3531 = vld [vmem:[%s3522 + $0x40] sm:$0xff]
  %v3532 = vld [vmem:[%s3522 + $0x48] sm:$0xff]
  %v3533 = vld [vmem:[%s3522 + $0x50] sm:$0xff]
  %v3534 = vld [vmem:[%s3522 + $0x58] sm:$0xff]
  %v3535 = vld [vmem:[%s3522 + $0x60] sm:$0xff]
  %v3536 = vld [vmem:[%s3522 + $0x68] sm:$0xff]
  %v3537 = vld [vmem:[%s3522 + $0x70] sm:$0xff]
  %v3538 = vld [vmem:[%s3522 + $0x78] sm:$0xff]
  %v3539 = vld [vmem:[%s3522 + $0x80] sm:$0xff]
  %v3540 = vld [vmem:[%s3522 + $0x88] sm:$0xff]
  %v3541 = vld [vmem:[%s3522 + $0x90] sm:$0xff]
  %v3542 = vld [vmem:[%s3522 + $0x98] sm:$0xff]
  %v3543 = vld [vmem:[%s3522 + $0xa0] sm:$0xff]
  %v3544 = vld [vmem:[%s3522 + $0xa8] sm:$0xff]
  %v3545 = vld [vmem:[%s3522 + $0xb0] sm:$0xff]
  %v3546 = vld [vmem:[%s3522 + $0xb8] sm:$0xff]
  %v3547 = vld [vmem:[%s3522 + $0xc0] sm:$0xff]
  %v3548 = vld [vmem:[%s3522 + $0xc8] sm:$0xff]
  %v3549 = vld [vmem:[%s3522 + $0xd0] sm:$0xff]
  %v3550 = vld [vmem:[%s3522 + $0xd8] sm:$0xff]
  %v3551 = vld [vmem:[%s3522 + $0xe0] sm:$0xff]
  %v3552 = vld [vmem:[%s3522 + $0xe8] sm:$0xff]
  %v3553 = vld [vmem:[%s3522 + $0xf0] sm:$0xff]
  %v3554 = vld [vmem:[%s3522 + $0xf8] sm:$0xff]
  %v3555 = vld [vmem:[%s3522 + $0x100] sm:$0xff]
  %v3556 = vld [vmem:[%s3522 + $0x108] sm:$0xff]
  %v3557 = vld [vmem:[%s3522 + $0x110] sm:$0xff]
  %v3558 = vld [vmem:[%s3522 + $0x118] sm:$0xff]
  %v3559 = vld [vmem:[%s3522 + $0x120] sm:$0xff]
  %v3560 = vld [vmem:[%s3522 + $0x128] sm:$0xff]
  %v3561 = vld [vmem:[%s3522 + $0x130] sm:$0xff]
  %v3562 = vld [vmem:[%s3522 + $0x138] sm:$0xff]
  %v3563 = vld [vmem:[%s3522 + $0x140] sm:$0xff]
  %v3564 = vld [vmem:[%s3522 + $0x148] sm:$0xff]
  %v3565 = vld [vmem:[%s3522 + $0x150] sm:$0xff]
  %v3566 = vld [vmem:[%s3522 + $0x158] sm:$0xff]
  %v3567 = vld [vmem:[%s3522 + $0x160] sm:$0xff]
  %v3568 = vld [vmem:[%s3522 + $0x168] sm:$0xff]
  %v3569 = vld [vmem:[%s3522 + $0x170] sm:$0xff]
  %v3570 = vld [vmem:[%s3522 + $0x178] sm:$0xff]
  %v3571 = vld [vmem:[%s3522 + $0x180] sm:$0xff]
  %v3572 = vld [vmem:[%s3522 + $0x188] sm:$0xff]
  %v3573 = vld [vmem:[%s3522 + $0x190] sm:$0xff]
  %v3574 = vld [vmem:[%s3522 + $0x198] sm:$0xff]
  %v3575 = vld [vmem:[%s3522 + $0x1a0] sm:$0xff]
  %v3576 = vld [vmem:[%s3522 + $0x1a8] sm:$0xff]
  %v3577 = vld [vmem:[%s3522 + $0x1b0] sm:$0xff]
  %v3578 = vld [vmem:[%s3522 + $0x1b8] sm:$0xff]
  %v3579 = vld [vmem:[%s3522 + $0x1c0] sm:$0xff]
  %v3580 = vld [vmem:[%s3522 + $0x1c8] sm:$0xff]
  %v3581 = vld [vmem:[%s3522 + $0x1d0] sm:$0xff]
  %v3582 = vld [vmem:[%s3522 + $0x1d8] sm:$0xff]
  %v3583 = vld [vmem:[%s3522 + $0x1e0] sm:$0xff]
  %v3584 = vld [vmem:[%s3522 + $0x1e8] sm:$0xff]
  %v3585 = vld [vmem:[%s3522 + $0x1f0] sm:$0xff]
  %v3586 = vld [vmem:[%s3522 + $0x1f8] sm:$0xff]
  %v3651 = vunpack.c.l.b16 %v3523
  %v3652 = vunpack.c.h.b16 %v3523
  %v3653 = vunpack.c.l.b16 %v3524
  %v3654 = vunpack.c.h.b16 %v3524
  %v3655 = vunpack.c.l.b16 %v3525
  %v3656 = vunpack.c.h.b16 %v3525
  %v3657 = vunpack.c.l.b16 %v3526
  %v3658 = vunpack.c.h.b16 %v3526
  %v3659 = vunpack.c.l.b16 %v3527
  %v3660 = vunpack.c.h.b16 %v3527
  %v3661 = vunpack.c.l.b16 %v3528
  %v3662 = vunpack.c.h.b16 %v3528
  %v3663 = vunpack.c.l.b16 %v3529
  %v3664 = vunpack.c.h.b16 %v3529
  %v3665 = vunpack.c.l.b16 %v3530
  %v3666 = vunpack.c.h.b16 %v3530
  %v3667 = vunpack.c.l.b16 %v3531
  %v3668 = vunpack.c.h.b16 %v3531
  %v3669 = vunpack.c.l.b16 %v3532
  %v3670 = vunpack.c.h.b16 %v3532
  %v3671 = vunpack.c.l.b16 %v3533
  %v3672 = vunpack.c.h.b16 %v3533
  %v3673 = vunpack.c.l.b16 %v3534
  %v3674 = vunpack.c.h.b16 %v3534
  %v3675 = vunpack.c.l.b16 %v3535
  %v3676 = vunpack.c.h.b16 %v3535
  %v3677 = vunpack.c.l.b16 %v3536
  %v3678 = vunpack.c.h.b16 %v3536
  %v3679 = vunpack.c.l.b16 %v3537
  %v3680 = vunpack.c.h.b16 %v3537
  %v3681 = vunpack.c.l.b16 %v3538
  %v3682 = vunpack.c.h.b16 %v3538
  %v3683 = vunpack.c.l.b16 %v3539
  %v3684 = vunpack.c.h.b16 %v3539
  %v3685 = vunpack.c.l.b16 %v3540
  %v3686 = vunpack.c.h.b16 %v3540
  %v3687 = vunpack.c.l.b16 %v3541
  %v3688 = vunpack.c.h.b16 %v3541
  %v3689 = vunpack.c.l.b16 %v3542
  %v3690 = vunpack.c.h.b16 %v3542
  %v3691 = vunpack.c.l.b16 %v3543
  %v3692 = vunpack.c.h.b16 %v3543
  %v3693 = vunpack.c.l.b16 %v3544
  %v3694 = vunpack.c.h.b16 %v3544
  %v3695 = vunpack.c.l.b16 %v3545
  %v3696 = vunpack.c.h.b16 %v3545
  %v3697 = vunpack.c.l.b16 %v3546
  %v3698 = vunpack.c.h.b16 %v3546
  %v3699 = vunpack.c.l.b16 %v3547
  %v3700 = vunpack.c.h.b16 %v3547
  %v3701 = vunpack.c.l.b16 %v3548
  %v3702 = vunpack.c.h.b16 %v3548
  %v3703 = vunpack.c.l.b16 %v3549
  %v3704 = vunpack.c.h.b16 %v3549
  %v3705 = vunpack.c.l.b16 %v3550
  %v3706 = vunpack.c.h.b16 %v3550
  %v3707 = vunpack.c.l.b16 %v3551
  %v3708 = vunpack.c.h.b16 %v3551
  %v3709 = vunpack.c.l.b16 %v3552
  %v3710 = vunpack.c.h.b16 %v3552
  %v3711 = vunpack.c.l.b16 %v3553
  %v3712 = vunpack.c.h.b16 %v3553
  %v3713 = vunpack.c.l.b16 %v3554
  %v3714 = vunpack.c.h.b16 %v3554
  %v3715 = vunpack.c.l.b16 %v3555
  %v3716 = vunpack.c.h.b16 %v3555
  %v3717 = vunpack.c.l.b16 %v3556
  %v3718 = vunpack.c.h.b16 %v3556
  %v3719 = vunpack.c.l.b16 %v3557
  %v3720 = vunpack.c.h.b16 %v3557
  %v3721 = vunpack.c.l.b16 %v3558
  %v3722 = vunpack.c.h.b16 %v3558
  %v3723 = vunpack.c.l.b16 %v3559
  %v3724 = vunpack.c.h.b16 %v3559
  %v3725 = vunpack.c.l.b16 %v3560
  %v3726 = vunpack.c.h.b16 %v3560
  %v3727 = vunpack.c.l.b16 %v3561
  %v3728 = vunpack.c.h.b16 %v3561
  %v3729 = vunpack.c.l.b16 %v3562
  %v3730 = vunpack.c.h.b16 %v3562
  %v3731 = vunpack.c.l.b16 %v3563
  %v3732 = vunpack.c.h.b16 %v3563
  %v3733 = vunpack.c.l.b16 %v3564
  %v3734 = vunpack.c.h.b16 %v3564
  %v3735 = vunpack.c.l.b16 %v3565
  %v3736 = vunpack.c.h.b16 %v3565
  %v3737 = vunpack.c.l.b16 %v3566
  %v3738 = vunpack.c.h.b16 %v3566
  %v3739 = vunpack.c.l.b16 %v3567
  %v3740 = vunpack.c.h.b16 %v3567
  %v3741 = vunpack.c.l.b16 %v3568
  %v3742 = vunpack.c.h.b16 %v3568
  %v3743 = vunpack.c.l.b16 %v3569
  %v3744 = vunpack.c.h.b16 %v3569
  %v3745 = vunpack.c.l.b16 %v3570
  %v3746 = vunpack.c.h.b16 %v3570
  %v3747 = vunpack.c.l.b16 %v3571
  %v3748 = vunpack.c.h.b16 %v3571
  %v3749 = vunpack.c.l.b16 %v3572
  %v3750 = vunpack.c.h.b16 %v3572
  %v3751 = vunpack.c.l.b16 %v3573
  %v3752 = vunpack.c.h.b16 %v3573
  %v3753 = vunpack.c.l.b16 %v3574
  %v3754 = vunpack.c.h.b16 %v3574
  %v3755 = vunpack.c.l.b16 %v3575
  %v3756 = vunpack.c.h.b16 %v3575
  %v3757 = vunpack.c.l.b16 %v3576
  %v3758 = vunpack.c.h.b16 %v3576
  %v3759 = vunpack.c.l.b16 %v3577
  %v3760 = vunpack.c.h.b16 %v3577
  %v3761 = vunpack.c.l.b16 %v3578
  %v3762 = vunpack.c.h.b16 %v3578
  %v3763 = vunpack.c.l.b16 %v3579
  %v3764 = vunpack.c.h.b16 %v3579
  %v3765 = vunpack.c.l.b16 %v3580
  %v3766 = vunpack.c.h.b16 %v3580
  %v3767 = vunpack.c.l.b16 %v3581
  %v3768 = vunpack.c.h.b16 %v3581
  %v3769 = vunpack.c.l.b16 %v3582
  %v3770 = vunpack.c.h.b16 %v3582
  %v3771 = vunpack.c.l.b16 %v3583
  %v3772 = vunpack.c.h.b16 %v3583
  %v3773 = vunpack.c.l.b16 %v3584
  %v3774 = vunpack.c.h.b16 %v3584
  %v3775 = vunpack.c.l.b16 %v3585
  %v3776 = vunpack.c.h.b16 %v3585
  %v3777 = vunpack.c.l.b16 %v3586
  %v3778 = vunpack.c.h.b16 %v3586
  %v3779 = vpack.c.b16 %v3655, %v3651
  %v3780 = vpack.c.b16 %v3656, %v3652
  %v3781 = vpack.c.b16 %v3657, %v3653
  %v3782 = vpack.c.b16 %v3658, %v3654
  %v3783 = vpack.c.b16 %v3663, %v3659
  %v3784 = vpack.c.b16 %v3664, %v3660
  %v3785 = vpack.c.b16 %v3665, %v3661
  %v3786 = vpack.c.b16 %v3666, %v3662
  %v3787 = vpack.c.b16 %v3671, %v3667
  %v3788 = vpack.c.b16 %v3672, %v3668
  %v3789 = vpack.c.b16 %v3673, %v3669
  %v3790 = vpack.c.b16 %v3674, %v3670
  %v3791 = vpack.c.b16 %v3679, %v3675
  %v3792 = vpack.c.b16 %v3680, %v3676
  %v3793 = vpack.c.b16 %v3681, %v3677
  %v3794 = vpack.c.b16 %v3682, %v3678
  %v3795 = vpack.c.b16 %v3687, %v3683
  %v3796 = vpack.c.b16 %v3688, %v3684
  %v3797 = vpack.c.b16 %v3689, %v3685
  %v3798 = vpack.c.b16 %v3690, %v3686
  %v3799 = vpack.c.b16 %v3695, %v3691
  %v3800 = vpack.c.b16 %v3696, %v3692
  %v3801 = vpack.c.b16 %v3697, %v3693
  %v3802 = vpack.c.b16 %v3698, %v3694
  %v3803 = vpack.c.b16 %v3703, %v3699
  %v3804 = vpack.c.b16 %v3704, %v3700
  %v3805 = vpack.c.b16 %v3705, %v3701
  %v3806 = vpack.c.b16 %v3706, %v3702
  %v3807 = vpack.c.b16 %v3711, %v3707
  %v3808 = vpack.c.b16 %v3712, %v3708
  %v3809 = vpack.c.b16 %v3713, %v3709
  %v3810 = vpack.c.b16 %v3714, %v3710
  %v3811 = vpack.c.b16 %v3719, %v3715
  %v3812 = vpack.c.b16 %v3720, %v3716
  %v3813 = vpack.c.b16 %v3721, %v3717
  %v3814 = vpack.c.b16 %v3722, %v3718
  %v3815 = vpack.c.b16 %v3727, %v3723
  %v3816 = vpack.c.b16 %v3728, %v3724
  %v3817 = vpack.c.b16 %v3729, %v3725
  %v3818 = vpack.c.b16 %v3730, %v3726
  %v3819 = vpack.c.b16 %v3735, %v3731
  %v3820 = vpack.c.b16 %v3736, %v3732
  %v3821 = vpack.c.b16 %v3737, %v3733
  %v3822 = vpack.c.b16 %v3738, %v3734
  %v3823 = vpack.c.b16 %v3743, %v3739
  %v3824 = vpack.c.b16 %v3744, %v3740
  %v3825 = vpack.c.b16 %v3745, %v3741
  %v3826 = vpack.c.b16 %v3746, %v3742
  %v3827 = vpack.c.b16 %v3751, %v3747
  %v3828 = vpack.c.b16 %v3752, %v3748
  %v3829 = vpack.c.b16 %v3753, %v3749
  %v3830 = vpack.c.b16 %v3754, %v3750
  %v3831 = vpack.c.b16 %v3759, %v3755
  %v3832 = vpack.c.b16 %v3760, %v3756
  %v3833 = vpack.c.b16 %v3761, %v3757
  %v3834 = vpack.c.b16 %v3762, %v3758
  %v3835 = vpack.c.b16 %v3767, %v3763
  %v3836 = vpack.c.b16 %v3768, %v3764
  %v3837 = vpack.c.b16 %v3769, %v3765
  %v3838 = vpack.c.b16 %v3770, %v3766
  %v3839 = vpack.c.b16 %v3775, %v3771
  %v3840 = vpack.c.b16 %v3776, %v3772
  %v3841 = vpack.c.b16 %v3777, %v3773
  %v3842 = vpack.c.b16 %v3778, %v3774
  %3907 = vmatprep.subr.bf16.mxu0 %v3780
  %3908 = vmatpush1.bf16.msra.mxu0 %v3779
  %3909 = vmatprep.subr.bf16.mxu0 %v3784
  %3910 = vmatpush1.bf16.msra.mxu0 %v3783
  %3911 = vmatprep.subr.bf16.mxu0 %v3788
  %3912 = vmatpush1.bf16.msra.mxu0 %v3787
  %3913 = vmatprep.subr.bf16.mxu0 %v3792
  %3914 = vmatpush1.bf16.msra.mxu0 %v3791
  %3915 = vmatprep.subr.bf16.mxu0 %v3796
  %3916 = vmatpush1.bf16.msra.mxu0 %v3795
  %3917 = vmatprep.subr.bf16.mxu0 %v3800
  %3918 = vmatpush1.bf16.msra.mxu0 %v3799
  %3919 = vmatprep.subr.bf16.mxu0 %v3804
  %3920 = vmatpush1.bf16.msra.mxu0 %v3803
  %3921 = vmatprep.subr.bf16.mxu0 %v3808
  %3922 = vmatpush1.bf16.msra.mxu0 %v3807
  %3923 = vmatprep.subr.bf16.mxu0 %v3812
  %3924 = vmatpush1.bf16.msra.mxu0 %v3811
  %3925 = vmatprep.subr.bf16.mxu0 %v3816
  %3926 = vmatpush1.bf16.msra.mxu0 %v3815
  %3927 = vmatprep.subr.bf16.mxu0 %v3820
  %3928 = vmatpush1.bf16.msra.mxu0 %v3819
  %3929 = vmatprep.subr.bf16.mxu0 %v3824
  %3930 = vmatpush1.bf16.msra.mxu0 %v3823
  %3931 = vmatprep.subr.bf16.mxu0 %v3828
  %3932 = vmatpush1.bf16.msra.mxu0 %v3827
  %3933 = vmatprep.subr.bf16.mxu0 %v3832
  %3934 = vmatpush1.bf16.msra.mxu0 %v3831
  %3935 = vmatprep.subr.bf16.mxu0 %v3836
  %3936 = vmatpush1.bf16.msra.mxu0 %v3835
  %3937 = vmatprep.subr.bf16.mxu0 %v3840
  %3938 = vmatpush1.bf16.msra.mxu0 %v3839
  %3939 = vmatprep.mubr.bf16.mxu0 %v2548
  %3940 = vmatmul.mubr.bf16.gmra.mrb[0].mxu0 %v2547
  %v3941 = vpop.f32.mrb[0].mxu0
  %v3942 = vadd.f32 0.0, %v3941
  %v3943 = vpop.f32.mrb[0].mxu0
  %v3944 = vadd.f32 0.0, %v3943
  %v3945 = vpop.f32.mrb[0].mxu0
  %v3946 = vadd.f32 0.0, %v3945
  %v3947 = vpop.f32.mrb[0].mxu0
  %v3948 = vadd.f32 0.0, %v3947
  %3949 = vdwg.mxu0
  %3950 = vmatprep.subr.bf16.mxu0 %v3782
  %3951 = vmatpush1.bf16.msra.mxu0 %v3781
  %3952 = vmatprep.subr.bf16.mxu0 %v3786
  %3953 = vmatpush1.bf16.msra.mxu0 %v3785
  %3954 = vmatprep.subr.bf16.mxu0 %v3790
  %3955 = vmatpush1.bf16.msra.mxu0 %v3789
  %3956 = vmatprep.subr.bf16.mxu0 %v3794
  %3957 = vmatpush1.bf16.msra.mxu0 %v3793
  %3958 = vmatprep.subr.bf16.mxu0 %v3798
  %3959 = vmatpush1.bf16.msra.mxu0 %v3797
  %3960 = vmatprep.subr.bf16.mxu0 %v3802
  %3961 = vmatpush1.bf16.msra.mxu0 %v3801
  %3962 = vmatprep.subr.bf16.mxu0 %v3806
  %3963 = vmatpush1.bf16.msra.mxu0 %v3805
  %3964 = vmatprep.subr.bf16.mxu0 %v3810
  %3965 = vmatpush1.bf16.msra.mxu0 %v3809
  %3966 = vmatprep.subr.bf16.mxu0 %v3814
  %3967 = vmatpush1.bf16.msra.mxu0 %v3813
  %3968 = vmatprep.subr.bf16.mxu0 %v3818
  %3969 = vmatpush1.bf16.msra.mxu0 %v3817
  %3970 = vmatprep.subr.bf16.mxu0 %v3822
  %3971 = vmatpush1.bf16.msra.mxu0 %v3821
  %3972 = vmatprep.subr.bf16.mxu0 %v3826
  %3973 = vmatpush1.bf16.msra.mxu0 %v3825
  %3974 = vmatprep.subr.bf16.mxu0 %v3830
  %3975 = vmatpush1.bf16.msra.mxu0 %v3829
  %3976 = vmatprep.subr.bf16.mxu0 %v3834
  %3977 = vmatpush1.bf16.msra.mxu0 %v3833
  %3978 = vmatprep.subr.bf16.mxu0 %v3838
  %3979 = vmatpush1.bf16.msra.mxu0 %v3837
  %3980 = vmatprep.subr.bf16.mxu0 %v3842
  %3981 = vmatpush1.bf16.msra.mxu0 %v3841
  %3982 = vmatprep.mubr.bf16.mxu0 %v2548
  %3983 = vmatmul.mubr.bf16.gmra.mrb[0].mxu0 %v2547
  %v3984 = vpop.f32.mrb[0].mxu0
  %v3985 = vadd.f32 0.0, %v3984
  %v3986 = vpop.f32.mrb[0].mxu0
  %v3987 = vadd.f32 0.0, %v3986
  %v3988 = vpop.f32.mrb[0].mxu0
  %v3989 = vadd.f32 0.0, %v3988
  %v3990 = vpop.f32.mrb[0].mxu0
  %v3991 = vadd.f32 0.0, %v3990
  %3992 = vdwg.mxu0
  %v3993 = vrot.slane %v3942, 2
  %v3994 = vrot.slane %v3944, 2
  %v3995 = vrot.slane %v3985, 2
  %v3996 = vrot.slane %v3987, 2
  %v3997 = vrot.slane %v3946, 2
  %v3998 = vrot.slane %v3948, 2
  %v3999 = vrot.slane %v3989, 2
  %v4000 = vrot.slane %v3991, 2
  %vm4001 = vcmp.lt.s32.totalorder %v54, 6
  %v4002 = vsel %vm4001, %v3993, %v3997
  %v4003 = vsel %vm4001, %v3994, %v3998
  %v4004 = vsel %vm4001, %v3995, %v3999
  %v4005 = vsel %vm4001, %v3996, %v4000
  %v4006 = vsel %vm4001, %v3997, %v3993
  %v4007 = vsel %vm4001, %v3998, %v3994
  %v4008 = vsel %vm4001, %v3999, %v3995
  %v4009 = vsel %vm4001, %v4000, %v3996
  %vm4010 = vcmp.lt.s32.totalorder %v78, 6
  %vm4011 = vcmp.lt.s32.totalorder %v79, 6
  %v4012 = vsel %vm4010, 1, 0
  %v4013 = vsel %vm4011, 1, 0
  %vm4014 = vcmp.eq.s32.totalorder %v4012, 1
  %vm4015 = vcmp.eq.s32.totalorder %v4013, 1
  %v4016 = vsel %vm4014, %v4002, 0.0
  %v4017 = vsel %vm4014, %v4003, 0.0
  %v4018 = vsel %vm4014, %v4004, 0.0
  %v4019 = vsel %vm4014, %v4005, 0.0
  %v4020 = vsel %vm4015, %v4006, 0.0
  %v4021 = vsel %vm4015, %v4007, 0.0
  %v4022 = vsel %vm4015, %v4008, 0.0
  %v4023 = vsel %vm4015, %v4009, 0.0
  %v4024 = vadd.f32 %v3471, %v4016
  %v4025 = vadd.f32 %v3473, %v4017
  %v4026 = vadd.f32 %v3514, %v4018
  %v4027 = vadd.f32 %v3516, %v4019
  %v4028 = vadd.f32 %v3475, %v4020
  %v4029 = vadd.f32 %v3477, %v4021
  %v4030 = vadd.f32 %v3518, %v4022
  %v4031 = vadd.f32 %v3520, %v4023
  %s4032 = scalar_lea.vmem %s7, 4
  %v4033 = vld [vmem:[%s4032] sm:$0xf]
  %v4036 = vunpack.c.l.s4 1966171168
  %v4037 = vunpack.c.0.s8 %v4036
  %v4038 = vlaneseq
  %v4039 = vshrl.u32 %v4038, 7
  %v4040 = vsub.s32 %v4037, %v4039
  %v4041 = vrot.slane %v4033, %v4040
  %v4042 = vcombine.high %v4041, %v4041
  %v4044 = vunpack.c.l.s4 1966171168
  %v4045 = vunpack.c.0.s8 %v4044
  %v4046 = vlaneseq
  %v4047 = vshrl.u32 %v4046, 7
  %v4048 = vsub.s32 %v4045, %v4047
  %v4049 = vrot.slane %v4041, %v4048
  %v4051 = vunpack.c.l.s4 1966171168
  %v4052 = vunpack.c.0.s8 %v4051
  %v4053 = vlaneseq
  %v4054 = vshrl.u32 %v4053, 7
  %v4055 = vsub.s32 %v4052, %v4054
  %v4056 = vrot.slane %v4042, %v4055
  %v4057 = vcombine.high %v4049, %v4049
  %v4058 = vcombine.high %v4056, %v4056
  %v4060 = vsel %vm116, %v4049, 0
  %v4063 = vsel %vm116, %v4056, 0
  %v4066 = vsel %vm116, %v4057, 0
  %v4069 = vsel %vm116, %v4058, 0
  %4071 = vmatprep.subr.bf16.mxu0 %v4063
  %4072 = vmatpush1.bf16.msra.mxu0 %v4060
  %4073 = vmatprep.subr.bf16.mxu0 0
  %4074 = vmatpush1.bf16.msra.mxu0 0
  %4075 = vmatprep.subr.bf16.mxu0 0
  %4076 = vmatpush1.bf16.msra.mxu0 0
  %4077 = vmatprep.subr.bf16.mxu0 0
  %4078 = vmatpush1.bf16.msra.mxu0 0
  %4079 = vmatprep.subr.bf16.mxu0 0
  %4080 = vmatpush1.bf16.msra.mxu0 0
  %4081 = vmatprep.subr.bf16.mxu0 0
  %4082 = vmatpush1.bf16.msra.mxu0 0
  %4083 = vmatprep.subr.bf16.mxu0 0
  %4084 = vmatpush1.bf16.msra.mxu0 0
  %4085 = vmatprep.subr.bf16.mxu0 0
  %4086 = vmatpush1.bf16.msra.mxu0 0
  %4087 = vmatprep.subr.bf16.mxu0 0
  %4088 = vmatpush1.bf16.msra.mxu0 0
  %4089 = vmatprep.subr.bf16.mxu0 0
  %4090 = vmatpush1.bf16.msra.mxu0 0
  %4091 = vmatprep.subr.bf16.mxu0 0
  %4092 = vmatpush1.bf16.msra.mxu0 0
  %4093 = vmatprep.subr.bf16.mxu0 0
  %4094 = vmatpush1.bf16.msra.mxu0 0
  %4095 = vmatprep.subr.bf16.mxu0 0
  %4096 = vmatpush1.bf16.msra.mxu0 0
  %4097 = vmatprep.subr.bf16.mxu0 0
  %4098 = vmatpush1.bf16.msra.mxu0 0
  %4099 = vmatprep.subr.bf16.mxu0 0
  %4100 = vmatpush1.bf16.msra.mxu0 0
  %4101 = vmatprep.subr.bf16.mxu0 0
  %4102 = vmatpush1.bf16.msra.mxu0 0
  %4103 = vmatprep.mubr.bf16.mxu0 0
  %4104 = vmatmul.mubr.bf16.gmra.mrb[0].mxu0 %v1871
  %v4105 = vpop.f32.mrb[0].mxu0
  %v4106 = vadd.f32 0.0, %v4105
  %v4107 = vpop.f32.mrb[0].mxu0
  %v4108 = vadd.f32 0.0, %v4107
  %v4109 = vpop.f32.mrb[0].mxu0
  %v4110 = vadd.f32 0.0, %v4109
  %v4111 = vpop.f32.mrb[0].mxu0
  %v4112 = vadd.f32 0.0, %v4111
  %4113 = vdwg.mxu0
  %4114 = vmatprep.subr.bf16.mxu0 %v4069
  %4115 = vmatpush1.bf16.msra.mxu0 %v4066
  %4116 = vmatprep.subr.bf16.mxu0 0
  %4117 = vmatpush1.bf16.msra.mxu0 0
  %4118 = vmatprep.subr.bf16.mxu0 0
  %4119 = vmatpush1.bf16.msra.mxu0 0
  %4120 = vmatprep.subr.bf16.mxu0 0
  %4121 = vmatpush1.bf16.msra.mxu0 0
  %4122 = vmatprep.subr.bf16.mxu0 0
  %4123 = vmatpush1.bf16.msra.mxu0 0
  %4124 = vmatprep.subr.bf16.mxu0 0
  %4125 = vmatpush1.bf16.msra.mxu0 0
  %4126 = vmatprep.subr.bf16.mxu0 0
  %4127 = vmatpush1.bf16.msra.mxu0 0
  %4128 = vmatprep.subr.bf16.mxu0 0
  %4129 = vmatpush1.bf16.msra.mxu0 0
  %4130 = vmatprep.subr.bf16.mxu0 0
  %4131 = vmatpush1.bf16.msra.mxu0 0
  %4132 = vmatprep.subr.bf16.mxu0 0
  %4133 = vmatpush1.bf16.msra.mxu0 0
  %4134 = vmatprep.subr.bf16.mxu0 0
  %4135 = vmatpush1.bf16.msra.mxu0 0
  %4136 = vmatprep.subr.bf16.mxu0 0
  %4137 = vmatpush1.bf16.msra.mxu0 0
  %4138 = vmatprep.subr.bf16.mxu0 0
  %4139 = vmatpush1.bf16.msra.mxu0 0
  %4140 = vmatprep.subr.bf16.mxu0 0
  %4141 = vmatpush1.bf16.msra.mxu0 0
  %4142 = vmatprep.subr.bf16.mxu0 0
  %4143 = vmatpush1.bf16.msra.mxu0 0
  %4144 = vmatprep.subr.bf16.mxu0 0
  %4145 = vmatpush1.bf16.msra.mxu0 0
  %4146 = vmatprep.mubr.bf16.mxu0 0
  %4147 = vmatmul.mubr.bf16.gmra.mrb[0].mxu0 %v1871
  %v4148 = vpop.f32.mrb[0].mxu0
  %v4149 = vadd.f32 0.0, %v4148
  %v4150 = vpop.f32.mrb[0].mxu0
  %v4151 = vadd.f32 0.0, %v4150
  %v4152 = vpop.f32.mrb[0].mxu0
  %v4153 = vadd.f32 0.0, %v4152
  %v4154 = vpop.f32.mrb[0].mxu0
  %v4155 = vadd.f32 0.0, %v4154
  %4156 = vdwg.mxu0
  %v4157 = vadd.f32 %v4024, %v4106
  %v4158 = vadd.f32 %v4025, %v4108
  %v4159 = vadd.f32 %v4026, %v4149
  %v4160 = vadd.f32 %v4027, %v4151
  %v4161 = vadd.f32 %v4028, %v4110
  %v4162 = vadd.f32 %v4029, %v4112
  %v4163 = vadd.f32 %v4030, %v4153
  %v4164 = vadd.f32 %v4031, %v4155
  %s4165 = scalar_lea.vmem %s6, 4
  %v4166 = vld [vmem:[%s4165] sm:$0xf]
  %v4168 = vlaneseq
  %v4169 = vshrl.u32 %v4168, 7
  %v4170 = vsub.s32 0, %v4169
  %v4171 = vrot.slane %v4166, %v4170
  %v4172 = vlaneseq
  %v4173 = vshrl.u32 %v4172, 7
  %v4174 = vsub.s32 1, %v4173
  %v4175 = vrot.slane %v4166, %v4174
  %v4176 = vlaneseq
  %v4177 = vshrl.u32 %v4176, 7
  %v4178 = vsub.s32 2, %v4177
  %v4179 = vrot.slane %v4166, %v4178
  %v4180 = vlaneseq
  %v4181 = vshrl.u32 %v4180, 7
  %v4182 = vsub.s32 3, %v4181
  %v4183 = vrot.slane %v4166, %v4182
  %v4188 = vadd.f32 %v4157, %v4171
  %v4189 = vadd.f32 %v4158, %v4175
  %v4190 = vadd.f32 %v4159, %v4179
  %v4191 = vadd.f32 %v4160, %v4183
  %v4192 = vadd.f32 %v4161, %v4171
  %v4193 = vadd.f32 %v4162, %v4175
  %v4194 = vadd.f32 %v4163, %v4179
  %v4195 = vadd.f32 %v4164, %v4183
  %v4196 = vtanh.pop %v4188
  %v4197 = vtanh.pop %v4189
  %v4198 = vtanh.pop %v4192
  %v4199 = vtanh.pop %v4193
  %v4200 = vxor.u32 %v4190, 2147483648
  %v4201 = vxor.u32 %v4191, 2147483648
  %v4202 = vxor.u32 %v4194, 2147483648
  %v4203 = vxor.u32 %v4195, 2147483648
  %v4204 = vmul.f32 %v4200, 1.442695
  %v4205 = vpow.pop %v4204
  %v4206 = vmul.f32 %v4201, 1.442695
  %v4207 = vpow.pop %v4206
  %v4208 = vmul.f32 %v4202, 1.442695
  %v4209 = vpow.pop %v4208
  %v4210 = vmul.f32 %v4203, 1.442695
  %v4211 = vpow.pop %v4210
  %v4212 = vadd.f32 %v4205, 1.0
  %v4213 = vadd.f32 %v4207, 1.0
  %v4214 = vadd.f32 %v4209, 1.0
  %v4215 = vadd.f32 %v4211, 1.0
  %v4216 = vrcp.pop %v4212
  %v4217 = vmul.f32 1.0, %v4216
  %v4218 = vrcp.pop %v4213
  %v4219 = vmul.f32 1.0, %v4218
  %v4220 = vrcp.pop %v4214
  %v4221 = vmul.f32 1.0, %v4220
  %v4222 = vrcp.pop %v4215
  %v4223 = vmul.f32 1.0, %v4222
  %v4224 = vmul.f32 %v4196, %v4217
  %v4225 = vmul.f32 %v4197, %v4219
  %v4226 = vmul.f32 %v4198, %v4221
  %v4227 = vmul.f32 %v4199, %v4223
  %v4228 = vpack.c.bf16 %v4226, %v4224
  %v4229 = vpack.c.bf16 %v4227, %v4225
  %s4230 = scalar_lea.vmem %s8, 512
  %v4231 = vld [vmem:[%s4230 + $0x8] sm:$0xff]
  %v4232 = vld [vmem:[%s4230 + $0x18] sm:$0xff]
  %v4233 = vld [vmem:[%s4230 + $0x28] sm:$0xff]
  %v4234 = vld [vmem:[%s4230 + $0x38] sm:$0xff]
  %v4235 = vld [vmem:[%s4230 + $0x48] sm:$0xff]
  %v4236 = vld [vmem:[%s4230 + $0x58] sm:$0xff]
  %v4237 = vld [vmem:[%s4230 + $0x68] sm:$0xff]
  %v4238 = vld [vmem:[%s4230 + $0x78] sm:$0xff]
  %v4239 = vld [vmem:[%s4230 + $0x88] sm:$0xff]
  %v4240 = vld [vmem:[%s4230 + $0x98] sm:$0xff]
  %v4241 = vld [vmem:[%s4230 + $0xa8] sm:$0xff]
  %v4242 = vld [vmem:[%s4230 + $0xb8] sm:$0xff]
  %v4243 = vld [vmem:[%s4230 + $0xc8] sm:$0xff]
  %v4244 = vld [vmem:[%s4230 + $0xd8] sm:$0xff]
  %v4245 = vld [vmem:[%s4230 + $0xe8] sm:$0xff]
  %v4246 = vld [vmem:[%s4230 + $0xf8] sm:$0xff]
  %v4247 = vld [vmem:[%s4230 + $0x108] sm:$0xff]
  %v4248 = vld [vmem:[%s4230 + $0x118] sm:$0xff]
  %v4249 = vld [vmem:[%s4230 + $0x128] sm:$0xff]
  %v4250 = vld [vmem:[%s4230 + $0x138] sm:$0xff]
  %v4251 = vld [vmem:[%s4230 + $0x148] sm:$0xff]
  %v4252 = vld [vmem:[%s4230 + $0x158] sm:$0xff]
  %v4253 = vld [vmem:[%s4230 + $0x168] sm:$0xff]
  %v4254 = vld [vmem:[%s4230 + $0x178] sm:$0xff]
  %v4255 = vld [vmem:[%s4230 + $0x188] sm:$0xff]
  %v4256 = vld [vmem:[%s4230 + $0x198] sm:$0xff]
  %v4257 = vld [vmem:[%s4230 + $0x1a8] sm:$0xff]
  %v4258 = vld [vmem:[%s4230 + $0x1b8] sm:$0xff]
  %v4259 = vld [vmem:[%s4230 + $0x1c8] sm:$0xff]
  %v4260 = vld [vmem:[%s4230 + $0x1d8] sm:$0xff]
  %v4261 = vld [vmem:[%s4230 + $0x1e8] sm:$0xff]
  %v4262 = vld [vmem:[%s4230 + $0x1f8] sm:$0xff]
  %s4263 = scalar_lea.vmem %s9, 4
  %v4264 = vld [vmem:[%s4263] sm:$0xf]
  %v4266 = vlaneseq
  %v4267 = vshrl.u32 %v4266, 7
  %v4268 = vsub.s32 2, %v4267
  %v4269 = vrot.slane %v4264, %v4268
  %v4270 = vlaneseq
  %v4271 = vshrl.u32 %v4270, 7
  %v4272 = vsub.s32 3, %v4271
  %v4273 = vrot.slane %v4264, %v4272
  %v4308 = vunpack.c.l.b16 %v4231
  %v4309 = vunpack.c.h.b16 %v4231
  %v4310 = vunpack.c.l.b16 %v4232
  %v4311 = vunpack.c.h.b16 %v4232
  %v4312 = vunpack.c.l.b16 %v4233
  %v4313 = vunpack.c.h.b16 %v4233
  %v4314 = vunpack.c.l.b16 %v4234
  %v4315 = vunpack.c.h.b16 %v4234
  %v4316 = vunpack.c.l.b16 %v4235
  %v4317 = vunpack.c.h.b16 %v4235
  %v4318 = vunpack.c.l.b16 %v4236
  %v4319 = vunpack.c.h.b16 %v4236
  %v4320 = vunpack.c.l.b16 %v4237
  %v4321 = vunpack.c.h.b16 %v4237
  %v4322 = vunpack.c.l.b16 %v4238
  %v4323 = vunpack.c.h.b16 %v4238
  %v4324 = vunpack.c.l.b16 %v4239
  %v4325 = vunpack.c.h.b16 %v4239
  %v4326 = vunpack.c.l.b16 %v4240
  %v4327 = vunpack.c.h.b16 %v4240
  %v4328 = vunpack.c.l.b16 %v4241
  %v4329 = vunpack.c.h.b16 %v4241
  %v4330 = vunpack.c.l.b16 %v4242
  %v4331 = vunpack.c.h.b16 %v4242
  %v4332 = vunpack.c.l.b16 %v4243
  %v4333 = vunpack.c.h.b16 %v4243
  %v4334 = vunpack.c.l.b16 %v4244
  %v4335 = vunpack.c.h.b16 %v4244
  %v4336 = vunpack.c.l.b16 %v4245
  %v4337 = vunpack.c.h.b16 %v4245
  %v4338 = vunpack.c.l.b16 %v4246
  %v4339 = vunpack.c.h.b16 %v4246
  %v4340 = vunpack.c.l.b16 %v4247
  %v4341 = vunpack.c.h.b16 %v4247
  %v4342 = vunpack.c.l.b16 %v4248
  %v4343 = vunpack.c.h.b16 %v4248
  %v4344 = vunpack.c.l.b16 %v4249
  %v4345 = vunpack.c.h.b16 %v4249
  %v4346 = vunpack.c.l.b16 %v4250
  %v4347 = vunpack.c.h.b16 %v4250
  %v4348 = vunpack.c.l.b16 %v4251
  %v4349 = vunpack.c.h.b16 %v4251
  %v4350 = vunpack.c.l.b16 %v4252
  %v4351 = vunpack.c.h.b16 %v4252
  %v4352 = vunpack.c.l.b16 %v4253
  %v4353 = vunpack.c.h.b16 %v4253
  %v4354 = vunpack.c.l.b16 %v4254
  %v4355 = vunpack.c.h.b16 %v4254
  %v4356 = vunpack.c.l.b16 %v4255
  %v4357 = vunpack.c.h.b16 %v4255
  %v4358 = vunpack.c.l.b16 %v4256
  %v4359 = vunpack.c.h.b16 %v4256
  %v4360 = vunpack.c.l.b16 %v4257
  %v4361 = vunpack.c.h.b16 %v4257
  %v4362 = vunpack.c.l.b16 %v4258
  %v4363 = vunpack.c.h.b16 %v4258
  %v4364 = vunpack.c.l.b16 %v4259
  %v4365 = vunpack.c.h.b16 %v4259
  %v4366 = vunpack.c.l.b16 %v4260
  %v4367 = vunpack.c.h.b16 %v4260
  %v4368 = vunpack.c.l.b16 %v4261
  %v4369 = vunpack.c.h.b16 %v4261
  %v4370 = vunpack.c.l.b16 %v4262
  %v4371 = vunpack.c.h.b16 %v4262
  %v4372 = vpack.c.b16 %v4310, %v4308
  %v4373 = vpack.c.b16 %v4311, %v4309
  %v4374 = vpack.c.b16 %v4314, %v4312
  %v4375 = vpack.c.b16 %v4315, %v4313
  %v4376 = vpack.c.b16 %v4318, %v4316
  %v4377 = vpack.c.b16 %v4319, %v4317
  %v4378 = vpack.c.b16 %v4322, %v4320
  %v4379 = vpack.c.b16 %v4323, %v4321
  %v4380 = vpack.c.b16 %v4326, %v4324
  %v4381 = vpack.c.b16 %v4327, %v4325
  %v4382 = vpack.c.b16 %v4330, %v4328
  %v4383 = vpack.c.b16 %v4331, %v4329
  %v4384 = vpack.c.b16 %v4334, %v4332
  %v4385 = vpack.c.b16 %v4335, %v4333
  %v4386 = vpack.c.b16 %v4338, %v4336
  %v4387 = vpack.c.b16 %v4339, %v4337
  %v4388 = vpack.c.b16 %v4342, %v4340
  %v4389 = vpack.c.b16 %v4343, %v4341
  %v4390 = vpack.c.b16 %v4346, %v4344
  %v4391 = vpack.c.b16 %v4347, %v4345
  %v4392 = vpack.c.b16 %v4350, %v4348
  %v4393 = vpack.c.b16 %v4351, %v4349
  %v4394 = vpack.c.b16 %v4354, %v4352
  %v4395 = vpack.c.b16 %v4355, %v4353
  %v4396 = vpack.c.b16 %v4358, %v4356
  %v4397 = vpack.c.b16 %v4359, %v4357
  %v4398 = vpack.c.b16 %v4362, %v4360
  %v4399 = vpack.c.b16 %v4363, %v4361
  %v4400 = vpack.c.b16 %v4366, %v4364
  %v4401 = vpack.c.b16 %v4367, %v4365
  %v4402 = vpack.c.b16 %v4370, %v4368
  %v4403 = vpack.c.b16 %v4371, %v4369
  %4436 = vmatprep.subr.bf16.mxu0 %v4373
  %4437 = vmatpush1.bf16.msra.mxu0 %v4372
  %4438 = vmatprep.subr.bf16.mxu0 %v4375
  %4439 = vmatpush1.bf16.msra.mxu0 %v4374
  %4440 = vmatprep.subr.bf16.mxu0 %v4377
  %4441 = vmatpush1.bf16.msra.mxu0 %v4376
  %4442 = vmatprep.subr.bf16.mxu0 %v4379
  %4443 = vmatpush1.bf16.msra.mxu0 %v4378
  %4444 = vmatprep.subr.bf16.mxu0 %v4381
  %4445 = vmatpush1.bf16.msra.mxu0 %v4380
  %4446 = vmatprep.subr.bf16.mxu0 %v4383
  %4447 = vmatpush1.bf16.msra.mxu0 %v4382
  %4448 = vmatprep.subr.bf16.mxu0 %v4385
  %4449 = vmatpush1.bf16.msra.mxu0 %v4384
  %4450 = vmatprep.subr.bf16.mxu0 %v4387
  %4451 = vmatpush1.bf16.msra.mxu0 %v4386
  %4452 = vmatprep.subr.bf16.mxu0 %v4389
  %4453 = vmatpush1.bf16.msra.mxu0 %v4388
  %4454 = vmatprep.subr.bf16.mxu0 %v4391
  %4455 = vmatpush1.bf16.msra.mxu0 %v4390
  %4456 = vmatprep.subr.bf16.mxu0 %v4393
  %4457 = vmatpush1.bf16.msra.mxu0 %v4392
  %4458 = vmatprep.subr.bf16.mxu0 %v4395
  %4459 = vmatpush1.bf16.msra.mxu0 %v4394
  %4460 = vmatprep.subr.bf16.mxu0 %v4397
  %4461 = vmatpush1.bf16.msra.mxu0 %v4396
  %4462 = vmatprep.subr.bf16.mxu0 %v4399
  %4463 = vmatpush1.bf16.msra.mxu0 %v4398
  %4464 = vmatprep.subr.bf16.mxu0 %v4401
  %4465 = vmatpush1.bf16.msra.mxu0 %v4400
  %4466 = vmatprep.subr.bf16.mxu0 %v4403
  %4467 = vmatpush1.bf16.msra.mxu0 %v4402
  %4468 = vmatprep.mubr.bf16.mxu0 %v4229
  %4469 = vmatmul.mubr.bf16.gmra.mrb[0].mxu0 %v4228
  %v4470 = vpop.f32.mrb[0].mxu0
  %v4471 = vadd.f32 %v4269, %v4470
  %v4472 = vpop.f32.mrb[0].mxu0
  %v4473 = vadd.f32 %v4273, %v4472
  %v4474 = vpop.f32.mrb[0].mxu0
  %v4475 = vadd.f32 %v4269, %v4474
  %v4476 = vpop.f32.mrb[0].mxu0
  %v4477 = vadd.f32 %v4273, %v4476
  %4478 = vdwg.mxu0
  %v4479 = vadd.f32 %v2543, %v4471
  %v4480 = vadd.f32 %v2544, %v4473
  %v4481 = vadd.f32 %v2545, %v4475
  %v4482 = vadd.f32 %v2546, %v4477
  %v4483 = vmax.f32 %v4479, 0.0
  %v4484 = vmax.f32 %v4480, 0.0
  %v4485 = vmax.f32 %v4481, 0.0
  %v4486 = vmax.f32 %v4482, 0.0
  %v4487 = vpack.c.bf16 %v4485, %v4483
  %v4488 = vpack.c.bf16 %v4486, %v4484
  %v4489 = vld [vmem:[%s10] sm:$0xff]
  %v4490 = vld [vmem:[%s10 + $0x8] sm:$0xff]
  %v4491 = vld [vmem:[%s10 + $0x10] sm:$0xff]
  %v4492 = vld [vmem:[%s10 + $0x18] sm:$0xff]
  %v4493 = vld [vmem:[%s10 + $0x20] sm:$0xff]
  %v4494 = vld [vmem:[%s10 + $0x28] sm:$0xff]
  %v4495 = vld [vmem:[%s10 + $0x30] sm:$0xff]
  %v4496 = vld [vmem:[%s10 + $0x38] sm:$0xff]
  %v4497 = vld [vmem:[%s10 + $0x40] sm:$0xff]
  %v4498 = vld [vmem:[%s10 + $0x48] sm:$0xff]
  %v4499 = vld [vmem:[%s10 + $0x50] sm:$0xff]
  %v4500 = vld [vmem:[%s10 + $0x58] sm:$0xff]
  %v4501 = vld [vmem:[%s10 + $0x60] sm:$0xff]
  %v4502 = vld [vmem:[%s10 + $0x68] sm:$0xff]
  %v4503 = vld [vmem:[%s10 + $0x70] sm:$0xff]
  %v4504 = vld [vmem:[%s10 + $0x78] sm:$0xff]
  %v4505 = vld [vmem:[%s10 + $0x80] sm:$0xff]
  %v4506 = vld [vmem:[%s10 + $0x88] sm:$0xff]
  %v4507 = vld [vmem:[%s10 + $0x90] sm:$0xff]
  %v4508 = vld [vmem:[%s10 + $0x98] sm:$0xff]
  %v4509 = vld [vmem:[%s10 + $0xa0] sm:$0xff]
  %v4510 = vld [vmem:[%s10 + $0xa8] sm:$0xff]
  %v4511 = vld [vmem:[%s10 + $0xb0] sm:$0xff]
  %v4512 = vld [vmem:[%s10 + $0xb8] sm:$0xff]
  %v4513 = vld [vmem:[%s10 + $0xc0] sm:$0xff]
  %v4514 = vld [vmem:[%s10 + $0xc8] sm:$0xff]
  %v4515 = vld [vmem:[%s10 + $0xd0] sm:$0xff]
  %v4516 = vld [vmem:[%s10 + $0xd8] sm:$0xff]
  %v4517 = vld [vmem:[%s10 + $0xe0] sm:$0xff]
  %v4518 = vld [vmem:[%s10 + $0xe8] sm:$0xff]
  %v4519 = vld [vmem:[%s10 + $0xf0] sm:$0xff]
  %v4520 = vld [vmem:[%s10 + $0xf8] sm:$0xff]
  %v4521 = vld [vmem:[%s11] sm:$0x3]
  %v4523 = vlaneseq
  %v4524 = vshrl.u32 %v4523, 7
  %v4525 = vsub.s32 0, %v4524
  %v4526 = vrot.slane %v4521, %v4525
  %v4527 = vlaneseq
  %v4528 = vshrl.u32 %v4527, 7
  %v4529 = vsub.s32 1, %v4528
  %v4530 = vrot.slane %v4521, %v4529
  %v4565 = vunpack.c.l.b16 %v4489
  %v4566 = vunpack.c.h.b16 %v4489
  %v4567 = vunpack.c.l.b16 %v4490
  %v4568 = vunpack.c.h.b16 %v4490
  %v4569 = vunpack.c.l.b16 %v4491
  %v4570 = vunpack.c.h.b16 %v4491
  %v4571 = vunpack.c.l.b16 %v4492
  %v4572 = vunpack.c.h.b16 %v4492
  %v4573 = vunpack.c.l.b16 %v4493
  %v4574 = vunpack.c.h.b16 %v4493
  %v4575 = vunpack.c.l.b16 %v4494
  %v4576 = vunpack.c.h.b16 %v4494
  %v4577 = vunpack.c.l.b16 %v4495
  %v4578 = vunpack.c.h.b16 %v4495
  %v4579 = vunpack.c.l.b16 %v4496
  %v4580 = vunpack.c.h.b16 %v4496
  %v4581 = vunpack.c.l.b16 %v4497
  %v4582 = vunpack.c.h.b16 %v4497
  %v4583 = vunpack.c.l.b16 %v4498
  %v4584 = vunpack.c.h.b16 %v4498
  %v4585 = vunpack.c.l.b16 %v4499
  %v4586 = vunpack.c.h.b16 %v4499
  %v4587 = vunpack.c.l.b16 %v4500
  %v4588 = vunpack.c.h.b16 %v4500
  %v4589 = vunpack.c.l.b16 %v4501
  %v4590 = vunpack.c.h.b16 %v4501
  %v4591 = vunpack.c.l.b16 %v4502
  %v4592 = vunpack.c.h.b16 %v4502
  %v4593 = vunpack.c.l.b16 %v4503
  %v4594 = vunpack.c.h.b16 %v4503
  %v4595 = vunpack.c.l.b16 %v4504
  %v4596 = vunpack.c.h.b16 %v4504
  %v4597 = vunpack.c.l.b16 %v4505
  %v4598 = vunpack.c.h.b16 %v4505
  %v4599 = vunpack.c.l.b16 %v4506
  %v4600 = vunpack.c.h.b16 %v4506
  %v4601 = vunpack.c.l.b16 %v4507
  %v4602 = vunpack.c.h.b16 %v4507
  %v4603 = vunpack.c.l.b16 %v4508
  %v4604 = vunpack.c.h.b16 %v4508
  %v4605 = vunpack.c.l.b16 %v4509
  %v4606 = vunpack.c.h.b16 %v4509
  %v4607 = vunpack.c.l.b16 %v4510
  %v4608 = vunpack.c.h.b16 %v4510
  %v4609 = vunpack.c.l.b16 %v4511
  %v4610 = vunpack.c.h.b16 %v4511
  %v4611 = vunpack.c.l.b16 %v4512
  %v4612 = vunpack.c.h.b16 %v4512
  %v4613 = vunpack.c.l.b16 %v4513
  %v4614 = vunpack.c.h.b16 %v4513
  %v4615 = vunpack.c.l.b16 %v4514
  %v4616 = vunpack.c.h.b16 %v4514
  %v4617 = vunpack.c.l.b16 %v4515
  %v4618 = vunpack.c.h.b16 %v4515
  %v4619 = vunpack.c.l.b16 %v4516
  %v4620 = vunpack.c.h.b16 %v4516
  %v4621 = vunpack.c.l.b16 %v4517
  %v4622 = vunpack.c.h.b16 %v4517
  %v4623 = vunpack.c.l.b16 %v4518
  %v4624 = vunpack.c.h.b16 %v4518
  %v4625 = vunpack.c.l.b16 %v4519
  %v4626 = vunpack.c.h.b16 %v4519
  %v4627 = vunpack.c.l.b16 %v4520
  %v4628 = vunpack.c.h.b16 %v4520
  %v4629 = vpack.c.b16 %v4567, %v4565
  %v4630 = vpack.c.b16 %v4568, %v4566
  %v4631 = vpack.c.b16 %v4571, %v4569
  %v4632 = vpack.c.b16 %v4572, %v4570
  %v4633 = vpack.c.b16 %v4575, %v4573
  %v4634 = vpack.c.b16 %v4576, %v4574
  %v4635 = vpack.c.b16 %v4579, %v4577
  %v4636 = vpack.c.b16 %v4580, %v4578
  %v4637 = vpack.c.b16 %v4583, %v4581
  %v4638 = vpack.c.b16 %v4584, %v4582
  %v4639 = vpack.c.b16 %v4587, %v4585
  %v4640 = vpack.c.b16 %v4588, %v4586
  %v4641 = vpack.c.b16 %v4591, %v4589
  %v4642 = vpack.c.b16 %v4592, %v4590
  %v4643 = vpack.c.b16 %v4595, %v4593
  %v4644 = vpack.c.b16 %v4596, %v4594
  %v4645 = vpack.c.b16 %v4599, %v4597
  %v4646 = vpack.c.b16 %v4600, %v4598
  %v4647 = vpack.c.b16 %v4603, %v4601
  %v4648 = vpack.c.b16 %v4604, %v4602
  %v4649 = vpack.c.b16 %v4607, %v4605
  %v4650 = vpack.c.b16 %v4608, %v4606
  %v4651 = vpack.c.b16 %v4611, %v4609
  %v4652 = vpack.c.b16 %v4612, %v4610
  %v4653 = vpack.c.b16 %v4615, %v4613
  %v4654 = vpack.c.b16 %v4616, %v4614
  %v4655 = vpack.c.b16 %v4619, %v4617
  %v4656 = vpack.c.b16 %v4620, %v4618
  %v4657 = vpack.c.b16 %v4623, %v4621
  %v4658 = vpack.c.b16 %v4624, %v4622
  %v4659 = vpack.c.b16 %v4627, %v4625
  %v4660 = vpack.c.b16 %v4628, %v4626
  %4693 = vmatprep.subr.bf16.mxu0 %v4630
  %4694 = vmatpush1.bf16.msra.mxu0 %v4629
  %4695 = vmatprep.subr.bf16.mxu0 %v4632
  %4696 = vmatpush1.bf16.msra.mxu0 %v4631
  %4697 = vmatprep.subr.bf16.mxu0 %v4634
  %4698 = vmatpush1.bf16.msra.mxu0 %v4633
  %4699 = vmatprep.subr.bf16.mxu0 %v4636
  %4700 = vmatpush1.bf16.msra.mxu0 %v4635
  %4701 = vmatprep.subr.bf16.mxu0 %v4638
  %4702 = vmatpush1.bf16.msra.mxu0 %v4637
  %4703 = vmatprep.subr.bf16.mxu0 %v4640
  %4704 = vmatpush1.bf16.msra.mxu0 %v4639
  %4705 = vmatprep.subr.bf16.mxu0 %v4642
  %4706 = vmatpush1.bf16.msra.mxu0 %v4641
  %4707 = vmatprep.subr.bf16.mxu0 %v4644
  %4708 = vmatpush1.bf16.msra.mxu0 %v4643
  %4709 = vmatprep.subr.bf16.mxu0 %v4646
  %4710 = vmatpush1.bf16.msra.mxu0 %v4645
  %4711 = vmatprep.subr.bf16.mxu0 %v4648
  %4712 = vmatpush1.bf16.msra.mxu0 %v4647
  %4713 = vmatprep.subr.bf16.mxu0 %v4650
  %4714 = vmatpush1.bf16.msra.mxu0 %v4649
  %4715 = vmatprep.subr.bf16.mxu0 %v4652
  %4716 = vmatpush1.bf16.msra.mxu0 %v4651
  %4717 = vmatprep.subr.bf16.mxu0 %v4654
  %4718 = vmatpush1.bf16.msra.mxu0 %v4653
  %4719 = vmatprep.subr.bf16.mxu0 %v4656
  %4720 = vmatpush1.bf16.msra.mxu0 %v4655
  %4721 = vmatprep.subr.bf16.mxu0 %v4658
  %4722 = vmatpush1.bf16.msra.mxu0 %v4657
  %4723 = vmatprep.subr.bf16.mxu0 %v4660
  %4724 = vmatpush1.bf16.msra.mxu0 %v4659
  %4725 = vmatprep.mubr.bf16.mxu0 %v4488
  %4726 = vmatmul.mubr.bf16.gmra.mrb[0].mxu0 %v4487
  %v4727 = vpop.f32.mrb[0].mxu0
  %v4728 = vadd.f32 %v4526, %v4727
  %v4729 = vpop.f32.mrb[0].mxu0
  %v4730 = vadd.f32 %v4530, %v4729
  %v4731 = vpop.f32.mrb[0].mxu0
  %v4732 = vadd.f32 %v4526, %v4731
  %v4733 = vpop.f32.mrb[0].mxu0
  %v4734 = vadd.f32 %v4530, %v4733
  %4735 = vdwg.mxu0
  %v4736 = vmax.f32 %v4728, 0.0
  %v4737 = vmax.f32 %v4730, 0.0
  %v4738 = vmax.f32 %v4732, 0.0
  %v4739 = vmax.f32 %v4734, 0.0
  %v4740 = vpack.c.bf16 %v4738, %v4736
  %v4741 = vpack.c.bf16 %v4739, %v4737
  %v4742 = vld [vmem:[%s12] sm:$0xff]
  %v4743 = vld [vmem:[%s12 + $0x8] sm:$0xff]
  %v4744 = vld [vmem:[%s12 + $0x10] sm:$0xff]
  %v4745 = vld [vmem:[%s12 + $0x18] sm:$0xff]
  %v4746 = vld [vmem:[%s12 + $0x20] sm:$0xff]
  %v4747 = vld [vmem:[%s12 + $0x28] sm:$0xff]
  %v4748 = vld [vmem:[%s12 + $0x30] sm:$0xff]
  %v4749 = vld [vmem:[%s12 + $0x38] sm:$0xff]
  %v4750 = vld [vmem:[%s12 + $0x40] sm:$0xff]
  %v4751 = vld [vmem:[%s12 + $0x48] sm:$0xff]
  %v4752 = vld [vmem:[%s12 + $0x50] sm:$0xff]
  %v4753 = vld [vmem:[%s12 + $0x58] sm:$0xff]
  %v4754 = vld [vmem:[%s12 + $0x60] sm:$0xff]
  %v4755 = vld [vmem:[%s12 + $0x68] sm:$0xff]
  %v4756 = vld [vmem:[%s12 + $0x70] sm:$0xff]
  %v4757 = vld [vmem:[%s12 + $0x78] sm:$0xff]
  %v4758 = vld [vmem:[%s12 + $0x80] sm:$0xff]
  %v4759 = vld [vmem:[%s12 + $0x88] sm:$0xff]
  %v4760 = vld [vmem:[%s12 + $0x90] sm:$0xff]
  %v4761 = vld [vmem:[%s12 + $0x98] sm:$0xff]
  %v4762 = vld [vmem:[%s12 + $0xa0] sm:$0xff]
  %v4763 = vld [vmem:[%s12 + $0xa8] sm:$0xff]
  %v4764 = vld [vmem:[%s12 + $0xb0] sm:$0xff]
  %v4765 = vld [vmem:[%s12 + $0xb8] sm:$0xff]
  %v4766 = vld [vmem:[%s12 + $0xc0] sm:$0xff]
  %v4767 = vld [vmem:[%s12 + $0xc8] sm:$0xff]
  %v4768 = vld [vmem:[%s12 + $0xd0] sm:$0xff]
  %v4769 = vld [vmem:[%s12 + $0xd8] sm:$0xff]
  %v4770 = vld [vmem:[%s12 + $0xe0] sm:$0xff]
  %v4771 = vld [vmem:[%s12 + $0xe8] sm:$0xff]
  %v4772 = vld [vmem:[%s12 + $0xf0] sm:$0xff]
  %v4773 = vld [vmem:[%s12 + $0xf8] sm:$0xff]
  %v4774 = vld [vmem:[%s13] sm:$0x3]
  %v4776 = vlaneseq
  %v4777 = vshrl.u32 %v4776, 7
  %v4778 = vsub.s32 0, %v4777
  %v4779 = vrot.slane %v4774, %v4778
  %v4780 = vlaneseq
  %v4781 = vshrl.u32 %v4780, 7
  %v4782 = vsub.s32 1, %v4781
  %v4783 = vrot.slane %v4774, %v4782
  %v4818 = vunpack.c.l.b16 %v4742
  %v4819 = vunpack.c.h.b16 %v4742
  %v4820 = vunpack.c.l.b16 %v4743
  %v4821 = vunpack.c.h.b16 %v4743
  %v4822 = vunpack.c.l.b16 %v4744
  %v4823 = vunpack.c.h.b16 %v4744
  %v4824 = vunpack.c.l.b16 %v4745
  %v4825 = vunpack.c.h.b16 %v4745
  %v4826 = vunpack.c.l.b16 %v4746
  %v4827 = vunpack.c.h.b16 %v4746
  %v4828 = vunpack.c.l.b16 %v4747
  %v4829 = vunpack.c.h.b16 %v4747
  %v4830 = vunpack.c.l.b16 %v4748
  %v4831 = vunpack.c.h.b16 %v4748
  %v4832 = vunpack.c.l.b16 %v4749
  %v4833 = vunpack.c.h.b16 %v4749
  %v4834 = vunpack.c.l.b16 %v4750
  %v4835 = vunpack.c.h.b16 %v4750
  %v4836 = vunpack.c.l.b16 %v4751
  %v4837 = vunpack.c.h.b16 %v4751
  %v4838 = vunpack.c.l.b16 %v4752
  %v4839 = vunpack.c.h.b16 %v4752
  %v4840 = vunpack.c.l.b16 %v4753
  %v4841 = vunpack.c.h.b16 %v4753
  %v4842 = vunpack.c.l.b16 %v4754
  %v4843 = vunpack.c.h.b16 %v4754
  %v4844 = vunpack.c.l.b16 %v4755
  %v4845 = vunpack.c.h.b16 %v4755
  %v4846 = vunpack.c.l.b16 %v4756
  %v4847 = vunpack.c.h.b16 %v4756
  %v4848 = vunpack.c.l.b16 %v4757
  %v4849 = vunpack.c.h.b16 %v4757
  %v4850 = vunpack.c.l.b16 %v4758
  %v4851 = vunpack.c.h.b16 %v4758
  %v4852 = vunpack.c.l.b16 %v4759
  %v4853 = vunpack.c.h.b16 %v4759
  %v4854 = vunpack.c.l.b16 %v4760
  %v4855 = vunpack.c.h.b16 %v4760
  %v4856 = vunpack.c.l.b16 %v4761
  %v4857 = vunpack.c.h.b16 %v4761
  %v4858 = vunpack.c.l.b16 %v4762
  %v4859 = vunpack.c.h.b16 %v4762
  %v4860 = vunpack.c.l.b16 %v4763
  %v4861 = vunpack.c.h.b16 %v4763
  %v4862 = vunpack.c.l.b16 %v4764
  %v4863 = vunpack.c.h.b16 %v4764
  %v4864 = vunpack.c.l.b16 %v4765
  %v4865 = vunpack.c.h.b16 %v4765
  %v4866 = vunpack.c.l.b16 %v4766
  %v4867 = vunpack.c.h.b16 %v4766
  %v4868 = vunpack.c.l.b16 %v4767
  %v4869 = vunpack.c.h.b16 %v4767
  %v4870 = vunpack.c.l.b16 %v4768
  %v4871 = vunpack.c.h.b16 %v4768
  %v4872 = vunpack.c.l.b16 %v4769
  %v4873 = vunpack.c.h.b16 %v4769
  %v4874 = vunpack.c.l.b16 %v4770
  %v4875 = vunpack.c.h.b16 %v4770
  %v4876 = vunpack.c.l.b16 %v4771
  %v4877 = vunpack.c.h.b16 %v4771
  %v4878 = vunpack.c.l.b16 %v4772
  %v4879 = vunpack.c.h.b16 %v4772
  %v4880 = vunpack.c.l.b16 %v4773
  %v4881 = vunpack.c.h.b16 %v4773
  %v4882 = vpack.c.b16 %v4820, %v4818
  %v4883 = vpack.c.b16 %v4821, %v4819
  %v4884 = vpack.c.b16 %v4824, %v4822
  %v4885 = vpack.c.b16 %v4825, %v4823
  %v4886 = vpack.c.b16 %v4828, %v4826
  %v4887 = vpack.c.b16 %v4829, %v4827
  %v4888 = vpack.c.b16 %v4832, %v4830
  %v4889 = vpack.c.b16 %v4833, %v4831
  %v4890 = vpack.c.b16 %v4836, %v4834
  %v4891 = vpack.c.b16 %v4837, %v4835
  %v4892 = vpack.c.b16 %v4840, %v4838
  %v4893 = vpack.c.b16 %v4841, %v4839
  %v4894 = vpack.c.b16 %v4844, %v4842
  %v4895 = vpack.c.b16 %v4845, %v4843
  %v4896 = vpack.c.b16 %v4848, %v4846
  %v4897 = vpack.c.b16 %v4849, %v4847
  %v4898 = vpack.c.b16 %v4852, %v4850
  %v4899 = vpack.c.b16 %v4853, %v4851
  %v4900 = vpack.c.b16 %v4856, %v4854
  %v4901 = vpack.c.b16 %v4857, %v4855
  %v4902 = vpack.c.b16 %v4860, %v4858
  %v4903 = vpack.c.b16 %v4861, %v4859
  %v4904 = vpack.c.b16 %v4864, %v4862
  %v4905 = vpack.c.b16 %v4865, %v4863
  %v4906 = vpack.c.b16 %v4868, %v4866
  %v4907 = vpack.c.b16 %v4869, %v4867
  %v4908 = vpack.c.b16 %v4872, %v4870
  %v4909 = vpack.c.b16 %v4873, %v4871
  %v4910 = vpack.c.b16 %v4876, %v4874
  %v4911 = vpack.c.b16 %v4877, %v4875
  %v4912 = vpack.c.b16 %v4880, %v4878
  %v4913 = vpack.c.b16 %v4881, %v4879
  %4946 = vmatprep.subr.bf16.mxu0 %v4883
  %4947 = vmatpush1.bf16.msra.mxu0 %v4882
  %4948 = vmatprep.subr.bf16.mxu0 %v4885
  %4949 = vmatpush1.bf16.msra.mxu0 %v4884
  %4950 = vmatprep.subr.bf16.mxu0 %v4887
  %4951 = vmatpush1.bf16.msra.mxu0 %v4886
  %4952 = vmatprep.subr.bf16.mxu0 %v4889
  %4953 = vmatpush1.bf16.msra.mxu0 %v4888
  %4954 = vmatprep.subr.bf16.mxu0 %v4891
  %4955 = vmatpush1.bf16.msra.mxu0 %v4890
  %4956 = vmatprep.subr.bf16.mxu0 %v4893
  %4957 = vmatpush1.bf16.msra.mxu0 %v4892
  %4958 = vmatprep.subr.bf16.mxu0 %v4895
  %4959 = vmatpush1.bf16.msra.mxu0 %v4894
  %4960 = vmatprep.subr.bf16.mxu0 %v4897
  %4961 = vmatpush1.bf16.msra.mxu0 %v4896
  %4962 = vmatprep.subr.bf16.mxu0 %v4899
  %4963 = vmatpush1.bf16.msra.mxu0 %v4898
  %4964 = vmatprep.subr.bf16.mxu0 %v4901
  %4965 = vmatpush1.bf16.msra.mxu0 %v4900
  %4966 = vmatprep.subr.bf16.mxu0 %v4903
  %4967 = vmatpush1.bf16.msra.mxu0 %v4902
  %4968 = vmatprep.subr.bf16.mxu0 %v4905
  %4969 = vmatpush1.bf16.msra.mxu0 %v4904
  %4970 = vmatprep.subr.bf16.mxu0 %v4907
  %4971 = vmatpush1.bf16.msra.mxu0 %v4906
  %4972 = vmatprep.subr.bf16.mxu0 %v4909
  %4973 = vmatpush1.bf16.msra.mxu0 %v4908
  %4974 = vmatprep.subr.bf16.mxu0 %v4911
  %4975 = vmatpush1.bf16.msra.mxu0 %v4910
  %4976 = vmatprep.subr.bf16.mxu0 %v4913
  %4977 = vmatpush1.bf16.msra.mxu0 %v4912
  %4978 = vmatprep.mubr.bf16.mxu0 %v4741
  %4979 = vmatmul.mubr.bf16.gmra.mrb[0].mxu0 %v4740
  %v4980 = vpop.f32.mrb[0].mxu0
  %v4981 = vadd.f32 %v4779, %v4980
  %v4982 = vpop.f32.mrb[0].mxu0
  %v4983 = vadd.f32 %v4783, %v4982
  %v4984 = vpop.f32.mrb[0].mxu0
  %v4985 = vadd.f32 %v4779, %v4984
  %v4986 = vpop.f32.mrb[0].mxu0
  %v4987 = vadd.f32 %v4783, %v4986
  %4988 = vdwg.mxu0
  %v4989 = vld [vmem:[%s14] sm:$0x3]
  %v4990 = vmul.f32 %v4989, 3.0
  %v4991 = vmul.f32 %v4990, 1.442695
  %v4992 = vpow.pop %v4991
  %v4994 = vlaneseq
  %v4995 = vshrl.u32 %v4994, 7
  %v4996 = vsub.s32 0, %v4995
  %v4997 = vrot.slane %v4992, %v4996
  %v4998 = vlaneseq
  %v4999 = vshrl.u32 %v4998, 7
  %v5000 = vsub.s32 1, %v4999
  %v5001 = vrot.slane %v4992, %v5000
  %v5004 = vmul.f32 %v4981, %v4997
  %v5005 = vmul.f32 %v4983, %v5001
  %v5006 = vmul.f32 %v4985, %v4997
  %v5007 = vmul.f32 %v4987, %v5001
  %v5008 = vld [vmem:[%s2] sm:$0xff]
  %v5009 = vld [vmem:[%s2 + $0x8] sm:$0xff]
  %v5010 = vsub.f32 %v5008, %v5005
  %v5011 = vsub.f32 %v5009, %v5007
  %v5012 = vsub.f32 0.0, %v5004
  %v5013 = vsub.f32 0.0, %v5006
  %v5014 = vmul.f32 %v5012, 1.442695
  %v5015 = vpow.pop %v5014
  %v5016 = vmul.f32 %v5013, 1.442695
  %v5017 = vpow.pop %v5016
  %v5018 = vmul.f32 %v5010, %v5015
  %v5019 = vmul.f32 %v5011, %v5017
  %5020 = vst [vmem:[%s15] sm:$0xff] %v5018
  %5021 = vst [vmem:[%s15 + $0x8] sm:$0xff] %v5019
  %v5022 = vadd.f32 %v5004, %v5006
  %v5023 = vrot.slane %v5022, 4
  %v5024 = vadd.f32 %v5022, %v5023
  %v5025 = vrot.slane %v5024, 2
  %v5026 = vadd.f32 %v5024, %v5025
  %v5027 = vrot.slane %v5026, 1
  %v5028 = vadd.f32 %v5026, %v5027
  %v5029 = vsub.f32 0.0, %v5028
  %5030 = vst [vmem:[%s16] sm:$0xff] %v5029
  // Predicated region
  $region62: #{block_forward.3} parent=0 // pred_check
    _
  $region63: #{block_forward.3} parent=0 // pred_check_branch
    %5032 = sbr.rel (0) target = $region65
  $region64: #{block_forward.3} parent=0 // pred_region
    _
  $region65: #{block_forward.3} parent=0 // pred_fallthru
    _
  // Predicated region
  $region66: #{block_forward.3} parent=0 // pred_check
    _
  $region67: #{block_forward.3} parent=0 // pred_check_branch
    %5034 = sbr.rel (0) target = $region69
  $region68: #{block_forward.3} parent=0 // pred_region
    _
  $region69: #{block_forward.3} parent=0 // pred_fallthru
    _
  // Predicated region
  $region70: #{block_forward.3} parent=0 // pred_check
    _
  $region71: #{block_forward.3} parent=0 // pred_check_branch
    %5036 = sbr.rel (0) target = $region73
  $region72: #{block_forward.3} parent=0 // pred_region
    _
  $region73: #{block_forward.3} parent=0 // pred_fallthru
    _
  // Predicated region
  $region74: #{block_forward.3} parent=0 // pred_check
    _
  $region75: #{block_forward.3} parent=0 // pred_check_branch
    %5038 = sbr.rel (0) target = $region77
  $region76: #{block_forward.3} parent=0 // pred_region
    _
  $region77: #{block_forward.3} parent=0 // pred_fallthru
    _

</llo_original>
